<compile_context>
chip_gen: v7x
topology: tpu7x:2x2x1
jax: 0.10.0
libtpu: 0.0.40
codegen_flags: <defaults>
</compile_context>

<pallas_src>
import functools

import jax
import jax.numpy as jnp
from jax import lax
from jax.experimental import pallas as pl
from jax.experimental.pallas import tpu as pltpu

BN_EPS = 1e-5


# ----------------------------- Pallas kernel --------------------------------
def _fused_gemm(xmat, wmat, scale, shift, residual, *, relu, tm):
    """Fused GEMM + BN(scale, shift) (+ residual) (+ ReLU).

    xmat:     [M, K]      bf16   (im2col patches; taps folded into K)
    wmat:     [K, cout]   bf16
    scale:    [1, cout]   f32    (BN gamma / sqrt(var + eps))
    shift:    [1, cout]   f32    (BN beta  - mean * scale)
    residual: [M, cout]   bf16 or None
    returns:  [M, cout]   bf16
    """
    M, K = xmat.shape
    cout = wmat.shape[1]
    G = M // tm
    has_res = residual is not None

    def kernel(x_ref, w_ref, s_ref, b_ref, *rest):
        if has_res:
            r_ref, o_ref = rest
        else:
            (o_ref,) = rest
        acc = jnp.dot(x_ref[...], w_ref[...],
                      preferred_element_type=jnp.float32)
        y = acc * s_ref[...] + b_ref[...]
        if has_res:
            y = y + r_ref[...].astype(jnp.float32)
        if relu:
            y = jnp.maximum(y, 0.0)
        o_ref[...] = y.astype(o_ref.dtype)

    in_specs = [
        pl.BlockSpec((tm, K), lambda i: (i, 0)),
        pl.BlockSpec((K, cout), lambda i: (0, 0)),
        pl.BlockSpec((1, cout), lambda i: (0, 0)),
        pl.BlockSpec((1, cout), lambda i: (0, 0)),
    ]
    args = [xmat, wmat, scale, shift]
    if has_res:
        in_specs.append(pl.BlockSpec((tm, cout), lambda i: (i, 0)))
        args.append(residual)

    flops = 2 * M * K * cout
    bytes_accessed = (M * K * 2 + K * cout * 2 + 2 * cout * 4
                      + M * cout * 2 * (2 if has_res else 1))

    return pl.pallas_call(
        kernel,
        out_shape=jax.ShapeDtypeStruct((M, cout), jnp.bfloat16),
        grid=(G,),
        in_specs=in_specs,
        out_specs=pl.BlockSpec((tm, cout), lambda i: (i, 0)),
        compiler_params=pltpu.CompilerParams(
            dimension_semantics=("parallel",)),
        cost_estimate=pl.CostEstimate(flops=flops, transcendentals=0,
                                      bytes_accessed=bytes_accessed),
    )(*args)


def _pick_tm(M):
    """Row-tile size: enough grid steps to pipeline, acc fits in vregs."""
    if M >= 1024 and M % 256 == 0:
        return 256
    if M >= 512 and M % 128 == 0:
        return 128
    for tm in (128, 64, 32, 16, 8):
        if M % tm == 0:
            return tm
    return None


def _conv_xla(x, p, relu, residual):
    """XLA fallback for tiny feature maps (pallas launch would dominate)."""
    k, s, pad, cin, cout = p['k'], p['stride'], p['pad'], p['cin'], p['cout']
    w4 = p['wmat'].reshape(k, k, cin, cout)
    y = lax.conv_general_dilated(
        x, w4, window_strides=(s, s), padding=[(pad, pad), (pad, pad)],
        dimension_numbers=('NHWC', 'HWIO', 'NHWC'),
        preferred_element_type=jnp.float32)
    y = y * p['scale'][0] + p['shift'][0]
    if residual is not None:
        y = y + residual.astype(jnp.float32)
    if relu:
        y = jnp.maximum(y, 0.0)
    return y.astype(jnp.bfloat16)


def conv2d_bn(x, p, relu=True, residual=None):
    """conv + inference-mode BN (+ residual) (+ ReLU).  x: [N,H,W,Cin] bf16."""
    k, s, pad, cin, cout = p['k'], p['stride'], p['pad'], p['cin'], p['cout']
    N, H, W, _ = x.shape
    Ho = (H + 2 * pad - k) // s + 1
    Wo = (W + 2 * pad - k) // s + 1
    M = N * Ho * Wo

    tm = _pick_tm(M)
    if tm is None or M < 128:
        return _conv_xla(x, p, relu, residual)

    # Fold the k*k taps into the contraction dim (im2col in bf16).  For 1x1
    # stride-1 convs this is a pure reshape (no data movement).
    if k == 1 and s == 1 and pad == 0:
        xmat = x.reshape(M, cin)
    else:
        xp = jnp.pad(x, ((0, 0), (pad, pad), (pad, pad), (0, 0)))
        cols = [xp[:, di:di + s * (Ho - 1) + 1:s,
                   dj:dj + s * (Wo - 1) + 1:s, :]
                for di in range(k) for dj in range(k)]
        xmat = jnp.concatenate(cols, axis=-1).reshape(M, k * k * cin)

    res = None
    if residual is not None:
        res = residual.astype(jnp.bfloat16).reshape(M, cout)

    out = _fused_gemm(xmat, p['wmat'], p['scale'], p['shift'], res,
                      relu=relu, tm=tm)
    return out.reshape(N, Ho, Wo, cout)


# ----------------------------- parameter setup ------------------------------
class ParamGen:
    def __init__(self, key):
        self.key = key

    def _next(self):
        self.key, sub = jax.random.split(self.key)
        return sub

    def conv_bn(self, cin, cout, k, stride, pad):
        # Kaiming-style init (fan_out, relu) for the conv weight; identity BN
        # (constant_init gamma=1, beta=0, running stats mean=0/var=1).
        fan_out = cout * k * k
        w = jax.random.normal(self._next(), (k * k, cin, cout), jnp.float32)
        w = w * jnp.sqrt(2.0 / fan_out)
        gamma = jnp.ones((cout,), jnp.float32)
        beta = jnp.zeros((cout,), jnp.float32)
        rmean = jnp.zeros((cout,), jnp.float32)
        rvar = jnp.ones((cout,), jnp.float32)
        scale = gamma / jnp.sqrt(rvar + BN_EPS)
        shift = beta - rmean * scale
        # Weights stay un-scaled bf16 [K, cout]; BN scale is applied in the
        # f32 epilogue inside the kernel (review: no pre-cast folding).
        wmat = w.reshape(k * k * cin, cout).astype(jnp.bfloat16)
        return dict(wmat=wmat,
                    scale=scale.reshape(1, cout),
                    shift=shift.reshape(1, cout),
                    k=k, stride=stride, pad=pad, cin=cin, cout=cout)


# ----------------------------- blocks ---------------------------------------
def make_block(gen, block_type, inplanes, planes, stride=1):
    exp = 4 if block_type == 'BOTTLENECK' else 1
    ds = None
    if stride != 1 or inplanes != planes * exp:
        ds = gen.conv_bn(inplanes, planes * exp, 1, stride, 0)
    if block_type == 'BOTTLENECK':
        return dict(type='bottleneck',
                    conv1=gen.conv_bn(inplanes, planes, 1, 1, 0),
                    conv2=gen.conv_bn(planes, planes, 3, stride, 1),
                    conv3=gen.conv_bn(planes, planes * exp, 1, 1, 0),
                    downsample=ds)
    return dict(type='basic',
                conv1=gen.conv_bn(inplanes, planes, 3, stride, 1),
                conv2=gen.conv_bn(planes, planes, 3, 1, 1),
                downsample=ds)


def make_layer(gen, block_type, inplanes, planes, blocks, stride=1):
    exp = 4 if block_type == 'BOTTLENECK' else 1
    layers = [make_block(gen, block_type, inplanes, planes, stride)]
    inplanes = planes * exp
    for _ in range(1, blocks):
        layers.append(make_block(gen, block_type, inplanes, planes, 1))
    return layers, inplanes


def block_fwd(p, x):
    residual = x if p['downsample'] is None else conv2d_bn(x, p['downsample'], relu=False)
    if p['type'] == 'basic':
        out = conv2d_bn(x, p['conv1'], relu=True)
        out = conv2d_bn(out, p['conv2'], relu=True, residual=residual)
    else:
        out = conv2d_bn(x, p['conv1'], relu=True)
        out = conv2d_bn(out, p['conv2'], relu=True)
        out = conv2d_bn(out, p['conv3'], relu=True, residual=residual)
    return out


def run_branch(blocks, x):
    for b in blocks:
        x = block_fwd(b, x)
    return x


# ----------------------------- HRModule -------------------------------------
def make_hrmodule(gen, cfg, num_inchannels, multi_scale_output=True):
    nb = cfg['num_branches']
    block_type = cfg['block']
    exp = 4 if block_type == 'BOTTLENECK' else 1
    num_inchannels = list(num_inchannels)
    branches = []
    for i in range(nb):
        blocks, _ = make_layer(gen, block_type, num_inchannels[i],
                               cfg['num_channels'][i], cfg['num_blocks'][i], 1)
        branches.append(blocks)
        num_inchannels[i] = cfg['num_channels'][i] * exp
    fuse_layers = None
    if nb > 1:
        fuse_layers = []
        for i in range(nb if multi_scale_output else 1):
            row = []
            for j in range(nb):
                if j > i:
                    row.append(dict(kind='up',
                                    conv=gen.conv_bn(num_inchannels[j], num_inchannels[i], 1, 1, 0),
                                    factor=2 ** (j - i)))
                elif j == i:
                    row.append(None)
                else:
                    convs, relus = [], []
                    for k in range(i - j):
                        if k == i - j - 1:
                            convs.append(gen.conv_bn(num_inchannels[j], num_inchannels[i], 3, 2, 1))
                            relus.append(False)
                        else:
                            convs.append(gen.conv_bn(num_inchannels[j], num_inchannels[j], 3, 2, 1))
                            relus.append(True)
                    row.append(dict(kind='down', convs=convs, relus=relus))
            fuse_layers.append(row)
    return dict(num_branches=nb, branches=branches, fuse_layers=fuse_layers), num_inchannels


def apply_fuse(fl, x):
    if fl['kind'] == 'up':
        y = conv2d_bn(x, fl['conv'], relu=False)
        f = fl['factor']
        return jnp.repeat(jnp.repeat(y, f, axis=1), f, axis=2)   # nearest upsample
    for p, r in zip(fl['convs'], fl['relus']):
        x = conv2d_bn(x, p, relu=r)
    return x


def hrmodule_fwd(mp, xs):
    nb = mp['num_branches']
    if nb == 1:
        return [run_branch(mp['branches'][0], xs[0])]
    xs = [run_branch(mp['branches'][i], xs[i]) for i in range(nb)]
    outs = []
    for i in range(len(mp['fuse_layers'])):
        y0 = xs[0] if i == 0 else apply_fuse(mp['fuse_layers'][i][0], xs[0])
        y = y0.astype(jnp.float32)
        for j in range(1, nb):
            t = xs[j] if i == j else apply_fuse(mp['fuse_layers'][i][j], xs[j])
            y = y + t.astype(jnp.float32)
        outs.append(jnp.maximum(y, 0.0).astype(jnp.bfloat16))
    return outs


def make_stage(gen, cfg, num_inchannels, multi_scale_output=True):
    modules = []
    for m in range(cfg['num_modules']):
        reset = not (not multi_scale_output and m == cfg['num_modules'] - 1)
        mod, num_inchannels = make_hrmodule(gen, cfg, num_inchannels, reset)
        modules.append(mod)
    return modules, num_inchannels


def run_stage(modules, xs):
    for mod in modules:
        xs = hrmodule_fwd(mod, xs)
    return xs


def make_transition(gen, pre, cur):
    nb_cur, nb_pre = len(cur), len(pre)
    layers = []
    for i in range(nb_cur):
        if i < nb_pre:
            if cur[i] != pre[i]:
                layers.append([gen.conv_bn(pre[i], cur[i], 3, 1, 1)])
            else:
                layers.append(None)
        else:
            convs = []
            for j in range(i + 1 - nb_pre):
                inch = pre[-1]
                outch = cur[i] if j == i - nb_pre else inch
                convs.append(gen.conv_bn(inch, outch, 3, 2, 1))
            layers.append(convs)
    return layers


def apply_transition(entry, x):
    for p in entry:
        x = conv2d_bn(x, p, relu=True)
    return x


# ----------------------------- HRNet -----------------------------------------
def build_hrnet(key, extra):
    gen = ParamGen(key)
    P = {}
    P['conv1'] = gen.conv_bn(3, 64, 3, 2, 1)
    P['conv2'] = gen.conv_bn(64, 64, 3, 2, 1)

    s1 = extra['stage1']
    P['layer1'], stage1_out = make_layer(gen, s1['block'], 64,
                                         s1['num_channels'][0], s1['num_blocks'][0])

    s2 = extra['stage2']
    exp2 = 4 if s2['block'] == 'BOTTLENECK' else 1
    ch2 = [c * exp2 for c in s2['num_channels']]
    P['transition1'] = make_transition(gen, [stage1_out], ch2)
    P['stage2'], pre = make_stage(gen, s2, ch2)

    s3 = extra['stage3']
    exp3 = 4 if s3['block'] == 'BOTTLENECK' else 1
    ch3 = [c * exp3 for c in s3['num_channels']]
    P['transition2'] = make_transition(gen, pre, ch3)
    P['stage3'], pre = make_stage(gen, s3, ch3)

    s4 = extra['stage4']
    exp4 = 4 if s4['block'] == 'BOTTLENECK' else 1
    ch4 = [c * exp4 for c in s4['num_channels']]
    P['transition3'] = make_transition(gen, pre, ch4)
    P['stage4'], pre = make_stage(gen, s4, ch4)
    return P


def hrnet_forward(P, extra, x_nchw):
    # NCHW -> NHWC, cast to bf16 once (activations stay bf16 end to end).
    x = jnp.transpose(x_nchw, (0, 2, 3, 1)).astype(jnp.bfloat16)
    x = conv2d_bn(x, P['conv1'], relu=True)
    x = conv2d_bn(x, P['conv2'], relu=True)
    x = run_branch(P['layer1'], x)

    xs = []
    for i in range(extra['stage2']['num_branches']):
        t = P['transition1'][i]
        xs.append(apply_transition(t, x) if t is not None else x)
    ys = run_stage(P['stage2'], xs)

    xs = []
    for i in range(extra['stage3']['num_branches']):
        t = P['transition2'][i]
        xs.append(apply_transition(t, ys[-1]) if t is not None else ys[i])
    ys = run_stage(P['stage3'], xs)

    xs = []
    for i in range(extra['stage4']['num_branches']):
        t = P['transition3'][i]
        xs.append(apply_transition(t, ys[-1]) if t is not None else ys[i])
    ys = run_stage(P['stage4'], xs)

    # Back to NCHW, f32 (PyTorch output dtype).
    return [jnp.transpose(y.astype(jnp.float32), (0, 3, 1, 2)) for y in ys]


# ----------------------------- main ------------------------------------------
if __name__ == "__main__":
    extra = dict(
        stage1=dict(num_modules=1, num_branches=1, block='BOTTLENECK',
                    num_blocks=[1], num_channels=[8], fuse_method='SUM'),
        stage2=dict(num_modules=1, num_branches=2, block='BASIC',
                    num_blocks=[1, 1], num_channels=[8, 16], fuse_method='SUM'),
        stage3=dict(num_modules=1, num_branches=3, block='BASIC',
                    num_blocks=[1, 1, 1], num_channels=[8, 16, 32], fuse_method='SUM'),
        stage4=dict(num_modules=1, num_branches=4, block='BASIC',
                    num_blocks=[1, 1, 1, 1], num_channels=[8, 16, 32, 64], fuse_method='SUM'),
    )

    key = jax.random.PRNGKey(0)
    pkey, xkey = jax.random.split(key)
    params = build_hrnet(pkey, extra)

    # PyTorch-style NCHW input.
    x = jax.random.normal(xkey, (2, 3, 64, 64), jnp.float32)

    fwd = jax.jit(lambda inp: hrnet_forward(params, extra, inp))
    ys = fwd(x)
    for y in ys:
        jax.block_until_ready(y)

    print("KERNEL_OK")
</pallas_src>

<mosaic_0001>
module attributes {stable_mosaic.version = 11 : i64} {
  func.func @kernel(%arg0: i32, %arg1: memref<256x27xbf16, #tpu.memory_space<vmem>>, %arg2: memref<27x64xbf16, #tpu.memory_space<vmem>>, %arg3: memref<1x64xf32, #tpu.memory_space<vmem>>, %arg4: memref<1x64xf32, #tpu.memory_space<vmem>>, %arg5: memref<256x64xbf16, #tpu.memory_space<vmem>>) attributes {dimension_semantics = [#tpu.dimension_semantics<parallel>], iteration_bounds = array<i64: 8>, scalar_prefetch = 0 : i64, scratch_operands = 0 : i64, tpu.core_type = #tpu.core_type<tc>, window_params = [{transform_indices = @transform_0, window_bounds = array<i64: 256, 27>}, {pipeline_mode = #tpu.pipeline_mode<synchronous>, transform_indices = @transform_1, window_bounds = array<i64: 27, 64>}, {pipeline_mode = #tpu.pipeline_mode<synchronous>, transform_indices = @transform_2, window_bounds = array<i64: 1, 64>}, {pipeline_mode = #tpu.pipeline_mode<synchronous>, transform_indices = @transform_3, window_bounds = array<i64: 1, 64>}, {transform_indices = @transform_4, window_bounds = array<i64: 256, 64>}]} {
    %c0 = arith.constant 0 : index
    %c0_0 = arith.constant 0 : index
    %0 = vector.load %arg1[%c0, %c0_0] : memref<256x27xbf16, #tpu.memory_space<vmem>>, vector<256x27xbf16>
    %c0_1 = arith.constant 0 : index
    %c0_2 = arith.constant 0 : index
    %1 = vector.load %arg2[%c0_1, %c0_2] : memref<27x64xbf16, #tpu.memory_space<vmem>>, vector<27x64xbf16>
    %cst = arith.constant dense<0.000000e+00> : vector<256x64xf32>
    %2 = tpu.matmul %0, %1, %cst {dimension_numbers = #tpu.dot_dimension_numbers<[1], [0], [0], [1], [0, 0, 1, 1], [], []>} : vector<256x27xbf16>, vector<27x64xbf16>, vector<256x64xf32> -> vector<256x64xf32>
    %c0_3 = arith.constant 0 : index
    %c0_4 = arith.constant 0 : index
    %3 = vector.load %arg3[%c0_3, %c0_4] : memref<1x64xf32, #tpu.memory_space<vmem>>, vector<1x64xf32>
    %4 = vector.broadcast %3 : vector<1x64xf32> to vector<256x64xf32>
    %5 = arith.mulf %2, %4 : vector<256x64xf32>
    %c0_5 = arith.constant 0 : index
    %c0_6 = arith.constant 0 : index
    %6 = vector.load %arg4[%c0_5, %c0_6] : memref<1x64xf32, #tpu.memory_space<vmem>>, vector<1x64xf32>
    %7 = vector.broadcast %6 : vector<1x64xf32> to vector<256x64xf32>
    %8 = arith.addf %5, %7 : vector<256x64xf32>
    %cst_7 = arith.constant 0.000000e+00 : f32
    %9 = vector.broadcast %cst_7 : f32 to vector<256x64xf32>
    %10 = arith.maximumf %8, %9 : vector<256x64xf32>
    %11 = arith.truncf %10 : vector<256x64xf32> to vector<256x64xbf16>
    %c0_8 = arith.constant 0 : index
    %c0_9 = arith.constant 0 : index
    %12 = vector.load %arg5[%c0_8, %c0_9] : memref<256x64xbf16, #tpu.memory_space<vmem>>, vector<256x64xbf16>
    tpu.vector_store %arg5[%c0_8, %c0_9], %11 {strides = array<i32>} : memref<256x64xbf16, #tpu.memory_space<vmem>>, vector<256x64xbf16>,
    return
  }
  func.func @transform_0(%arg0: i32) -> (i32, i32) {
    %c0_i32 = arith.constant 0 : i32
    %c0_i32_0 = arith.constant 0 : i32
    return %arg0, %c0_i32 : i32, i32
  }
  func.func @transform_1(%arg0: i32) -> (i32, i32) {
    %c0_i32 = arith.constant 0 : i32
    %c0_i32_0 = arith.constant 0 : i32
    %c0_i32_1 = arith.constant 0 : i32
    return %c0_i32, %c0_i32_0 : i32, i32
  }
  func.func @transform_2(%arg0: i32) -> (i32, i32) {
    %c0_i32 = arith.constant 0 : i32
    %c0_i32_0 = arith.constant 0 : i32
    %c0_i32_1 = arith.constant 0 : i32
    return %c0_i32, %c0_i32_0 : i32, i32
  }
  func.func @transform_3(%arg0: i32) -> (i32, i32) {
    %c0_i32 = arith.constant 0 : i32
    %c0_i32_0 = arith.constant 0 : i32
    %c0_i32_1 = arith.constant 0 : i32
    return %c0_i32, %c0_i32_0 : i32, i32
  }
  func.func @transform_4(%arg0: i32) -> (i32, i32) {
    %c0_i32 = arith.constant 0 : i32
    %c0_i32_0 = arith.constant 0 : i32
    return %arg0, %c0_i32 : i32, i32
  }
}

module attributes {stable_mosaic.version = 11 : i64} {
  func.func @kernel(%arg0: i32, %arg1: memref<128x64xbf16, #tpu.memory_space<vmem>>, %arg2: memref<64x8xbf16, #tpu.memory_space<vmem>>, %arg3: memref<1x8xf32, #tpu.memory_space<vmem>>, %arg4: memref<1x8xf32, #tpu.memory_space<vmem>>, %arg5: memref<128x8xbf16, #tpu.memory_space<vmem>>) attributes {dimension_semantics = [#tpu.dimension_semantics<parallel>], iteration_bounds = array<i64: 4>, scalar_prefetch = 0 : i64, scratch_operands = 0 : i64, tpu.core_type = #tpu.core_type<tc>, window_params = [{transform_indices = @transform_0, window_bounds = array<i64: 128, 64>}, {pipeline_mode = #tpu.pipeline_mode<synchronous>, transform_indices = @transform_1, window_bounds = array<i64: 64, 8>}, {pipeline_mode = #tpu.pipeline_mode<synchronous>, transform_indices = @transform_2, window_bounds = array<i64: 1, 8>}, {pipeline_mode = #tpu.pipeline_mode<synchronous>, transform_indices = @transform_3, window_bounds = array<i64: 1, 8>}, {transform_indices = @transform_4, window_bounds = array<i64: 128, 8>}]} {
    %c0 = arith.constant 0 : index
    %c0_0 = arith.constant 0 : index
    %0 = vector.load %arg1[%c0, %c0_0] : memref<128x64xbf16, #tpu.memory_space<vmem>>, vector<128x64xbf16>
    %c0_1 = arith.constant 0 : index
    %c0_2 = arith.constant 0 : index
    %1 = vector.load %arg2[%c0_1, %c0_2] : memref<64x8xbf16, #tpu.memory_space<vmem>>, vector<64x8xbf16>
    %cst = arith.constant dense<0.000000e+00> : vector<128x8xf32>
    %2 = tpu.matmul %0, %1, %cst {dimension_numbers = #tpu.dot_dimension_numbers<[1], [0], [0], [1], [0, 0, 1, 1], [], []>} : vector<128x64xbf16>, vector<64x8xbf16>, vector<128x8xf32> -> vector<128x8xf32>
    %c0_3 = arith.constant 0 : index
    %c0_4 = arith.constant 0 : index
    %3 = vector.load %arg3[%c0_3, %c0_4] : memref<1x8xf32, #tpu.memory_space<vmem>>, vector<1x8xf32>
    %4 = vector.broadcast %3 : vector<1x8xf32> to vector<128x8xf32>
    %5 = arith.mulf %2, %4 : vector<128x8xf32>
    %c0_5 = arith.constant 0 : index
    %c0_6 = arith.constant 0 : index
    %6 = vector.load %arg4[%c0_5, %c0_6] : memref<1x8xf32, #tpu.memory_space<vmem>>, vector<1x8xf32>
    %7 = vector.broadcast %6 : vector<1x8xf32> to vector<128x8xf32>
    %8 = arith.addf %5, %7 : vector<128x8xf32>
    %cst_7 = arith.constant 0.000000e+00 : f32
    %9 = vector.broadcast %cst_7 : f32 to vector<128x8xf32>
    %10 = arith.maximumf %8, %9 : vector<128x8xf32>
    %11 = arith.truncf %10 : vector<128x8xf32> to vector<128x8xbf16>
    %c0_8 = arith.constant 0 : index
    %c0_9 = arith.constant 0 : index
    %12 = vector.load %arg5[%c0_8, %c0_9] : memref<128x8xbf16, #tpu.memory_space<vmem>>, vector<128x8xbf16>
    tpu.vector_store %arg5[%c0_8, %c0_9], %11 {strides = array<i32>} : memref<128x8xbf16, #tpu.memory_space<vmem>>, vector<128x8xbf16>,
    return
  }
  func.func @transform_0(%arg0: i32) -> (i32, i32) {
    %c0_i32 = arith.constant 0 : i32
    %c0_i32_0 = arith.constant 0 : i32
    return %arg0, %c0_i32 : i32, i32
  }
  func.func @transform_1(%arg0: i32) -> (i32, i32) {
    %c0_i32 = arith.constant 0 : i32
    %c0_i32_0 = arith.constant 0 : i32
    %c0_i32_1 = arith.constant 0 : i32
    return %c0_i32, %c0_i32_0 : i32, i32
  }
  func.func @transform_2(%arg0: i32) -> (i32, i32) {
    %c0_i32 = arith.constant 0 : i32
    %c0_i32_0 = arith.constant 0 : i32
    %c0_i32_1 = arith.constant 0 : i32
    return %c0_i32, %c0_i32_0 : i32, i32
  }
  func.func @transform_3(%arg0: i32) -> (i32, i32) {
    %c0_i32 = arith.constant 0 : i32
    %c0_i32_0 = arith.constant 0 : i32
    %c0_i32_1 = arith.constant 0 : i32
    return %c0_i32, %c0_i32_0 : i32, i32
  }
  func.func @transform_4(%arg0: i32) -> (i32, i32) {
    %c0_i32 = arith.constant 0 : i32
    %c0_i32_0 = arith.constant 0 : i32
    return %arg0, %c0_i32 : i32, i32
  }
}

module attributes {stable_mosaic.version = 11 : i64} {
  func.func @kernel(%arg0: i32, %arg1: memref<128x576xbf16, #tpu.memory_space<vmem>>, %arg2: memref<576x64xbf16, #tpu.memory_space<vmem>>, %arg3: memref<1x64xf32, #tpu.memory_space<vmem>>, %arg4: memref<1x64xf32, #tpu.memory_space<vmem>>, %arg5: memref<128x64xbf16, #tpu.memory_space<vmem>>) attributes {dimension_semantics = [#tpu.dimension_semantics<parallel>], iteration_bounds = array<i64: 4>, scalar_prefetch = 0 : i64, scratch_operands = 0 : i64, tpu.core_type = #tpu.core_type<tc>, window_params = [{transform_indices = @transform_0, window_bounds = array<i64: 128, 576>}, {pipeline_mode = #tpu.pipeline_mode<synchronous>, transform_indices = @transform_1, window_bounds = array<i64: 576, 64>}, {pipeline_mode = #tpu.pipeline_mode<synchronous>, transform_indices = @transform_2, window_bounds = array<i64: 1, 64>}, {pipeline_mode = #tpu.pipeline_mode<synchronous>, transform_indices = @transform_3, window_bounds = array<i64: 1, 64>}, {transform_indices = @transform_4, window_bounds = array<i64: 128, 64>}]} {
    %c0 = arith.constant 0 : index
    %c0_0 = arith.constant 0 : index
    %0 = vector.load %arg1[%c0, %c0_0] : memref<128x576xbf16, #tpu.memory_space<vmem>>, vector<128x576xbf16>
    %c0_1 = arith.constant 0 : index
    %c0_2 = arith.constant 0 : index
    %1 = vector.load %arg2[%c0_1, %c0_2] : memref<576x64xbf16, #tpu.memory_space<vmem>>, vector<576x64xbf16>
    %cst = arith.constant dense<0.000000e+00> : vector<128x64xf32>
    %2 = tpu.matmul %0, %1, %cst {dimension_numbers = #tpu.dot_dimension_numbers<[1], [0], [0], [1], [0, 0, 1, 1], [], []>} : vector<128x576xbf16>, vector<576x64xbf16>, vector<128x64xf32> -> vector<128x64xf32>
    %c0_3 = arith.constant 0 : index
    %c0_4 = arith.constant 0 : index
    %3 = vector.load %arg3[%c0_3, %c0_4] : memref<1x64xf32, #tpu.memory_space<vmem>>, vector<1x64xf32>
    %4 = vector.broadcast %3 : vector<1x64xf32> to vector<128x64xf32>
    %5 = arith.mulf %2, %4 : vector<128x64xf32>
    %c0_5 = arith.constant 0 : index
    %c0_6 = arith.constant 0 : index
    %6 = vector.load %arg4[%c0_5, %c0_6] : memref<1x64xf32, #tpu.memory_space<vmem>>, vector<1x64xf32>
    %7 = vector.broadcast %6 : vector<1x64xf32> to vector<128x64xf32>
    %8 = arith.addf %5, %7 : vector<128x64xf32>
    %cst_7 = arith.constant 0.000000e+00 : f32
    %9 = vector.broadcast %cst_7 : f32 to vector<128x64xf32>
    %10 = arith.maximumf %8, %9 : vector<128x64xf32>
    %11 = arith.truncf %10 : vector<128x64xf32> to vector<128x64xbf16>
    %c0_8 = arith.constant 0 : index
    %c0_9 = arith.constant 0 : index
    %12 = vector.load %arg5[%c0_8, %c0_9] : memref<128x64xbf16, #tpu.memory_space<vmem>>, vector<128x64xbf16>
    tpu.vector_store %arg5[%c0_8, %c0_9], %11 {strides = array<i32>} : memref<128x64xbf16, #tpu.memory_space<vmem>>, vector<128x64xbf16>,
    return
  }
  func.func @transform_0(%arg0: i32) -> (i32, i32) {
    %c0_i32 = arith.constant 0 : i32
    %c0_i32_0 = arith.constant 0 : i32
    return %arg0, %c0_i32 : i32, i32
  }
  func.func @transform_1(%arg0: i32) -> (i32, i32) {
    %c0_i32 = arith.constant 0 : i32
    %c0_i32_0 = arith.constant 0 : i32
    %c0_i32_1 = arith.constant 0 : i32
    return %c0_i32, %c0_i32_0 : i32, i32
  }
  func.func @transform_2(%arg0: i32) -> (i32, i32) {
    %c0_i32 = arith.constant 0 : i32
    %c0_i32_0 = arith.constant 0 : i32
    %c0_i32_1 = arith.constant 0 : i32
    return %c0_i32, %c0_i32_0 : i32, i32
  }
  func.func @transform_3(%arg0: i32) -> (i32, i32) {
    %c0_i32 = arith.constant 0 : i32
    %c0_i32_0 = arith.constant 0 : i32
    %c0_i32_1 = arith.constant 0 : i32
    return %c0_i32, %c0_i32_0 : i32, i32
  }
  func.func @transform_4(%arg0: i32) -> (i32, i32) {
    %c0_i32 = arith.constant 0 : i32
    %c0_i32_0 = arith.constant 0 : i32
    return %arg0, %c0_i32 : i32, i32
  }
}

module attributes {stable_mosaic.version = 11 : i64} {
  func.func @kernel(%arg0: i32, %arg1: memref<128x72xbf16, #tpu.memory_space<vmem>>, %arg2: memref<72x8xbf16, #tpu.memory_space<vmem>>, %arg3: memref<1x8xf32, #tpu.memory_space<vmem>>, %arg4: memref<1x8xf32, #tpu.memory_space<vmem>>, %arg5: memref<128x8xbf16, #tpu.memory_space<vmem>>) attributes {dimension_semantics = [#tpu.dimension_semantics<parallel>], iteration_bounds = array<i64: 4>, scalar_prefetch = 0 : i64, scratch_operands = 0 : i64, tpu.core_type = #tpu.core_type<tc>, window_params = [{transform_indices = @transform_0, window_bounds = array<i64: 128, 72>}, {pipeline_mode = #tpu.pipeline_mode<synchronous>, transform_indices = @transform_1, window_bounds = array<i64: 72, 8>}, {pipeline_mode = #tpu.pipeline_mode<synchronous>, transform_indices = @transform_2, window_bounds = array<i64: 1, 8>}, {pipeline_mode = #tpu.pipeline_mode<synchronous>, transform_indices = @transform_3, window_bounds = array<i64: 1, 8>}, {transform_indices = @transform_4, window_bounds = array<i64: 128, 8>}]} {
    %c0 = arith.constant 0 : index
    %c0_0 = arith.constant 0 : index
    %0 = vector.load %arg1[%c0, %c0_0] : memref<128x72xbf16, #tpu.memory_space<vmem>>, vector<128x72xbf16>
    %c0_1 = arith.constant 0 : index
    %c0_2 = arith.constant 0 : index
    %1 = vector.load %arg2[%c0_1, %c0_2] : memref<72x8xbf16, #tpu.memory_space<vmem>>, vector<72x8xbf16>
    %cst = arith.constant dense<0.000000e+00> : vector<128x8xf32>
    %2 = tpu.matmul %0, %1, %cst {dimension_numbers = #tpu.dot_dimension_numbers<[1], [0], [0], [1], [0, 0, 1, 1], [], []>} : vector<128x72xbf16>, vector<72x8xbf16>, vector<128x8xf32> -> vector<128x8xf32>
    %c0_3 = arith.constant 0 : index
    %c0_4 = arith.constant 0 : index
    %3 = vector.load %arg3[%c0_3, %c0_4] : memref<1x8xf32, #tpu.memory_space<vmem>>, vector<1x8xf32>
    %4 = vector.broadcast %3 : vector<1x8xf32> to vector<128x8xf32>
    %5 = arith.mulf %2, %4 : vector<128x8xf32>
    %c0_5 = arith.constant 0 : index
    %c0_6 = arith.constant 0 : index
    %6 = vector.load %arg4[%c0_5, %c0_6] : memref<1x8xf32, #tpu.memory_space<vmem>>, vector<1x8xf32>
    %7 = vector.broadcast %6 : vector<1x8xf32> to vector<128x8xf32>
    %8 = arith.addf %5, %7 : vector<128x8xf32>
    %cst_7 = arith.constant 0.000000e+00 : f32
    %9 = vector.broadcast %cst_7 : f32 to vector<128x8xf32>
    %10 = arith.maximumf %8, %9 : vector<128x8xf32>
    %11 = arith.truncf %10 : vector<128x8xf32> to vector<128x8xbf16>
    %c0_8 = arith.constant 0 : index
    %c0_9 = arith.constant 0 : index
    %12 = vector.load %arg5[%c0_8, %c0_9] : memref<128x8xbf16, #tpu.memory_space<vmem>>, vector<128x8xbf16>
    tpu.vector_store %arg5[%c0_8, %c0_9], %11 {strides = array<i32>} : memref<128x8xbf16, #tpu.memory_space<vmem>>, vector<128x8xbf16>,
    return
  }
  func.func @transform_0(%arg0: i32) -> (i32, i32) {
    %c0_i32 = arith.constant 0 : i32
    %c0_i32_0 = arith.constant 0 : i32
    return %arg0, %c0_i32 : i32, i32
  }
  func.func @transform_1(%arg0: i32) -> (i32, i32) {
    %c0_i32 = arith.constant 0 : i32
    %c0_i32_0 = arith.constant 0 : i32
    %c0_i32_1 = arith.constant 0 : i32
    return %c0_i32, %c0_i32_0 : i32, i32
  }
  func.func @transform_2(%arg0: i32) -> (i32, i32) {
    %c0_i32 = arith.constant 0 : i32
    %c0_i32_0 = arith.constant 0 : i32
    %c0_i32_1 = arith.constant 0 : i32
    return %c0_i32, %c0_i32_0 : i32, i32
  }
  func.func @transform_3(%arg0: i32) -> (i32, i32) {
    %c0_i32 = arith.constant 0 : i32
    %c0_i32_0 = arith.constant 0 : i32
    %c0_i32_1 = arith.constant 0 : i32
    return %c0_i32, %c0_i32_0 : i32, i32
  }
  func.func @transform_4(%arg0: i32) -> (i32, i32) {
    %c0_i32 = arith.constant 0 : i32
    %c0_i32_0 = arith.constant 0 : i32
    return %arg0, %c0_i32 : i32, i32
  }
}

module attributes {stable_mosaic.version = 11 : i64} {
  func.func @kernel(%arg0: i32, %arg1: memref<128x64xbf16, #tpu.memory_space<vmem>>, %arg2: memref<64x32xbf16, #tpu.memory_space<vmem>>, %arg3: memref<1x32xf32, #tpu.memory_space<vmem>>, %arg4: memref<1x32xf32, #tpu.memory_space<vmem>>, %arg5: memref<128x32xbf16, #tpu.memory_space<vmem>>) attributes {dimension_semantics = [#tpu.dimension_semantics<parallel>], iteration_bounds = array<i64: 4>, scalar_prefetch = 0 : i64, scratch_operands = 0 : i64, tpu.core_type = #tpu.core_type<tc>, window_params = [{transform_indices = @transform_0, window_bounds = array<i64: 128, 64>}, {pipeline_mode = #tpu.pipeline_mode<synchronous>, transform_indices = @transform_1, window_bounds = array<i64: 64, 32>}, {pipeline_mode = #tpu.pipeline_mode<synchronous>, transform_indices = @transform_2, window_bounds = array<i64: 1, 32>}, {pipeline_mode = #tpu.pipeline_mode<synchronous>, transform_indices = @transform_3, window_bounds = array<i64: 1, 32>}, {transform_indices = @transform_4, window_bounds = array<i64: 128, 32>}]} {
    %c0 = arith.constant 0 : index
    %c0_0 = arith.constant 0 : index
    %0 = vector.load %arg1[%c0, %c0_0] : memref<128x64xbf16, #tpu.memory_space<vmem>>, vector<128x64xbf16>
    %c0_1 = arith.constant 0 : index
    %c0_2 = arith.constant 0 : index
    %1 = vector.load %arg2[%c0_1, %c0_2] : memref<64x32xbf16, #tpu.memory_space<vmem>>, vector<64x32xbf16>
    %cst = arith.constant dense<0.000000e+00> : vector<128x32xf32>
    %2 = tpu.matmul %0, %1, %cst {dimension_numbers = #tpu.dot_dimension_numbers<[1], [0], [0], [1], [0, 0, 1, 1], [], []>} : vector<128x64xbf16>, vector<64x32xbf16>, vector<128x32xf32> -> vector<128x32xf32>
    %c0_3 = arith.constant 0 : index
    %c0_4 = arith.constant 0 : index
    %3 = vector.load %arg3[%c0_3, %c0_4] : memref<1x32xf32, #tpu.memory_space<vmem>>, vector<1x32xf32>
    %4 = vector.broadcast %3 : vector<1x32xf32> to vector<128x32xf32>
    %5 = arith.mulf %2, %4 : vector<128x32xf32>
    %c0_5 = arith.constant 0 : index
    %c0_6 = arith.constant 0 : index
    %6 = vector.load %arg4[%c0_5, %c0_6] : memref<1x32xf32, #tpu.memory_space<vmem>>, vector<1x32xf32>
    %7 = vector.broadcast %6 : vector<1x32xf32> to vector<128x32xf32>
    %8 = arith.addf %5, %7 : vector<128x32xf32>
    %9 = arith.truncf %8 : vector<128x32xf32> to vector<128x32xbf16>
    %c0_7 = arith.constant 0 : index
    %c0_8 = arith.constant 0 : index
    %10 = vector.load %arg5[%c0_7, %c0_8] : memref<128x32xbf16, #tpu.memory_space<vmem>>, vector<128x32xbf16>
    tpu.vector_store %arg5[%c0_7, %c0_8], %9 {strides = array<i32>} : memref<128x32xbf16, #tpu.memory_space<vmem>>, vector<128x32xbf16>,
    return
  }
  func.func @transform_0(%arg0: i32) -> (i32, i32) {
    %c0_i32 = arith.constant 0 : i32
    %c0_i32_0 = arith.constant 0 : i32
    return %arg0, %c0_i32 : i32, i32
  }
  func.func @transform_1(%arg0: i32) -> (i32, i32) {
    %c0_i32 = arith.constant 0 : i32
    %c0_i32_0 = arith.constant 0 : i32
    %c0_i32_1 = arith.constant 0 : i32
    return %c0_i32, %c0_i32_0 : i32, i32
  }
  func.func @transform_2(%arg0: i32) -> (i32, i32) {
    %c0_i32 = arith.constant 0 : i32
    %c0_i32_0 = arith.constant 0 : i32
    %c0_i32_1 = arith.constant 0 : i32
    return %c0_i32, %c0_i32_0 : i32, i32
  }
  func.func @transform_3(%arg0: i32) -> (i32, i32) {
    %c0_i32 = arith.constant 0 : i32
    %c0_i32_0 = arith.constant 0 : i32
    %c0_i32_1 = arith.constant 0 : i32
    return %c0_i32, %c0_i32_0 : i32, i32
  }
  func.func @transform_4(%arg0: i32) -> (i32, i32) {
    %c0_i32 = arith.constant 0 : i32
    %c0_i32_0 = arith.constant 0 : i32
    return %arg0, %c0_i32 : i32, i32
  }
}

module attributes {stable_mosaic.version = 11 : i64} {
  func.func @kernel(%arg0: i32, %arg1: memref<128x8xbf16, #tpu.memory_space<vmem>>, %arg2: memref<8x32xbf16, #tpu.memory_space<vmem>>, %arg3: memref<1x32xf32, #tpu.memory_space<vmem>>, %arg4: memref<1x32xf32, #tpu.memory_space<vmem>>, %arg5: memref<128x32xbf16, #tpu.memory_space<vmem>>, %arg6: memref<128x32xbf16, #tpu.memory_space<vmem>>) attributes {dimension_semantics = [#tpu.dimension_semantics<parallel>], iteration_bounds = array<i64: 4>, scalar_prefetch = 0 : i64, scratch_operands = 0 : i64, tpu.core_type = #tpu.core_type<tc>, window_params = [{transform_indices = @transform_0, window_bounds = array<i64: 128, 8>}, {pipeline_mode = #tpu.pipeline_mode<synchronous>, transform_indices = @transform_1, window_bounds = array<i64: 8, 32>}, {pipeline_mode = #tpu.pipeline_mode<synchronous>, transform_indices = @transform_2, window_bounds = array<i64: 1, 32>}, {pipeline_mode = #tpu.pipeline_mode<synchronous>, transform_indices = @transform_3, window_bounds = array<i64: 1, 32>}, {transform_indices = @transform_4, window_bounds = array<i64: 128, 32>}, {transform_indices = @transform_5, window_bounds = array<i64: 128, 32>}]} {
    %c0 = arith.constant 0 : index
    %c0_0 = arith.constant 0 : index
    %0 = vector.load %arg1[%c0, %c0_0] : memref<128x8xbf16, #tpu.memory_space<vmem>>, vector<128x8xbf16>
    %c0_1 = arith.constant 0 : index
    %c0_2 = arith.constant 0 : index
    %1 = vector.load %arg2[%c0_1, %c0_2] : memref<8x32xbf16, #tpu.memory_space<vmem>>, vector<8x32xbf16>
    %cst = arith.constant dense<0.000000e+00> : vector<128x32xf32>
    %2 = tpu.matmul %0, %1, %cst {dimension_numbers = #tpu.dot_dimension_numbers<[1], [0], [0], [1], [0, 0, 1, 1], [], []>} : vector<128x8xbf16>, vector<8x32xbf16>, vector<128x32xf32> -> vector<128x32xf32>
    %c0_3 = arith.constant 0 : index
    %c0_4 = arith.constant 0 : index
    %3 = vector.load %arg3[%c0_3, %c0_4] : memref<1x32xf32, #tpu.memory_space<vmem>>, vector<1x32xf32>
    %4 = vector.broadcast %3 : vector<1x32xf32> to vector<128x32xf32>
    %5 = arith.mulf %2, %4 : vector<128x32xf32>
    %c0_5 = arith.constant 0 : index
    %c0_6 = arith.constant 0 : index
    %6 = vector.load %arg4[%c0_5, %c0_6] : memref<1x32xf32, #tpu.memory_space<vmem>>, vector<1x32xf32>
    %7 = vector.broadcast %6 : vector<1x32xf32> to vector<128x32xf32>
    %8 = arith.addf %5, %7 : vector<128x32xf32>
    %c0_7 = arith.constant 0 : index
    %c0_8 = arith.constant 0 : index
    %9 = vector.load %arg5[%c0_7, %c0_8] : memref<128x32xbf16, #tpu.memory_space<vmem>>, vector<128x32xbf16>
    %10 = arith.extf %9 : vector<128x32xbf16> to vector<128x32xf32>
    %11 = arith.addf %8, %10 : vector<128x32xf32>
    %cst_9 = arith.constant 0.000000e+00 : f32
    %12 = vector.broadcast %cst_9 : f32 to vector<128x32xf32>
    %13 = arith.maximumf %11, %12 : vector<128x32xf32>
    %14 = arith.truncf %13 : vector<128x32xf32> to vector<128x32xbf16>
    %c0_10 = arith.constant 0 : index
    %c0_11 = arith.constant 0 : index
    %15 = vector.load %arg6[%c0_10, %c0_11] : memref<128x32xbf16, #tpu.memory_space<vmem>>, vector<128x32xbf16>
    tpu.vector_store %arg6[%c0_10, %c0_11], %14 {strides = array<i32>} : memref<128x32xbf16, #tpu.memory_space<vmem>>, vector<128x32xbf16>,
    return
  }
  func.func @transform_0(%arg0: i32) -> (i32, i32) {
    %c0_i32 = arith.constant 0 : i32
    %c0_i32_0 = arith.constant 0 : i32
    return %arg0, %c0_i32 : i32, i32
  }
  func.func @transform_1(%arg0: i32) -> (i32, i32) {
    %c0_i32 = arith.constant 0 : i32
    %c0_i32_0 = arith.constant 0 : i32
    %c0_i32_1 = arith.constant 0 : i32
    return %c0_i32, %c0_i32_0 : i32, i32
  }
  func.func @transform_2(%arg0: i32) -> (i32, i32) {
    %c0_i32 = arith.constant 0 : i32
    %c0_i32_0 = arith.constant 0 : i32
    %c0_i32_1 = arith.constant 0 : i32
    return %c0_i32, %c0_i32_0 : i32, i32
  }
  func.func @transform_3(%arg0: i32) -> (i32, i32) {
    %c0_i32 = arith.constant 0 : i32
    %c0_i32_0 = arith.constant 0 : i32
    %c0_i32_1 = arith.constant 0 : i32
    return %c0_i32, %c0_i32_0 : i32, i32
  }
  func.func @transform_4(%arg0: i32) -> (i32, i32) {
    %c0_i32 = arith.constant 0 : i32
    %c0_i32_0 = arith.constant 0 : i32
    return %arg0, %c0_i32 : i32, i32
  }
  func.func @transform_5(%arg0: i32) -> (i32, i32) {
    %c0_i32 = arith.constant 0 : i32
    %c0_i32_0 = arith.constant 0 : i32
    return %arg0, %c0_i32 : i32, i32
  }
}

module attributes {stable_mosaic.version = 11 : i64} {
  func.func @kernel(%arg0: i32, %arg1: memref<128x288xbf16, #tpu.memory_space<vmem>>, %arg2: memref<288x8xbf16, #tpu.memory_space<vmem>>, %arg3: memref<1x8xf32, #tpu.memory_space<vmem>>, %arg4: memref<1x8xf32, #tpu.memory_space<vmem>>, %arg5: memref<128x8xbf16, #tpu.memory_space<vmem>>) attributes {dimension_semantics = [#tpu.dimension_semantics<parallel>], iteration_bounds = array<i64: 4>, scalar_prefetch = 0 : i64, scratch_operands = 0 : i64, tpu.core_type = #tpu.core_type<tc>, window_params = [{transform_indices = @transform_0, window_bounds = array<i64: 128, 288>}, {pipeline_mode = #tpu.pipeline_mode<synchronous>, transform_indices = @transform_1, window_bounds = array<i64: 288, 8>}, {pipeline_mode = #tpu.pipeline_mode<synchronous>, transform_indices = @transform_2, window_bounds = array<i64: 1, 8>}, {pipeline_mode = #tpu.pipeline_mode<synchronous>, transform_indices = @transform_3, window_bounds = array<i64: 1, 8>}, {transform_indices = @transform_4, window_bounds = array<i64: 128, 8>}]} {
    %c0 = arith.constant 0 : index
    %c0_0 = arith.constant 0 : index
    %0 = vector.load %arg1[%c0, %c0_0] : memref<128x288xbf16, #tpu.memory_space<vmem>>, vector<128x288xbf16>
    %c0_1 = arith.constant 0 : index
    %c0_2 = arith.constant 0 : index
    %1 = vector.load %arg2[%c0_1, %c0_2] : memref<288x8xbf16, #tpu.memory_space<vmem>>, vector<288x8xbf16>
    %cst = arith.constant dense<0.000000e+00> : vector<128x8xf32>
    %2 = tpu.matmul %0, %1, %cst {dimension_numbers = #tpu.dot_dimension_numbers<[1], [0], [0], [1], [0, 0, 1, 1], [], []>} : vector<128x288xbf16>, vector<288x8xbf16>, vector<128x8xf32> -> vector<128x8xf32>
    %c0_3 = arith.constant 0 : index
    %c0_4 = arith.constant 0 : index
    %3 = vector.load %arg3[%c0_3, %c0_4] : memref<1x8xf32, #tpu.memory_space<vmem>>, vector<1x8xf32>
    %4 = vector.broadcast %3 : vector<1x8xf32> to vector<128x8xf32>
    %5 = arith.mulf %2, %4 : vector<128x8xf32>
    %c0_5 = arith.constant 0 : index
    %c0_6 = arith.constant 0 : index
    %6 = vector.load %arg4[%c0_5, %c0_6] : memref<1x8xf32, #tpu.memory_space<vmem>>, vector<1x8xf32>
    %7 = vector.broadcast %6 : vector<1x8xf32> to vector<128x8xf32>
    %8 = arith.addf %5, %7 : vector<128x8xf32>
    %cst_7 = arith.constant 0.000000e+00 : f32
    %9 = vector.broadcast %cst_7 : f32 to vector<128x8xf32>
    %10 = arith.maximumf %8, %9 : vector<128x8xf32>
    %11 = arith.truncf %10 : vector<128x8xf32> to vector<128x8xbf16>
    %c0_8 = arith.constant 0 : index
    %c0_9 = arith.constant 0 : index
    %12 = vector.load %arg5[%c0_8, %c0_9] : memref<128x8xbf16, #tpu.memory_space<vmem>>, vector<128x8xbf16>
    tpu.vector_store %arg5[%c0_8, %c0_9], %11 {strides = array<i32>} : memref<128x8xbf16, #tpu.memory_space<vmem>>, vector<128x8xbf16>,
    return
  }
  func.func @transform_0(%arg0: i32) -> (i32, i32) {
    %c0_i32 = arith.constant 0 : i32
    %c0_i32_0 = arith.constant 0 : i32
    return %arg0, %c0_i32 : i32, i32
  }
  func.func @transform_1(%arg0: i32) -> (i32, i32) {
    %c0_i32 = arith.constant 0 : i32
    %c0_i32_0 = arith.constant 0 : i32
    %c0_i32_1 = arith.constant 0 : i32
    return %c0_i32, %c0_i32_0 : i32, i32
  }
  func.func @transform_2(%arg0: i32) -> (i32, i32) {
    %c0_i32 = arith.constant 0 : i32
    %c0_i32_0 = arith.constant 0 : i32
    %c0_i32_1 = arith.constant 0 : i32
    return %c0_i32, %c0_i32_0 : i32, i32
  }
  func.func @transform_3(%arg0: i32) -> (i32, i32) {
    %c0_i32 = arith.constant 0 : i32
    %c0_i32_0 = arith.constant 0 : i32
    %c0_i32_1 = arith.constant 0 : i32
    return %c0_i32, %c0_i32_0 : i32, i32
  }
  func.func @transform_4(%arg0: i32) -> (i32, i32) {
    %c0_i32 = arith.constant 0 : i32
    %c0_i32_0 = arith.constant 0 : i32
    return %arg0, %c0_i32 : i32, i32
  }
}

module attributes {stable_mosaic.version = 11 : i64} {
  func.func @kernel(%arg0: i32, %arg1: memref<128x72xbf16, #tpu.memory_space<vmem>>, %arg2: memref<72x8xbf16, #tpu.memory_space<vmem>>, %arg3: memref<1x8xf32, #tpu.memory_space<vmem>>, %arg4: memref<1x8xf32, #tpu.memory_space<vmem>>, %arg5: memref<128x8xbf16, #tpu.memory_space<vmem>>, %arg6: memref<128x8xbf16, #tpu.memory_space<vmem>>) attributes {dimension_semantics = [#tpu.dimension_semantics<parallel>], iteration_bounds = array<i64: 4>, scalar_prefetch = 0 : i64, scratch_operands = 0 : i64, tpu.core_type = #tpu.core_type<tc>, window_params = [{transform_indices = @transform_0, window_bounds = array<i64: 128, 72>}, {pipeline_mode = #tpu.pipeline_mode<synchronous>, transform_indices = @transform_1, window_bounds = array<i64: 72, 8>}, {pipeline_mode = #tpu.pipeline_mode<synchronous>, transform_indices = @transform_2, window_bounds = array<i64: 1, 8>}, {pipeline_mode = #tpu.pipeline_mode<synchronous>, transform_indices = @transform_3, window_bounds = array<i64: 1, 8>}, {transform_indices = @transform_4, window_bounds = array<i64: 128, 8>}, {transform_indices = @transform_5, window_bounds = array<i64: 128, 8>}]} {
    %c0 = arith.constant 0 : index
    %c0_0 = arith.constant 0 : index
    %0 = vector.load %arg1[%c0, %c0_0] : memref<128x72xbf16, #tpu.memory_space<vmem>>, vector<128x72xbf16>
    %c0_1 = arith.constant 0 : index
    %c0_2 = arith.constant 0 : index
    %1 = vector.load %arg2[%c0_1, %c0_2] : memref<72x8xbf16, #tpu.memory_space<vmem>>, vector<72x8xbf16>
    %cst = arith.constant dense<0.000000e+00> : vector<128x8xf32>
    %2 = tpu.matmul %0, %1, %cst {dimension_numbers = #tpu.dot_dimension_numbers<[1], [0], [0], [1], [0, 0, 1, 1], [], []>} : vector<128x72xbf16>, vector<72x8xbf16>, vector<128x8xf32> -> vector<128x8xf32>
    %c0_3 = arith.constant 0 : index
    %c0_4 = arith.constant 0 : index
    %3 = vector.load %arg3[%c0_3, %c0_4] : memref<1x8xf32, #tpu.memory_space<vmem>>, vector<1x8xf32>
    %4 = vector.broadcast %3 : vector<1x8xf32> to vector<128x8xf32>
    %5 = arith.mulf %2, %4 : vector<128x8xf32>
    %c0_5 = arith.constant 0 : index
    %c0_6 = arith.constant 0 : index
    %6 = vector.load %arg4[%c0_5, %c0_6] : memref<1x8xf32, #tpu.memory_space<vmem>>, vector<1x8xf32>
    %7 = vector.broadcast %6 : vector<1x8xf32> to vector<128x8xf32>
    %8 = arith.addf %5, %7 : vector<128x8xf32>
    %c0_7 = arith.constant 0 : index
    %c0_8 = arith.constant 0 : index
    %9 = vector.load %arg5[%c0_7, %c0_8] : memref<128x8xbf16, #tpu.memory_space<vmem>>, vector<128x8xbf16>
    %10 = arith.extf %9 : vector<128x8xbf16> to vector<128x8xf32>
    %11 = arith.addf %8, %10 : vector<128x8xf32>
    %cst_9 = arith.constant 0.000000e+00 : f32
    %12 = vector.broadcast %cst_9 : f32 to vector<128x8xf32>
    %13 = arith.maximumf %11, %12 : vector<128x8xf32>
    %14 = arith.truncf %13 : vector<128x8xf32> to vector<128x8xbf16>
    %c0_10 = arith.constant 0 : index
    %c0_11 = arith.constant 0 : index
    %15 = vector.load %arg6[%c0_10, %c0_11] : memref<128x8xbf16, #tpu.memory_space<vmem>>, vector<128x8xbf16>
    tpu.vector_store %arg6[%c0_10, %c0_11], %14 {strides = array<i32>} : memref<128x8xbf16, #tpu.memory_space<vmem>>, vector<128x8xbf16>,
    return
  }
  func.func @transform_0(%arg0: i32) -> (i32, i32) {
    %c0_i32 = arith.constant 0 : i32
    %c0_i32_0 = arith.constant 0 : i32
    return %arg0, %c0_i32 : i32, i32
  }
  func.func @transform_1(%arg0: i32) -> (i32, i32) {
    %c0_i32 = arith.constant 0 : i32
    %c0_i32_0 = arith.constant 0 : i32
    %c0_i32_1 = arith.constant 0 : i32
    return %c0_i32, %c0_i32_0 : i32, i32
  }
  func.func @transform_2(%arg0: i32) -> (i32, i32) {
    %c0_i32 = arith.constant 0 : i32
    %c0_i32_0 = arith.constant 0 : i32
    %c0_i32_1 = arith.constant 0 : i32
    return %c0_i32, %c0_i32_0 : i32, i32
  }
  func.func @transform_3(%arg0: i32) -> (i32, i32) {
    %c0_i32 = arith.constant 0 : i32
    %c0_i32_0 = arith.constant 0 : i32
    %c0_i32_1 = arith.constant 0 : i32
    return %c0_i32, %c0_i32_0 : i32, i32
  }
  func.func @transform_4(%arg0: i32) -> (i32, i32) {
    %c0_i32 = arith.constant 0 : i32
    %c0_i32_0 = arith.constant 0 : i32
    return %arg0, %c0_i32 : i32, i32
  }
  func.func @transform_5(%arg0: i32) -> (i32, i32) {
    %c0_i32 = arith.constant 0 : i32
    %c0_i32_0 = arith.constant 0 : i32
    return %arg0, %c0_i32 : i32, i32
  }
}

module attributes {stable_mosaic.version = 11 : i64} {
  func.func @kernel(%arg0: i32, %arg1: memref<128x288xbf16, #tpu.memory_space<vmem>>, %arg2: memref<288x16xbf16, #tpu.memory_space<vmem>>, %arg3: memref<1x16xf32, #tpu.memory_space<vmem>>, %arg4: memref<1x16xf32, #tpu.memory_space<vmem>>, %arg5: memref<128x16xbf16, #tpu.memory_space<vmem>>) attributes {dimension_semantics = [#tpu.dimension_semantics<parallel>], iteration_bounds = array<i64: 1>, scalar_prefetch = 0 : i64, scratch_operands = 0 : i64, tpu.core_type = #tpu.core_type<tc>, window_params = [{transform_indices = @transform_0, window_bounds = array<i64: 128, 288>}, {pipeline_mode = #tpu.pipeline_mode<synchronous>, transform_indices = @transform_1, window_bounds = array<i64: 288, 16>}, {pipeline_mode = #tpu.pipeline_mode<synchronous>, transform_indices = @transform_2, window_bounds = array<i64: 1, 16>}, {pipeline_mode = #tpu.pipeline_mode<synchronous>, transform_indices = @transform_3, window_bounds = array<i64: 1, 16>}, {transform_indices = @transform_4, window_bounds = array<i64: 128, 16>}]} {
    %c0 = arith.constant 0 : index
    %c0_0 = arith.constant 0 : index
    %0 = vector.load %arg1[%c0, %c0_0] : memref<128x288xbf16, #tpu.memory_space<vmem>>, vector<128x288xbf16>
    %c0_1 = arith.constant 0 : index
    %c0_2 = arith.constant 0 : index
    %1 = vector.load %arg2[%c0_1, %c0_2] : memref<288x16xbf16, #tpu.memory_space<vmem>>, vector<288x16xbf16>
    %cst = arith.constant dense<0.000000e+00> : vector<128x16xf32>
    %2 = tpu.matmul %0, %1, %cst {dimension_numbers = #tpu.dot_dimension_numbers<[1], [0], [0], [1], [0, 0, 1, 1], [], []>} : vector<128x288xbf16>, vector<288x16xbf16>, vector<128x16xf32> -> vector<128x16xf32>
    %c0_3 = arith.constant 0 : index
    %c0_4 = arith.constant 0 : index
    %3 = vector.load %arg3[%c0_3, %c0_4] : memref<1x16xf32, #tpu.memory_space<vmem>>, vector<1x16xf32>
    %4 = vector.broadcast %3 : vector<1x16xf32> to vector<128x16xf32>
    %5 = arith.mulf %2, %4 : vector<128x16xf32>
    %c0_5 = arith.constant 0 : index
    %c0_6 = arith.constant 0 : index
    %6 = vector.load %arg4[%c0_5, %c0_6] : memref<1x16xf32, #tpu.memory_space<vmem>>, vector<1x16xf32>
    %7 = vector.broadcast %6 : vector<1x16xf32> to vector<128x16xf32>
    %8 = arith.addf %5, %7 : vector<128x16xf32>
    %cst_7 = arith.constant 0.000000e+00 : f32
    %9 = vector.broadcast %cst_7 : f32 to vector<128x16xf32>
    %10 = arith.maximumf %8, %9 : vector<128x16xf32>
    %11 = arith.truncf %10 : vector<128x16xf32> to vector<128x16xbf16>
    %c0_8 = arith.constant 0 : index
    %c0_9 = arith.constant 0 : index
    %12 = vector.load %arg5[%c0_8, %c0_9] : memref<128x16xbf16, #tpu.memory_space<vmem>>, vector<128x16xbf16>
    tpu.vector_store %arg5[%c0_8, %c0_9], %11 {strides = array<i32>} : memref<128x16xbf16, #tpu.memory_space<vmem>>, vector<128x16xbf16>,
    return
  }
  func.func @transform_0(%arg0: i32) -> (i32, i32) {
    %c0_i32 = arith.constant 0 : i32
    %c0_i32_0 = arith.constant 0 : i32
    return %arg0, %c0_i32 : i32, i32
  }
  func.func @transform_1(%arg0: i32) -> (i32, i32) {
    %c0_i32 = arith.constant 0 : i32
    %c0_i32_0 = arith.constant 0 : i32
    %c0_i32_1 = arith.constant 0 : i32
    return %c0_i32, %c0_i32_0 : i32, i32
  }
  func.func @transform_2(%arg0: i32) -> (i32, i32) {
    %c0_i32 = arith.constant 0 : i32
    %c0_i32_0 = arith.constant 0 : i32
    %c0_i32_1 = arith.constant 0 : i32
    return %c0_i32, %c0_i32_0 : i32, i32
  }
  func.func @transform_3(%arg0: i32) -> (i32, i32) {
    %c0_i32 = arith.constant 0 : i32
    %c0_i32_0 = arith.constant 0 : i32
    %c0_i32_1 = arith.constant 0 : i32
    return %c0_i32, %c0_i32_0 : i32, i32
  }
  func.func @transform_4(%arg0: i32) -> (i32, i32) {
    %c0_i32 = arith.constant 0 : i32
    %c0_i32_0 = arith.constant 0 : i32
    return %arg0, %c0_i32 : i32, i32
  }
}

module attributes {stable_mosaic.version = 11 : i64} {
  func.func @kernel(%arg0: i32, %arg1: memref<128x144xbf16, #tpu.memory_space<vmem>>, %arg2: memref<144x16xbf16, #tpu.memory_space<vmem>>, %arg3: memref<1x16xf32, #tpu.memory_space<vmem>>, %arg4: memref<1x16xf32, #tpu.memory_space<vmem>>, %arg5: memref<128x16xbf16, #tpu.memory_space<vmem>>) attributes {dimension_semantics = [#tpu.dimension_semantics<parallel>], iteration_bounds = array<i64: 1>, scalar_prefetch = 0 : i64, scratch_operands = 0 : i64, tpu.core_type = #tpu.core_type<tc>, window_params = [{transform_indices = @transform_0, window_bounds = array<i64: 128, 144>}, {pipeline_mode = #tpu.pipeline_mode<synchronous>, transform_indices = @transform_1, window_bounds = array<i64: 144, 16>}, {pipeline_mode = #tpu.pipeline_mode<synchronous>, transform_indices = @transform_2, window_bounds = array<i64: 1, 16>}, {pipeline_mode = #tpu.pipeline_mode<synchronous>, transform_indices = @transform_3, window_bounds = array<i64: 1, 16>}, {transform_indices = @transform_4, window_bounds = array<i64: 128, 16>}]} {
    %c0 = arith.constant 0 : index
    %c0_0 = arith.constant 0 : index
    %0 = vector.load %arg1[%c0, %c0_0] : memref<128x144xbf16, #tpu.memory_space<vmem>>, vector<128x144xbf16>
    %c0_1 = arith.constant 0 : index
    %c0_2 = arith.constant 0 : index
    %1 = vector.load %arg2[%c0_1, %c0_2] : memref<144x16xbf16, #tpu.memory_space<vmem>>, vector<144x16xbf16>
    %cst = arith.constant dense<0.000000e+00> : vector<128x16xf32>
    %2 = tpu.matmul %0, %1, %cst {dimension_numbers = #tpu.dot_dimension_numbers<[1], [0], [0], [1], [0, 0, 1, 1], [], []>} : vector<128x144xbf16>, vector<144x16xbf16>, vector<128x16xf32> -> vector<128x16xf32>
    %c0_3 = arith.constant 0 : index
    %c0_4 = arith.constant 0 : index
    %3 = vector.load %arg3[%c0_3, %c0_4] : memref<1x16xf32, #tpu.memory_space<vmem>>, vector<1x16xf32>
    %4 = vector.broadcast %3 : vector<1x16xf32> to vector<128x16xf32>
    %5 = arith.mulf %2, %4 : vector<128x16xf32>
    %c0_5 = arith.constant 0 : index
    %c0_6 = arith.constant 0 : index
    %6 = vector.load %arg4[%c0_5, %c0_6] : memref<1x16xf32, #tpu.memory_space<vmem>>, vector<1x16xf32>
    %7 = vector.broadcast %6 : vector<1x16xf32> to vector<128x16xf32>
    %8 = arith.addf %5, %7 : vector<128x16xf32>
    %cst_7 = arith.constant 0.000000e+00 : f32
    %9 = vector.broadcast %cst_7 : f32 to vector<128x16xf32>
    %10 = arith.maximumf %8, %9 : vector<128x16xf32>
    %11 = arith.truncf %10 : vector<128x16xf32> to vector<128x16xbf16>
    %c0_8 = arith.constant 0 : index
    %c0_9 = arith.constant 0 : index
    %12 = vector.load %arg5[%c0_8, %c0_9] : memref<128x16xbf16, #tpu.memory_space<vmem>>, vector<128x16xbf16>
    tpu.vector_store %arg5[%c0_8, %c0_9], %11 {strides = array<i32>} : memref<128x16xbf16, #tpu.memory_space<vmem>>, vector<128x16xbf16>,
    return
  }
  func.func @transform_0(%arg0: i32) -> (i32, i32) {
    %c0_i32 = arith.constant 0 : i32
    %c0_i32_0 = arith.constant 0 : i32
    return %arg0, %c0_i32 : i32, i32
  }
  func.func @transform_1(%arg0: i32) -> (i32, i32) {
    %c0_i32 = arith.constant 0 : i32
    %c0_i32_0 = arith.constant 0 : i32
    %c0_i32_1 = arith.constant 0 : i32
    return %c0_i32, %c0_i32_0 : i32, i32
  }
  func.func @transform_2(%arg0: i32) -> (i32, i32) {
    %c0_i32 = arith.constant 0 : i32
    %c0_i32_0 = arith.constant 0 : i32
    %c0_i32_1 = arith.constant 0 : i32
    return %c0_i32, %c0_i32_0 : i32, i32
  }
  func.func @transform_3(%arg0: i32) -> (i32, i32) {
    %c0_i32 = arith.constant 0 : i32
    %c0_i32_0 = arith.constant 0 : i32
    %c0_i32_1 = arith.constant 0 : i32
    return %c0_i32, %c0_i32_0 : i32, i32
  }
  func.func @transform_4(%arg0: i32) -> (i32, i32) {
    %c0_i32 = arith.constant 0 : i32
    %c0_i32_0 = arith.constant 0 : i32
    return %arg0, %c0_i32 : i32, i32
  }
}

module attributes {stable_mosaic.version = 11 : i64} {
  func.func @kernel(%arg0: i32, %arg1: memref<128x16xbf16, #tpu.memory_space<vmem>>, %arg2: memref<16x8xbf16, #tpu.memory_space<vmem>>, %arg3: memref<1x8xf32, #tpu.memory_space<vmem>>, %arg4: memref<1x8xf32, #tpu.memory_space<vmem>>, %arg5: memref<128x8xbf16, #tpu.memory_space<vmem>>) attributes {dimension_semantics = [#tpu.dimension_semantics<parallel>], iteration_bounds = array<i64: 1>, scalar_prefetch = 0 : i64, scratch_operands = 0 : i64, tpu.core_type = #tpu.core_type<tc>, window_params = [{transform_indices = @transform_0, window_bounds = array<i64: 128, 16>}, {pipeline_mode = #tpu.pipeline_mode<synchronous>, transform_indices = @transform_1, window_bounds = array<i64: 16, 8>}, {pipeline_mode = #tpu.pipeline_mode<synchronous>, transform_indices = @transform_2, window_bounds = array<i64: 1, 8>}, {pipeline_mode = #tpu.pipeline_mode<synchronous>, transform_indices = @transform_3, window_bounds = array<i64: 1, 8>}, {transform_indices = @transform_4, window_bounds = array<i64: 128, 8>}]} {
    %c0 = arith.constant 0 : index
    %c0_0 = arith.constant 0 : index
    %0 = vector.load %arg1[%c0, %c0_0] : memref<128x16xbf16, #tpu.memory_space<vmem>>, vector<128x16xbf16>
    %c0_1 = arith.constant 0 : index
    %c0_2 = arith.constant 0 : index
    %1 = vector.load %arg2[%c0_1, %c0_2] : memref<16x8xbf16, #tpu.memory_space<vmem>>, vector<16x8xbf16>
    %cst = arith.constant dense<0.000000e+00> : vector<128x8xf32>
    %2 = tpu.matmul %0, %1, %cst {dimension_numbers = #tpu.dot_dimension_numbers<[1], [0], [0], [1], [0, 0, 1, 1], [], []>} : vector<128x16xbf16>, vector<16x8xbf16>, vector<128x8xf32> -> vector<128x8xf32>
    %c0_3 = arith.constant 0 : index
    %c0_4 = arith.constant 0 : index
    %3 = vector.load %arg3[%c0_3, %c0_4] : memref<1x8xf32, #tpu.memory_space<vmem>>, vector<1x8xf32>
    %4 = vector.broadcast %3 : vector<1x8xf32> to vector<128x8xf32>
    %5 = arith.mulf %2, %4 : vector<128x8xf32>
    %c0_5 = arith.constant 0 : index
    %c0_6 = arith.constant 0 : index
    %6 = vector.load %arg4[%c0_5, %c0_6] : memref<1x8xf32, #tpu.memory_space<vmem>>, vector<1x8xf32>
    %7 = vector.broadcast %6 : vector<1x8xf32> to vector<128x8xf32>
    %8 = arith.addf %5, %7 : vector<128x8xf32>
    %9 = arith.truncf %8 : vector<128x8xf32> to vector<128x8xbf16>
    %c0_7 = arith.constant 0 : index
    %c0_8 = arith.constant 0 : index
    %10 = vector.load %arg5[%c0_7, %c0_8] : memref<128x8xbf16, #tpu.memory_space<vmem>>, vector<128x8xbf16>
    tpu.vector_store %arg5[%c0_7, %c0_8], %9 {strides = array<i32>} : memref<128x8xbf16, #tpu.memory_space<vmem>>, vector<128x8xbf16>,
    return
  }
  func.func @transform_0(%arg0: i32) -> (i32, i32) {
    %c0_i32 = arith.constant 0 : i32
    %c0_i32_0 = arith.constant 0 : i32
    return %arg0, %c0_i32 : i32, i32
  }
  func.func @transform_1(%arg0: i32) -> (i32, i32) {
    %c0_i32 = arith.constant 0 : i32
    %c0_i32_0 = arith.constant 0 : i32
    %c0_i32_1 = arith.constant 0 : i32
    return %c0_i32, %c0_i32_0 : i32, i32
  }
  func.func @transform_2(%arg0: i32) -> (i32, i32) {
    %c0_i32 = arith.constant 0 : i32
    %c0_i32_0 = arith.constant 0 : i32
    %c0_i32_1 = arith.constant 0 : i32
    return %c0_i32, %c0_i32_0 : i32, i32
  }
  func.func @transform_3(%arg0: i32) -> (i32, i32) {
    %c0_i32 = arith.constant 0 : i32
    %c0_i32_0 = arith.constant 0 : i32
    %c0_i32_1 = arith.constant 0 : i32
    return %c0_i32, %c0_i32_0 : i32, i32
  }
  func.func @transform_4(%arg0: i32) -> (i32, i32) {
    %c0_i32 = arith.constant 0 : i32
    %c0_i32_0 = arith.constant 0 : i32
    return %arg0, %c0_i32 : i32, i32
  }
}

module attributes {stable_mosaic.version = 11 : i64} {
  func.func @kernel(%arg0: i32, %arg1: memref<128x144xbf16, #tpu.memory_space<vmem>>, %arg2: memref<144x16xbf16, #tpu.memory_space<vmem>>, %arg3: memref<1x16xf32, #tpu.memory_space<vmem>>, %arg4: memref<1x16xf32, #tpu.memory_space<vmem>>, %arg5: memref<128x16xbf16, #tpu.memory_space<vmem>>, %arg6: memref<128x16xbf16, #tpu.memory_space<vmem>>) attributes {dimension_semantics = [#tpu.dimension_semantics<parallel>], iteration_bounds = array<i64: 1>, scalar_prefetch = 0 : i64, scratch_operands = 0 : i64, tpu.core_type = #tpu.core_type<tc>, window_params = [{transform_indices = @transform_0, window_bounds = array<i64: 128, 144>}, {pipeline_mode = #tpu.pipeline_mode<synchronous>, transform_indices = @transform_1, window_bounds = array<i64: 144, 16>}, {pipeline_mode = #tpu.pipeline_mode<synchronous>, transform_indices = @transform_2, window_bounds = array<i64: 1, 16>}, {pipeline_mode = #tpu.pipeline_mode<synchronous>, transform_indices = @transform_3, window_bounds = array<i64: 1, 16>}, {transform_indices = @transform_4, window_bounds = array<i64: 128, 16>}, {transform_indices = @transform_5, window_bounds = array<i64: 128, 16>}]} {
    %c0 = arith.constant 0 : index
    %c0_0 = arith.constant 0 : index
    %0 = vector.load %arg1[%c0, %c0_0] : memref<128x144xbf16, #tpu.memory_space<vmem>>, vector<128x144xbf16>
    %c0_1 = arith.constant 0 : index
    %c0_2 = arith.constant 0 : index
    %1 = vector.load %arg2[%c0_1, %c0_2] : memref<144x16xbf16, #tpu.memory_space<vmem>>, vector<144x16xbf16>
    %cst = arith.constant dense<0.000000e+00> : vector<128x16xf32>
    %2 = tpu.matmul %0, %1, %cst {dimension_numbers = #tpu.dot_dimension_numbers<[1], [0], [0], [1], [0, 0, 1, 1], [], []>} : vector<128x144xbf16>, vector<144x16xbf16>, vector<128x16xf32> -> vector<128x16xf32>
    %c0_3 = arith.constant 0 : index
    %c0_4 = arith.constant 0 : index
    %3 = vector.load %arg3[%c0_3, %c0_4] : memref<1x16xf32, #tpu.memory_space<vmem>>, vector<1x16xf32>
    %4 = vector.broadcast %3 : vector<1x16xf32> to vector<128x16xf32>
    %5 = arith.mulf %2, %4 : vector<128x16xf32>
    %c0_5 = arith.constant 0 : index
    %c0_6 = arith.constant 0 : index
    %6 = vector.load %arg4[%c0_5, %c0_6] : memref<1x16xf32, #tpu.memory_space<vmem>>, vector<1x16xf32>
    %7 = vector.broadcast %6 : vector<1x16xf32> to vector<128x16xf32>
    %8 = arith.addf %5, %7 : vector<128x16xf32>
    %c0_7 = arith.constant 0 : index
    %c0_8 = arith.constant 0 : index
    %9 = vector.load %arg5[%c0_7, %c0_8] : memref<128x16xbf16, #tpu.memory_space<vmem>>, vector<128x16xbf16>
    %10 = arith.extf %9 : vector<128x16xbf16> to vector<128x16xf32>
    %11 = arith.addf %8, %10 : vector<128x16xf32>
    %cst_9 = arith.constant 0.000000e+00 : f32
    %12 = vector.broadcast %cst_9 : f32 to vector<128x16xf32>
    %13 = arith.maximumf %11, %12 : vector<128x16xf32>
    %14 = arith.truncf %13 : vector<128x16xf32> to vector<128x16xbf16>
    %c0_10 = arith.constant 0 : index
    %c0_11 = arith.constant 0 : index
    %15 = vector.load %arg6[%c0_10, %c0_11] : memref<128x16xbf16, #tpu.memory_space<vmem>>, vector<128x16xbf16>
    tpu.vector_store %arg6[%c0_10, %c0_11], %14 {strides = array<i32>} : memref<128x16xbf16, #tpu.memory_space<vmem>>, vector<128x16xbf16>,
    return
  }
  func.func @transform_0(%arg0: i32) -> (i32, i32) {
    %c0_i32 = arith.constant 0 : i32
    %c0_i32_0 = arith.constant 0 : i32
    return %arg0, %c0_i32 : i32, i32
  }
  func.func @transform_1(%arg0: i32) -> (i32, i32) {
    %c0_i32 = arith.constant 0 : i32
    %c0_i32_0 = arith.constant 0 : i32
    %c0_i32_1 = arith.constant 0 : i32
    return %c0_i32, %c0_i32_0 : i32, i32
  }
  func.func @transform_2(%arg0: i32) -> (i32, i32) {
    %c0_i32 = arith.constant 0 : i32
    %c0_i32_0 = arith.constant 0 : i32
    %c0_i32_1 = arith.constant 0 : i32
    return %c0_i32, %c0_i32_0 : i32, i32
  }
  func.func @transform_3(%arg0: i32) -> (i32, i32) {
    %c0_i32 = arith.constant 0 : i32
    %c0_i32_0 = arith.constant 0 : i32
    %c0_i32_1 = arith.constant 0 : i32
    return %c0_i32, %c0_i32_0 : i32, i32
  }
  func.func @transform_4(%arg0: i32) -> (i32, i32) {
    %c0_i32 = arith.constant 0 : i32
    %c0_i32_0 = arith.constant 0 : i32
    return %arg0, %c0_i32 : i32, i32
  }
  func.func @transform_5(%arg0: i32) -> (i32, i32) {
    %c0_i32 = arith.constant 0 : i32
    %c0_i32_0 = arith.constant 0 : i32
    return %arg0, %c0_i32 : i32, i32
  }
}

module attributes {stable_mosaic.version = 11 : i64} {
  func.func @kernel(%arg0: i32, %arg1: memref<128x72xbf16, #tpu.memory_space<vmem>>, %arg2: memref<72x16xbf16, #tpu.memory_space<vmem>>, %arg3: memref<1x16xf32, #tpu.memory_space<vmem>>, %arg4: memref<1x16xf32, #tpu.memory_space<vmem>>, %arg5: memref<128x16xbf16, #tpu.memory_space<vmem>>) attributes {dimension_semantics = [#tpu.dimension_semantics<parallel>], iteration_bounds = array<i64: 1>, scalar_prefetch = 0 : i64, scratch_operands = 0 : i64, tpu.core_type = #tpu.core_type<tc>, window_params = [{transform_indices = @transform_0, window_bounds = array<i64: 128, 72>}, {pipeline_mode = #tpu.pipeline_mode<synchronous>, transform_indices = @transform_1, window_bounds = array<i64: 72, 16>}, {pipeline_mode = #tpu.pipeline_mode<synchronous>, transform_indices = @transform_2, window_bounds = array<i64: 1, 16>}, {pipeline_mode = #tpu.pipeline_mode<synchronous>, transform_indices = @transform_3, window_bounds = array<i64: 1, 16>}, {transform_indices = @transform_4, window_bounds = array<i64: 128, 16>}]} {
    %c0 = arith.constant 0 : index
    %c0_0 = arith.constant 0 : index
    %0 = vector.load %arg1[%c0, %c0_0] : memref<128x72xbf16, #tpu.memory_space<vmem>>, vector<128x72xbf16>
    %c0_1 = arith.constant 0 : index
    %c0_2 = arith.constant 0 : index
    %1 = vector.load %arg2[%c0_1, %c0_2] : memref<72x16xbf16, #tpu.memory_space<vmem>>, vector<72x16xbf16>
    %cst = arith.constant dense<0.000000e+00> : vector<128x16xf32>
    %2 = tpu.matmul %0, %1, %cst {dimension_numbers = #tpu.dot_dimension_numbers<[1], [0], [0], [1], [0, 0, 1, 1], [], []>} : vector<128x72xbf16>, vector<72x16xbf16>, vector<128x16xf32> -> vector<128x16xf32>
    %c0_3 = arith.constant 0 : index
    %c0_4 = arith.constant 0 : index
    %3 = vector.load %arg3[%c0_3, %c0_4] : memref<1x16xf32, #tpu.memory_space<vmem>>, vector<1x16xf32>
    %4 = vector.broadcast %3 : vector<1x16xf32> to vector<128x16xf32>
    %5 = arith.mulf %2, %4 : vector<128x16xf32>
    %c0_5 = arith.constant 0 : index
    %c0_6 = arith.constant 0 : index
    %6 = vector.load %arg4[%c0_5, %c0_6] : memref<1x16xf32, #tpu.memory_space<vmem>>, vector<1x16xf32>
    %7 = vector.broadcast %6 : vector<1x16xf32> to vector<128x16xf32>
    %8 = arith.addf %5, %7 : vector<128x16xf32>
    %9 = arith.truncf %8 : vector<128x16xf32> to vector<128x16xbf16>
    %c0_7 = arith.constant 0 : index
    %c0_8 = arith.constant 0 : index
    %10 = vector.load %arg5[%c0_7, %c0_8] : memref<128x16xbf16, #tpu.memory_space<vmem>>, vector<128x16xbf16>
    tpu.vector_store %arg5[%c0_7, %c0_8], %9 {strides = array<i32>} : memref<128x16xbf16, #tpu.memory_space<vmem>>, vector<128x16xbf16>,
    return
  }
  func.func @transform_0(%arg0: i32) -> (i32, i32) {
    %c0_i32 = arith.constant 0 : i32
    %c0_i32_0 = arith.constant 0 : i32
    return %arg0, %c0_i32 : i32, i32
  }
  func.func @transform_1(%arg0: i32) -> (i32, i32) {
    %c0_i32 = arith.constant 0 : i32
    %c0_i32_0 = arith.constant 0 : i32
    %c0_i32_1 = arith.constant 0 : i32
    return %c0_i32, %c0_i32_0 : i32, i32
  }
  func.func @transform_2(%arg0: i32) -> (i32, i32) {
    %c0_i32 = arith.constant 0 : i32
    %c0_i32_0 = arith.constant 0 : i32
    %c0_i32_1 = arith.constant 0 : i32
    return %c0_i32, %c0_i32_0 : i32, i32
  }
  func.func @transform_3(%arg0: i32) -> (i32, i32) {
    %c0_i32 = arith.constant 0 : i32
    %c0_i32_0 = arith.constant 0 : i32
    %c0_i32_1 = arith.constant 0 : i32
    return %c0_i32, %c0_i32_0 : i32, i32
  }
  func.func @transform_4(%arg0: i32) -> (i32, i32) {
    %c0_i32 = arith.constant 0 : i32
    %c0_i32_0 = arith.constant 0 : i32
    return %arg0, %c0_i32 : i32, i32
  }
}

module attributes {stable_mosaic.version = 11 : i64} {
  func.func @kernel(%arg0: i32, %arg1: memref<128x72xbf16, #tpu.memory_space<vmem>>, %arg2: memref<72x8xbf16, #tpu.memory_space<vmem>>, %arg3: memref<1x8xf32, #tpu.memory_space<vmem>>, %arg4: memref<1x8xf32, #tpu.memory_space<vmem>>, %arg5: memref<128x8xbf16, #tpu.memory_space<vmem>>) attributes {dimension_semantics = [#tpu.dimension_semantics<parallel>], iteration_bounds = array<i64: 1>, scalar_prefetch = 0 : i64, scratch_operands = 0 : i64, tpu.core_type = #tpu.core_type<tc>, window_params = [{transform_indices = @transform_0, window_bounds = array<i64: 128, 72>}, {pipeline_mode = #tpu.pipeline_mode<synchronous>, transform_indices = @transform_1, window_bounds = array<i64: 72, 8>}, {pipeline_mode = #tpu.pipeline_mode<synchronous>, transform_indices = @transform_2, window_bounds = array<i64: 1, 8>}, {pipeline_mode = #tpu.pipeline_mode<synchronous>, transform_indices = @transform_3, window_bounds = array<i64: 1, 8>}, {transform_indices = @transform_4, window_bounds = array<i64: 128, 8>}]} {
    %c0 = arith.constant 0 : index
    %c0_0 = arith.constant 0 : index
    %0 = vector.load %arg1[%c0, %c0_0] : memref<128x72xbf16, #tpu.memory_space<vmem>>, vector<128x72xbf16>
    %c0_1 = arith.constant 0 : index
    %c0_2 = arith.constant 0 : index
    %1 = vector.load %arg2[%c0_1, %c0_2] : memref<72x8xbf16, #tpu.memory_space<vmem>>, vector<72x8xbf16>
    %cst = arith.constant dense<0.000000e+00> : vector<128x8xf32>
    %2 = tpu.matmul %0, %1, %cst {dimension_numbers = #tpu.dot_dimension_numbers<[1], [0], [0], [1], [0, 0, 1, 1], [], []>} : vector<128x72xbf16>, vector<72x8xbf16>, vector<128x8xf32> -> vector<128x8xf32>
    %c0_3 = arith.constant 0 : index
    %c0_4 = arith.constant 0 : index
    %3 = vector.load %arg3[%c0_3, %c0_4] : memref<1x8xf32, #tpu.memory_space<vmem>>, vector<1x8xf32>
    %4 = vector.broadcast %3 : vector<1x8xf32> to vector<128x8xf32>
    %5 = arith.mulf %2, %4 : vector<128x8xf32>
    %c0_5 = arith.constant 0 : index
    %c0_6 = arith.constant 0 : index
    %6 = vector.load %arg4[%c0_5, %c0_6] : memref<1x8xf32, #tpu.memory_space<vmem>>, vector<1x8xf32>
    %7 = vector.broadcast %6 : vector<1x8xf32> to vector<128x8xf32>
    %8 = arith.addf %5, %7 : vector<128x8xf32>
    %cst_7 = arith.constant 0.000000e+00 : f32
    %9 = vector.broadcast %cst_7 : f32 to vector<128x8xf32>
    %10 = arith.maximumf %8, %9 : vector<128x8xf32>
    %11 = arith.truncf %10 : vector<128x8xf32> to vector<128x8xbf16>
    %c0_8 = arith.constant 0 : index
    %c0_9 = arith.constant 0 : index
    %12 = vector.load %arg5[%c0_8, %c0_9] : memref<128x8xbf16, #tpu.memory_space<vmem>>, vector<128x8xbf16>
    tpu.vector_store %arg5[%c0_8, %c0_9], %11 {strides = array<i32>} : memref<128x8xbf16, #tpu.memory_space<vmem>>, vector<128x8xbf16>,
    return
  }
  func.func @transform_0(%arg0: i32) -> (i32, i32) {
    %c0_i32 = arith.constant 0 : i32
    %c0_i32_0 = arith.constant 0 : i32
    return %arg0, %c0_i32 : i32, i32
  }
  func.func @transform_1(%arg0: i32) -> (i32, i32) {
    %c0_i32 = arith.constant 0 : i32
    %c0_i32_0 = arith.constant 0 : i32
    %c0_i32_1 = arith.constant 0 : i32
    return %c0_i32, %c0_i32_0 : i32, i32
  }
  func.func @transform_2(%arg0: i32) -> (i32, i32) {
    %c0_i32 = arith.constant 0 : i32
    %c0_i32_0 = arith.constant 0 : i32
    %c0_i32_1 = arith.constant 0 : i32
    return %c0_i32, %c0_i32_0 : i32, i32
  }
  func.func @transform_3(%arg0: i32) -> (i32, i32) {
    %c0_i32 = arith.constant 0 : i32
    %c0_i32_0 = arith.constant 0 : i32
    %c0_i32_1 = arith.constant 0 : i32
    return %c0_i32, %c0_i32_0 : i32, i32
  }
  func.func @transform_4(%arg0: i32) -> (i32, i32) {
    %c0_i32 = arith.constant 0 : i32
    %c0_i32_0 = arith.constant 0 : i32
    return %arg0, %c0_i32 : i32, i32
  }
}

</mosaic_0001>

<llo_original>
// kernel: _lambda_.29
$region0: #{_lambda_.29}
  #allocation0 [shape = 'u32[]', space=smem, size = 0x4, offset = 0x4, fixed_abs, tag = 'smem constant byte address 0x4 - core index']
  #allocation1 [shape = 'u32[144,128]{1,0:T(1,128)}', space=vmem, size = 0x12000, scoped, tag = 'internal scratch']
  %s0 = inlined_call_operand.vmem [shape: bf16[2048,27], index: 0, kind: input, shape index: {}]
  %s1 = inlined_call_operand.vmem [shape: bf16[27,64], index: 1, kind: input, shape index: {}]
  %s2 = inlined_call_operand.vmem [shape: f32[1,64], index: 2, kind: input, shape index: {}]
  %s3 = inlined_call_operand.vmem [shape: f32[1,64], index: 3, kind: input, shape index: {}]
  %s4 = inlined_call_operand.vmem [shape: bf16[2048,64], index: 4, kind: output, shape index: {}]
  %s5 = sld [smem:[#allocation0]]
  $region49: #{_lambda_.29} parent=0
    _
  %s7 = ssub.s32 1, %s5
  %s8 = scalar_select 0, %s7, %s5
  loop: start=0, step=1, limit=10
  $region2: #{_lambda_.29} parent=0 // loop_pre_header
    _
  $region3: #{_lambda_.29} parent=0 // loop_header
    %s10 = sphi 0, %s14
    %p11 = scmp.ge.s32.totalorder %s10, 10
    %s20 = sphi 0, %s22
    %s23 = sphi 0, %s20
    %s24 = sphi 0, %s23
    %s40 = sphi 0, %s24
    %s44 = sphi 0, %s44
    %s46 = sphi 0, %s44
    %s47 = sphi 0, %s46
    %s61 = sphi 0, %s47
    %s65 = sphi 0, %s65
    %s67 = sphi 0, %s65
    %s68 = sphi 0, %s67
    %s82 = sphi 0, %s68
    %s86 = sphi 0, %s86
    %s88 = sphi 0, %s86
    %s89 = sphi 0, %s88
    %s103 = sphi 0, %s89
    %s109 = sphi 0, %s111
    %s112 = sphi 0, %s109
    %s113 = sphi 0, %s112
    %s129 = sphi 0, %s113
  $region4: #{_lambda_.29} parent=0 // loop_header_branch
    %13 = sbr.rel (%p11) target = $region8
  $region5: #{_lambda_.29} parent=0 // loop_body
    %s15 = ssub.s32 %s10, 1
    %s16 = ssub.s32 %s10, 2
    %s17 = sadd.s32 %s10, 1
    %s18 = ssub.s32 %s10, %s17
    %p19 = scmp.eq.s32.totalorder %s18, 0
    %s21 = sadd.s32 %s20, 1
    %s22 = scalar_select %p19, %s20, %s21
    %p25 = pneg %p19
    %p26 = scmp.eq.s32.totalorder %s10, 7
    %p27 = por %p25, %p26
    %p28 = scmp.ne.s32.totalorder %s20, %s23
    %p29 = scmp.eq.s32.totalorder %s10, 0
    %p30 = por %p28, %p29
    %p31 = scmp.ne.s32.totalorder %s20, %s23
    %p32 = scmp.eq.s32.totalorder %s15, 7
    %p33 = por %p31, %p32
    %p34 = scmp.ne.s32.totalorder %s23, %s24
    %p35 = scmp.eq.s32.totalorder %s15, 0
    %p36 = por %p34, %p35
    %p37 = scmp.ne.s32.totalorder %s23, %s24
    %p38 = scmp.eq.s32.totalorder %s16, 7
    %p39 = por %p37, %p38
    %p41 = scmp.ne.s32.totalorder %s24, %s40
    %p42 = scmp.eq.s32.totalorder %s16, 0
    %p43 = por %p41, %p42
    %s45 = sadd.s32 %s44, 1
    %p48 = scmp.eq.s32.totalorder %s10, 7
    %p49 = scmp.ne.s32.totalorder %s44, %s46
    %p50 = scmp.eq.s32.totalorder %s10, 0
    %p51 = por %p49, %p50
    %p52 = scmp.ne.s32.totalorder %s44, %s46
    %p53 = scmp.eq.s32.totalorder %s15, 7
    %p54 = por %p52, %p53
    %p55 = scmp.ne.s32.totalorder %s46, %s47
    %p56 = scmp.eq.s32.totalorder %s15, 0
    %p57 = por %p55, %p56
    %p58 = scmp.ne.s32.totalorder %s46, %s47
    %p59 = scmp.eq.s32.totalorder %s16, 7
    %p60 = por %p58, %p59
    %p62 = scmp.ne.s32.totalorder %s47, %s61
    %p63 = scmp.eq.s32.totalorder %s16, 0
    %p64 = por %p62, %p63
    %s66 = sadd.s32 %s65, 1
    %p69 = scmp.eq.s32.totalorder %s10, 7
    %p70 = scmp.ne.s32.totalorder %s65, %s67
    %p71 = scmp.eq.s32.totalorder %s10, 0
    %p72 = por %p70, %p71
    %p73 = scmp.ne.s32.totalorder %s65, %s67
    %p74 = scmp.eq.s32.totalorder %s15, 7
    %p75 = por %p73, %p74
    %p76 = scmp.ne.s32.totalorder %s67, %s68
    %p77 = scmp.eq.s32.totalorder %s15, 0
    %p78 = por %p76, %p77
    %p79 = scmp.ne.s32.totalorder %s67, %s68
    %p80 = scmp.eq.s32.totalorder %s16, 7
    %p81 = por %p79, %p80
    %p83 = scmp.ne.s32.totalorder %s68, %s82
    %p84 = scmp.eq.s32.totalorder %s16, 0
    %p85 = por %p83, %p84
    %s87 = sadd.s32 %s86, 1
    %p90 = scmp.eq.s32.totalorder %s10, 7
    %p91 = scmp.ne.s32.totalorder %s86, %s88
    %p92 = scmp.eq.s32.totalorder %s10, 0
    %p93 = por %p91, %p92
    %p94 = scmp.ne.s32.totalorder %s86, %s88
    %p95 = scmp.eq.s32.totalorder %s15, 7
    %p96 = por %p94, %p95
    %p97 = scmp.ne.s32.totalorder %s88, %s89
    %p98 = scmp.eq.s32.totalorder %s15, 0
    %p99 = por %p97, %p98
    %p100 = scmp.ne.s32.totalorder %s88, %s89
    %p101 = scmp.eq.s32.totalorder %s16, 7
    %p102 = por %p100, %p101
    %p104 = scmp.ne.s32.totalorder %s89, %s103
    %p105 = scmp.eq.s32.totalorder %s16, 0
    %p106 = por %p104, %p105
    %s107 = ssub.s32 %s10, %s17
    %p108 = scmp.eq.s32.totalorder %s107, 0
    %s110 = sadd.s32 %s109, 1
    %s111 = scalar_select %p108, %s109, %s110
    %p114 = pneg %p108
    %p115 = scmp.eq.s32.totalorder %s10, 7
    %p116 = por %p114, %p115
    %p117 = scmp.ne.s32.totalorder %s109, %s112
    %p118 = scmp.eq.s32.totalorder %s10, 0
    %p119 = por %p117, %p118
    %p120 = scmp.ne.s32.totalorder %s109, %s112
    %p121 = scmp.eq.s32.totalorder %s15, 7
    %p122 = por %p120, %p121
    %p123 = scmp.ne.s32.totalorder %s112, %s113
    %p124 = scmp.eq.s32.totalorder %s15, 0
    %p125 = por %p123, %p124
    %p126 = scmp.ne.s32.totalorder %s112, %s113
    %p127 = scmp.eq.s32.totalorder %s16, 7
    %p128 = por %p126, %p127
    %p130 = scmp.ne.s32.totalorder %s113, %s129
    %p131 = scmp.eq.s32.totalorder %s16, 0
    %p132 = por %p130, %p131
    %p133 = scmp.le.s32.totalorder 1, %s10
    %p134 = scmp.lt.s32.totalorder %s10, 9
    %p135 = pnand %p133, %p134
    %p136 = pneg %p135
    // Predicated region
    $region9: #{_lambda_.29} parent=5 // pred_check
      _
    $region10: #{_lambda_.29} parent=5 // pred_check_branch
      %138 = sbr.rel (%p135) target = $region12
    $region11: #{_lambda_.29} parent=5 // pred_region
      %s139 = ssub.s32 %s10, 1
      // Predicated region
      $region13: #{_lambda_.29} parent=11 // pred_check
        %p140 = pneg %p57
      $region14: #{_lambda_.29} parent=11 // pred_check_branch
        %142 = sbr.rel (%p140) target = $region16
      $region15: #{_lambda_.29} parent=11 // pred_region
        _
      $region16: #{_lambda_.29} parent=11 // pred_fallthru
        _
      // Predicated region
      $region17: #{_lambda_.29} parent=11 // pred_check
        %p143 = pneg %p78
      $region18: #{_lambda_.29} parent=11 // pred_check_branch
        %145 = sbr.rel (%p143) target = $region20
      $region19: #{_lambda_.29} parent=11 // pred_region
        _
      $region20: #{_lambda_.29} parent=11 // pred_fallthru
        _
      // Predicated region
      $region21: #{_lambda_.29} parent=11 // pred_check
        %p146 = pneg %p99
      $region22: #{_lambda_.29} parent=11 // pred_check_branch
        %148 = sbr.rel (%p146) target = $region24
      $region23: #{_lambda_.29} parent=11 // pred_region
        _
      $region24: #{_lambda_.29} parent=11 // pred_fallthru
        _
    $region12: #{_lambda_.29} parent=5 // pred_fallthru
      _
    %p149 = scmp.lt.s32.totalorder %s10, 8
    // Predicated region
    $region25: #{_lambda_.29} parent=5 // pred_check
      %p150 = pneg %p149
    $region26: #{_lambda_.29} parent=5 // pred_check_branch
      %152 = sbr.rel (%p150) target = $region28
    $region27: #{_lambda_.29} parent=5 // pred_region
      // Predicated region
      $region29: #{_lambda_.29} parent=27 // pred_check
        %p153 = pneg %p30
      $region30: #{_lambda_.29} parent=27 // pred_check_branch
        %155 = sbr.rel (%p153) target = $region32
      $region31: #{_lambda_.29} parent=27 // pred_region
        %s156 = smul.u32 32, %s10
        %p157 = scmp.lt.s32.totalorder %s156, 255
        %s158 = scalar_select %p157, %s156, 255
        %s159 = smul.addr %s158, 4
        %s160 = scalar_lea.vmem %s0, %s159
        %s161 = smul.u32 32, %s10
      $region32: #{_lambda_.29} parent=27 // pred_fallthru
        _
    $region28: #{_lambda_.29} parent=5 // pred_fallthru
      _
    %p162 = scmp.le.s32.totalorder 1, %s10
    %p163 = scmp.lt.s32.totalorder %s10, 9
    %p164 = pnand %p162, %p163
    %p165 = pneg %p164
    // Predicated region
    $region33: #{_lambda_.29} parent=5 // pred_check
      _
    $region34: #{_lambda_.29} parent=5 // pred_check_branch
      %167 = sbr.rel (%p164) target = $region36
    $region35: #{_lambda_.29} parent=5 // pred_region
      %s168 = ssub.s32 %s10, 1
      %s169 = smul.u32 32, %s15
      %p170 = scmp.lt.s32.totalorder %s169, 255
      %s171 = scalar_select %p170, %s169, 255
      %s172 = smul.addr %s171, 4
      %s173 = scalar_lea.vmem %s0, %s172
      %p174 = pneg %p36
      %p175 = pneg %p33
      %p176 = pneg %p57
      %p177 = pneg %p54
      %p178 = pneg %p78
      %p179 = pneg %p75
      %p180 = pneg %p99
      %p181 = pneg %p96
      %p182 = pneg %p125
      %p183 = pneg %p122
      %s184 = smul.u32 32, %s15
      %p185 = scmp.lt.s32.totalorder %s184, 255
      %s186 = scalar_select %p185, %s184, 255
      %s187 = smul.addr %s186, 4
      %s188 = scalar_lea.vmem %s4, %s187
      %s189 = smul.u32 32, %s15
      %p190 = scmp.lt.s32.totalorder %s189, 255
      %s191 = scalar_select %p190, %s189, 255
      %s192 = smul.addr %s191, 4
      %s193 = scalar_lea.vmem %s0, %s192
      %s194 = smul.u32 32, %s15
      %s195 = smul.u32 32, %s15
      %p196 = scmp.lt.s32.totalorder %s195, 255
      %s197 = scalar_select %p196, %s195, 255
      %s198 = smul.addr %s197, 4
      %s199 = scalar_lea.vmem %s4, %s198
      %s200 = smul.u32 32, %s15
      %v202 = vld [vmem:[%s193] sm:$0xf]
      %v203 = vld [vmem:[%s193 + $0x4] sm:$0xf]
      %v204 = vld [vmem:[%s193 + $0x8] sm:$0xf]
      %v205 = vld [vmem:[%s193 + $0xc] sm:$0xf]
      %v206 = vld [vmem:[%s193 + $0x10] sm:$0xf]
      %v207 = vld [vmem:[%s193 + $0x14] sm:$0xf]
      %v208 = vld [vmem:[%s193 + $0x18] sm:$0xf]
      %v209 = vld [vmem:[%s193 + $0x1c] sm:$0xf]
      %v210 = vld [vmem:[%s193 + $0x20] sm:$0xf]
      %v211 = vld [vmem:[%s193 + $0x24] sm:$0xf]
      %v212 = vld [vmem:[%s193 + $0x28] sm:$0xf]
      %v213 = vld [vmem:[%s193 + $0x2c] sm:$0xf]
      %v214 = vld [vmem:[%s193 + $0x30] sm:$0xf]
      %v215 = vld [vmem:[%s193 + $0x34] sm:$0xf]
      %v216 = vld [vmem:[%s193 + $0x38] sm:$0xf]
      %v217 = vld [vmem:[%s193 + $0x3c] sm:$0xf]
      %v218 = vld [vmem:[%s193 + $0x40] sm:$0xf]
      %v219 = vld [vmem:[%s193 + $0x44] sm:$0xf]
      %v220 = vld [vmem:[%s193 + $0x48] sm:$0xf]
      %v221 = vld [vmem:[%s193 + $0x4c] sm:$0xf]
      %v222 = vld [vmem:[%s193 + $0x50] sm:$0xf]
      %v223 = vld [vmem:[%s193 + $0x54] sm:$0xf]
      %v224 = vld [vmem:[%s193 + $0x58] sm:$0xf]
      %v225 = vld [vmem:[%s193 + $0x5c] sm:$0xf]
      %v226 = vld [vmem:[%s193 + $0x60] sm:$0xf]
      %v227 = vld [vmem:[%s193 + $0x64] sm:$0xf]
      %v228 = vld [vmem:[%s193 + $0x68] sm:$0xf]
      %v229 = vld [vmem:[%s193 + $0x6c] sm:$0xf]
      %v230 = vld [vmem:[%s193 + $0x70] sm:$0xf]
      %v231 = vld [vmem:[%s193 + $0x74] sm:$0xf]
      %v232 = vld [vmem:[%s193 + $0x78] sm:$0xf]
      %v233 = vld [vmem:[%s193 + $0x7c] sm:$0xf]
      %v234 = vld [vmem:[%s1] sm:$0xf]
      %v235 = vld [vmem:[%s1 + $0x4] sm:$0xf]
      %v236 = vld [vmem:[%s1 + $0x8] sm:$0xf]
      %v237 = vld [vmem:[%s1 + $0xc] sm:$0x3]
      %v270 = vunpack.c.l.b16 %v202
      %v271 = vunpack.c.l.b16 %v203
      %v272 = vunpack.c.l.b16 %v204
      %v273 = vunpack.c.l.b16 %v205
      %v274 = vunpack.c.l.b16 %v206
      %v275 = vunpack.c.l.b16 %v207
      %v276 = vunpack.c.l.b16 %v208
      %v277 = vunpack.c.l.b16 %v209
      %v278 = vunpack.c.l.b16 %v210
      %v279 = vunpack.c.l.b16 %v211
      %v280 = vunpack.c.l.b16 %v212
      %v281 = vunpack.c.l.b16 %v213
      %v282 = vunpack.c.l.b16 %v214
      %v283 = vunpack.c.l.b16 %v215
      %v284 = vunpack.c.l.b16 %v216
      %v285 = vunpack.c.l.b16 %v217
      %v286 = vunpack.c.l.b16 %v218
      %v287 = vunpack.c.l.b16 %v219
      %v288 = vunpack.c.l.b16 %v220
      %v289 = vunpack.c.l.b16 %v221
      %v290 = vunpack.c.l.b16 %v222
      %v291 = vunpack.c.l.b16 %v223
      %v292 = vunpack.c.l.b16 %v224
      %v293 = vunpack.c.l.b16 %v225
      %v294 = vunpack.c.l.b16 %v226
      %v295 = vunpack.c.l.b16 %v227
      %v296 = vunpack.c.l.b16 %v228
      %v297 = vunpack.c.l.b16 %v229
      %v298 = vunpack.c.l.b16 %v230
      %v299 = vunpack.c.l.b16 %v231
      %v300 = vunpack.c.l.b16 %v232
      %v301 = vunpack.c.l.b16 %v233
      %v302 = vpack.c.b16 %v271, %v270
      %v303 = vpack.c.b16 %v273, %v272
      %v304 = vpack.c.b16 %v275, %v274
      %v305 = vpack.c.b16 %v277, %v276
      %v306 = vpack.c.b16 %v279, %v278
      %v307 = vpack.c.b16 %v281, %v280
      %v308 = vpack.c.b16 %v283, %v282
      %v309 = vpack.c.b16 %v285, %v284
      %v310 = vpack.c.b16 %v287, %v286
      %v311 = vpack.c.b16 %v289, %v288
      %v312 = vpack.c.b16 %v291, %v290
      %v313 = vpack.c.b16 %v293, %v292
      %v314 = vpack.c.b16 %v295, %v294
      %v315 = vpack.c.b16 %v297, %v296
      %v316 = vpack.c.b16 %v299, %v298
      %v317 = vpack.c.b16 %v301, %v300
      %v322 = vunpack.c.l.b16 %v234
      %v323 = vunpack.c.l.b16 %v235
      %v324 = vunpack.c.l.b16 %v236
      %v325 = vunpack.c.l.b16 %v237
      %v326 = vpack.c.b16 %v323, %v322
      %v327 = vpack.c.b16 %v325, %v324
      %vm329 = vcmask 220160
      %v331 = vsel %vm329, %v302, 0
      %v334 = vsel %vm329, %v303, 0
      %v337 = vsel %vm329, %v304, 0
      %v340 = vsel %vm329, %v305, 0
      %v343 = vsel %vm329, %v306, 0
      %v346 = vsel %vm329, %v307, 0
      %v349 = vsel %vm329, %v308, 0
      %v352 = vsel %vm329, %v309, 0
      %v355 = vsel %vm329, %v310, 0
      %v358 = vsel %vm329, %v311, 0
      %v361 = vsel %vm329, %v312, 0
      %v364 = vsel %vm329, %v313, 0
      %v367 = vsel %vm329, %v314, 0
      %v370 = vsel %vm329, %v315, 0
      %v373 = vsel %vm329, %v316, 0
      %v376 = vsel %vm329, %v317, 0
      %vm378 = vcmask 1044480
      %vm379 = vcmask 1045504
      %v380 = vsel %vm378, 4294967295, 65535
      %v381 = vsel %vm379, %v380, 0
      %v383 = vand.u32 %v327, %v381
      %385 = vmatprep.subr.bf16.mxu0 0
      %386 = vmatpush1.bf16.msra.mxu0 %v326
      %387 = vmatprep.subr.bf16.mxu0 0
      %388 = vmatpush1.bf16.msra.mxu0 %v383
      %389 = vmatprep.subr.bf16.mxu0 0
      %390 = vmatpush1.bf16.msra.mxu0 0
      %391 = vmatprep.subr.bf16.mxu0 0
      %392 = vmatpush1.bf16.msra.mxu0 0
      %393 = vmatprep.subr.bf16.mxu0 0
      %394 = vmatpush1.bf16.msra.mxu0 0
      %395 = vmatprep.subr.bf16.mxu0 0
      %396 = vmatpush1.bf16.msra.mxu0 0
      %397 = vmatprep.subr.bf16.mxu0 0
      %398 = vmatpush1.bf16.msra.mxu0 0
      %399 = vmatprep.subr.bf16.mxu0 0
      %400 = vmatpush1.bf16.msra.mxu0 0
      %401 = vmatprep.subr.bf16.mxu0 0
      %402 = vmatpush1.bf16.msra.mxu0 0
      %403 = vmatprep.subr.bf16.mxu0 0
      %404 = vmatpush1.bf16.msra.mxu0 0
      %405 = vmatprep.subr.bf16.mxu0 0
      %406 = vmatpush1.bf16.msra.mxu0 0
      %407 = vmatprep.subr.bf16.mxu0 0
      %408 = vmatpush1.bf16.msra.mxu0 0
      %409 = vmatprep.subr.bf16.mxu0 0
      %410 = vmatpush1.bf16.msra.mxu0 0
      %411 = vmatprep.subr.bf16.mxu0 0
      %412 = vmatpush1.bf16.msra.mxu0 0
      %413 = vmatprep.subr.bf16.mxu0 0
      %414 = vmatpush1.bf16.msra.mxu0 0
      %415 = vmatprep.subr.bf16.mxu0 0
      %416 = vmatpush1.bf16.msra.mxu0 0
      %417 = vmatprep.mubr.bf16.mxu0 0
      %418 = vmatmul.mubr.bf16.gmra.mrb[0].mxu0 %v331
      %v419 = vpop.f32.mrb[0].mxu0
      %v420 = vadd.f32 0.0, %v419
      %v421 = vpop.f32.mrb[0].mxu0
      %v422 = vpop.f32.mrb[0].mxu0
      %v423 = vadd.f32 0.0, %v422
      %v424 = vpop.f32.mrb[0].mxu0
      %425 = vmatprep.mubr.bf16.mxu0 0
      %426 = vmatmul.mubr.bf16.gmra.mrb[0].mxu0 %v334
      %v427 = vpop.f32.mrb[0].mxu0
      %v428 = vadd.f32 0.0, %v427
      %v429 = vpop.f32.mrb[0].mxu0
      %v430 = vpop.f32.mrb[0].mxu0
      %v431 = vadd.f32 0.0, %v430
      %v432 = vpop.f32.mrb[0].mxu0
      %433 = vmatprep.mubr.bf16.mxu0 0
      %434 = vmatmul.mubr.bf16.gmra.mrb[0].mxu0 %v337
      %v435 = vpop.f32.mrb[0].mxu0
      %v436 = vadd.f32 0.0, %v435
      %v437 = vpop.f32.mrb[0].mxu0
      %v438 = vpop.f32.mrb[0].mxu0
      %v439 = vadd.f32 0.0, %v438
      %v440 = vpop.f32.mrb[0].mxu0
      %441 = vmatprep.mubr.bf16.mxu0 0
      %442 = vmatmul.mubr.bf16.gmra.mrb[0].mxu0 %v340
      %v443 = vpop.f32.mrb[0].mxu0
      %v444 = vadd.f32 0.0, %v443
      %v445 = vpop.f32.mrb[0].mxu0
      %v446 = vpop.f32.mrb[0].mxu0
      %v447 = vadd.f32 0.0, %v446
      %v448 = vpop.f32.mrb[0].mxu0
      %449 = vmatprep.mubr.bf16.mxu0 0
      %450 = vmatmul.mubr.bf16.gmra.mrb[0].mxu0 %v343
      %v451 = vpop.f32.mrb[0].mxu0
      %v452 = vadd.f32 0.0, %v451
      %v453 = vpop.f32.mrb[0].mxu0
      %v454 = vpop.f32.mrb[0].mxu0
      %v455 = vadd.f32 0.0, %v454
      %v456 = vpop.f32.mrb[0].mxu0
      %457 = vmatprep.mubr.bf16.mxu0 0
      %458 = vmatmul.mubr.bf16.gmra.mrb[0].mxu0 %v346
      %v459 = vpop.f32.mrb[0].mxu0
      %v460 = vadd.f32 0.0, %v459
      %v461 = vpop.f32.mrb[0].mxu0
      %v462 = vpop.f32.mrb[0].mxu0
      %v463 = vadd.f32 0.0, %v462
      %v464 = vpop.f32.mrb[0].mxu0
      %465 = vmatprep.mubr.bf16.mxu0 0
      %466 = vmatmul.mubr.bf16.gmra.mrb[0].mxu0 %v349
      %v467 = vpop.f32.mrb[0].mxu0
      %v468 = vadd.f32 0.0, %v467
      %v469 = vpop.f32.mrb[0].mxu0
      %v470 = vpop.f32.mrb[0].mxu0
      %v471 = vadd.f32 0.0, %v470
      %v472 = vpop.f32.mrb[0].mxu0
      %473 = vmatprep.mubr.bf16.mxu0 0
      %474 = vmatmul.mubr.bf16.gmra.mrb[0].mxu0 %v352
      %v475 = vpop.f32.mrb[0].mxu0
      %v476 = vadd.f32 0.0, %v475
      %v477 = vpop.f32.mrb[0].mxu0
      %v478 = vpop.f32.mrb[0].mxu0
      %v479 = vadd.f32 0.0, %v478
      %v480 = vpop.f32.mrb[0].mxu0
      %481 = vmatprep.mubr.bf16.mxu0 0
      %482 = vmatmul.mubr.bf16.gmra.mrb[0].mxu0 %v355
      %v483 = vpop.f32.mrb[0].mxu0
      %v484 = vadd.f32 0.0, %v483
      %v485 = vpop.f32.mrb[0].mxu0
      %v486 = vpop.f32.mrb[0].mxu0
      %v487 = vadd.f32 0.0, %v486
      %v488 = vpop.f32.mrb[0].mxu0
      %489 = vmatprep.mubr.bf16.mxu0 0
      %490 = vmatmul.mubr.bf16.gmra.mrb[0].mxu0 %v358
      %v491 = vpop.f32.mrb[0].mxu0
      %v492 = vadd.f32 0.0, %v491
      %v493 = vpop.f32.mrb[0].mxu0
      %v494 = vpop.f32.mrb[0].mxu0
      %v495 = vadd.f32 0.0, %v494
      %v496 = vpop.f32.mrb[0].mxu0
      %497 = vmatprep.mubr.bf16.mxu0 0
      %498 = vmatmul.mubr.bf16.gmra.mrb[0].mxu0 %v361
      %v499 = vpop.f32.mrb[0].mxu0
      %v500 = vadd.f32 0.0, %v499
      %v501 = vpop.f32.mrb[0].mxu0
      %v502 = vpop.f32.mrb[0].mxu0
      %v503 = vadd.f32 0.0, %v502
      %v504 = vpop.f32.mrb[0].mxu0
      %505 = vmatprep.mubr.bf16.mxu0 0
      %506 = vmatmul.mubr.bf16.gmra.mrb[0].mxu0 %v364
      %v507 = vpop.f32.mrb[0].mxu0
      %v508 = vadd.f32 0.0, %v507
      %v509 = vpop.f32.mrb[0].mxu0
      %v510 = vpop.f32.mrb[0].mxu0
      %v511 = vadd.f32 0.0, %v510
      %v512 = vpop.f32.mrb[0].mxu0
      %513 = vmatprep.mubr.bf16.mxu0 0
      %514 = vmatmul.mubr.bf16.gmra.mrb[0].mxu0 %v367
      %v515 = vpop.f32.mrb[0].mxu0
      %v516 = vadd.f32 0.0, %v515
      %v517 = vpop.f32.mrb[0].mxu0
      %v518 = vpop.f32.mrb[0].mxu0
      %v519 = vadd.f32 0.0, %v518
      %v520 = vpop.f32.mrb[0].mxu0
      %521 = vmatprep.mubr.bf16.mxu0 0
      %522 = vmatmul.mubr.bf16.gmra.mrb[0].mxu0 %v370
      %v523 = vpop.f32.mrb[0].mxu0
      %v524 = vadd.f32 0.0, %v523
      %v525 = vpop.f32.mrb[0].mxu0
      %v526 = vpop.f32.mrb[0].mxu0
      %v527 = vadd.f32 0.0, %v526
      %v528 = vpop.f32.mrb[0].mxu0
      %529 = vmatprep.mubr.bf16.mxu0 0
      %530 = vmatmul.mubr.bf16.gmra.mrb[0].mxu0 %v373
      %v531 = vpop.f32.mrb[0].mxu0
      %v532 = vadd.f32 0.0, %v531
      %v533 = vpop.f32.mrb[0].mxu0
      %v534 = vpop.f32.mrb[0].mxu0
      %v535 = vadd.f32 0.0, %v534
      %v536 = vpop.f32.mrb[0].mxu0
      %537 = vmatprep.mubr.bf16.mxu0 0
      %538 = vmatmul.mubr.bf16.gmra.mrb[0].mxu0 %v376
      %v539 = vpop.f32.mrb[0].mxu0
      %v540 = vadd.f32 0.0, %v539
      %v541 = vpop.f32.mrb[0].mxu0
      %v542 = vpop.f32.mrb[0].mxu0
      %v543 = vadd.f32 0.0, %v542
      %v544 = vpop.f32.mrb[0].mxu0
      %545 = vdwg.mxu0
      %v546 = vld [vmem:[%s2] sm:$0x1]
      %v548 = vlaneseq
      %v549 = vshrl.u32 %v548, 7
      %v550 = vsub.s32 0, %v549
      %v551 = vrot.slane %v546, %v550
      %v553 = vmul.f32 %v420, %v551
      %v554 = vmul.f32 %v423, %v551
      %v555 = vmul.f32 %v428, %v551
      %v556 = vmul.f32 %v431, %v551
      %v557 = vmul.f32 %v436, %v551
      %v558 = vmul.f32 %v439, %v551
      %v559 = vmul.f32 %v444, %v551
      %v560 = vmul.f32 %v447, %v551
      %v561 = vmul.f32 %v452, %v551
      %v562 = vmul.f32 %v455, %v551
      %v563 = vmul.f32 %v460, %v551
      %v564 = vmul.f32 %v463, %v551
      %v565 = vmul.f32 %v468, %v551
      %v566 = vmul.f32 %v471, %v551
      %v567 = vmul.f32 %v476, %v551
      %v568 = vmul.f32 %v479, %v551
      %v569 = vmul.f32 %v484, %v551
      %v570 = vmul.f32 %v487, %v551
      %v571 = vmul.f32 %v492, %v551
      %v572 = vmul.f32 %v495, %v551
      %v573 = vmul.f32 %v500, %v551
      %v574 = vmul.f32 %v503, %v551
      %v575 = vmul.f32 %v508, %v551
      %v576 = vmul.f32 %v511, %v551
      %v577 = vmul.f32 %v516, %v551
      %v578 = vmul.f32 %v519, %v551
      %v579 = vmul.f32 %v524, %v551
      %v580 = vmul.f32 %v527, %v551
      %v581 = vmul.f32 %v532, %v551
      %v582 = vmul.f32 %v535, %v551
      %v583 = vmul.f32 %v540, %v551
      %v584 = vmul.f32 %v543, %v551
      %v585 = vld [vmem:[%s3] sm:$0x1]
      %v587 = vlaneseq
      %v588 = vshrl.u32 %v587, 7
      %v589 = vsub.s32 0, %v588
      %v590 = vrot.slane %v585, %v589
      %v592 = vadd.f32 %v553, %v590
      %v593 = vadd.f32 %v554, %v590
      %v594 = vadd.f32 %v555, %v590
      %v595 = vadd.f32 %v556, %v590
      %v596 = vadd.f32 %v557, %v590
      %v597 = vadd.f32 %v558, %v590
      %v598 = vadd.f32 %v559, %v590
      %v599 = vadd.f32 %v560, %v590
      %v600 = vadd.f32 %v561, %v590
      %v601 = vadd.f32 %v562, %v590
      %v602 = vadd.f32 %v563, %v590
      %v603 = vadd.f32 %v564, %v590
      %v604 = vadd.f32 %v565, %v590
      %v605 = vadd.f32 %v566, %v590
      %v606 = vadd.f32 %v567, %v590
      %v607 = vadd.f32 %v568, %v590
      %v608 = vadd.f32 %v569, %v590
      %v609 = vadd.f32 %v570, %v590
      %v610 = vadd.f32 %v571, %v590
      %v611 = vadd.f32 %v572, %v590
      %v612 = vadd.f32 %v573, %v590
      %v613 = vadd.f32 %v574, %v590
      %v614 = vadd.f32 %v575, %v590
      %v615 = vadd.f32 %v576, %v590
      %v616 = vadd.f32 %v577, %v590
      %v617 = vadd.f32 %v578, %v590
      %v618 = vadd.f32 %v579, %v590
      %v619 = vadd.f32 %v580, %v590
      %v620 = vadd.f32 %v581, %v590
      %v621 = vadd.f32 %v582, %v590
      %v622 = vadd.f32 %v583, %v590
      %v623 = vadd.f32 %v584, %v590
      %v624 = vmax.f32 %v592, 0.0
      %v625 = vmax.f32 %v593, 0.0
      %v626 = vmax.f32 %v594, 0.0
      %v627 = vmax.f32 %v595, 0.0
      %v628 = vmax.f32 %v596, 0.0
      %v629 = vmax.f32 %v597, 0.0
      %v630 = vmax.f32 %v598, 0.0
      %v631 = vmax.f32 %v599, 0.0
      %v632 = vmax.f32 %v600, 0.0
      %v633 = vmax.f32 %v601, 0.0
      %v634 = vmax.f32 %v602, 0.0
      %v635 = vmax.f32 %v603, 0.0
      %v636 = vmax.f32 %v604, 0.0
      %v637 = vmax.f32 %v605, 0.0
      %v638 = vmax.f32 %v606, 0.0
      %v639 = vmax.f32 %v607, 0.0
      %v640 = vmax.f32 %v608, 0.0
      %v641 = vmax.f32 %v609, 0.0
      %v642 = vmax.f32 %v610, 0.0
      %v643 = vmax.f32 %v611, 0.0
      %v644 = vmax.f32 %v612, 0.0
      %v645 = vmax.f32 %v613, 0.0
      %v646 = vmax.f32 %v614, 0.0
      %v647 = vmax.f32 %v615, 0.0
      %v648 = vmax.f32 %v616, 0.0
      %v649 = vmax.f32 %v617, 0.0
      %v650 = vmax.f32 %v618, 0.0
      %v651 = vmax.f32 %v619, 0.0
      %v652 = vmax.f32 %v620, 0.0
      %v653 = vmax.f32 %v621, 0.0
      %v654 = vmax.f32 %v622, 0.0
      %v655 = vmax.f32 %v623, 0.0
      %v656 = vpack.c.bf16 %v625, %v624
      %v657 = vpack.c.bf16 %v627, %v626
      %v658 = vpack.c.bf16 %v629, %v628
      %v659 = vpack.c.bf16 %v631, %v630
      %v660 = vpack.c.bf16 %v633, %v632
      %v661 = vpack.c.bf16 %v635, %v634
      %v662 = vpack.c.bf16 %v637, %v636
      %v663 = vpack.c.bf16 %v639, %v638
      %v664 = vpack.c.bf16 %v641, %v640
      %v665 = vpack.c.bf16 %v643, %v642
      %v666 = vpack.c.bf16 %v645, %v644
      %v667 = vpack.c.bf16 %v647, %v646
      %v668 = vpack.c.bf16 %v649, %v648
      %v669 = vpack.c.bf16 %v651, %v650
      %v670 = vpack.c.bf16 %v653, %v652
      %v671 = vpack.c.bf16 %v655, %v654
      %v688 = vunpack.c.l.b16 %v656
      %v689 = vunpack.c.h.b16 %v656
      %v690 = vunpack.c.l.b16 %v657
      %v691 = vunpack.c.h.b16 %v657
      %v692 = vunpack.c.l.b16 %v658
      %v693 = vunpack.c.h.b16 %v658
      %v694 = vunpack.c.l.b16 %v659
      %v695 = vunpack.c.h.b16 %v659
      %v696 = vunpack.c.l.b16 %v660
      %v697 = vunpack.c.h.b16 %v660
      %v698 = vunpack.c.l.b16 %v661
      %v699 = vunpack.c.h.b16 %v661
      %v700 = vunpack.c.l.b16 %v662
      %v701 = vunpack.c.h.b16 %v662
      %v702 = vunpack.c.l.b16 %v663
      %v703 = vunpack.c.h.b16 %v663
      %v704 = vunpack.c.l.b16 %v664
      %v705 = vunpack.c.h.b16 %v664
      %v706 = vunpack.c.l.b16 %v665
      %v707 = vunpack.c.h.b16 %v665
      %v708 = vunpack.c.l.b16 %v666
      %v709 = vunpack.c.h.b16 %v666
      %v710 = vunpack.c.l.b16 %v667
      %v711 = vunpack.c.h.b16 %v667
      %v712 = vunpack.c.l.b16 %v668
      %v713 = vunpack.c.h.b16 %v668
      %v714 = vunpack.c.l.b16 %v669
      %v715 = vunpack.c.h.b16 %v669
      %v716 = vunpack.c.l.b16 %v670
      %v717 = vunpack.c.h.b16 %v670
      %v718 = vunpack.c.l.b16 %v671
      %v719 = vunpack.c.h.b16 %v671
      %v720 = vpack.c.b16 %v688, %v688
      %v721 = vpack.c.b16 %v689, %v689
      %v722 = vpack.c.b16 %v690, %v690
      %v723 = vpack.c.b16 %v691, %v691
      %v724 = vpack.c.b16 %v692, %v692
      %v725 = vpack.c.b16 %v693, %v693
      %v726 = vpack.c.b16 %v694, %v694
      %v727 = vpack.c.b16 %v695, %v695
      %v728 = vpack.c.b16 %v696, %v696
      %v729 = vpack.c.b16 %v697, %v697
      %v730 = vpack.c.b16 %v698, %v698
      %v731 = vpack.c.b16 %v699, %v699
      %v732 = vpack.c.b16 %v700, %v700
      %v733 = vpack.c.b16 %v701, %v701
      %v734 = vpack.c.b16 %v702, %v702
      %v735 = vpack.c.b16 %v703, %v703
      %v736 = vpack.c.b16 %v704, %v704
      %v737 = vpack.c.b16 %v705, %v705
      %v738 = vpack.c.b16 %v706, %v706
      %v739 = vpack.c.b16 %v707, %v707
      %v740 = vpack.c.b16 %v708, %v708
      %v741 = vpack.c.b16 %v709, %v709
      %v742 = vpack.c.b16 %v710, %v710
      %v743 = vpack.c.b16 %v711, %v711
      %v744 = vpack.c.b16 %v712, %v712
      %v745 = vpack.c.b16 %v713, %v713
      %v746 = vpack.c.b16 %v714, %v714
      %v747 = vpack.c.b16 %v715, %v715
      %v748 = vpack.c.b16 %v716, %v716
      %v749 = vpack.c.b16 %v717, %v717
      %v750 = vpack.c.b16 %v718, %v718
      %v751 = vpack.c.b16 %v719, %v719
      %vm784 = vcmask 519168
      %785 = vst.msk [vmem:[%s199] sm:$0xf] %vm784, %v720
      %786 = vst.msk [vmem:[%s199 + $0x4] sm:$0xf] %vm784, %v721
      %787 = vst.msk [vmem:[%s199 + $0x8] sm:$0xf] %vm784, %v722
      %788 = vst.msk [vmem:[%s199 + $0xc] sm:$0xf] %vm784, %v723
      %789 = vst.msk [vmem:[%s199 + $0x10] sm:$0xf] %vm784, %v724
      %790 = vst.msk [vmem:[%s199 + $0x14] sm:$0xf] %vm784, %v725
      %791 = vst.msk [vmem:[%s199 + $0x18] sm:$0xf] %vm784, %v726
      %792 = vst.msk [vmem:[%s199 + $0x1c] sm:$0xf] %vm784, %v727
      %793 = vst.msk [vmem:[%s199 + $0x20] sm:$0xf] %vm784, %v728
      %794 = vst.msk [vmem:[%s199 + $0x24] sm:$0xf] %vm784, %v729
      %795 = vst.msk [vmem:[%s199 + $0x28] sm:$0xf] %vm784, %v730
      %796 = vst.msk [vmem:[%s199 + $0x2c] sm:$0xf] %vm784, %v731
      %797 = vst.msk [vmem:[%s199 + $0x30] sm:$0xf] %vm784, %v732
      %798 = vst.msk [vmem:[%s199 + $0x34] sm:$0xf] %vm784, %v733
      %799 = vst.msk [vmem:[%s199 + $0x38] sm:$0xf] %vm784, %v734
      %800 = vst.msk [vmem:[%s199 + $0x3c] sm:$0xf] %vm784, %v735
      %801 = vst.msk [vmem:[%s199 + $0x40] sm:$0xf] %vm784, %v736
      %802 = vst.msk [vmem:[%s199 + $0x44] sm:$0xf] %vm784, %v737
      %803 = vst.msk [vmem:[%s199 + $0x48] sm:$0xf] %vm784, %v738
      %804 = vst.msk [vmem:[%s199 + $0x4c] sm:$0xf] %vm784, %v739
      %805 = vst.msk [vmem:[%s199 + $0x50] sm:$0xf] %vm784, %v740
      %806 = vst.msk [vmem:[%s199 + $0x54] sm:$0xf] %vm784, %v741
      %807 = vst.msk [vmem:[%s199 + $0x58] sm:$0xf] %vm784, %v742
      %808 = vst.msk [vmem:[%s199 + $0x5c] sm:$0xf] %vm784, %v743
      %809 = vst.msk [vmem:[%s199 + $0x60] sm:$0xf] %vm784, %v744
      %810 = vst.msk [vmem:[%s199 + $0x64] sm:$0xf] %vm784, %v745
      %811 = vst.msk [vmem:[%s199 + $0x68] sm:$0xf] %vm784, %v746
      %812 = vst.msk [vmem:[%s199 + $0x6c] sm:$0xf] %vm784, %v747
      %813 = vst.msk [vmem:[%s199 + $0x70] sm:$0xf] %vm784, %v748
      %814 = vst.msk [vmem:[%s199 + $0x74] sm:$0xf] %vm784, %v749
      %815 = vst.msk [vmem:[%s199 + $0x78] sm:$0xf] %vm784, %v750
      %816 = vst.msk [vmem:[%s199 + $0x7c] sm:$0xf] %vm784, %v751
      %s817 = smul.u32 32, %s15
      %p818 = scmp.lt.s32.totalorder %s817, 255
      %s819 = scalar_select %p818, %s817, 255
      %s820 = smul.addr %s819, 4
      %s821 = scalar_lea.vmem %s4, %s820
      // Predicated region
      $region37: #{_lambda_.29} parent=35 // pred_check
        %p822 = pneg %p122
      $region38: #{_lambda_.29} parent=35 // pred_check_branch
        %824 = sbr.rel (%p822) target = $region40
      $region39: #{_lambda_.29} parent=35 // pred_region
        %s825 = smul.u32 32, %s15
      $region40: #{_lambda_.29} parent=35 // pred_fallthru
        _
    $region36: #{_lambda_.29} parent=5 // pred_fallthru
      _
    %p826 = scmp.le.s32.totalorder 2, %s10
    // Predicated region
    $region41: #{_lambda_.29} parent=5 // pred_check
      %p827 = pneg %p826
    $region42: #{_lambda_.29} parent=5 // pred_check_branch
      %829 = sbr.rel (%p827) target = $region44
    $region43: #{_lambda_.29} parent=5 // pred_region
      %s830 = ssub.s32 %s10, 2
      // Predicated region
      $region45: #{_lambda_.29} parent=43 // pred_check
        %p831 = pneg %p128
      $region46: #{_lambda_.29} parent=43 // pred_check_branch
        %833 = sbr.rel (%p831) target = $region48
      $region47: #{_lambda_.29} parent=43 // pred_region
        %s834 = smul.u32 32, %s16
        %p835 = scmp.lt.s32.totalorder %s834, 255
        %s836 = scalar_select %p835, %s834, 255
        %s837 = smul.addr %s836, 4
        %s838 = scalar_lea.vmem %s4, %s837
      $region48: #{_lambda_.29} parent=43 // pred_fallthru
        _
    $region44: #{_lambda_.29} parent=5 // pred_fallthru
      _
  $region6: #{_lambda_.29} parent=0 // loop_footer
    %s14 = sadd.s32 1, %s10
  $region7: #{_lambda_.29} parent=0 // loop_footer_branch
    %9 = sbr.rel target = $region3
  $region8: #{_lambda_.29} parent=0 // loop_exit
    _

// kernel: _lambda_.32
$region0: #{_lambda_.32}
  #allocation0 [shape = 'u32[]', space=smem, size = 0x4, offset = 0x4, fixed_abs, tag = 'smem constant byte address 0x4 - core index']
  #allocation1 [shape = 'u32[144,128]{1,0:T(1,128)}', space=vmem, size = 0x12000, scoped, tag = 'internal scratch']
  %s0 = inlined_call_operand.vmem [shape: bf16[512,64], index: 0, kind: input, shape index: {}]
  %s1 = inlined_call_operand.vmem [shape: bf16[64,8], index: 1, kind: input, shape index: {}]
  %s2 = inlined_call_operand.vmem [shape: f32[1,8], index: 2, kind: input, shape index: {}]
  %s3 = inlined_call_operand.vmem [shape: f32[1,8], index: 3, kind: input, shape index: {}]
  %s4 = inlined_call_operand.vmem [shape: bf16[512,8], index: 4, kind: output, shape index: {}]
  %s5 = sld [smem:[#allocation0]]
  $region49: #{_lambda_.32} parent=0
    _
  %s7 = ssub.s32 1, %s5
  %s8 = scalar_select 0, %s7, %s5
  loop: start=0, step=1, limit=6
  $region2: #{_lambda_.32} parent=0 // loop_pre_header
    _
  $region3: #{_lambda_.32} parent=0 // loop_header
    %s10 = sphi 0, %s14
    %p11 = scmp.ge.s32.totalorder %s10, 6
    %s20 = sphi 0, %s22
    %s23 = sphi 0, %s20
    %s24 = sphi 0, %s23
    %s40 = sphi 0, %s24
    %s44 = sphi 0, %s44
    %s46 = sphi 0, %s44
    %s47 = sphi 0, %s46
    %s61 = sphi 0, %s47
    %s65 = sphi 0, %s65
    %s67 = sphi 0, %s65
    %s68 = sphi 0, %s67
    %s82 = sphi 0, %s68
    %s86 = sphi 0, %s86
    %s88 = sphi 0, %s86
    %s89 = sphi 0, %s88
    %s103 = sphi 0, %s89
    %s109 = sphi 0, %s111
    %s112 = sphi 0, %s109
    %s113 = sphi 0, %s112
    %s129 = sphi 0, %s113
  $region4: #{_lambda_.32} parent=0 // loop_header_branch
    %13 = sbr.rel (%p11) target = $region8
  $region5: #{_lambda_.32} parent=0 // loop_body
    %s15 = ssub.s32 %s10, 1
    %s16 = ssub.s32 %s10, 2
    %s17 = sadd.s32 %s10, 1
    %s18 = ssub.s32 %s10, %s17
    %p19 = scmp.eq.s32.totalorder %s18, 0
    %s21 = sadd.s32 %s20, 1
    %s22 = scalar_select %p19, %s20, %s21
    %p25 = pneg %p19
    %p26 = scmp.eq.s32.totalorder %s10, 3
    %p27 = por %p25, %p26
    %p28 = scmp.ne.s32.totalorder %s20, %s23
    %p29 = scmp.eq.s32.totalorder %s10, 0
    %p30 = por %p28, %p29
    %p31 = scmp.ne.s32.totalorder %s20, %s23
    %p32 = scmp.eq.s32.totalorder %s15, 3
    %p33 = por %p31, %p32
    %p34 = scmp.ne.s32.totalorder %s23, %s24
    %p35 = scmp.eq.s32.totalorder %s15, 0
    %p36 = por %p34, %p35
    %p37 = scmp.ne.s32.totalorder %s23, %s24
    %p38 = scmp.eq.s32.totalorder %s16, 3
    %p39 = por %p37, %p38
    %p41 = scmp.ne.s32.totalorder %s24, %s40
    %p42 = scmp.eq.s32.totalorder %s16, 0
    %p43 = por %p41, %p42
    %s45 = sadd.s32 %s44, 1
    %p48 = scmp.eq.s32.totalorder %s10, 3
    %p49 = scmp.ne.s32.totalorder %s44, %s46
    %p50 = scmp.eq.s32.totalorder %s10, 0
    %p51 = por %p49, %p50
    %p52 = scmp.ne.s32.totalorder %s44, %s46
    %p53 = scmp.eq.s32.totalorder %s15, 3
    %p54 = por %p52, %p53
    %p55 = scmp.ne.s32.totalorder %s46, %s47
    %p56 = scmp.eq.s32.totalorder %s15, 0
    %p57 = por %p55, %p56
    %p58 = scmp.ne.s32.totalorder %s46, %s47
    %p59 = scmp.eq.s32.totalorder %s16, 3
    %p60 = por %p58, %p59
    %p62 = scmp.ne.s32.totalorder %s47, %s61
    %p63 = scmp.eq.s32.totalorder %s16, 0
    %p64 = por %p62, %p63
    %s66 = sadd.s32 %s65, 1
    %p69 = scmp.eq.s32.totalorder %s10, 3
    %p70 = scmp.ne.s32.totalorder %s65, %s67
    %p71 = scmp.eq.s32.totalorder %s10, 0
    %p72 = por %p70, %p71
    %p73 = scmp.ne.s32.totalorder %s65, %s67
    %p74 = scmp.eq.s32.totalorder %s15, 3
    %p75 = por %p73, %p74
    %p76 = scmp.ne.s32.totalorder %s67, %s68
    %p77 = scmp.eq.s32.totalorder %s15, 0
    %p78 = por %p76, %p77
    %p79 = scmp.ne.s32.totalorder %s67, %s68
    %p80 = scmp.eq.s32.totalorder %s16, 3
    %p81 = por %p79, %p80
    %p83 = scmp.ne.s32.totalorder %s68, %s82
    %p84 = scmp.eq.s32.totalorder %s16, 0
    %p85 = por %p83, %p84
    %s87 = sadd.s32 %s86, 1
    %p90 = scmp.eq.s32.totalorder %s10, 3
    %p91 = scmp.ne.s32.totalorder %s86, %s88
    %p92 = scmp.eq.s32.totalorder %s10, 0
    %p93 = por %p91, %p92
    %p94 = scmp.ne.s32.totalorder %s86, %s88
    %p95 = scmp.eq.s32.totalorder %s15, 3
    %p96 = por %p94, %p95
    %p97 = scmp.ne.s32.totalorder %s88, %s89
    %p98 = scmp.eq.s32.totalorder %s15, 0
    %p99 = por %p97, %p98
    %p100 = scmp.ne.s32.totalorder %s88, %s89
    %p101 = scmp.eq.s32.totalorder %s16, 3
    %p102 = por %p100, %p101
    %p104 = scmp.ne.s32.totalorder %s89, %s103
    %p105 = scmp.eq.s32.totalorder %s16, 0
    %p106 = por %p104, %p105
    %s107 = ssub.s32 %s10, %s17
    %p108 = scmp.eq.s32.totalorder %s107, 0
    %s110 = sadd.s32 %s109, 1
    %s111 = scalar_select %p108, %s109, %s110
    %p114 = pneg %p108
    %p115 = scmp.eq.s32.totalorder %s10, 3
    %p116 = por %p114, %p115
    %p117 = scmp.ne.s32.totalorder %s109, %s112
    %p118 = scmp.eq.s32.totalorder %s10, 0
    %p119 = por %p117, %p118
    %p120 = scmp.ne.s32.totalorder %s109, %s112
    %p121 = scmp.eq.s32.totalorder %s15, 3
    %p122 = por %p120, %p121
    %p123 = scmp.ne.s32.totalorder %s112, %s113
    %p124 = scmp.eq.s32.totalorder %s15, 0
    %p125 = por %p123, %p124
    %p126 = scmp.ne.s32.totalorder %s112, %s113
    %p127 = scmp.eq.s32.totalorder %s16, 3
    %p128 = por %p126, %p127
    %p130 = scmp.ne.s32.totalorder %s113, %s129
    %p131 = scmp.eq.s32.totalorder %s16, 0
    %p132 = por %p130, %p131
    %p133 = scmp.le.s32.totalorder 1, %s10
    %p134 = scmp.lt.s32.totalorder %s10, 5
    %p135 = pnand %p133, %p134
    %p136 = pneg %p135
    // Predicated region
    $region9: #{_lambda_.32} parent=5 // pred_check
      _
    $region10: #{_lambda_.32} parent=5 // pred_check_branch
      %138 = sbr.rel (%p135) target = $region12
    $region11: #{_lambda_.32} parent=5 // pred_region
      %s139 = ssub.s32 %s10, 1
      // Predicated region
      $region13: #{_lambda_.32} parent=11 // pred_check
        %p140 = pneg %p57
      $region14: #{_lambda_.32} parent=11 // pred_check_branch
        %142 = sbr.rel (%p140) target = $region16
      $region15: #{_lambda_.32} parent=11 // pred_region
        _
      $region16: #{_lambda_.32} parent=11 // pred_fallthru
        _
      // Predicated region
      $region17: #{_lambda_.32} parent=11 // pred_check
        %p143 = pneg %p78
      $region18: #{_lambda_.32} parent=11 // pred_check_branch
        %145 = sbr.rel (%p143) target = $region20
      $region19: #{_lambda_.32} parent=11 // pred_region
        _
      $region20: #{_lambda_.32} parent=11 // pred_fallthru
        _
      // Predicated region
      $region21: #{_lambda_.32} parent=11 // pred_check
        %p146 = pneg %p99
      $region22: #{_lambda_.32} parent=11 // pred_check_branch
        %148 = sbr.rel (%p146) target = $region24
      $region23: #{_lambda_.32} parent=11 // pred_region
        _
      $region24: #{_lambda_.32} parent=11 // pred_fallthru
        _
    $region12: #{_lambda_.32} parent=5 // pred_fallthru
      _
    %p149 = scmp.lt.s32.totalorder %s10, 4
    // Predicated region
    $region25: #{_lambda_.32} parent=5 // pred_check
      %p150 = pneg %p149
    $region26: #{_lambda_.32} parent=5 // pred_check_branch
      %152 = sbr.rel (%p150) target = $region28
    $region27: #{_lambda_.32} parent=5 // pred_region
      // Predicated region
      $region29: #{_lambda_.32} parent=27 // pred_check
        %p153 = pneg %p30
      $region30: #{_lambda_.32} parent=27 // pred_check_branch
        %155 = sbr.rel (%p153) target = $region32
      $region31: #{_lambda_.32} parent=27 // pred_region
        %s156 = smul.u32 16, %s10
        %p157 = scmp.lt.s32.totalorder %s156, 63
        %s158 = scalar_select %p157, %s156, 63
        %s159 = smul.addr %s158, 4
        %s160 = scalar_lea.vmem %s0, %s159
        %s161 = smul.u32 16, %s10
      $region32: #{_lambda_.32} parent=27 // pred_fallthru
        _
    $region28: #{_lambda_.32} parent=5 // pred_fallthru
      _
    %p162 = scmp.le.s32.totalorder 1, %s10
    %p163 = scmp.lt.s32.totalorder %s10, 5
    %p164 = pnand %p162, %p163
    %p165 = pneg %p164
    // Predicated region
    $region33: #{_lambda_.32} parent=5 // pred_check
      _
    $region34: #{_lambda_.32} parent=5 // pred_check_branch
      %167 = sbr.rel (%p164) target = $region36
    $region35: #{_lambda_.32} parent=5 // pred_region
      %s168 = ssub.s32 %s10, 1
      %s169 = smul.u32 16, %s15
      %p170 = scmp.lt.s32.totalorder %s169, 63
      %s171 = scalar_select %p170, %s169, 63
      %s172 = smul.addr %s171, 4
      %s173 = scalar_lea.vmem %s0, %s172
      %p174 = pneg %p36
      %p175 = pneg %p33
      %p176 = pneg %p57
      %p177 = pneg %p54
      %p178 = pneg %p78
      %p179 = pneg %p75
      %p180 = pneg %p99
      %p181 = pneg %p96
      %p182 = pneg %p125
      %p183 = pneg %p122
      %s184 = smul.u32 16, %s15
      %p185 = scmp.lt.s32.totalorder %s184, 63
      %s186 = scalar_select %p185, %s184, 63
      %s187 = smul.addr %s186, 4
      %s188 = scalar_lea.vmem %s4, %s187
      %s189 = smul.u32 16, %s15
      %p190 = scmp.lt.s32.totalorder %s189, 63
      %s191 = scalar_select %p190, %s189, 63
      %s192 = smul.addr %s191, 4
      %s193 = scalar_lea.vmem %s0, %s192
      %s194 = smul.u32 16, %s15
      %s195 = smul.u32 16, %s15
      %p196 = scmp.lt.s32.totalorder %s195, 63
      %s197 = scalar_select %p196, %s195, 63
      %s198 = smul.addr %s197, 4
      %s199 = scalar_lea.vmem %s4, %s198
      %s200 = smul.u32 16, %s15
      %v202 = vld [vmem:[%s193] sm:$0xf]
      %v203 = vld [vmem:[%s193 + $0x4] sm:$0xf]
      %v204 = vld [vmem:[%s193 + $0x8] sm:$0xf]
      %v205 = vld [vmem:[%s193 + $0xc] sm:$0xf]
      %v206 = vld [vmem:[%s193 + $0x10] sm:$0xf]
      %v207 = vld [vmem:[%s193 + $0x14] sm:$0xf]
      %v208 = vld [vmem:[%s193 + $0x18] sm:$0xf]
      %v209 = vld [vmem:[%s193 + $0x1c] sm:$0xf]
      %v210 = vld [vmem:[%s193 + $0x20] sm:$0xf]
      %v211 = vld [vmem:[%s193 + $0x24] sm:$0xf]
      %v212 = vld [vmem:[%s193 + $0x28] sm:$0xf]
      %v213 = vld [vmem:[%s193 + $0x2c] sm:$0xf]
      %v214 = vld [vmem:[%s193 + $0x30] sm:$0xf]
      %v215 = vld [vmem:[%s193 + $0x34] sm:$0xf]
      %v216 = vld [vmem:[%s193 + $0x38] sm:$0xf]
      %v217 = vld [vmem:[%s193 + $0x3c] sm:$0xf]
      %v218 = vld [vmem:[%s1] sm:$0xf]
      %v219 = vld [vmem:[%s1 + $0x4] sm:$0xf]
      %v220 = vld [vmem:[%s1 + $0x8] sm:$0xf]
      %v221 = vld [vmem:[%s1 + $0xc] sm:$0xf]
      %v222 = vld [vmem:[%s1 + $0x10] sm:$0xf]
      %v223 = vld [vmem:[%s1 + $0x14] sm:$0xf]
      %v224 = vld [vmem:[%s1 + $0x18] sm:$0xf]
      %v225 = vld [vmem:[%s1 + $0x1c] sm:$0xf]
      %v242 = vunpack.c.l.b16 %v202
      %v243 = vunpack.c.l.b16 %v203
      %v244 = vunpack.c.l.b16 %v204
      %v245 = vunpack.c.l.b16 %v205
      %v246 = vunpack.c.l.b16 %v206
      %v247 = vunpack.c.l.b16 %v207
      %v248 = vunpack.c.l.b16 %v208
      %v249 = vunpack.c.l.b16 %v209
      %v250 = vunpack.c.l.b16 %v210
      %v251 = vunpack.c.l.b16 %v211
      %v252 = vunpack.c.l.b16 %v212
      %v253 = vunpack.c.l.b16 %v213
      %v254 = vunpack.c.l.b16 %v214
      %v255 = vunpack.c.l.b16 %v215
      %v256 = vunpack.c.l.b16 %v216
      %v257 = vunpack.c.l.b16 %v217
      %v258 = vpack.c.b16 %v243, %v242
      %v259 = vpack.c.b16 %v245, %v244
      %v260 = vpack.c.b16 %v247, %v246
      %v261 = vpack.c.b16 %v249, %v248
      %v262 = vpack.c.b16 %v251, %v250
      %v263 = vpack.c.b16 %v253, %v252
      %v264 = vpack.c.b16 %v255, %v254
      %v265 = vpack.c.b16 %v257, %v256
      %v274 = vunpack.c.l.b16 %v218
      %v275 = vunpack.c.l.b16 %v219
      %v276 = vunpack.c.l.b16 %v220
      %v277 = vunpack.c.l.b16 %v221
      %v278 = vunpack.c.l.b16 %v222
      %v279 = vunpack.c.l.b16 %v223
      %v280 = vunpack.c.l.b16 %v224
      %v281 = vunpack.c.l.b16 %v225
      %v282 = vpack.c.b16 %v275, %v274
      %v283 = vpack.c.b16 %v277, %v276
      %v284 = vpack.c.b16 %v279, %v278
      %v285 = vpack.c.b16 %v281, %v280
      %vm290 = vcmask 523264
      %v292 = vsel %vm290, %v258, 0
      %v295 = vsel %vm290, %v259, 0
      %v298 = vsel %vm290, %v260, 0
      %v301 = vsel %vm290, %v261, 0
      %v304 = vsel %vm290, %v262, 0
      %v307 = vsel %vm290, %v263, 0
      %v310 = vsel %vm290, %v264, 0
      %v313 = vsel %vm290, %v265, 0
      %315 = vmatprep.subr.bf16.mxu0 0
      %316 = vmatpush1.bf16.msra.mxu0 %v282
      %317 = vmatprep.subr.bf16.mxu0 0
      %318 = vmatpush1.bf16.msra.mxu0 %v283
      %319 = vmatprep.subr.bf16.mxu0 0
      %320 = vmatpush1.bf16.msra.mxu0 %v284
      %321 = vmatprep.subr.bf16.mxu0 0
      %322 = vmatpush1.bf16.msra.mxu0 %v285
      %323 = vmatprep.subr.bf16.mxu0 0
      %324 = vmatpush1.bf16.msra.mxu0 0
      %325 = vmatprep.subr.bf16.mxu0 0
      %326 = vmatpush1.bf16.msra.mxu0 0
      %327 = vmatprep.subr.bf16.mxu0 0
      %328 = vmatpush1.bf16.msra.mxu0 0
      %329 = vmatprep.subr.bf16.mxu0 0
      %330 = vmatpush1.bf16.msra.mxu0 0
      %331 = vmatprep.subr.bf16.mxu0 0
      %332 = vmatpush1.bf16.msra.mxu0 0
      %333 = vmatprep.subr.bf16.mxu0 0
      %334 = vmatpush1.bf16.msra.mxu0 0
      %335 = vmatprep.subr.bf16.mxu0 0
      %336 = vmatpush1.bf16.msra.mxu0 0
      %337 = vmatprep.subr.bf16.mxu0 0
      %338 = vmatpush1.bf16.msra.mxu0 0
      %339 = vmatprep.subr.bf16.mxu0 0
      %340 = vmatpush1.bf16.msra.mxu0 0
      %341 = vmatprep.subr.bf16.mxu0 0
      %342 = vmatpush1.bf16.msra.mxu0 0
      %343 = vmatprep.subr.bf16.mxu0 0
      %344 = vmatpush1.bf16.msra.mxu0 0
      %345 = vmatprep.subr.bf16.mxu0 0
      %346 = vmatpush1.bf16.msra.mxu0 0
      %347 = vmatprep.mubr.bf16.mxu0 0
      %348 = vmatmul.mubr.bf16.gmra.mrb[0].mxu0 %v292
      %v349 = vpop.f32.mrb[0].mxu0
      %v350 = vadd.f32 0.0, %v349
      %v351 = vpop.f32.mrb[0].mxu0
      %v352 = vpop.f32.mrb[0].mxu0
      %v353 = vadd.f32 0.0, %v352
      %v354 = vpop.f32.mrb[0].mxu0
      %355 = vmatprep.mubr.bf16.mxu0 0
      %356 = vmatmul.mubr.bf16.gmra.mrb[0].mxu0 %v295
      %v357 = vpop.f32.mrb[0].mxu0
      %v358 = vadd.f32 0.0, %v357
      %v359 = vpop.f32.mrb[0].mxu0
      %v360 = vpop.f32.mrb[0].mxu0
      %v361 = vadd.f32 0.0, %v360
      %v362 = vpop.f32.mrb[0].mxu0
      %363 = vmatprep.mubr.bf16.mxu0 0
      %364 = vmatmul.mubr.bf16.gmra.mrb[0].mxu0 %v298
      %v365 = vpop.f32.mrb[0].mxu0
      %v366 = vadd.f32 0.0, %v365
      %v367 = vpop.f32.mrb[0].mxu0
      %v368 = vpop.f32.mrb[0].mxu0
      %v369 = vadd.f32 0.0, %v368
      %v370 = vpop.f32.mrb[0].mxu0
      %371 = vmatprep.mubr.bf16.mxu0 0
      %372 = vmatmul.mubr.bf16.gmra.mrb[0].mxu0 %v301
      %v373 = vpop.f32.mrb[0].mxu0
      %v374 = vadd.f32 0.0, %v373
      %v375 = vpop.f32.mrb[0].mxu0
      %v376 = vpop.f32.mrb[0].mxu0
      %v377 = vadd.f32 0.0, %v376
      %v378 = vpop.f32.mrb[0].mxu0
      %379 = vmatprep.mubr.bf16.mxu0 0
      %380 = vmatmul.mubr.bf16.gmra.mrb[0].mxu0 %v304
      %v381 = vpop.f32.mrb[0].mxu0
      %v382 = vadd.f32 0.0, %v381
      %v383 = vpop.f32.mrb[0].mxu0
      %v384 = vpop.f32.mrb[0].mxu0
      %v385 = vadd.f32 0.0, %v384
      %v386 = vpop.f32.mrb[0].mxu0
      %387 = vmatprep.mubr.bf16.mxu0 0
      %388 = vmatmul.mubr.bf16.gmra.mrb[0].mxu0 %v307
      %v389 = vpop.f32.mrb[0].mxu0
      %v390 = vadd.f32 0.0, %v389
      %v391 = vpop.f32.mrb[0].mxu0
      %v392 = vpop.f32.mrb[0].mxu0
      %v393 = vadd.f32 0.0, %v392
      %v394 = vpop.f32.mrb[0].mxu0
      %395 = vmatprep.mubr.bf16.mxu0 0
      %396 = vmatmul.mubr.bf16.gmra.mrb[0].mxu0 %v310
      %v397 = vpop.f32.mrb[0].mxu0
      %v398 = vadd.f32 0.0, %v397
      %v399 = vpop.f32.mrb[0].mxu0
      %v400 = vpop.f32.mrb[0].mxu0
      %v401 = vadd.f32 0.0, %v400
      %v402 = vpop.f32.mrb[0].mxu0
      %403 = vmatprep.mubr.bf16.mxu0 0
      %404 = vmatmul.mubr.bf16.gmra.mrb[0].mxu0 %v313
      %v405 = vpop.f32.mrb[0].mxu0
      %v406 = vadd.f32 0.0, %v405
      %v407 = vpop.f32.mrb[0].mxu0
      %v408 = vpop.f32.mrb[0].mxu0
      %v409 = vadd.f32 0.0, %v408
      %v410 = vpop.f32.mrb[0].mxu0
      %411 = vdwg.mxu0
      %v412 = vld [vmem:[%s2] sm:$0x1]
      %v414 = vlaneseq
      %v415 = vshrl.u32 %v414, 7
      %v416 = vsub.s32 0, %v415
      %v417 = vrot.slane %v412, %v416
      %v419 = vmul.f32 %v350, %v417
      %v420 = vmul.f32 %v353, %v417
      %v421 = vmul.f32 %v358, %v417
      %v422 = vmul.f32 %v361, %v417
      %v423 = vmul.f32 %v366, %v417
      %v424 = vmul.f32 %v369, %v417
      %v425 = vmul.f32 %v374, %v417
      %v426 = vmul.f32 %v377, %v417
      %v427 = vmul.f32 %v382, %v417
      %v428 = vmul.f32 %v385, %v417
      %v429 = vmul.f32 %v390, %v417
      %v430 = vmul.f32 %v393, %v417
      %v431 = vmul.f32 %v398, %v417
      %v432 = vmul.f32 %v401, %v417
      %v433 = vmul.f32 %v406, %v417
      %v434 = vmul.f32 %v409, %v417
      %v435 = vld [vmem:[%s3] sm:$0x1]
      %v437 = vlaneseq
      %v438 = vshrl.u32 %v437, 7
      %v439 = vsub.s32 0, %v438
      %v440 = vrot.slane %v435, %v439
      %v442 = vadd.f32 %v419, %v440
      %v443 = vadd.f32 %v420, %v440
      %v444 = vadd.f32 %v421, %v440
      %v445 = vadd.f32 %v422, %v440
      %v446 = vadd.f32 %v423, %v440
      %v447 = vadd.f32 %v424, %v440
      %v448 = vadd.f32 %v425, %v440
      %v449 = vadd.f32 %v426, %v440
      %v450 = vadd.f32 %v427, %v440
      %v451 = vadd.f32 %v428, %v440
      %v452 = vadd.f32 %v429, %v440
      %v453 = vadd.f32 %v430, %v440
      %v454 = vadd.f32 %v431, %v440
      %v455 = vadd.f32 %v432, %v440
      %v456 = vadd.f32 %v433, %v440
      %v457 = vadd.f32 %v434, %v440
      %v458 = vmax.f32 %v442, 0.0
      %v459 = vmax.f32 %v443, 0.0
      %v460 = vmax.f32 %v444, 0.0
      %v461 = vmax.f32 %v445, 0.0
      %v462 = vmax.f32 %v446, 0.0
      %v463 = vmax.f32 %v447, 0.0
      %v464 = vmax.f32 %v448, 0.0
      %v465 = vmax.f32 %v449, 0.0
      %v466 = vmax.f32 %v450, 0.0
      %v467 = vmax.f32 %v451, 0.0
      %v468 = vmax.f32 %v452, 0.0
      %v469 = vmax.f32 %v453, 0.0
      %v470 = vmax.f32 %v454, 0.0
      %v471 = vmax.f32 %v455, 0.0
      %v472 = vmax.f32 %v456, 0.0
      %v473 = vmax.f32 %v457, 0.0
      %v474 = vpack.c.bf16 %v459, %v458
      %v475 = vpack.c.bf16 %v461, %v460
      %v476 = vpack.c.bf16 %v463, %v462
      %v477 = vpack.c.bf16 %v465, %v464
      %v478 = vpack.c.bf16 %v467, %v466
      %v479 = vpack.c.bf16 %v469, %v468
      %v480 = vpack.c.bf16 %v471, %v470
      %v481 = vpack.c.bf16 %v473, %v472
      %v490 = vunpack.c.l.b16 %v474
      %v491 = vunpack.c.h.b16 %v474
      %v492 = vunpack.c.l.b16 %v475
      %v493 = vunpack.c.h.b16 %v475
      %v494 = vunpack.c.l.b16 %v476
      %v495 = vunpack.c.h.b16 %v476
      %v496 = vunpack.c.l.b16 %v477
      %v497 = vunpack.c.h.b16 %v477
      %v498 = vunpack.c.l.b16 %v478
      %v499 = vunpack.c.h.b16 %v478
      %v500 = vunpack.c.l.b16 %v479
      %v501 = vunpack.c.h.b16 %v479
      %v502 = vunpack.c.l.b16 %v480
      %v503 = vunpack.c.h.b16 %v480
      %v504 = vunpack.c.l.b16 %v481
      %v505 = vunpack.c.h.b16 %v481
      %v506 = vpack.c.b16 %v490, %v490
      %v507 = vpack.c.b16 %v491, %v491
      %v508 = vpack.c.b16 %v492, %v492
      %v509 = vpack.c.b16 %v493, %v493
      %v510 = vpack.c.b16 %v494, %v494
      %v511 = vpack.c.b16 %v495, %v495
      %v512 = vpack.c.b16 %v496, %v496
      %v513 = vpack.c.b16 %v497, %v497
      %v514 = vpack.c.b16 %v498, %v498
      %v515 = vpack.c.b16 %v499, %v499
      %v516 = vpack.c.b16 %v500, %v500
      %v517 = vpack.c.b16 %v501, %v501
      %v518 = vpack.c.b16 %v502, %v502
      %v519 = vpack.c.b16 %v503, %v503
      %v520 = vpack.c.b16 %v504, %v504
      %v521 = vpack.c.b16 %v505, %v505
      %vm538 = vcmask 60416
      %539 = vst.msk [vmem:[%s199] sm:$0xf] %vm538, %v506
      %540 = vst.msk [vmem:[%s199 + $0x4] sm:$0xf] %vm538, %v507
      %541 = vst.msk [vmem:[%s199 + $0x8] sm:$0xf] %vm538, %v508
      %542 = vst.msk [vmem:[%s199 + $0xc] sm:$0xf] %vm538, %v509
      %543 = vst.msk [vmem:[%s199 + $0x10] sm:$0xf] %vm538, %v510
      %544 = vst.msk [vmem:[%s199 + $0x14] sm:$0xf] %vm538, %v511
      %545 = vst.msk [vmem:[%s199 + $0x18] sm:$0xf] %vm538, %v512
      %546 = vst.msk [vmem:[%s199 + $0x1c] sm:$0xf] %vm538, %v513
      %547 = vst.msk [vmem:[%s199 + $0x20] sm:$0xf] %vm538, %v514
      %548 = vst.msk [vmem:[%s199 + $0x24] sm:$0xf] %vm538, %v515
      %549 = vst.msk [vmem:[%s199 + $0x28] sm:$0xf] %vm538, %v516
      %550 = vst.msk [vmem:[%s199 + $0x2c] sm:$0xf] %vm538, %v517
      %551 = vst.msk [vmem:[%s199 + $0x30] sm:$0xf] %vm538, %v518
      %552 = vst.msk [vmem:[%s199 + $0x34] sm:$0xf] %vm538, %v519
      %553 = vst.msk [vmem:[%s199 + $0x38] sm:$0xf] %vm538, %v520
      %554 = vst.msk [vmem:[%s199 + $0x3c] sm:$0xf] %vm538, %v521
      %s555 = smul.u32 16, %s15
      %p556 = scmp.lt.s32.totalorder %s555, 63
      %s557 = scalar_select %p556, %s555, 63
      %s558 = smul.addr %s557, 4
      %s559 = scalar_lea.vmem %s4, %s558
      // Predicated region
      $region37: #{_lambda_.32} parent=35 // pred_check
        %p560 = pneg %p122
      $region38: #{_lambda_.32} parent=35 // pred_check_branch
        %562 = sbr.rel (%p560) target = $region40
      $region39: #{_lambda_.32} parent=35 // pred_region
        %s563 = smul.u32 16, %s15
      $region40: #{_lambda_.32} parent=35 // pred_fallthru
        _
    $region36: #{_lambda_.32} parent=5 // pred_fallthru
      _
    %p564 = scmp.le.s32.totalorder 2, %s10
    // Predicated region
    $region41: #{_lambda_.32} parent=5 // pred_check
      %p565 = pneg %p564
    $region42: #{_lambda_.32} parent=5 // pred_check_branch
      %567 = sbr.rel (%p565) target = $region44
    $region43: #{_lambda_.32} parent=5 // pred_region
      %s568 = ssub.s32 %s10, 2
      // Predicated region
      $region45: #{_lambda_.32} parent=43 // pred_check
        %p569 = pneg %p128
      $region46: #{_lambda_.32} parent=43 // pred_check_branch
        %571 = sbr.rel (%p569) target = $region48
      $region47: #{_lambda_.32} parent=43 // pred_region
        %s572 = smul.u32 16, %s16
        %p573 = scmp.lt.s32.totalorder %s572, 63
        %s574 = scalar_select %p573, %s572, 63
        %s575 = smul.addr %s574, 4
        %s576 = scalar_lea.vmem %s4, %s575
      $region48: #{_lambda_.32} parent=43 // pred_fallthru
        _
    $region44: #{_lambda_.32} parent=5 // pred_fallthru
      _
  $region6: #{_lambda_.32} parent=0 // loop_footer
    %s14 = sadd.s32 1, %s10
  $region7: #{_lambda_.32} parent=0 // loop_footer_branch
    %9 = sbr.rel target = $region3
  $region8: #{_lambda_.32} parent=0 // loop_exit
    _

// kernel: _lambda_.30
$region0: #{_lambda_.30}
  #allocation0 [shape = 'u32[]', space=smem, size = 0x4, offset = 0x4, fixed_abs, tag = 'smem constant byte address 0x4 - core index']
  #allocation1 [shape = 'u32[144,128]{1,0:T(1,128)}', space=vmem, size = 0x12000, scoped, tag = 'internal scratch']
  %s0 = inlined_call_operand.vmem [shape: bf16[512,576], index: 0, kind: input, shape index: {}]
  %s1 = inlined_call_operand.vmem [shape: bf16[576,64], index: 1, kind: input, shape index: {}]
  %s2 = inlined_call_operand.vmem [shape: f32[1,64], index: 2, kind: input, shape index: {}]
  %s3 = inlined_call_operand.vmem [shape: f32[1,64], index: 3, kind: input, shape index: {}]
  %s4 = inlined_call_operand.vmem [shape: bf16[512,64], index: 4, kind: output, shape index: {}]
  %s5 = sld [smem:[#allocation0]]
  $region49: #{_lambda_.30} parent=0
    _
  %s7 = ssub.s32 1, %s5
  %s8 = scalar_select 0, %s7, %s5
  loop: start=0, step=1, limit=6
  $region2: #{_lambda_.30} parent=0 // loop_pre_header
    _
  $region3: #{_lambda_.30} parent=0 // loop_header
    %s10 = sphi 0, %s14
    %p11 = scmp.ge.s32.totalorder %s10, 6
    %s20 = sphi 0, %s22
    %s23 = sphi 0, %s20
    %s24 = sphi 0, %s23
    %s40 = sphi 0, %s24
    %s44 = sphi 0, %s44
    %s46 = sphi 0, %s44
    %s47 = sphi 0, %s46
    %s61 = sphi 0, %s47
    %s65 = sphi 0, %s65
    %s67 = sphi 0, %s65
    %s68 = sphi 0, %s67
    %s82 = sphi 0, %s68
    %s86 = sphi 0, %s86
    %s88 = sphi 0, %s86
    %s89 = sphi 0, %s88
    %s103 = sphi 0, %s89
    %s109 = sphi 0, %s111
    %s112 = sphi 0, %s109
    %s113 = sphi 0, %s112
    %s129 = sphi 0, %s113
  $region4: #{_lambda_.30} parent=0 // loop_header_branch
    %13 = sbr.rel (%p11) target = $region8
  $region5: #{_lambda_.30} parent=0 // loop_body
    %s15 = ssub.s32 %s10, 1
    %s16 = ssub.s32 %s10, 2
    %s17 = sadd.s32 %s10, 1
    %s18 = ssub.s32 %s10, %s17
    %p19 = scmp.eq.s32.totalorder %s18, 0
    %s21 = sadd.s32 %s20, 1
    %s22 = scalar_select %p19, %s20, %s21
    %p25 = pneg %p19
    %p26 = scmp.eq.s32.totalorder %s10, 3
    %p27 = por %p25, %p26
    %p28 = scmp.ne.s32.totalorder %s20, %s23
    %p29 = scmp.eq.s32.totalorder %s10, 0
    %p30 = por %p28, %p29
    %p31 = scmp.ne.s32.totalorder %s20, %s23
    %p32 = scmp.eq.s32.totalorder %s15, 3
    %p33 = por %p31, %p32
    %p34 = scmp.ne.s32.totalorder %s23, %s24
    %p35 = scmp.eq.s32.totalorder %s15, 0
    %p36 = por %p34, %p35
    %p37 = scmp.ne.s32.totalorder %s23, %s24
    %p38 = scmp.eq.s32.totalorder %s16, 3
    %p39 = por %p37, %p38
    %p41 = scmp.ne.s32.totalorder %s24, %s40
    %p42 = scmp.eq.s32.totalorder %s16, 0
    %p43 = por %p41, %p42
    %s45 = sadd.s32 %s44, 1
    %p48 = scmp.eq.s32.totalorder %s10, 3
    %p49 = scmp.ne.s32.totalorder %s44, %s46
    %p50 = scmp.eq.s32.totalorder %s10, 0
    %p51 = por %p49, %p50
    %p52 = scmp.ne.s32.totalorder %s44, %s46
    %p53 = scmp.eq.s32.totalorder %s15, 3
    %p54 = por %p52, %p53
    %p55 = scmp.ne.s32.totalorder %s46, %s47
    %p56 = scmp.eq.s32.totalorder %s15, 0
    %p57 = por %p55, %p56
    %p58 = scmp.ne.s32.totalorder %s46, %s47
    %p59 = scmp.eq.s32.totalorder %s16, 3
    %p60 = por %p58, %p59
    %p62 = scmp.ne.s32.totalorder %s47, %s61
    %p63 = scmp.eq.s32.totalorder %s16, 0
    %p64 = por %p62, %p63
    %s66 = sadd.s32 %s65, 1
    %p69 = scmp.eq.s32.totalorder %s10, 3
    %p70 = scmp.ne.s32.totalorder %s65, %s67
    %p71 = scmp.eq.s32.totalorder %s10, 0
    %p72 = por %p70, %p71
    %p73 = scmp.ne.s32.totalorder %s65, %s67
    %p74 = scmp.eq.s32.totalorder %s15, 3
    %p75 = por %p73, %p74
    %p76 = scmp.ne.s32.totalorder %s67, %s68
    %p77 = scmp.eq.s32.totalorder %s15, 0
    %p78 = por %p76, %p77
    %p79 = scmp.ne.s32.totalorder %s67, %s68
    %p80 = scmp.eq.s32.totalorder %s16, 3
    %p81 = por %p79, %p80
    %p83 = scmp.ne.s32.totalorder %s68, %s82
    %p84 = scmp.eq.s32.totalorder %s16, 0
    %p85 = por %p83, %p84
    %s87 = sadd.s32 %s86, 1
    %p90 = scmp.eq.s32.totalorder %s10, 3
    %p91 = scmp.ne.s32.totalorder %s86, %s88
    %p92 = scmp.eq.s32.totalorder %s10, 0
    %p93 = por %p91, %p92
    %p94 = scmp.ne.s32.totalorder %s86, %s88
    %p95 = scmp.eq.s32.totalorder %s15, 3
    %p96 = por %p94, %p95
    %p97 = scmp.ne.s32.totalorder %s88, %s89
    %p98 = scmp.eq.s32.totalorder %s15, 0
    %p99 = por %p97, %p98
    %p100 = scmp.ne.s32.totalorder %s88, %s89
    %p101 = scmp.eq.s32.totalorder %s16, 3
    %p102 = por %p100, %p101
    %p104 = scmp.ne.s32.totalorder %s89, %s103
    %p105 = scmp.eq.s32.totalorder %s16, 0
    %p106 = por %p104, %p105
    %s107 = ssub.s32 %s10, %s17
    %p108 = scmp.eq.s32.totalorder %s107, 0
    %s110 = sadd.s32 %s109, 1
    %s111 = scalar_select %p108, %s109, %s110
    %p114 = pneg %p108
    %p115 = scmp.eq.s32.totalorder %s10, 3
    %p116 = por %p114, %p115
    %p117 = scmp.ne.s32.totalorder %s109, %s112
    %p118 = scmp.eq.s32.totalorder %s10, 0
    %p119 = por %p117, %p118
    %p120 = scmp.ne.s32.totalorder %s109, %s112
    %p121 = scmp.eq.s32.totalorder %s15, 3
    %p122 = por %p120, %p121
    %p123 = scmp.ne.s32.totalorder %s112, %s113
    %p124 = scmp.eq.s32.totalorder %s15, 0
    %p125 = por %p123, %p124
    %p126 = scmp.ne.s32.totalorder %s112, %s113
    %p127 = scmp.eq.s32.totalorder %s16, 3
    %p128 = por %p126, %p127
    %p130 = scmp.ne.s32.totalorder %s113, %s129
    %p131 = scmp.eq.s32.totalorder %s16, 0
    %p132 = por %p130, %p131
    %p133 = scmp.le.s32.totalorder 1, %s10
    %p134 = scmp.lt.s32.totalorder %s10, 5
    %p135 = pnand %p133, %p134
    %p136 = pneg %p135
    // Predicated region
    $region9: #{_lambda_.30} parent=5 // pred_check
      _
    $region10: #{_lambda_.30} parent=5 // pred_check_branch
      %138 = sbr.rel (%p135) target = $region12
    $region11: #{_lambda_.30} parent=5 // pred_region
      %s139 = ssub.s32 %s10, 1
      // Predicated region
      $region13: #{_lambda_.30} parent=11 // pred_check
        %p140 = pneg %p57
      $region14: #{_lambda_.30} parent=11 // pred_check_branch
        %142 = sbr.rel (%p140) target = $region16
      $region15: #{_lambda_.30} parent=11 // pred_region
        _
      $region16: #{_lambda_.30} parent=11 // pred_fallthru
        _
      // Predicated region
      $region17: #{_lambda_.30} parent=11 // pred_check
        %p143 = pneg %p78
      $region18: #{_lambda_.30} parent=11 // pred_check_branch
        %145 = sbr.rel (%p143) target = $region20
      $region19: #{_lambda_.30} parent=11 // pred_region
        _
      $region20: #{_lambda_.30} parent=11 // pred_fallthru
        _
      // Predicated region
      $region21: #{_lambda_.30} parent=11 // pred_check
        %p146 = pneg %p99
      $region22: #{_lambda_.30} parent=11 // pred_check_branch
        %148 = sbr.rel (%p146) target = $region24
      $region23: #{_lambda_.30} parent=11 // pred_region
        _
      $region24: #{_lambda_.30} parent=11 // pred_fallthru
        _
    $region12: #{_lambda_.30} parent=5 // pred_fallthru
      _
    %p149 = scmp.lt.s32.totalorder %s10, 4
    // Predicated region
    $region25: #{_lambda_.30} parent=5 // pred_check
      %p150 = pneg %p149
    $region26: #{_lambda_.30} parent=5 // pred_check_branch
      %152 = sbr.rel (%p150) target = $region28
    $region27: #{_lambda_.30} parent=5 // pred_region
      // Predicated region
      $region29: #{_lambda_.30} parent=27 // pred_check
        %p153 = pneg %p30
      $region30: #{_lambda_.30} parent=27 // pred_check_branch
        %155 = sbr.rel (%p153) target = $region32
      $region31: #{_lambda_.30} parent=27 // pred_region
        %s156 = smul.u32 16, %s10
        %p157 = scmp.lt.s32.totalorder %s156, 63
        %s158 = scalar_select %p157, %s156, 63
        %s159 = smul.addr %s158, 5
        %s160 = smul.addr %s159, 4
        %s161 = scalar_lea.vmem %s0, %s160
        %s162 = smul.u32 16, %s10
      $region32: #{_lambda_.30} parent=27 // pred_fallthru
        _
    $region28: #{_lambda_.30} parent=5 // pred_fallthru
      _
    %p163 = scmp.le.s32.totalorder 1, %s10
    %p164 = scmp.lt.s32.totalorder %s10, 5
    %p165 = pnand %p163, %p164
    %p166 = pneg %p165
    // Predicated region
    $region33: #{_lambda_.30} parent=5 // pred_check
      _
    $region34: #{_lambda_.30} parent=5 // pred_check_branch
      %168 = sbr.rel (%p165) target = $region36
    $region35: #{_lambda_.30} parent=5 // pred_region
      %s169 = ssub.s32 %s10, 1
      %s170 = smul.u32 16, %s15
      %p171 = scmp.lt.s32.totalorder %s170, 63
      %s172 = scalar_select %p171, %s170, 63
      %s173 = smul.addr %s172, 5
      %s174 = smul.addr %s173, 4
      %s175 = scalar_lea.vmem %s0, %s174
      %p176 = pneg %p36
      %p177 = pneg %p33
      %p178 = pneg %p57
      %p179 = pneg %p54
      %p180 = pneg %p78
      %p181 = pneg %p75
      %p182 = pneg %p99
      %p183 = pneg %p96
      %p184 = pneg %p125
      %p185 = pneg %p122
      %s186 = smul.u32 16, %s15
      %p187 = scmp.lt.s32.totalorder %s186, 63
      %s188 = scalar_select %p187, %s186, 63
      %s189 = smul.addr %s188, 4
      %s190 = scalar_lea.vmem %s4, %s189
      %s191 = smul.u32 16, %s15
      %p192 = scmp.lt.s32.totalorder %s191, 63
      %s193 = scalar_select %p192, %s191, 63
      %s194 = smul.addr %s193, 5
      %s195 = smul.addr %s194, 4
      %s196 = scalar_lea.vmem %s0, %s195
      %s197 = smul.u32 16, %s15
      %s198 = smul.u32 16, %s15
      %p199 = scmp.lt.s32.totalorder %s198, 63
      %s200 = scalar_select %p199, %s198, 63
      %s201 = smul.addr %s200, 4
      %s202 = scalar_lea.vmem %s4, %s201
      %s203 = smul.u32 16, %s15
      %v205 = vld [vmem:[%s196] sm:$0xff]
      %v206 = vld [vmem:[%s196 + $0x8] sm:$0xff]
      %v207 = vld [vmem:[%s196 + $0x10] sm:$0xf]
      %v208 = vld [vmem:[%s196 + $0x14] sm:$0xff]
      %v209 = vld [vmem:[%s196 + $0x1c] sm:$0xff]
      %v210 = vld [vmem:[%s196 + $0x24] sm:$0xf]
      %v211 = vld [vmem:[%s196 + $0x28] sm:$0xff]
      %v212 = vld [vmem:[%s196 + $0x30] sm:$0xff]
      %v213 = vld [vmem:[%s196 + $0x38] sm:$0xf]
      %v214 = vld [vmem:[%s196 + $0x3c] sm:$0xff]
      %v215 = vld [vmem:[%s196 + $0x44] sm:$0xff]
      %v216 = vld [vmem:[%s196 + $0x4c] sm:$0xf]
      %v217 = vld [vmem:[%s196 + $0x50] sm:$0xff]
      %v218 = vld [vmem:[%s196 + $0x58] sm:$0xff]
      %v219 = vld [vmem:[%s196 + $0x60] sm:$0xf]
      %v220 = vld [vmem:[%s196 + $0x64] sm:$0xff]
      %v221 = vld [vmem:[%s196 + $0x6c] sm:$0xff]
      %v222 = vld [vmem:[%s196 + $0x74] sm:$0xf]
      %v223 = vld [vmem:[%s196 + $0x78] sm:$0xff]
      %v224 = vld [vmem:[%s196 + $0x80] sm:$0xff]
      %v225 = vld [vmem:[%s196 + $0x88] sm:$0xf]
      %v226 = vld [vmem:[%s196 + $0x8c] sm:$0xff]
      %v227 = vld [vmem:[%s196 + $0x94] sm:$0xff]
      %v228 = vld [vmem:[%s196 + $0x9c] sm:$0xf]
      %v229 = vld [vmem:[%s196 + $0xa0] sm:$0xff]
      %v230 = vld [vmem:[%s196 + $0xa8] sm:$0xff]
      %v231 = vld [vmem:[%s196 + $0xb0] sm:$0xf]
      %v232 = vld [vmem:[%s196 + $0xb4] sm:$0xff]
      %v233 = vld [vmem:[%s196 + $0xbc] sm:$0xff]
      %v234 = vld [vmem:[%s196 + $0xc4] sm:$0xf]
      %v235 = vld [vmem:[%s196 + $0xc8] sm:$0xff]
      %v236 = vld [vmem:[%s196 + $0xd0] sm:$0xff]
      %v237 = vld [vmem:[%s196 + $0xd8] sm:$0xf]
      %v238 = vld [vmem:[%s196 + $0xdc] sm:$0xff]
      %v239 = vld [vmem:[%s196 + $0xe4] sm:$0xff]
      %v240 = vld [vmem:[%s196 + $0xec] sm:$0xf]
      %v241 = vld [vmem:[%s196 + $0xf0] sm:$0xff]
      %v242 = vld [vmem:[%s196 + $0xf8] sm:$0xff]
      %v243 = vld [vmem:[%s196 + $0x100] sm:$0xf]
      %v244 = vld [vmem:[%s196 + $0x104] sm:$0xff]
      %v245 = vld [vmem:[%s196 + $0x10c] sm:$0xff]
      %v246 = vld [vmem:[%s196 + $0x114] sm:$0xf]
      %v247 = vld [vmem:[%s196 + $0x118] sm:$0xff]
      %v248 = vld [vmem:[%s196 + $0x120] sm:$0xff]
      %v249 = vld [vmem:[%s196 + $0x128] sm:$0xf]
      %v250 = vld [vmem:[%s196 + $0x12c] sm:$0xff]
      %v251 = vld [vmem:[%s196 + $0x134] sm:$0xff]
      %v252 = vld [vmem:[%s196 + $0x13c] sm:$0xf]
      %v253 = vld [vmem:[%s1] sm:$0xf]
      %v254 = vld [vmem:[%s1 + $0x4] sm:$0xf]
      %v255 = vld [vmem:[%s1 + $0x8] sm:$0xf]
      %v256 = vld [vmem:[%s1 + $0xc] sm:$0xf]
      %v257 = vld [vmem:[%s1 + $0x10] sm:$0xf]
      %v258 = vld [vmem:[%s1 + $0x14] sm:$0xf]
      %v259 = vld [vmem:[%s1 + $0x18] sm:$0xf]
      %v260 = vld [vmem:[%s1 + $0x1c] sm:$0xf]
      %v261 = vld [vmem:[%s1 + $0x20] sm:$0xf]
      %v262 = vld [vmem:[%s1 + $0x24] sm:$0xf]
      %v263 = vld [vmem:[%s1 + $0x28] sm:$0xf]
      %v264 = vld [vmem:[%s1 + $0x2c] sm:$0xf]
      %v265 = vld [vmem:[%s1 + $0x30] sm:$0xf]
      %v266 = vld [vmem:[%s1 + $0x34] sm:$0xf]
      %v267 = vld [vmem:[%s1 + $0x38] sm:$0xf]
      %v268 = vld [vmem:[%s1 + $0x3c] sm:$0xf]
      %v269 = vld [vmem:[%s1 + $0x40] sm:$0xf]
      %v270 = vld [vmem:[%s1 + $0x44] sm:$0xf]
      %v271 = vld [vmem:[%s1 + $0x48] sm:$0xf]
      %v272 = vld [vmem:[%s1 + $0x4c] sm:$0xf]
      %v273 = vld [vmem:[%s1 + $0x50] sm:$0xf]
      %v274 = vld [vmem:[%s1 + $0x54] sm:$0xf]
      %v275 = vld [vmem:[%s1 + $0x58] sm:$0xf]
      %v276 = vld [vmem:[%s1 + $0x5c] sm:$0xf]
      %v277 = vld [vmem:[%s1 + $0x60] sm:$0xf]
      %v278 = vld [vmem:[%s1 + $0x64] sm:$0xf]
      %v279 = vld [vmem:[%s1 + $0x68] sm:$0xf]
      %v280 = vld [vmem:[%s1 + $0x6c] sm:$0xf]
      %v281 = vld [vmem:[%s1 + $0x70] sm:$0xf]
      %v282 = vld [vmem:[%s1 + $0x74] sm:$0xf]
      %v283 = vld [vmem:[%s1 + $0x78] sm:$0xf]
      %v284 = vld [vmem:[%s1 + $0x7c] sm:$0xf]
      %v285 = vld [vmem:[%s1 + $0x80] sm:$0xf]
      %v286 = vld [vmem:[%s1 + $0x84] sm:$0xf]
      %v287 = vld [vmem:[%s1 + $0x88] sm:$0xf]
      %v288 = vld [vmem:[%s1 + $0x8c] sm:$0xf]
      %v289 = vld [vmem:[%s1 + $0x90] sm:$0xf]
      %v290 = vld [vmem:[%s1 + $0x94] sm:$0xf]
      %v291 = vld [vmem:[%s1 + $0x98] sm:$0xf]
      %v292 = vld [vmem:[%s1 + $0x9c] sm:$0xf]
      %v293 = vld [vmem:[%s1 + $0xa0] sm:$0xf]
      %v294 = vld [vmem:[%s1 + $0xa4] sm:$0xf]
      %v295 = vld [vmem:[%s1 + $0xa8] sm:$0xf]
      %v296 = vld [vmem:[%s1 + $0xac] sm:$0xf]
      %v297 = vld [vmem:[%s1 + $0xb0] sm:$0xf]
      %v298 = vld [vmem:[%s1 + $0xb4] sm:$0xf]
      %v299 = vld [vmem:[%s1 + $0xb8] sm:$0xf]
      %v300 = vld [vmem:[%s1 + $0xbc] sm:$0xf]
      %v301 = vld [vmem:[%s1 + $0xc0] sm:$0xf]
      %v302 = vld [vmem:[%s1 + $0xc4] sm:$0xf]
      %v303 = vld [vmem:[%s1 + $0xc8] sm:$0xf]
      %v304 = vld [vmem:[%s1 + $0xcc] sm:$0xf]
      %v305 = vld [vmem:[%s1 + $0xd0] sm:$0xf]
      %v306 = vld [vmem:[%s1 + $0xd4] sm:$0xf]
      %v307 = vld [vmem:[%s1 + $0xd8] sm:$0xf]
      %v308 = vld [vmem:[%s1 + $0xdc] sm:$0xf]
      %v309 = vld [vmem:[%s1 + $0xe0] sm:$0xf]
      %v310 = vld [vmem:[%s1 + $0xe4] sm:$0xf]
      %v311 = vld [vmem:[%s1 + $0xe8] sm:$0xf]
      %v312 = vld [vmem:[%s1 + $0xec] sm:$0xf]
      %v313 = vld [vmem:[%s1 + $0xf0] sm:$0xf]
      %v314 = vld [vmem:[%s1 + $0xf4] sm:$0xf]
      %v315 = vld [vmem:[%s1 + $0xf8] sm:$0xf]
      %v316 = vld [vmem:[%s1 + $0xfc] sm:$0xf]
      %v317 = vld [vmem:[%s1 + $0x100] sm:$0xf]
      %v318 = vld [vmem:[%s1 + $0x104] sm:$0xf]
      %v319 = vld [vmem:[%s1 + $0x108] sm:$0xf]
      %v320 = vld [vmem:[%s1 + $0x10c] sm:$0xf]
      %v321 = vld [vmem:[%s1 + $0x110] sm:$0xf]
      %v322 = vld [vmem:[%s1 + $0x114] sm:$0xf]
      %v323 = vld [vmem:[%s1 + $0x118] sm:$0xf]
      %v324 = vld [vmem:[%s1 + $0x11c] sm:$0xf]
      %v373 = vunpack.c.l.b16 %v205
      %v374 = vunpack.c.h.b16 %v205
      %v375 = vunpack.c.l.b16 %v206
      %v376 = vunpack.c.h.b16 %v206
      %v377 = vunpack.c.l.b16 %v207
      %v378 = vunpack.c.l.b16 %v208
      %v379 = vunpack.c.h.b16 %v208
      %v380 = vunpack.c.l.b16 %v209
      %v381 = vunpack.c.h.b16 %v209
      %v382 = vunpack.c.l.b16 %v210
      %v383 = vunpack.c.l.b16 %v211
      %v384 = vunpack.c.h.b16 %v211
      %v385 = vunpack.c.l.b16 %v212
      %v386 = vunpack.c.h.b16 %v212
      %v387 = vunpack.c.l.b16 %v213
      %v388 = vunpack.c.l.b16 %v214
      %v389 = vunpack.c.h.b16 %v214
      %v390 = vunpack.c.l.b16 %v215
      %v391 = vunpack.c.h.b16 %v215
      %v392 = vunpack.c.l.b16 %v216
      %v393 = vunpack.c.l.b16 %v217
      %v394 = vunpack.c.h.b16 %v217
      %v395 = vunpack.c.l.b16 %v218
      %v396 = vunpack.c.h.b16 %v218
      %v397 = vunpack.c.l.b16 %v219
      %v398 = vunpack.c.l.b16 %v220
      %v399 = vunpack.c.h.b16 %v220
      %v400 = vunpack.c.l.b16 %v221
      %v401 = vunpack.c.h.b16 %v221
      %v402 = vunpack.c.l.b16 %v222
      %v403 = vunpack.c.l.b16 %v223
      %v404 = vunpack.c.h.b16 %v223
      %v405 = vunpack.c.l.b16 %v224
      %v406 = vunpack.c.h.b16 %v224
      %v407 = vunpack.c.l.b16 %v225
      %v408 = vunpack.c.l.b16 %v226
      %v409 = vunpack.c.h.b16 %v226
      %v410 = vunpack.c.l.b16 %v227
      %v411 = vunpack.c.h.b16 %v227
      %v412 = vunpack.c.l.b16 %v228
      %v413 = vunpack.c.l.b16 %v229
      %v414 = vunpack.c.h.b16 %v229
      %v415 = vunpack.c.l.b16 %v230
      %v416 = vunpack.c.h.b16 %v230
      %v417 = vunpack.c.l.b16 %v231
      %v418 = vunpack.c.l.b16 %v232
      %v419 = vunpack.c.h.b16 %v232
      %v420 = vunpack.c.l.b16 %v233
      %v421 = vunpack.c.h.b16 %v233
      %v422 = vunpack.c.l.b16 %v234
      %v423 = vunpack.c.l.b16 %v235
      %v424 = vunpack.c.h.b16 %v235
      %v425 = vunpack.c.l.b16 %v236
      %v426 = vunpack.c.h.b16 %v236
      %v427 = vunpack.c.l.b16 %v237
      %v428 = vunpack.c.l.b16 %v238
      %v429 = vunpack.c.h.b16 %v238
      %v430 = vunpack.c.l.b16 %v239
      %v431 = vunpack.c.h.b16 %v239
      %v432 = vunpack.c.l.b16 %v240
      %v433 = vunpack.c.l.b16 %v241
      %v434 = vunpack.c.h.b16 %v241
      %v435 = vunpack.c.l.b16 %v242
      %v436 = vunpack.c.h.b16 %v242
      %v437 = vunpack.c.l.b16 %v243
      %v438 = vunpack.c.l.b16 %v244
      %v439 = vunpack.c.h.b16 %v244
      %v440 = vunpack.c.l.b16 %v245
      %v441 = vunpack.c.h.b16 %v245
      %v442 = vunpack.c.l.b16 %v246
      %v443 = vunpack.c.l.b16 %v247
      %v444 = vunpack.c.h.b16 %v247
      %v445 = vunpack.c.l.b16 %v248
      %v446 = vunpack.c.h.b16 %v248
      %v447 = vunpack.c.l.b16 %v249
      %v448 = vunpack.c.l.b16 %v250
      %v449 = vunpack.c.h.b16 %v250
      %v450 = vunpack.c.l.b16 %v251
      %v451 = vunpack.c.h.b16 %v251
      %v452 = vunpack.c.l.b16 %v252
      %v453 = vpack.c.b16 %v378, %v373
      %v454 = vpack.c.b16 %v379, %v374
      %v455 = vpack.c.b16 %v380, %v375
      %v456 = vpack.c.b16 %v381, %v376
      %v457 = vpack.c.b16 %v382, %v377
      %v458 = vpack.c.b16 %v388, %v383
      %v459 = vpack.c.b16 %v389, %v384
      %v460 = vpack.c.b16 %v390, %v385
      %v461 = vpack.c.b16 %v391, %v386
      %v462 = vpack.c.b16 %v392, %v387
      %v463 = vpack.c.b16 %v398, %v393
      %v464 = vpack.c.b16 %v399, %v394
      %v465 = vpack.c.b16 %v400, %v395
      %v466 = vpack.c.b16 %v401, %v396
      %v467 = vpack.c.b16 %v402, %v397
      %v468 = vpack.c.b16 %v408, %v403
      %v469 = vpack.c.b16 %v409, %v404
      %v470 = vpack.c.b16 %v410, %v405
      %v471 = vpack.c.b16 %v411, %v406
      %v472 = vpack.c.b16 %v412, %v407
      %v473 = vpack.c.b16 %v418, %v413
      %v474 = vpack.c.b16 %v419, %v414
      %v475 = vpack.c.b16 %v420, %v415
      %v476 = vpack.c.b16 %v421, %v416
      %v477 = vpack.c.b16 %v422, %v417
      %v478 = vpack.c.b16 %v428, %v423
      %v479 = vpack.c.b16 %v429, %v424
      %v480 = vpack.c.b16 %v430, %v425
      %v481 = vpack.c.b16 %v431, %v426
      %v482 = vpack.c.b16 %v432, %v427
      %v483 = vpack.c.b16 %v438, %v433
      %v484 = vpack.c.b16 %v439, %v434
      %v485 = vpack.c.b16 %v440, %v435
      %v486 = vpack.c.b16 %v441, %v436
      %v487 = vpack.c.b16 %v442, %v437
      %v488 = vpack.c.b16 %v448, %v443
      %v489 = vpack.c.b16 %v449, %v444
      %v490 = vpack.c.b16 %v450, %v445
      %v491 = vpack.c.b16 %v451, %v446
      %v492 = vpack.c.b16 %v452, %v447
      %v597 = vunpack.c.l.b16 %v253
      %v598 = vunpack.c.l.b16 %v254
      %v599 = vunpack.c.l.b16 %v255
      %v600 = vunpack.c.l.b16 %v256
      %v601 = vunpack.c.l.b16 %v257
      %v602 = vunpack.c.l.b16 %v258
      %v603 = vunpack.c.l.b16 %v259
      %v604 = vunpack.c.l.b16 %v260
      %v605 = vunpack.c.l.b16 %v261
      %v606 = vunpack.c.l.b16 %v262
      %v607 = vunpack.c.l.b16 %v263
      %v608 = vunpack.c.l.b16 %v264
      %v609 = vunpack.c.l.b16 %v265
      %v610 = vunpack.c.l.b16 %v266
      %v611 = vunpack.c.l.b16 %v267
      %v612 = vunpack.c.l.b16 %v268
      %v613 = vunpack.c.l.b16 %v269
      %v614 = vunpack.c.l.b16 %v270
      %v615 = vunpack.c.l.b16 %v271
      %v616 = vunpack.c.l.b16 %v272
      %v617 = vunpack.c.l.b16 %v273
      %v618 = vunpack.c.l.b16 %v274
      %v619 = vunpack.c.l.b16 %v275
      %v620 = vunpack.c.l.b16 %v276
      %v621 = vunpack.c.l.b16 %v277
      %v622 = vunpack.c.l.b16 %v278
      %v623 = vunpack.c.l.b16 %v279
      %v624 = vunpack.c.l.b16 %v280
      %v625 = vunpack.c.l.b16 %v281
      %v626 = vunpack.c.l.b16 %v282
      %v627 = vunpack.c.l.b16 %v283
      %v628 = vunpack.c.l.b16 %v284
      %v629 = vunpack.c.l.b16 %v285
      %v630 = vunpack.c.l.b16 %v286
      %v631 = vunpack.c.l.b16 %v287
      %v632 = vunpack.c.l.b16 %v288
      %v633 = vunpack.c.l.b16 %v289
      %v634 = vunpack.c.l.b16 %v290
      %v635 = vunpack.c.l.b16 %v291
      %v636 = vunpack.c.l.b16 %v292
      %v637 = vunpack.c.l.b16 %v293
      %v638 = vunpack.c.l.b16 %v294
      %v639 = vunpack.c.l.b16 %v295
      %v640 = vunpack.c.l.b16 %v296
      %v641 = vunpack.c.l.b16 %v297
      %v642 = vunpack.c.l.b16 %v298
      %v643 = vunpack.c.l.b16 %v299
      %v644 = vunpack.c.l.b16 %v300
      %v645 = vunpack.c.l.b16 %v301
      %v646 = vunpack.c.l.b16 %v302
      %v647 = vunpack.c.l.b16 %v303
      %v648 = vunpack.c.l.b16 %v304
      %v649 = vunpack.c.l.b16 %v305
      %v650 = vunpack.c.l.b16 %v306
      %v651 = vunpack.c.l.b16 %v307
      %v652 = vunpack.c.l.b16 %v308
      %v653 = vunpack.c.l.b16 %v309
      %v654 = vunpack.c.l.b16 %v310
      %v655 = vunpack.c.l.b16 %v311
      %v656 = vunpack.c.l.b16 %v312
      %v657 = vunpack.c.l.b16 %v313
      %v658 = vunpack.c.l.b16 %v314
      %v659 = vunpack.c.l.b16 %v315
      %v660 = vunpack.c.l.b16 %v316
      %v661 = vunpack.c.l.b16 %v317
      %v662 = vunpack.c.l.b16 %v318
      %v663 = vunpack.c.l.b16 %v319
      %v664 = vunpack.c.l.b16 %v320
      %v665 = vunpack.c.l.b16 %v321
      %v666 = vunpack.c.l.b16 %v322
      %v667 = vunpack.c.l.b16 %v323
      %v668 = vunpack.c.l.b16 %v324
      %v669 = vpack.c.b16 %v598, %v597
      %v670 = vpack.c.b16 %v600, %v599
      %v671 = vpack.c.b16 %v602, %v601
      %v672 = vpack.c.b16 %v604, %v603
      %v673 = vpack.c.b16 %v606, %v605
      %v674 = vpack.c.b16 %v608, %v607
      %v675 = vpack.c.b16 %v610, %v609
      %v676 = vpack.c.b16 %v612, %v611
      %v677 = vpack.c.b16 %v614, %v613
      %v678 = vpack.c.b16 %v616, %v615
      %v679 = vpack.c.b16 %v618, %v617
      %v680 = vpack.c.b16 %v620, %v619
      %v681 = vpack.c.b16 %v622, %v621
      %v682 = vpack.c.b16 %v624, %v623
      %v683 = vpack.c.b16 %v626, %v625
      %v684 = vpack.c.b16 %v628, %v627
      %v685 = vpack.c.b16 %v630, %v629
      %v686 = vpack.c.b16 %v632, %v631
      %v687 = vpack.c.b16 %v634, %v633
      %v688 = vpack.c.b16 %v636, %v635
      %v689 = vpack.c.b16 %v638, %v637
      %v690 = vpack.c.b16 %v640, %v639
      %v691 = vpack.c.b16 %v642, %v641
      %v692 = vpack.c.b16 %v644, %v643
      %v693 = vpack.c.b16 %v646, %v645
      %v694 = vpack.c.b16 %v648, %v647
      %v695 = vpack.c.b16 %v650, %v649
      %v696 = vpack.c.b16 %v652, %v651
      %v697 = vpack.c.b16 %v654, %v653
      %v698 = vpack.c.b16 %v656, %v655
      %v699 = vpack.c.b16 %v658, %v657
      %v700 = vpack.c.b16 %v660, %v659
      %v701 = vpack.c.b16 %v662, %v661
      %v702 = vpack.c.b16 %v664, %v663
      %v703 = vpack.c.b16 %v666, %v665
      %v704 = vpack.c.b16 %v668, %v667
      %vm741 = vcmask 523264
      %v743 = vsel %vm741, %v457, 0
      %v746 = vsel %vm741, %v462, 0
      %v749 = vsel %vm741, %v467, 0
      %v752 = vsel %vm741, %v472, 0
      %v755 = vsel %vm741, %v477, 0
      %v758 = vsel %vm741, %v482, 0
      %v761 = vsel %vm741, %v487, 0
      %v764 = vsel %vm741, %v492, 0
      %766 = vmatprep.subr.bf16.mxu0 0
      %767 = vmatpush1.bf16.msra.mxu0 %v669
      %768 = vmatprep.subr.bf16.mxu0 0
      %769 = vmatpush1.bf16.msra.mxu0 %v670
      %770 = vmatprep.subr.bf16.mxu0 0
      %771 = vmatpush1.bf16.msra.mxu0 %v671
      %772 = vmatprep.subr.bf16.mxu0 0
      %773 = vmatpush1.bf16.msra.mxu0 %v672
      %774 = vmatprep.subr.bf16.mxu0 0
      %775 = vmatpush1.bf16.msra.mxu0 %v673
      %776 = vmatprep.subr.bf16.mxu0 0
      %777 = vmatpush1.bf16.msra.mxu0 %v674
      %778 = vmatprep.subr.bf16.mxu0 0
      %779 = vmatpush1.bf16.msra.mxu0 %v675
      %780 = vmatprep.subr.bf16.mxu0 0
      %781 = vmatpush1.bf16.msra.mxu0 %v676
      %782 = vmatprep.subr.bf16.mxu0 0
      %783 = vmatpush1.bf16.msra.mxu0 %v677
      %784 = vmatprep.subr.bf16.mxu0 0
      %785 = vmatpush1.bf16.msra.mxu0 %v678
      %786 = vmatprep.subr.bf16.mxu0 0
      %787 = vmatpush1.bf16.msra.mxu0 %v679
      %788 = vmatprep.subr.bf16.mxu0 0
      %789 = vmatpush1.bf16.msra.mxu0 %v680
      %790 = vmatprep.subr.bf16.mxu0 0
      %791 = vmatpush1.bf16.msra.mxu0 %v681
      %792 = vmatprep.subr.bf16.mxu0 0
      %793 = vmatpush1.bf16.msra.mxu0 %v682
      %794 = vmatprep.subr.bf16.mxu0 0
      %795 = vmatpush1.bf16.msra.mxu0 %v683
      %796 = vmatprep.subr.bf16.mxu0 0
      %797 = vmatpush1.bf16.msra.mxu0 %v684
      %798 = vmatprep.mubr.bf16.mxu0 %v454
      %799 = vmatmul.mubr.bf16.gmra.mrb[0].mxu0 %v453
      %v800 = vpop.f32.mrb[0].mxu0
      %v801 = vadd.f32 0.0, %v800
      %v802 = vpop.f32.mrb[0].mxu0
      %v803 = vpop.f32.mrb[0].mxu0
      %v804 = vadd.f32 0.0, %v803
      %v805 = vpop.f32.mrb[0].mxu0
      %806 = vmatprep.mubr.bf16.mxu0 %v459
      %807 = vmatmul.mubr.bf16.gmra.mrb[0].mxu0 %v458
      %v808 = vpop.f32.mrb[0].mxu0
      %v809 = vadd.f32 0.0, %v808
      %v810 = vpop.f32.mrb[0].mxu0
      %v811 = vpop.f32.mrb[0].mxu0
      %v812 = vadd.f32 0.0, %v811
      %v813 = vpop.f32.mrb[0].mxu0
      %814 = vmatprep.mubr.bf16.mxu0 %v464
      %815 = vmatmul.mubr.bf16.gmra.mrb[0].mxu0 %v463
      %v816 = vpop.f32.mrb[0].mxu0
      %v817 = vadd.f32 0.0, %v816
      %v818 = vpop.f32.mrb[0].mxu0
      %v819 = vpop.f32.mrb[0].mxu0
      %v820 = vadd.f32 0.0, %v819
      %v821 = vpop.f32.mrb[0].mxu0
      %822 = vmatprep.mubr.bf16.mxu0 %v469
      %823 = vmatmul.mubr.bf16.gmra.mrb[0].mxu0 %v468
      %v824 = vpop.f32.mrb[0].mxu0
      %v825 = vadd.f32 0.0, %v824
      %v826 = vpop.f32.mrb[0].mxu0
      %v827 = vpop.f32.mrb[0].mxu0
      %v828 = vadd.f32 0.0, %v827
      %v829 = vpop.f32.mrb[0].mxu0
      %830 = vmatprep.mubr.bf16.mxu0 %v474
      %831 = vmatmul.mubr.bf16.gmra.mrb[0].mxu0 %v473
      %v832 = vpop.f32.mrb[0].mxu0
      %v833 = vadd.f32 0.0, %v832
      %v834 = vpop.f32.mrb[0].mxu0
      %v835 = vpop.f32.mrb[0].mxu0
      %v836 = vadd.f32 0.0, %v835
      %v837 = vpop.f32.mrb[0].mxu0
      %838 = vmatprep.mubr.bf16.mxu0 %v479
      %839 = vmatmul.mubr.bf16.gmra.mrb[0].mxu0 %v478
      %v840 = vpop.f32.mrb[0].mxu0
      %v841 = vadd.f32 0.0, %v840
      %v842 = vpop.f32.mrb[0].mxu0
      %v843 = vpop.f32.mrb[0].mxu0
      %v844 = vadd.f32 0.0, %v843
      %v845 = vpop.f32.mrb[0].mxu0
      %846 = vmatprep.mubr.bf16.mxu0 %v484
      %847 = vmatmul.mubr.bf16.gmra.mrb[0].mxu0 %v483
      %v848 = vpop.f32.mrb[0].mxu0
      %v849 = vadd.f32 0.0, %v848
      %v850 = vpop.f32.mrb[0].mxu0
      %v851 = vpop.f32.mrb[0].mxu0
      %v852 = vadd.f32 0.0, %v851
      %v853 = vpop.f32.mrb[0].mxu0
      %854 = vmatprep.mubr.bf16.mxu0 %v489
      %855 = vmatmul.mubr.bf16.gmra.mrb[0].mxu0 %v488
      %v856 = vpop.f32.mrb[0].mxu0
      %v857 = vadd.f32 0.0, %v856
      %v858 = vpop.f32.mrb[0].mxu0
      %v859 = vpop.f32.mrb[0].mxu0
      %v860 = vadd.f32 0.0, %v859
      %v861 = vpop.f32.mrb[0].mxu0
      %862 = vdwg.mxu0
      %863 = vmatprep.subr.bf16.mxu0 0
      %864 = vmatpush1.bf16.msra.mxu0 %v685
      %865 = vmatprep.subr.bf16.mxu0 0
      %866 = vmatpush1.bf16.msra.mxu0 %v686
      %867 = vmatprep.subr.bf16.mxu0 0
      %868 = vmatpush1.bf16.msra.mxu0 %v687
      %869 = vmatprep.subr.bf16.mxu0 0
      %870 = vmatpush1.bf16.msra.mxu0 %v688
      %871 = vmatprep.subr.bf16.mxu0 0
      %872 = vmatpush1.bf16.msra.mxu0 %v689
      %873 = vmatprep.subr.bf16.mxu0 0
      %874 = vmatpush1.bf16.msra.mxu0 %v690
      %875 = vmatprep.subr.bf16.mxu0 0
      %876 = vmatpush1.bf16.msra.mxu0 %v691
      %877 = vmatprep.subr.bf16.mxu0 0
      %878 = vmatpush1.bf16.msra.mxu0 %v692
      %879 = vmatprep.subr.bf16.mxu0 0
      %880 = vmatpush1.bf16.msra.mxu0 %v693
      %881 = vmatprep.subr.bf16.mxu0 0
      %882 = vmatpush1.bf16.msra.mxu0 %v694
      %883 = vmatprep.subr.bf16.mxu0 0
      %884 = vmatpush1.bf16.msra.mxu0 %v695
      %885 = vmatprep.subr.bf16.mxu0 0
      %886 = vmatpush1.bf16.msra.mxu0 %v696
      %887 = vmatprep.subr.bf16.mxu0 0
      %888 = vmatpush1.bf16.msra.mxu0 %v697
      %889 = vmatprep.subr.bf16.mxu0 0
      %890 = vmatpush1.bf16.msra.mxu0 %v698
      %891 = vmatprep.subr.bf16.mxu0 0
      %892 = vmatpush1.bf16.msra.mxu0 %v699
      %893 = vmatprep.subr.bf16.mxu0 0
      %894 = vmatpush1.bf16.msra.mxu0 %v700
      %895 = vmatprep.mubr.bf16.mxu0 %v456
      %896 = vmatmul.mubr.bf16.gmra.mrb[0].mxu0 %v455
      %v897 = vpop.f32.mrb[0].mxu0
      %v898 = vadd.f32 %v801, %v897
      %v899 = vpop.f32.mrb[0].mxu0
      %v900 = vpop.f32.mrb[0].mxu0
      %v901 = vadd.f32 %v804, %v900
      %v902 = vpop.f32.mrb[0].mxu0
      %903 = vmatprep.mubr.bf16.mxu0 %v461
      %904 = vmatmul.mubr.bf16.gmra.mrb[0].mxu0 %v460
      %v905 = vpop.f32.mrb[0].mxu0
      %v906 = vadd.f32 %v809, %v905
      %v907 = vpop.f32.mrb[0].mxu0
      %v908 = vpop.f32.mrb[0].mxu0
      %v909 = vadd.f32 %v812, %v908
      %v910 = vpop.f32.mrb[0].mxu0
      %911 = vmatprep.mubr.bf16.mxu0 %v466
      %912 = vmatmul.mubr.bf16.gmra.mrb[0].mxu0 %v465
      %v913 = vpop.f32.mrb[0].mxu0
      %v914 = vadd.f32 %v817, %v913
      %v915 = vpop.f32.mrb[0].mxu0
      %v916 = vpop.f32.mrb[0].mxu0
      %v917 = vadd.f32 %v820, %v916
      %v918 = vpop.f32.mrb[0].mxu0
      %919 = vmatprep.mubr.bf16.mxu0 %v471
      %920 = vmatmul.mubr.bf16.gmra.mrb[0].mxu0 %v470
      %v921 = vpop.f32.mrb[0].mxu0
      %v922 = vadd.f32 %v825, %v921
      %v923 = vpop.f32.mrb[0].mxu0
      %v924 = vpop.f32.mrb[0].mxu0
      %v925 = vadd.f32 %v828, %v924
      %v926 = vpop.f32.mrb[0].mxu0
      %927 = vmatprep.mubr.bf16.mxu0 %v476
      %928 = vmatmul.mubr.bf16.gmra.mrb[0].mxu0 %v475
      %v929 = vpop.f32.mrb[0].mxu0
      %v930 = vadd.f32 %v833, %v929
      %v931 = vpop.f32.mrb[0].mxu0
      %v932 = vpop.f32.mrb[0].mxu0
      %v933 = vadd.f32 %v836, %v932
      %v934 = vpop.f32.mrb[0].mxu0
      %935 = vmatprep.mubr.bf16.mxu0 %v481
      %936 = vmatmul.mubr.bf16.gmra.mrb[0].mxu0 %v480
      %v937 = vpop.f32.mrb[0].mxu0
      %v938 = vadd.f32 %v841, %v937
      %v939 = vpop.f32.mrb[0].mxu0
      %v940 = vpop.f32.mrb[0].mxu0
      %v941 = vadd.f32 %v844, %v940
      %v942 = vpop.f32.mrb[0].mxu0
      %943 = vmatprep.mubr.bf16.mxu0 %v486
      %944 = vmatmul.mubr.bf16.gmra.mrb[0].mxu0 %v485
      %v945 = vpop.f32.mrb[0].mxu0
      %v946 = vadd.f32 %v849, %v945
      %v947 = vpop.f32.mrb[0].mxu0
      %v948 = vpop.f32.mrb[0].mxu0
      %v949 = vadd.f32 %v852, %v948
      %v950 = vpop.f32.mrb[0].mxu0
      %951 = vmatprep.mubr.bf16.mxu0 %v491
      %952 = vmatmul.mubr.bf16.gmra.mrb[0].mxu0 %v490
      %v953 = vpop.f32.mrb[0].mxu0
      %v954 = vadd.f32 %v857, %v953
      %v955 = vpop.f32.mrb[0].mxu0
      %v956 = vpop.f32.mrb[0].mxu0
      %v957 = vadd.f32 %v860, %v956
      %v958 = vpop.f32.mrb[0].mxu0
      %959 = vdwg.mxu0
      %960 = vmatprep.subr.bf16.mxu0 0
      %961 = vmatpush1.bf16.msra.mxu0 %v701
      %962 = vmatprep.subr.bf16.mxu0 0
      %963 = vmatpush1.bf16.msra.mxu0 %v702
      %964 = vmatprep.subr.bf16.mxu0 0
      %965 = vmatpush1.bf16.msra.mxu0 %v703
      %966 = vmatprep.subr.bf16.mxu0 0
      %967 = vmatpush1.bf16.msra.mxu0 %v704
      %968 = vmatprep.subr.bf16.mxu0 0
      %969 = vmatpush1.bf16.msra.mxu0 0
      %970 = vmatprep.subr.bf16.mxu0 0
      %971 = vmatpush1.bf16.msra.mxu0 0
      %972 = vmatprep.subr.bf16.mxu0 0
      %973 = vmatpush1.bf16.msra.mxu0 0
      %974 = vmatprep.subr.bf16.mxu0 0
      %975 = vmatpush1.bf16.msra.mxu0 0
      %976 = vmatprep.subr.bf16.mxu0 0
      %977 = vmatpush1.bf16.msra.mxu0 0
      %978 = vmatprep.subr.bf16.mxu0 0
      %979 = vmatpush1.bf16.msra.mxu0 0
      %980 = vmatprep.subr.bf16.mxu0 0
      %981 = vmatpush1.bf16.msra.mxu0 0
      %982 = vmatprep.subr.bf16.mxu0 0
      %983 = vmatpush1.bf16.msra.mxu0 0
      %984 = vmatprep.subr.bf16.mxu0 0
      %985 = vmatpush1.bf16.msra.mxu0 0
      %986 = vmatprep.subr.bf16.mxu0 0
      %987 = vmatpush1.bf16.msra.mxu0 0
      %988 = vmatprep.subr.bf16.mxu0 0
      %989 = vmatpush1.bf16.msra.mxu0 0
      %990 = vmatprep.subr.bf16.mxu0 0
      %991 = vmatpush1.bf16.msra.mxu0 0
      %992 = vmatprep.mubr.bf16.mxu0 0
      %993 = vmatmul.mubr.bf16.gmra.mrb[0].mxu0 %v743
      %v994 = vpop.f32.mrb[0].mxu0
      %v995 = vadd.f32 %v898, %v994
      %v996 = vpop.f32.mrb[0].mxu0
      %v997 = vpop.f32.mrb[0].mxu0
      %v998 = vadd.f32 %v901, %v997
      %v999 = vpop.f32.mrb[0].mxu0
      %1000 = vmatprep.mubr.bf16.mxu0 0
      %1001 = vmatmul.mubr.bf16.gmra.mrb[0].mxu0 %v746
      %v1002 = vpop.f32.mrb[0].mxu0
      %v1003 = vadd.f32 %v906, %v1002
      %v1004 = vpop.f32.mrb[0].mxu0
      %v1005 = vpop.f32.mrb[0].mxu0
      %v1006 = vadd.f32 %v909, %v1005
      %v1007 = vpop.f32.mrb[0].mxu0
      %1008 = vmatprep.mubr.bf16.mxu0 0
      %1009 = vmatmul.mubr.bf16.gmra.mrb[0].mxu0 %v749
      %v1010 = vpop.f32.mrb[0].mxu0
      %v1011 = vadd.f32 %v914, %v1010
      %v1012 = vpop.f32.mrb[0].mxu0
      %v1013 = vpop.f32.mrb[0].mxu0
      %v1014 = vadd.f32 %v917, %v1013
      %v1015 = vpop.f32.mrb[0].mxu0
      %1016 = vmatprep.mubr.bf16.mxu0 0
      %1017 = vmatmul.mubr.bf16.gmra.mrb[0].mxu0 %v752
      %v1018 = vpop.f32.mrb[0].mxu0
      %v1019 = vadd.f32 %v922, %v1018
      %v1020 = vpop.f32.mrb[0].mxu0
      %v1021 = vpop.f32.mrb[0].mxu0
      %v1022 = vadd.f32 %v925, %v1021
      %v1023 = vpop.f32.mrb[0].mxu0
      %1024 = vmatprep.mubr.bf16.mxu0 0
      %1025 = vmatmul.mubr.bf16.gmra.mrb[0].mxu0 %v755
      %v1026 = vpop.f32.mrb[0].mxu0
      %v1027 = vadd.f32 %v930, %v1026
      %v1028 = vpop.f32.mrb[0].mxu0
      %v1029 = vpop.f32.mrb[0].mxu0
      %v1030 = vadd.f32 %v933, %v1029
      %v1031 = vpop.f32.mrb[0].mxu0
      %1032 = vmatprep.mubr.bf16.mxu0 0
      %1033 = vmatmul.mubr.bf16.gmra.mrb[0].mxu0 %v758
      %v1034 = vpop.f32.mrb[0].mxu0
      %v1035 = vadd.f32 %v938, %v1034
      %v1036 = vpop.f32.mrb[0].mxu0
      %v1037 = vpop.f32.mrb[0].mxu0
      %v1038 = vadd.f32 %v941, %v1037
      %v1039 = vpop.f32.mrb[0].mxu0
      %1040 = vmatprep.mubr.bf16.mxu0 0
      %1041 = vmatmul.mubr.bf16.gmra.mrb[0].mxu0 %v761
      %v1042 = vpop.f32.mrb[0].mxu0
      %v1043 = vadd.f32 %v946, %v1042
      %v1044 = vpop.f32.mrb[0].mxu0
      %v1045 = vpop.f32.mrb[0].mxu0
      %v1046 = vadd.f32 %v949, %v1045
      %v1047 = vpop.f32.mrb[0].mxu0
      %1048 = vmatprep.mubr.bf16.mxu0 0
      %1049 = vmatmul.mubr.bf16.gmra.mrb[0].mxu0 %v764
      %v1050 = vpop.f32.mrb[0].mxu0
      %v1051 = vadd.f32 %v954, %v1050
      %v1052 = vpop.f32.mrb[0].mxu0
      %v1053 = vpop.f32.mrb[0].mxu0
      %v1054 = vadd.f32 %v957, %v1053
      %v1055 = vpop.f32.mrb[0].mxu0
      %1056 = vdwg.mxu0
      %v1057 = vld [vmem:[%s2] sm:$0x1]
      %v1059 = vlaneseq
      %v1060 = vshrl.u32 %v1059, 7
      %v1061 = vsub.s32 0, %v1060
      %v1062 = vrot.slane %v1057, %v1061
      %v1064 = vmul.f32 %v995, %v1062
      %v1065 = vmul.f32 %v998, %v1062
      %v1066 = vmul.f32 %v1003, %v1062
      %v1067 = vmul.f32 %v1006, %v1062
      %v1068 = vmul.f32 %v1011, %v1062
      %v1069 = vmul.f32 %v1014, %v1062
      %v1070 = vmul.f32 %v1019, %v1062
      %v1071 = vmul.f32 %v1022, %v1062
      %v1072 = vmul.f32 %v1027, %v1062
      %v1073 = vmul.f32 %v1030, %v1062
      %v1074 = vmul.f32 %v1035, %v1062
      %v1075 = vmul.f32 %v1038, %v1062
      %v1076 = vmul.f32 %v1043, %v1062
      %v1077 = vmul.f32 %v1046, %v1062
      %v1078 = vmul.f32 %v1051, %v1062
      %v1079 = vmul.f32 %v1054, %v1062
      %v1080 = vld [vmem:[%s3] sm:$0x1]
      %v1082 = vlaneseq
      %v1083 = vshrl.u32 %v1082, 7
      %v1084 = vsub.s32 0, %v1083
      %v1085 = vrot.slane %v1080, %v1084
      %v1087 = vadd.f32 %v1064, %v1085
      %v1088 = vadd.f32 %v1065, %v1085
      %v1089 = vadd.f32 %v1066, %v1085
      %v1090 = vadd.f32 %v1067, %v1085
      %v1091 = vadd.f32 %v1068, %v1085
      %v1092 = vadd.f32 %v1069, %v1085
      %v1093 = vadd.f32 %v1070, %v1085
      %v1094 = vadd.f32 %v1071, %v1085
      %v1095 = vadd.f32 %v1072, %v1085
      %v1096 = vadd.f32 %v1073, %v1085
      %v1097 = vadd.f32 %v1074, %v1085
      %v1098 = vadd.f32 %v1075, %v1085
      %v1099 = vadd.f32 %v1076, %v1085
      %v1100 = vadd.f32 %v1077, %v1085
      %v1101 = vadd.f32 %v1078, %v1085
      %v1102 = vadd.f32 %v1079, %v1085
      %v1103 = vmax.f32 %v1087, 0.0
      %v1104 = vmax.f32 %v1088, 0.0
      %v1105 = vmax.f32 %v1089, 0.0
      %v1106 = vmax.f32 %v1090, 0.0
      %v1107 = vmax.f32 %v1091, 0.0
      %v1108 = vmax.f32 %v1092, 0.0
      %v1109 = vmax.f32 %v1093, 0.0
      %v1110 = vmax.f32 %v1094, 0.0
      %v1111 = vmax.f32 %v1095, 0.0
      %v1112 = vmax.f32 %v1096, 0.0
      %v1113 = vmax.f32 %v1097, 0.0
      %v1114 = vmax.f32 %v1098, 0.0
      %v1115 = vmax.f32 %v1099, 0.0
      %v1116 = vmax.f32 %v1100, 0.0
      %v1117 = vmax.f32 %v1101, 0.0
      %v1118 = vmax.f32 %v1102, 0.0
      %v1119 = vpack.c.bf16 %v1104, %v1103
      %v1120 = vpack.c.bf16 %v1106, %v1105
      %v1121 = vpack.c.bf16 %v1108, %v1107
      %v1122 = vpack.c.bf16 %v1110, %v1109
      %v1123 = vpack.c.bf16 %v1112, %v1111
      %v1124 = vpack.c.bf16 %v1114, %v1113
      %v1125 = vpack.c.bf16 %v1116, %v1115
      %v1126 = vpack.c.bf16 %v1118, %v1117
      %v1135 = vunpack.c.l.b16 %v1119
      %v1136 = vunpack.c.h.b16 %v1119
      %v1137 = vunpack.c.l.b16 %v1120
      %v1138 = vunpack.c.h.b16 %v1120
      %v1139 = vunpack.c.l.b16 %v1121
      %v1140 = vunpack.c.h.b16 %v1121
      %v1141 = vunpack.c.l.b16 %v1122
      %v1142 = vunpack.c.h.b16 %v1122
      %v1143 = vunpack.c.l.b16 %v1123
      %v1144 = vunpack.c.h.b16 %v1123
      %v1145 = vunpack.c.l.b16 %v1124
      %v1146 = vunpack.c.h.b16 %v1124
      %v1147 = vunpack.c.l.b16 %v1125
      %v1148 = vunpack.c.h.b16 %v1125
      %v1149 = vunpack.c.l.b16 %v1126
      %v1150 = vunpack.c.h.b16 %v1126
      %v1151 = vpack.c.b16 %v1135, %v1135
      %v1152 = vpack.c.b16 %v1136, %v1136
      %v1153 = vpack.c.b16 %v1137, %v1137
      %v1154 = vpack.c.b16 %v1138, %v1138
      %v1155 = vpack.c.b16 %v1139, %v1139
      %v1156 = vpack.c.b16 %v1140, %v1140
      %v1157 = vpack.c.b16 %v1141, %v1141
      %v1158 = vpack.c.b16 %v1142, %v1142
      %v1159 = vpack.c.b16 %v1143, %v1143
      %v1160 = vpack.c.b16 %v1144, %v1144
      %v1161 = vpack.c.b16 %v1145, %v1145
      %v1162 = vpack.c.b16 %v1146, %v1146
      %v1163 = vpack.c.b16 %v1147, %v1147
      %v1164 = vpack.c.b16 %v1148, %v1148
      %v1165 = vpack.c.b16 %v1149, %v1149
      %v1166 = vpack.c.b16 %v1150, %v1150
      %vm1183 = vcmask 519168
      %1184 = vst.msk [vmem:[%s202] sm:$0xf] %vm1183, %v1151
      %1185 = vst.msk [vmem:[%s202 + $0x4] sm:$0xf] %vm1183, %v1152
      %1186 = vst.msk [vmem:[%s202 + $0x8] sm:$0xf] %vm1183, %v1153
      %1187 = vst.msk [vmem:[%s202 + $0xc] sm:$0xf] %vm1183, %v1154
      %1188 = vst.msk [vmem:[%s202 + $0x10] sm:$0xf] %vm1183, %v1155
      %1189 = vst.msk [vmem:[%s202 + $0x14] sm:$0xf] %vm1183, %v1156
      %1190 = vst.msk [vmem:[%s202 + $0x18] sm:$0xf] %vm1183, %v1157
      %1191 = vst.msk [vmem:[%s202 + $0x1c] sm:$0xf] %vm1183, %v1158
      %1192 = vst.msk [vmem:[%s202 + $0x20] sm:$0xf] %vm1183, %v1159
      %1193 = vst.msk [vmem:[%s202 + $0x24] sm:$0xf] %vm1183, %v1160
      %1194 = vst.msk [vmem:[%s202 + $0x28] sm:$0xf] %vm1183, %v1161
      %1195 = vst.msk [vmem:[%s202 + $0x2c] sm:$0xf] %vm1183, %v1162
      %1196 = vst.msk [vmem:[%s202 + $0x30] sm:$0xf] %vm1183, %v1163
      %1197 = vst.msk [vmem:[%s202 + $0x34] sm:$0xf] %vm1183, %v1164
      %1198 = vst.msk [vmem:[%s202 + $0x38] sm:$0xf] %vm1183, %v1165
      %1199 = vst.msk [vmem:[%s202 + $0x3c] sm:$0xf] %vm1183, %v1166
      %s1200 = smul.u32 16, %s15
      %p1201 = scmp.lt.s32.totalorder %s1200, 63
      %s1202 = scalar_select %p1201, %s1200, 63
      %s1203 = smul.addr %s1202, 4
      %s1204 = scalar_lea.vmem %s4, %s1203
      // Predicated region
      $region37: #{_lambda_.30} parent=35 // pred_check
        %p1205 = pneg %p122
      $region38: #{_lambda_.30} parent=35 // pred_check_branch
        %1207 = sbr.rel (%p1205) target = $region40
      $region39: #{_lambda_.30} parent=35 // pred_region
        %s1208 = smul.u32 16, %s15
      $region40: #{_lambda_.30} parent=35 // pred_fallthru
        _
    $region36: #{_lambda_.30} parent=5 // pred_fallthru
      _
    %p1209 = scmp.le.s32.totalorder 2, %s10
    // Predicated region
    $region41: #{_lambda_.30} parent=5 // pred_check
      %p1210 = pneg %p1209
    $region42: #{_lambda_.30} parent=5 // pred_check_branch
      %1212 = sbr.rel (%p1210) target = $region44
    $region43: #{_lambda_.30} parent=5 // pred_region
      %s1213 = ssub.s32 %s10, 2
      // Predicated region
      $region45: #{_lambda_.30} parent=43 // pred_check
        %p1214 = pneg %p128
      $region46: #{_lambda_.30} parent=43 // pred_check_branch
        %1216 = sbr.rel (%p1214) target = $region48
      $region47: #{_lambda_.30} parent=43 // pred_region
        %s1217 = smul.u32 16, %s16
        %p1218 = scmp.lt.s32.totalorder %s1217, 63
        %s1219 = scalar_select %p1218, %s1217, 63
        %s1220 = smul.addr %s1219, 4
        %s1221 = scalar_lea.vmem %s4, %s1220
      $region48: #{_lambda_.30} parent=43 // pred_fallthru
        _
    $region44: #{_lambda_.30} parent=5 // pred_fallthru
      _
  $region6: #{_lambda_.30} parent=0 // loop_footer
    %s14 = sadd.s32 1, %s10
  $region7: #{_lambda_.30} parent=0 // loop_footer_branch
    %9 = sbr.rel target = $region3
  $region8: #{_lambda_.30} parent=0 // loop_exit
    _

// kernel: _lambda_.33
$region0: #{_lambda_.33}
  #allocation0 [shape = 'u32[]', space=smem, size = 0x4, offset = 0x4, fixed_abs, tag = 'smem constant byte address 0x4 - core index']
  #allocation1 [shape = 'u32[144,128]{1,0:T(1,128)}', space=vmem, size = 0x12000, scoped, tag = 'internal scratch']
  %s0 = inlined_call_operand.vmem [shape: bf16[512,72], index: 0, kind: input, shape index: {}]
  %s1 = inlined_call_operand.vmem [shape: bf16[72,8], index: 1, kind: input, shape index: {}]
  %s2 = inlined_call_operand.vmem [shape: f32[1,8], index: 2, kind: input, shape index: {}]
  %s3 = inlined_call_operand.vmem [shape: f32[1,8], index: 3, kind: input, shape index: {}]
  %s4 = inlined_call_operand.vmem [shape: bf16[512,8], index: 4, kind: output, shape index: {}]
  %s5 = sld [smem:[#allocation0]]
  $region49: #{_lambda_.33} parent=0
    _
  %s7 = ssub.s32 1, %s5
  %s8 = scalar_select 0, %s7, %s5
  loop: start=0, step=1, limit=6
  $region2: #{_lambda_.33} parent=0 // loop_pre_header
    _
  $region3: #{_lambda_.33} parent=0 // loop_header
    %s10 = sphi 0, %s14
    %p11 = scmp.ge.s32.totalorder %s10, 6
    %s20 = sphi 0, %s22
    %s23 = sphi 0, %s20
    %s24 = sphi 0, %s23
    %s40 = sphi 0, %s24
    %s44 = sphi 0, %s44
    %s46 = sphi 0, %s44
    %s47 = sphi 0, %s46
    %s61 = sphi 0, %s47
    %s65 = sphi 0, %s65
    %s67 = sphi 0, %s65
    %s68 = sphi 0, %s67
    %s82 = sphi 0, %s68
    %s86 = sphi 0, %s86
    %s88 = sphi 0, %s86
    %s89 = sphi 0, %s88
    %s103 = sphi 0, %s89
    %s109 = sphi 0, %s111
    %s112 = sphi 0, %s109
    %s113 = sphi 0, %s112
    %s129 = sphi 0, %s113
  $region4: #{_lambda_.33} parent=0 // loop_header_branch
    %13 = sbr.rel (%p11) target = $region8
  $region5: #{_lambda_.33} parent=0 // loop_body
    %s15 = ssub.s32 %s10, 1
    %s16 = ssub.s32 %s10, 2
    %s17 = sadd.s32 %s10, 1
    %s18 = ssub.s32 %s10, %s17
    %p19 = scmp.eq.s32.totalorder %s18, 0
    %s21 = sadd.s32 %s20, 1
    %s22 = scalar_select %p19, %s20, %s21
    %p25 = pneg %p19
    %p26 = scmp.eq.s32.totalorder %s10, 3
    %p27 = por %p25, %p26
    %p28 = scmp.ne.s32.totalorder %s20, %s23
    %p29 = scmp.eq.s32.totalorder %s10, 0
    %p30 = por %p28, %p29
    %p31 = scmp.ne.s32.totalorder %s20, %s23
    %p32 = scmp.eq.s32.totalorder %s15, 3
    %p33 = por %p31, %p32
    %p34 = scmp.ne.s32.totalorder %s23, %s24
    %p35 = scmp.eq.s32.totalorder %s15, 0
    %p36 = por %p34, %p35
    %p37 = scmp.ne.s32.totalorder %s23, %s24
    %p38 = scmp.eq.s32.totalorder %s16, 3
    %p39 = por %p37, %p38
    %p41 = scmp.ne.s32.totalorder %s24, %s40
    %p42 = scmp.eq.s32.totalorder %s16, 0
    %p43 = por %p41, %p42
    %s45 = sadd.s32 %s44, 1
    %p48 = scmp.eq.s32.totalorder %s10, 3
    %p49 = scmp.ne.s32.totalorder %s44, %s46
    %p50 = scmp.eq.s32.totalorder %s10, 0
    %p51 = por %p49, %p50
    %p52 = scmp.ne.s32.totalorder %s44, %s46
    %p53 = scmp.eq.s32.totalorder %s15, 3
    %p54 = por %p52, %p53
    %p55 = scmp.ne.s32.totalorder %s46, %s47
    %p56 = scmp.eq.s32.totalorder %s15, 0
    %p57 = por %p55, %p56
    %p58 = scmp.ne.s32.totalorder %s46, %s47
    %p59 = scmp.eq.s32.totalorder %s16, 3
    %p60 = por %p58, %p59
    %p62 = scmp.ne.s32.totalorder %s47, %s61
    %p63 = scmp.eq.s32.totalorder %s16, 0
    %p64 = por %p62, %p63
    %s66 = sadd.s32 %s65, 1
    %p69 = scmp.eq.s32.totalorder %s10, 3
    %p70 = scmp.ne.s32.totalorder %s65, %s67
    %p71 = scmp.eq.s32.totalorder %s10, 0
    %p72 = por %p70, %p71
    %p73 = scmp.ne.s32.totalorder %s65, %s67
    %p74 = scmp.eq.s32.totalorder %s15, 3
    %p75 = por %p73, %p74
    %p76 = scmp.ne.s32.totalorder %s67, %s68
    %p77 = scmp.eq.s32.totalorder %s15, 0
    %p78 = por %p76, %p77
    %p79 = scmp.ne.s32.totalorder %s67, %s68
    %p80 = scmp.eq.s32.totalorder %s16, 3
    %p81 = por %p79, %p80
    %p83 = scmp.ne.s32.totalorder %s68, %s82
    %p84 = scmp.eq.s32.totalorder %s16, 0
    %p85 = por %p83, %p84
    %s87 = sadd.s32 %s86, 1
    %p90 = scmp.eq.s32.totalorder %s10, 3
    %p91 = scmp.ne.s32.totalorder %s86, %s88
    %p92 = scmp.eq.s32.totalorder %s10, 0
    %p93 = por %p91, %p92
    %p94 = scmp.ne.s32.totalorder %s86, %s88
    %p95 = scmp.eq.s32.totalorder %s15, 3
    %p96 = por %p94, %p95
    %p97 = scmp.ne.s32.totalorder %s88, %s89
    %p98 = scmp.eq.s32.totalorder %s15, 0
    %p99 = por %p97, %p98
    %p100 = scmp.ne.s32.totalorder %s88, %s89
    %p101 = scmp.eq.s32.totalorder %s16, 3
    %p102 = por %p100, %p101
    %p104 = scmp.ne.s32.totalorder %s89, %s103
    %p105 = scmp.eq.s32.totalorder %s16, 0
    %p106 = por %p104, %p105
    %s107 = ssub.s32 %s10, %s17
    %p108 = scmp.eq.s32.totalorder %s107, 0
    %s110 = sadd.s32 %s109, 1
    %s111 = scalar_select %p108, %s109, %s110
    %p114 = pneg %p108
    %p115 = scmp.eq.s32.totalorder %s10, 3
    %p116 = por %p114, %p115
    %p117 = scmp.ne.s32.totalorder %s109, %s112
    %p118 = scmp.eq.s32.totalorder %s10, 0
    %p119 = por %p117, %p118
    %p120 = scmp.ne.s32.totalorder %s109, %s112
    %p121 = scmp.eq.s32.totalorder %s15, 3
    %p122 = por %p120, %p121
    %p123 = scmp.ne.s32.totalorder %s112, %s113
    %p124 = scmp.eq.s32.totalorder %s15, 0
    %p125 = por %p123, %p124
    %p126 = scmp.ne.s32.totalorder %s112, %s113
    %p127 = scmp.eq.s32.totalorder %s16, 3
    %p128 = por %p126, %p127
    %p130 = scmp.ne.s32.totalorder %s113, %s129
    %p131 = scmp.eq.s32.totalorder %s16, 0
    %p132 = por %p130, %p131
    %p133 = scmp.le.s32.totalorder 1, %s10
    %p134 = scmp.lt.s32.totalorder %s10, 5
    %p135 = pnand %p133, %p134
    %p136 = pneg %p135
    // Predicated region
    $region9: #{_lambda_.33} parent=5 // pred_check
      _
    $region10: #{_lambda_.33} parent=5 // pred_check_branch
      %138 = sbr.rel (%p135) target = $region12
    $region11: #{_lambda_.33} parent=5 // pred_region
      %s139 = ssub.s32 %s10, 1
      // Predicated region
      $region13: #{_lambda_.33} parent=11 // pred_check
        %p140 = pneg %p57
      $region14: #{_lambda_.33} parent=11 // pred_check_branch
        %142 = sbr.rel (%p140) target = $region16
      $region15: #{_lambda_.33} parent=11 // pred_region
        _
      $region16: #{_lambda_.33} parent=11 // pred_fallthru
        _
      // Predicated region
      $region17: #{_lambda_.33} parent=11 // pred_check
        %p143 = pneg %p78
      $region18: #{_lambda_.33} parent=11 // pred_check_branch
        %145 = sbr.rel (%p143) target = $region20
      $region19: #{_lambda_.33} parent=11 // pred_region
        _
      $region20: #{_lambda_.33} parent=11 // pred_fallthru
        _
      // Predicated region
      $region21: #{_lambda_.33} parent=11 // pred_check
        %p146 = pneg %p99
      $region22: #{_lambda_.33} parent=11 // pred_check_branch
        %148 = sbr.rel (%p146) target = $region24
      $region23: #{_lambda_.33} parent=11 // pred_region
        _
      $region24: #{_lambda_.33} parent=11 // pred_fallthru
        _
    $region12: #{_lambda_.33} parent=5 // pred_fallthru
      _
    %p149 = scmp.lt.s32.totalorder %s10, 4
    // Predicated region
    $region25: #{_lambda_.33} parent=5 // pred_check
      %p150 = pneg %p149
    $region26: #{_lambda_.33} parent=5 // pred_check_branch
      %152 = sbr.rel (%p150) target = $region28
    $region27: #{_lambda_.33} parent=5 // pred_region
      // Predicated region
      $region29: #{_lambda_.33} parent=27 // pred_check
        %p153 = pneg %p30
      $region30: #{_lambda_.33} parent=27 // pred_check_branch
        %155 = sbr.rel (%p153) target = $region32
      $region31: #{_lambda_.33} parent=27 // pred_region
        %s156 = smul.u32 16, %s10
        %p157 = scmp.lt.s32.totalorder %s156, 63
        %s158 = scalar_select %p157, %s156, 63
        %s159 = smul.addr %s158, 4
        %s160 = scalar_lea.vmem %s0, %s159
        %s161 = smul.u32 16, %s10
      $region32: #{_lambda_.33} parent=27 // pred_fallthru
        _
    $region28: #{_lambda_.33} parent=5 // pred_fallthru
      _
    %p162 = scmp.le.s32.totalorder 1, %s10
    %p163 = scmp.lt.s32.totalorder %s10, 5
    %p164 = pnand %p162, %p163
    %p165 = pneg %p164
    // Predicated region
    $region33: #{_lambda_.33} parent=5 // pred_check
      _
    $region34: #{_lambda_.33} parent=5 // pred_check_branch
      %167 = sbr.rel (%p164) target = $region36
    $region35: #{_lambda_.33} parent=5 // pred_region
      %s168 = ssub.s32 %s10, 1
      %s169 = smul.u32 16, %s15
      %p170 = scmp.lt.s32.totalorder %s169, 63
      %s171 = scalar_select %p170, %s169, 63
      %s172 = smul.addr %s171, 4
      %s173 = scalar_lea.vmem %s0, %s172
      %p174 = pneg %p36
      %p175 = pneg %p33
      %p176 = pneg %p57
      %p177 = pneg %p54
      %p178 = pneg %p78
      %p179 = pneg %p75
      %p180 = pneg %p99
      %p181 = pneg %p96
      %p182 = pneg %p125
      %p183 = pneg %p122
      %s184 = smul.u32 16, %s15
      %p185 = scmp.lt.s32.totalorder %s184, 63
      %s186 = scalar_select %p185, %s184, 63
      %s187 = smul.addr %s186, 4
      %s188 = scalar_lea.vmem %s4, %s187
      %s189 = smul.u32 16, %s15
      %p190 = scmp.lt.s32.totalorder %s189, 63
      %s191 = scalar_select %p190, %s189, 63
      %s192 = smul.addr %s191, 4
      %s193 = scalar_lea.vmem %s0, %s192
      %s194 = smul.u32 16, %s15
      %s195 = smul.u32 16, %s15
      %p196 = scmp.lt.s32.totalorder %s195, 63
      %s197 = scalar_select %p196, %s195, 63
      %s198 = smul.addr %s197, 4
      %s199 = scalar_lea.vmem %s4, %s198
      %s200 = smul.u32 16, %s15
      %v202 = vld [vmem:[%s193] sm:$0xf]
      %v203 = vld [vmem:[%s193 + $0x4] sm:$0xf]
      %v204 = vld [vmem:[%s193 + $0x8] sm:$0xf]
      %v205 = vld [vmem:[%s193 + $0xc] sm:$0xf]
      %v206 = vld [vmem:[%s193 + $0x10] sm:$0xf]
      %v207 = vld [vmem:[%s193 + $0x14] sm:$0xf]
      %v208 = vld [vmem:[%s193 + $0x18] sm:$0xf]
      %v209 = vld [vmem:[%s193 + $0x1c] sm:$0xf]
      %v210 = vld [vmem:[%s193 + $0x20] sm:$0xf]
      %v211 = vld [vmem:[%s193 + $0x24] sm:$0xf]
      %v212 = vld [vmem:[%s193 + $0x28] sm:$0xf]
      %v213 = vld [vmem:[%s193 + $0x2c] sm:$0xf]
      %v214 = vld [vmem:[%s193 + $0x30] sm:$0xf]
      %v215 = vld [vmem:[%s193 + $0x34] sm:$0xf]
      %v216 = vld [vmem:[%s193 + $0x38] sm:$0xf]
      %v217 = vld [vmem:[%s193 + $0x3c] sm:$0xf]
      %v218 = vld [vmem:[%s1] sm:$0xf]
      %v219 = vld [vmem:[%s1 + $0x4] sm:$0xf]
      %v220 = vld [vmem:[%s1 + $0x8] sm:$0xf]
      %v221 = vld [vmem:[%s1 + $0xc] sm:$0xf]
      %v222 = vld [vmem:[%s1 + $0x10] sm:$0xf]
      %v223 = vld [vmem:[%s1 + $0x14] sm:$0xf]
      %v224 = vld [vmem:[%s1 + $0x18] sm:$0xf]
      %v225 = vld [vmem:[%s1 + $0x1c] sm:$0xf]
      %v226 = vld [vmem:[%s1 + $0x20] sm:$0xf]
      %v243 = vunpack.c.l.b16 %v202
      %v244 = vunpack.c.l.b16 %v203
      %v245 = vunpack.c.l.b16 %v204
      %v246 = vunpack.c.l.b16 %v205
      %v247 = vunpack.c.l.b16 %v206
      %v248 = vunpack.c.l.b16 %v207
      %v249 = vunpack.c.l.b16 %v208
      %v250 = vunpack.c.l.b16 %v209
      %v251 = vunpack.c.l.b16 %v210
      %v252 = vunpack.c.l.b16 %v211
      %v253 = vunpack.c.l.b16 %v212
      %v254 = vunpack.c.l.b16 %v213
      %v255 = vunpack.c.l.b16 %v214
      %v256 = vunpack.c.l.b16 %v215
      %v257 = vunpack.c.l.b16 %v216
      %v258 = vunpack.c.l.b16 %v217
      %v259 = vpack.c.b16 %v244, %v243
      %v260 = vpack.c.b16 %v246, %v245
      %v261 = vpack.c.b16 %v248, %v247
      %v262 = vpack.c.b16 %v250, %v249
      %v263 = vpack.c.b16 %v252, %v251
      %v264 = vpack.c.b16 %v254, %v253
      %v265 = vpack.c.b16 %v256, %v255
      %v266 = vpack.c.b16 %v258, %v257
      %v276 = vunpack.c.l.b16 %v218
      %v277 = vunpack.c.l.b16 %v219
      %v278 = vunpack.c.l.b16 %v220
      %v279 = vunpack.c.l.b16 %v221
      %v280 = vunpack.c.l.b16 %v222
      %v281 = vunpack.c.l.b16 %v223
      %v282 = vunpack.c.l.b16 %v224
      %v283 = vunpack.c.l.b16 %v225
      %v284 = vunpack.c.l.b16 %v226
      %v285 = vpack.c.b16 %v277, %v276
      %v286 = vpack.c.b16 %v279, %v278
      %v287 = vpack.c.b16 %v281, %v280
      %v288 = vpack.c.b16 %v283, %v282
      %v289 = vpack.c.b16 %v284, %v284
      %vm294 = vcmask 588800
      %v296 = vsel %vm294, %v259, 0
      %v299 = vsel %vm294, %v260, 0
      %v302 = vsel %vm294, %v261, 0
      %v305 = vsel %vm294, %v262, 0
      %v308 = vsel %vm294, %v263, 0
      %v311 = vsel %vm294, %v264, 0
      %v314 = vsel %vm294, %v265, 0
      %v317 = vsel %vm294, %v266, 0
      %vm319 = vcmask 1043456
      %v321 = vsel %vm319, %v289, 0
      %323 = vmatprep.subr.bf16.mxu0 0
      %324 = vmatpush1.bf16.msra.mxu0 %v285
      %325 = vmatprep.subr.bf16.mxu0 0
      %326 = vmatpush1.bf16.msra.mxu0 %v286
      %327 = vmatprep.subr.bf16.mxu0 0
      %328 = vmatpush1.bf16.msra.mxu0 %v287
      %329 = vmatprep.subr.bf16.mxu0 0
      %330 = vmatpush1.bf16.msra.mxu0 %v288
      %331 = vmatprep.subr.bf16.mxu0 0
      %332 = vmatpush1.bf16.msra.mxu0 %v321
      %333 = vmatprep.subr.bf16.mxu0 0
      %334 = vmatpush1.bf16.msra.mxu0 0
      %335 = vmatprep.subr.bf16.mxu0 0
      %336 = vmatpush1.bf16.msra.mxu0 0
      %337 = vmatprep.subr.bf16.mxu0 0
      %338 = vmatpush1.bf16.msra.mxu0 0
      %339 = vmatprep.subr.bf16.mxu0 0
      %340 = vmatpush1.bf16.msra.mxu0 0
      %341 = vmatprep.subr.bf16.mxu0 0
      %342 = vmatpush1.bf16.msra.mxu0 0
      %343 = vmatprep.subr.bf16.mxu0 0
      %344 = vmatpush1.bf16.msra.mxu0 0
      %345 = vmatprep.subr.bf16.mxu0 0
      %346 = vmatpush1.bf16.msra.mxu0 0
      %347 = vmatprep.subr.bf16.mxu0 0
      %348 = vmatpush1.bf16.msra.mxu0 0
      %349 = vmatprep.subr.bf16.mxu0 0
      %350 = vmatpush1.bf16.msra.mxu0 0
      %351 = vmatprep.subr.bf16.mxu0 0
      %352 = vmatpush1.bf16.msra.mxu0 0
      %353 = vmatprep.subr.bf16.mxu0 0
      %354 = vmatpush1.bf16.msra.mxu0 0
      %355 = vmatprep.mubr.bf16.mxu0 0
      %356 = vmatmul.mubr.bf16.gmra.mrb[0].mxu0 %v296
      %v357 = vpop.f32.mrb[0].mxu0
      %v358 = vadd.f32 0.0, %v357
      %v359 = vpop.f32.mrb[0].mxu0
      %v360 = vpop.f32.mrb[0].mxu0
      %v361 = vadd.f32 0.0, %v360
      %v362 = vpop.f32.mrb[0].mxu0
      %363 = vmatprep.mubr.bf16.mxu0 0
      %364 = vmatmul.mubr.bf16.gmra.mrb[0].mxu0 %v299
      %v365 = vpop.f32.mrb[0].mxu0
      %v366 = vadd.f32 0.0, %v365
      %v367 = vpop.f32.mrb[0].mxu0
      %v368 = vpop.f32.mrb[0].mxu0
      %v369 = vadd.f32 0.0, %v368
      %v370 = vpop.f32.mrb[0].mxu0
      %371 = vmatprep.mubr.bf16.mxu0 0
      %372 = vmatmul.mubr.bf16.gmra.mrb[0].mxu0 %v302
      %v373 = vpop.f32.mrb[0].mxu0
      %v374 = vadd.f32 0.0, %v373
      %v375 = vpop.f32.mrb[0].mxu0
      %v376 = vpop.f32.mrb[0].mxu0
      %v377 = vadd.f32 0.0, %v376
      %v378 = vpop.f32.mrb[0].mxu0
      %379 = vmatprep.mubr.bf16.mxu0 0
      %380 = vmatmul.mubr.bf16.gmra.mrb[0].mxu0 %v305
      %v381 = vpop.f32.mrb[0].mxu0
      %v382 = vadd.f32 0.0, %v381
      %v383 = vpop.f32.mrb[0].mxu0
      %v384 = vpop.f32.mrb[0].mxu0
      %v385 = vadd.f32 0.0, %v384
      %v386 = vpop.f32.mrb[0].mxu0
      %387 = vmatprep.mubr.bf16.mxu0 0
      %388 = vmatmul.mubr.bf16.gmra.mrb[0].mxu0 %v308
      %v389 = vpop.f32.mrb[0].mxu0
      %v390 = vadd.f32 0.0, %v389
      %v391 = vpop.f32.mrb[0].mxu0
      %v392 = vpop.f32.mrb[0].mxu0
      %v393 = vadd.f32 0.0, %v392
      %v394 = vpop.f32.mrb[0].mxu0
      %395 = vmatprep.mubr.bf16.mxu0 0
      %396 = vmatmul.mubr.bf16.gmra.mrb[0].mxu0 %v311
      %v397 = vpop.f32.mrb[0].mxu0
      %v398 = vadd.f32 0.0, %v397
      %v399 = vpop.f32.mrb[0].mxu0
      %v400 = vpop.f32.mrb[0].mxu0
      %v401 = vadd.f32 0.0, %v400
      %v402 = vpop.f32.mrb[0].mxu0
      %403 = vmatprep.mubr.bf16.mxu0 0
      %404 = vmatmul.mubr.bf16.gmra.mrb[0].mxu0 %v314
      %v405 = vpop.f32.mrb[0].mxu0
      %v406 = vadd.f32 0.0, %v405
      %v407 = vpop.f32.mrb[0].mxu0
      %v408 = vpop.f32.mrb[0].mxu0
      %v409 = vadd.f32 0.0, %v408
      %v410 = vpop.f32.mrb[0].mxu0
      %411 = vmatprep.mubr.bf16.mxu0 0
      %412 = vmatmul.mubr.bf16.gmra.mrb[0].mxu0 %v317
      %v413 = vpop.f32.mrb[0].mxu0
      %v414 = vadd.f32 0.0, %v413
      %v415 = vpop.f32.mrb[0].mxu0
      %v416 = vpop.f32.mrb[0].mxu0
      %v417 = vadd.f32 0.0, %v416
      %v418 = vpop.f32.mrb[0].mxu0
      %419 = vdwg.mxu0
      %v420 = vld [vmem:[%s2] sm:$0x1]
      %v422 = vlaneseq
      %v423 = vshrl.u32 %v422, 7
      %v424 = vsub.s32 0, %v423
      %v425 = vrot.slane %v420, %v424
      %v427 = vmul.f32 %v358, %v425
      %v428 = vmul.f32 %v361, %v425
      %v429 = vmul.f32 %v366, %v425
      %v430 = vmul.f32 %v369, %v425
      %v431 = vmul.f32 %v374, %v425
      %v432 = vmul.f32 %v377, %v425
      %v433 = vmul.f32 %v382, %v425
      %v434 = vmul.f32 %v385, %v425
      %v435 = vmul.f32 %v390, %v425
      %v436 = vmul.f32 %v393, %v425
      %v437 = vmul.f32 %v398, %v425
      %v438 = vmul.f32 %v401, %v425
      %v439 = vmul.f32 %v406, %v425
      %v440 = vmul.f32 %v409, %v425
      %v441 = vmul.f32 %v414, %v425
      %v442 = vmul.f32 %v417, %v425
      %v443 = vld [vmem:[%s3] sm:$0x1]
      %v445 = vlaneseq
      %v446 = vshrl.u32 %v445, 7
      %v447 = vsub.s32 0, %v446
      %v448 = vrot.slane %v443, %v447
      %v450 = vadd.f32 %v427, %v448
      %v451 = vadd.f32 %v428, %v448
      %v452 = vadd.f32 %v429, %v448
      %v453 = vadd.f32 %v430, %v448
      %v454 = vadd.f32 %v431, %v448
      %v455 = vadd.f32 %v432, %v448
      %v456 = vadd.f32 %v433, %v448
      %v457 = vadd.f32 %v434, %v448
      %v458 = vadd.f32 %v435, %v448
      %v459 = vadd.f32 %v436, %v448
      %v460 = vadd.f32 %v437, %v448
      %v461 = vadd.f32 %v438, %v448
      %v462 = vadd.f32 %v439, %v448
      %v463 = vadd.f32 %v440, %v448
      %v464 = vadd.f32 %v441, %v448
      %v465 = vadd.f32 %v442, %v448
      %v466 = vmax.f32 %v450, 0.0
      %v467 = vmax.f32 %v451, 0.0
      %v468 = vmax.f32 %v452, 0.0
      %v469 = vmax.f32 %v453, 0.0
      %v470 = vmax.f32 %v454, 0.0
      %v471 = vmax.f32 %v455, 0.0
      %v472 = vmax.f32 %v456, 0.0
      %v473 = vmax.f32 %v457, 0.0
      %v474 = vmax.f32 %v458, 0.0
      %v475 = vmax.f32 %v459, 0.0
      %v476 = vmax.f32 %v460, 0.0
      %v477 = vmax.f32 %v461, 0.0
      %v478 = vmax.f32 %v462, 0.0
      %v479 = vmax.f32 %v463, 0.0
      %v480 = vmax.f32 %v464, 0.0
      %v481 = vmax.f32 %v465, 0.0
      %v482 = vpack.c.bf16 %v467, %v466
      %v483 = vpack.c.bf16 %v469, %v468
      %v484 = vpack.c.bf16 %v471, %v470
      %v485 = vpack.c.bf16 %v473, %v472
      %v486 = vpack.c.bf16 %v475, %v474
      %v487 = vpack.c.bf16 %v477, %v476
      %v488 = vpack.c.bf16 %v479, %v478
      %v489 = vpack.c.bf16 %v481, %v480
      %v498 = vunpack.c.l.b16 %v482
      %v499 = vunpack.c.h.b16 %v482
      %v500 = vunpack.c.l.b16 %v483
      %v501 = vunpack.c.h.b16 %v483
      %v502 = vunpack.c.l.b16 %v484
      %v503 = vunpack.c.h.b16 %v484
      %v504 = vunpack.c.l.b16 %v485
      %v505 = vunpack.c.h.b16 %v485
      %v506 = vunpack.c.l.b16 %v486
      %v507 = vunpack.c.h.b16 %v486
      %v508 = vunpack.c.l.b16 %v487
      %v509 = vunpack.c.h.b16 %v487
      %v510 = vunpack.c.l.b16 %v488
      %v511 = vunpack.c.h.b16 %v488
      %v512 = vunpack.c.l.b16 %v489
      %v513 = vunpack.c.h.b16 %v489
      %v514 = vpack.c.b16 %v498, %v498
      %v515 = vpack.c.b16 %v499, %v499
      %v516 = vpack.c.b16 %v500, %v500
      %v517 = vpack.c.b16 %v501, %v501
      %v518 = vpack.c.b16 %v502, %v502
      %v519 = vpack.c.b16 %v503, %v503
      %v520 = vpack.c.b16 %v504, %v504
      %v521 = vpack.c.b16 %v505, %v505
      %v522 = vpack.c.b16 %v506, %v506
      %v523 = vpack.c.b16 %v507, %v507
      %v524 = vpack.c.b16 %v508, %v508
      %v525 = vpack.c.b16 %v509, %v509
      %v526 = vpack.c.b16 %v510, %v510
      %v527 = vpack.c.b16 %v511, %v511
      %v528 = vpack.c.b16 %v512, %v512
      %v529 = vpack.c.b16 %v513, %v513
      %vm546 = vcmask 60416
      %547 = vst.msk [vmem:[%s199] sm:$0xf] %vm546, %v514
      %548 = vst.msk [vmem:[%s199 + $0x4] sm:$0xf] %vm546, %v515
      %549 = vst.msk [vmem:[%s199 + $0x8] sm:$0xf] %vm546, %v516
      %550 = vst.msk [vmem:[%s199 + $0xc] sm:$0xf] %vm546, %v517
      %551 = vst.msk [vmem:[%s199 + $0x10] sm:$0xf] %vm546, %v518
      %552 = vst.msk [vmem:[%s199 + $0x14] sm:$0xf] %vm546, %v519
      %553 = vst.msk [vmem:[%s199 + $0x18] sm:$0xf] %vm546, %v520
      %554 = vst.msk [vmem:[%s199 + $0x1c] sm:$0xf] %vm546, %v521
      %555 = vst.msk [vmem:[%s199 + $0x20] sm:$0xf] %vm546, %v522
      %556 = vst.msk [vmem:[%s199 + $0x24] sm:$0xf] %vm546, %v523
      %557 = vst.msk [vmem:[%s199 + $0x28] sm:$0xf] %vm546, %v524
      %558 = vst.msk [vmem:[%s199 + $0x2c] sm:$0xf] %vm546, %v525
      %559 = vst.msk [vmem:[%s199 + $0x30] sm:$0xf] %vm546, %v526
      %560 = vst.msk [vmem:[%s199 + $0x34] sm:$0xf] %vm546, %v527
      %561 = vst.msk [vmem:[%s199 + $0x38] sm:$0xf] %vm546, %v528
      %562 = vst.msk [vmem:[%s199 + $0x3c] sm:$0xf] %vm546, %v529
      %s563 = smul.u32 16, %s15
      %p564 = scmp.lt.s32.totalorder %s563, 63
      %s565 = scalar_select %p564, %s563, 63
      %s566 = smul.addr %s565, 4
      %s567 = scalar_lea.vmem %s4, %s566
      // Predicated region
      $region37: #{_lambda_.33} parent=35 // pred_check
        %p568 = pneg %p122
      $region38: #{_lambda_.33} parent=35 // pred_check_branch
        %570 = sbr.rel (%p568) target = $region40
      $region39: #{_lambda_.33} parent=35 // pred_region
        %s571 = smul.u32 16, %s15
      $region40: #{_lambda_.33} parent=35 // pred_fallthru
        _
    $region36: #{_lambda_.33} parent=5 // pred_fallthru
      _
    %p572 = scmp.le.s32.totalorder 2, %s10
    // Predicated region
    $region41: #{_lambda_.33} parent=5 // pred_check
      %p573 = pneg %p572
    $region42: #{_lambda_.33} parent=5 // pred_check_branch
      %575 = sbr.rel (%p573) target = $region44
    $region43: #{_lambda_.33} parent=5 // pred_region
      %s576 = ssub.s32 %s10, 2
      // Predicated region
      $region45: #{_lambda_.33} parent=43 // pred_check
        %p577 = pneg %p128
      $region46: #{_lambda_.33} parent=43 // pred_check_branch
        %579 = sbr.rel (%p577) target = $region48
      $region47: #{_lambda_.33} parent=43 // pred_region
        %s580 = smul.u32 16, %s16
        %p581 = scmp.lt.s32.totalorder %s580, 63
        %s582 = scalar_select %p581, %s580, 63
        %s583 = smul.addr %s582, 4
        %s584 = scalar_lea.vmem %s4, %s583
      $region48: #{_lambda_.33} parent=43 // pred_fallthru
        _
    $region44: #{_lambda_.33} parent=5 // pred_fallthru
      _
  $region6: #{_lambda_.33} parent=0 // loop_footer
    %s14 = sadd.s32 1, %s10
  $region7: #{_lambda_.33} parent=0 // loop_footer_branch
    %9 = sbr.rel target = $region3
  $region8: #{_lambda_.33} parent=0 // loop_exit
    _

// kernel: _lambda_.31
$region0: #{_lambda_.31}
  #allocation0 [shape = 'u32[]', space=smem, size = 0x4, offset = 0x4, fixed_abs, tag = 'smem constant byte address 0x4 - core index']
  #allocation1 [shape = 'u32[144,128]{1,0:T(1,128)}', space=vmem, size = 0x12000, scoped, tag = 'internal scratch']
  %s0 = inlined_call_operand.vmem [shape: bf16[512,64], index: 0, kind: input, shape index: {}]
  %s1 = inlined_call_operand.vmem [shape: bf16[64,32], index: 1, kind: input, shape index: {}]
  %s2 = inlined_call_operand.vmem [shape: f32[1,32], index: 2, kind: input, shape index: {}]
  %s3 = inlined_call_operand.vmem [shape: f32[1,32], index: 3, kind: input, shape index: {}]
  %s4 = inlined_call_operand.vmem [shape: bf16[512,32], index: 4, kind: output, shape index: {}]
  %s5 = sld [smem:[#allocation0]]
  $region49: #{_lambda_.31} parent=0
    _
  %s7 = ssub.s32 1, %s5
  %s8 = scalar_select 0, %s7, %s5
  loop: start=0, step=1, limit=6
  $region2: #{_lambda_.31} parent=0 // loop_pre_header
    _
  $region3: #{_lambda_.31} parent=0 // loop_header
    %s10 = sphi 0, %s14
    %p11 = scmp.ge.s32.totalorder %s10, 6
    %s20 = sphi 0, %s22
    %s23 = sphi 0, %s20
    %s24 = sphi 0, %s23
    %s40 = sphi 0, %s24
    %s44 = sphi 0, %s44
    %s46 = sphi 0, %s44
    %s47 = sphi 0, %s46
    %s61 = sphi 0, %s47
    %s65 = sphi 0, %s65
    %s67 = sphi 0, %s65
    %s68 = sphi 0, %s67
    %s82 = sphi 0, %s68
    %s86 = sphi 0, %s86
    %s88 = sphi 0, %s86
    %s89 = sphi 0, %s88
    %s103 = sphi 0, %s89
    %s109 = sphi 0, %s111
    %s112 = sphi 0, %s109
    %s113 = sphi 0, %s112
    %s129 = sphi 0, %s113
  $region4: #{_lambda_.31} parent=0 // loop_header_branch
    %13 = sbr.rel (%p11) target = $region8
  $region5: #{_lambda_.31} parent=0 // loop_body
    %s15 = ssub.s32 %s10, 1
    %s16 = ssub.s32 %s10, 2
    %s17 = sadd.s32 %s10, 1
    %s18 = ssub.s32 %s10, %s17
    %p19 = scmp.eq.s32.totalorder %s18, 0
    %s21 = sadd.s32 %s20, 1
    %s22 = scalar_select %p19, %s20, %s21
    %p25 = pneg %p19
    %p26 = scmp.eq.s32.totalorder %s10, 3
    %p27 = por %p25, %p26
    %p28 = scmp.ne.s32.totalorder %s20, %s23
    %p29 = scmp.eq.s32.totalorder %s10, 0
    %p30 = por %p28, %p29
    %p31 = scmp.ne.s32.totalorder %s20, %s23
    %p32 = scmp.eq.s32.totalorder %s15, 3
    %p33 = por %p31, %p32
    %p34 = scmp.ne.s32.totalorder %s23, %s24
    %p35 = scmp.eq.s32.totalorder %s15, 0
    %p36 = por %p34, %p35
    %p37 = scmp.ne.s32.totalorder %s23, %s24
    %p38 = scmp.eq.s32.totalorder %s16, 3
    %p39 = por %p37, %p38
    %p41 = scmp.ne.s32.totalorder %s24, %s40
    %p42 = scmp.eq.s32.totalorder %s16, 0
    %p43 = por %p41, %p42
    %s45 = sadd.s32 %s44, 1
    %p48 = scmp.eq.s32.totalorder %s10, 3
    %p49 = scmp.ne.s32.totalorder %s44, %s46
    %p50 = scmp.eq.s32.totalorder %s10, 0
    %p51 = por %p49, %p50
    %p52 = scmp.ne.s32.totalorder %s44, %s46
    %p53 = scmp.eq.s32.totalorder %s15, 3
    %p54 = por %p52, %p53
    %p55 = scmp.ne.s32.totalorder %s46, %s47
    %p56 = scmp.eq.s32.totalorder %s15, 0
    %p57 = por %p55, %p56
    %p58 = scmp.ne.s32.totalorder %s46, %s47
    %p59 = scmp.eq.s32.totalorder %s16, 3
    %p60 = por %p58, %p59
    %p62 = scmp.ne.s32.totalorder %s47, %s61
    %p63 = scmp.eq.s32.totalorder %s16, 0
    %p64 = por %p62, %p63
    %s66 = sadd.s32 %s65, 1
    %p69 = scmp.eq.s32.totalorder %s10, 3
    %p70 = scmp.ne.s32.totalorder %s65, %s67
    %p71 = scmp.eq.s32.totalorder %s10, 0
    %p72 = por %p70, %p71
    %p73 = scmp.ne.s32.totalorder %s65, %s67
    %p74 = scmp.eq.s32.totalorder %s15, 3
    %p75 = por %p73, %p74
    %p76 = scmp.ne.s32.totalorder %s67, %s68
    %p77 = scmp.eq.s32.totalorder %s15, 0
    %p78 = por %p76, %p77
    %p79 = scmp.ne.s32.totalorder %s67, %s68
    %p80 = scmp.eq.s32.totalorder %s16, 3
    %p81 = por %p79, %p80
    %p83 = scmp.ne.s32.totalorder %s68, %s82
    %p84 = scmp.eq.s32.totalorder %s16, 0
    %p85 = por %p83, %p84
    %s87 = sadd.s32 %s86, 1
    %p90 = scmp.eq.s32.totalorder %s10, 3
    %p91 = scmp.ne.s32.totalorder %s86, %s88
    %p92 = scmp.eq.s32.totalorder %s10, 0
    %p93 = por %p91, %p92
    %p94 = scmp.ne.s32.totalorder %s86, %s88
    %p95 = scmp.eq.s32.totalorder %s15, 3
    %p96 = por %p94, %p95
    %p97 = scmp.ne.s32.totalorder %s88, %s89
    %p98 = scmp.eq.s32.totalorder %s15, 0
    %p99 = por %p97, %p98
    %p100 = scmp.ne.s32.totalorder %s88, %s89
    %p101 = scmp.eq.s32.totalorder %s16, 3
    %p102 = por %p100, %p101
    %p104 = scmp.ne.s32.totalorder %s89, %s103
    %p105 = scmp.eq.s32.totalorder %s16, 0
    %p106 = por %p104, %p105
    %s107 = ssub.s32 %s10, %s17
    %p108 = scmp.eq.s32.totalorder %s107, 0
    %s110 = sadd.s32 %s109, 1
    %s111 = scalar_select %p108, %s109, %s110
    %p114 = pneg %p108
    %p115 = scmp.eq.s32.totalorder %s10, 3
    %p116 = por %p114, %p115
    %p117 = scmp.ne.s32.totalorder %s109, %s112
    %p118 = scmp.eq.s32.totalorder %s10, 0
    %p119 = por %p117, %p118
    %p120 = scmp.ne.s32.totalorder %s109, %s112
    %p121 = scmp.eq.s32.totalorder %s15, 3
    %p122 = por %p120, %p121
    %p123 = scmp.ne.s32.totalorder %s112, %s113
    %p124 = scmp.eq.s32.totalorder %s15, 0
    %p125 = por %p123, %p124
    %p126 = scmp.ne.s32.totalorder %s112, %s113
    %p127 = scmp.eq.s32.totalorder %s16, 3
    %p128 = por %p126, %p127
    %p130 = scmp.ne.s32.totalorder %s113, %s129
    %p131 = scmp.eq.s32.totalorder %s16, 0
    %p132 = por %p130, %p131
    %p133 = scmp.le.s32.totalorder 1, %s10
    %p134 = scmp.lt.s32.totalorder %s10, 5
    %p135 = pnand %p133, %p134
    %p136 = pneg %p135
    // Predicated region
    $region9: #{_lambda_.31} parent=5 // pred_check
      _
    $region10: #{_lambda_.31} parent=5 // pred_check_branch
      %138 = sbr.rel (%p135) target = $region12
    $region11: #{_lambda_.31} parent=5 // pred_region
      %s139 = ssub.s32 %s10, 1
      // Predicated region
      $region13: #{_lambda_.31} parent=11 // pred_check
        %p140 = pneg %p57
      $region14: #{_lambda_.31} parent=11 // pred_check_branch
        %142 = sbr.rel (%p140) target = $region16
      $region15: #{_lambda_.31} parent=11 // pred_region
        _
      $region16: #{_lambda_.31} parent=11 // pred_fallthru
        _
      // Predicated region
      $region17: #{_lambda_.31} parent=11 // pred_check
        %p143 = pneg %p78
      $region18: #{_lambda_.31} parent=11 // pred_check_branch
        %145 = sbr.rel (%p143) target = $region20
      $region19: #{_lambda_.31} parent=11 // pred_region
        _
      $region20: #{_lambda_.31} parent=11 // pred_fallthru
        _
      // Predicated region
      $region21: #{_lambda_.31} parent=11 // pred_check
        %p146 = pneg %p99
      $region22: #{_lambda_.31} parent=11 // pred_check_branch
        %148 = sbr.rel (%p146) target = $region24
      $region23: #{_lambda_.31} parent=11 // pred_region
        _
      $region24: #{_lambda_.31} parent=11 // pred_fallthru
        _
    $region12: #{_lambda_.31} parent=5 // pred_fallthru
      _
    %p149 = scmp.lt.s32.totalorder %s10, 4
    // Predicated region
    $region25: #{_lambda_.31} parent=5 // pred_check
      %p150 = pneg %p149
    $region26: #{_lambda_.31} parent=5 // pred_check_branch
      %152 = sbr.rel (%p150) target = $region28
    $region27: #{_lambda_.31} parent=5 // pred_region
      // Predicated region
      $region29: #{_lambda_.31} parent=27 // pred_check
        %p153 = pneg %p30
      $region30: #{_lambda_.31} parent=27 // pred_check_branch
        %155 = sbr.rel (%p153) target = $region32
      $region31: #{_lambda_.31} parent=27 // pred_region
        %s156 = smul.u32 16, %s10
        %p157 = scmp.lt.s32.totalorder %s156, 63
        %s158 = scalar_select %p157, %s156, 63
        %s159 = smul.addr %s158, 4
        %s160 = scalar_lea.vmem %s0, %s159
        %s161 = smul.u32 16, %s10
      $region32: #{_lambda_.31} parent=27 // pred_fallthru
        _
    $region28: #{_lambda_.31} parent=5 // pred_fallthru
      _
    %p162 = scmp.le.s32.totalorder 1, %s10
    %p163 = scmp.lt.s32.totalorder %s10, 5
    %p164 = pnand %p162, %p163
    %p165 = pneg %p164
    // Predicated region
    $region33: #{_lambda_.31} parent=5 // pred_check
      _
    $region34: #{_lambda_.31} parent=5 // pred_check_branch
      %167 = sbr.rel (%p164) target = $region36
    $region35: #{_lambda_.31} parent=5 // pred_region
      %s168 = ssub.s32 %s10, 1
      %s169 = smul.u32 16, %s15
      %p170 = scmp.lt.s32.totalorder %s169, 63
      %s171 = scalar_select %p170, %s169, 63
      %s172 = smul.addr %s171, 4
      %s173 = scalar_lea.vmem %s0, %s172
      %p174 = pneg %p36
      %p175 = pneg %p33
      %p176 = pneg %p57
      %p177 = pneg %p54
      %p178 = pneg %p78
      %p179 = pneg %p75
      %p180 = pneg %p99
      %p181 = pneg %p96
      %p182 = pneg %p125
      %p183 = pneg %p122
      %s184 = smul.u32 16, %s15
      %p185 = scmp.lt.s32.totalorder %s184, 63
      %s186 = scalar_select %p185, %s184, 63
      %s187 = smul.addr %s186, 4
      %s188 = scalar_lea.vmem %s4, %s187
      %s189 = smul.u32 16, %s15
      %p190 = scmp.lt.s32.totalorder %s189, 63
      %s191 = scalar_select %p190, %s189, 63
      %s192 = smul.addr %s191, 4
      %s193 = scalar_lea.vmem %s0, %s192
      %s194 = smul.u32 16, %s15
      %s195 = smul.u32 16, %s15
      %p196 = scmp.lt.s32.totalorder %s195, 63
      %s197 = scalar_select %p196, %s195, 63
      %s198 = smul.addr %s197, 4
      %s199 = scalar_lea.vmem %s4, %s198
      %s200 = smul.u32 16, %s15
      %v202 = vld [vmem:[%s193] sm:$0xf]
      %v203 = vld [vmem:[%s193 + $0x4] sm:$0xf]
      %v204 = vld [vmem:[%s193 + $0x8] sm:$0xf]
      %v205 = vld [vmem:[%s193 + $0xc] sm:$0xf]
      %v206 = vld [vmem:[%s193 + $0x10] sm:$0xf]
      %v207 = vld [vmem:[%s193 + $0x14] sm:$0xf]
      %v208 = vld [vmem:[%s193 + $0x18] sm:$0xf]
      %v209 = vld [vmem:[%s193 + $0x1c] sm:$0xf]
      %v210 = vld [vmem:[%s193 + $0x20] sm:$0xf]
      %v211 = vld [vmem:[%s193 + $0x24] sm:$0xf]
      %v212 = vld [vmem:[%s193 + $0x28] sm:$0xf]
      %v213 = vld [vmem:[%s193 + $0x2c] sm:$0xf]
      %v214 = vld [vmem:[%s193 + $0x30] sm:$0xf]
      %v215 = vld [vmem:[%s193 + $0x34] sm:$0xf]
      %v216 = vld [vmem:[%s193 + $0x38] sm:$0xf]
      %v217 = vld [vmem:[%s193 + $0x3c] sm:$0xf]
      %v218 = vld [vmem:[%s1] sm:$0xf]
      %v219 = vld [vmem:[%s1 + $0x4] sm:$0xf]
      %v220 = vld [vmem:[%s1 + $0x8] sm:$0xf]
      %v221 = vld [vmem:[%s1 + $0xc] sm:$0xf]
      %v222 = vld [vmem:[%s1 + $0x10] sm:$0xf]
      %v223 = vld [vmem:[%s1 + $0x14] sm:$0xf]
      %v224 = vld [vmem:[%s1 + $0x18] sm:$0xf]
      %v225 = vld [vmem:[%s1 + $0x1c] sm:$0xf]
      %v242 = vunpack.c.l.b16 %v202
      %v243 = vunpack.c.l.b16 %v203
      %v244 = vunpack.c.l.b16 %v204
      %v245 = vunpack.c.l.b16 %v205
      %v246 = vunpack.c.l.b16 %v206
      %v247 = vunpack.c.l.b16 %v207
      %v248 = vunpack.c.l.b16 %v208
      %v249 = vunpack.c.l.b16 %v209
      %v250 = vunpack.c.l.b16 %v210
      %v251 = vunpack.c.l.b16 %v211
      %v252 = vunpack.c.l.b16 %v212
      %v253 = vunpack.c.l.b16 %v213
      %v254 = vunpack.c.l.b16 %v214
      %v255 = vunpack.c.l.b16 %v215
      %v256 = vunpack.c.l.b16 %v216
      %v257 = vunpack.c.l.b16 %v217
      %v258 = vpack.c.b16 %v243, %v242
      %v259 = vpack.c.b16 %v245, %v244
      %v260 = vpack.c.b16 %v247, %v246
      %v261 = vpack.c.b16 %v249, %v248
      %v262 = vpack.c.b16 %v251, %v250
      %v263 = vpack.c.b16 %v253, %v252
      %v264 = vpack.c.b16 %v255, %v254
      %v265 = vpack.c.b16 %v257, %v256
      %v274 = vunpack.c.l.b16 %v218
      %v275 = vunpack.c.l.b16 %v219
      %v276 = vunpack.c.l.b16 %v220
      %v277 = vunpack.c.l.b16 %v221
      %v278 = vunpack.c.l.b16 %v222
      %v279 = vunpack.c.l.b16 %v223
      %v280 = vunpack.c.l.b16 %v224
      %v281 = vunpack.c.l.b16 %v225
      %v282 = vpack.c.b16 %v275, %v274
      %v283 = vpack.c.b16 %v277, %v276
      %v284 = vpack.c.b16 %v279, %v278
      %v285 = vpack.c.b16 %v281, %v280
      %vm290 = vcmask 523264
      %v292 = vsel %vm290, %v258, 0
      %v295 = vsel %vm290, %v259, 0
      %v298 = vsel %vm290, %v260, 0
      %v301 = vsel %vm290, %v261, 0
      %v304 = vsel %vm290, %v262, 0
      %v307 = vsel %vm290, %v263, 0
      %v310 = vsel %vm290, %v264, 0
      %v313 = vsel %vm290, %v265, 0
      %315 = vmatprep.subr.bf16.mxu0 0
      %316 = vmatpush1.bf16.msra.mxu0 %v282
      %317 = vmatprep.subr.bf16.mxu0 0
      %318 = vmatpush1.bf16.msra.mxu0 %v283
      %319 = vmatprep.subr.bf16.mxu0 0
      %320 = vmatpush1.bf16.msra.mxu0 %v284
      %321 = vmatprep.subr.bf16.mxu0 0
      %322 = vmatpush1.bf16.msra.mxu0 %v285
      %323 = vmatprep.subr.bf16.mxu0 0
      %324 = vmatpush1.bf16.msra.mxu0 0
      %325 = vmatprep.subr.bf16.mxu0 0
      %326 = vmatpush1.bf16.msra.mxu0 0
      %327 = vmatprep.subr.bf16.mxu0 0
      %328 = vmatpush1.bf16.msra.mxu0 0
      %329 = vmatprep.subr.bf16.mxu0 0
      %330 = vmatpush1.bf16.msra.mxu0 0
      %331 = vmatprep.subr.bf16.mxu0 0
      %332 = vmatpush1.bf16.msra.mxu0 0
      %333 = vmatprep.subr.bf16.mxu0 0
      %334 = vmatpush1.bf16.msra.mxu0 0
      %335 = vmatprep.subr.bf16.mxu0 0
      %336 = vmatpush1.bf16.msra.mxu0 0
      %337 = vmatprep.subr.bf16.mxu0 0
      %338 = vmatpush1.bf16.msra.mxu0 0
      %339 = vmatprep.subr.bf16.mxu0 0
      %340 = vmatpush1.bf16.msra.mxu0 0
      %341 = vmatprep.subr.bf16.mxu0 0
      %342 = vmatpush1.bf16.msra.mxu0 0
      %343 = vmatprep.subr.bf16.mxu0 0
      %344 = vmatpush1.bf16.msra.mxu0 0
      %345 = vmatprep.subr.bf16.mxu0 0
      %346 = vmatpush1.bf16.msra.mxu0 0
      %347 = vmatprep.mubr.bf16.mxu0 0
      %348 = vmatmul.mubr.bf16.gmra.mrb[0].mxu0 %v292
      %v349 = vpop.f32.mrb[0].mxu0
      %v350 = vadd.f32 0.0, %v349
      %v351 = vpop.f32.mrb[0].mxu0
      %v352 = vpop.f32.mrb[0].mxu0
      %v353 = vadd.f32 0.0, %v352
      %v354 = vpop.f32.mrb[0].mxu0
      %355 = vmatprep.mubr.bf16.mxu0 0
      %356 = vmatmul.mubr.bf16.gmra.mrb[0].mxu0 %v295
      %v357 = vpop.f32.mrb[0].mxu0
      %v358 = vadd.f32 0.0, %v357
      %v359 = vpop.f32.mrb[0].mxu0
      %v360 = vpop.f32.mrb[0].mxu0
      %v361 = vadd.f32 0.0, %v360
      %v362 = vpop.f32.mrb[0].mxu0
      %363 = vmatprep.mubr.bf16.mxu0 0
      %364 = vmatmul.mubr.bf16.gmra.mrb[0].mxu0 %v298
      %v365 = vpop.f32.mrb[0].mxu0
      %v366 = vadd.f32 0.0, %v365
      %v367 = vpop.f32.mrb[0].mxu0
      %v368 = vpop.f32.mrb[0].mxu0
      %v369 = vadd.f32 0.0, %v368
      %v370 = vpop.f32.mrb[0].mxu0
      %371 = vmatprep.mubr.bf16.mxu0 0
      %372 = vmatmul.mubr.bf16.gmra.mrb[0].mxu0 %v301
      %v373 = vpop.f32.mrb[0].mxu0
      %v374 = vadd.f32 0.0, %v373
      %v375 = vpop.f32.mrb[0].mxu0
      %v376 = vpop.f32.mrb[0].mxu0
      %v377 = vadd.f32 0.0, %v376
      %v378 = vpop.f32.mrb[0].mxu0
      %379 = vmatprep.mubr.bf16.mxu0 0
      %380 = vmatmul.mubr.bf16.gmra.mrb[0].mxu0 %v304
      %v381 = vpop.f32.mrb[0].mxu0
      %v382 = vadd.f32 0.0, %v381
      %v383 = vpop.f32.mrb[0].mxu0
      %v384 = vpop.f32.mrb[0].mxu0
      %v385 = vadd.f32 0.0, %v384
      %v386 = vpop.f32.mrb[0].mxu0
      %387 = vmatprep.mubr.bf16.mxu0 0
      %388 = vmatmul.mubr.bf16.gmra.mrb[0].mxu0 %v307
      %v389 = vpop.f32.mrb[0].mxu0
      %v390 = vadd.f32 0.0, %v389
      %v391 = vpop.f32.mrb[0].mxu0
      %v392 = vpop.f32.mrb[0].mxu0
      %v393 = vadd.f32 0.0, %v392
      %v394 = vpop.f32.mrb[0].mxu0
      %395 = vmatprep.mubr.bf16.mxu0 0
      %396 = vmatmul.mubr.bf16.gmra.mrb[0].mxu0 %v310
      %v397 = vpop.f32.mrb[0].mxu0
      %v398 = vadd.f32 0.0, %v397
      %v399 = vpop.f32.mrb[0].mxu0
      %v400 = vpop.f32.mrb[0].mxu0
      %v401 = vadd.f32 0.0, %v400
      %v402 = vpop.f32.mrb[0].mxu0
      %403 = vmatprep.mubr.bf16.mxu0 0
      %404 = vmatmul.mubr.bf16.gmra.mrb[0].mxu0 %v313
      %v405 = vpop.f32.mrb[0].mxu0
      %v406 = vadd.f32 0.0, %v405
      %v407 = vpop.f32.mrb[0].mxu0
      %v408 = vpop.f32.mrb[0].mxu0
      %v409 = vadd.f32 0.0, %v408
      %v410 = vpop.f32.mrb[0].mxu0
      %411 = vdwg.mxu0
      %v412 = vld [vmem:[%s2] sm:$0x1]
      %v414 = vlaneseq
      %v415 = vshrl.u32 %v414, 7
      %v416 = vsub.s32 0, %v415
      %v417 = vrot.slane %v412, %v416
      %v419 = vmul.f32 %v350, %v417
      %v420 = vmul.f32 %v353, %v417
      %v421 = vmul.f32 %v358, %v417
      %v422 = vmul.f32 %v361, %v417
      %v423 = vmul.f32 %v366, %v417
      %v424 = vmul.f32 %v369, %v417
      %v425 = vmul.f32 %v374, %v417
      %v426 = vmul.f32 %v377, %v417
      %v427 = vmul.f32 %v382, %v417
      %v428 = vmul.f32 %v385, %v417
      %v429 = vmul.f32 %v390, %v417
      %v430 = vmul.f32 %v393, %v417
      %v431 = vmul.f32 %v398, %v417
      %v432 = vmul.f32 %v401, %v417
      %v433 = vmul.f32 %v406, %v417
      %v434 = vmul.f32 %v409, %v417
      %v435 = vld [vmem:[%s3] sm:$0x1]
      %v437 = vlaneseq
      %v438 = vshrl.u32 %v437, 7
      %v439 = vsub.s32 0, %v438
      %v440 = vrot.slane %v435, %v439
      %v442 = vadd.f32 %v419, %v440
      %v443 = vadd.f32 %v420, %v440
      %v444 = vadd.f32 %v421, %v440
      %v445 = vadd.f32 %v422, %v440
      %v446 = vadd.f32 %v423, %v440
      %v447 = vadd.f32 %v424, %v440
      %v448 = vadd.f32 %v425, %v440
      %v449 = vadd.f32 %v426, %v440
      %v450 = vadd.f32 %v427, %v440
      %v451 = vadd.f32 %v428, %v440
      %v452 = vadd.f32 %v429, %v440
      %v453 = vadd.f32 %v430, %v440
      %v454 = vadd.f32 %v431, %v440
      %v455 = vadd.f32 %v432, %v440
      %v456 = vadd.f32 %v433, %v440
      %v457 = vadd.f32 %v434, %v440
      %v458 = vpack.c.bf16 %v443, %v442
      %v459 = vpack.c.bf16 %v445, %v444
      %v460 = vpack.c.bf16 %v447, %v446
      %v461 = vpack.c.bf16 %v449, %v448
      %v462 = vpack.c.bf16 %v451, %v450
      %v463 = vpack.c.bf16 %v453, %v452
      %v464 = vpack.c.bf16 %v455, %v454
      %v465 = vpack.c.bf16 %v457, %v456
      %v474 = vunpack.c.l.b16 %v458
      %v475 = vunpack.c.h.b16 %v458
      %v476 = vunpack.c.l.b16 %v459
      %v477 = vunpack.c.h.b16 %v459
      %v478 = vunpack.c.l.b16 %v460
      %v479 = vunpack.c.h.b16 %v460
      %v480 = vunpack.c.l.b16 %v461
      %v481 = vunpack.c.h.b16 %v461
      %v482 = vunpack.c.l.b16 %v462
      %v483 = vunpack.c.h.b16 %v462
      %v484 = vunpack.c.l.b16 %v463
      %v485 = vunpack.c.h.b16 %v463
      %v486 = vunpack.c.l.b16 %v464
      %v487 = vunpack.c.h.b16 %v464
      %v488 = vunpack.c.l.b16 %v465
      %v489 = vunpack.c.h.b16 %v465
      %v490 = vpack.c.b16 %v474, %v474
      %v491 = vpack.c.b16 %v475, %v475
      %v492 = vpack.c.b16 %v476, %v476
      %v493 = vpack.c.b16 %v477, %v477
      %v494 = vpack.c.b16 %v478, %v478
      %v495 = vpack.c.b16 %v479, %v479
      %v496 = vpack.c.b16 %v480, %v480
      %v497 = vpack.c.b16 %v481, %v481
      %v498 = vpack.c.b16 %v482, %v482
      %v499 = vpack.c.b16 %v483, %v483
      %v500 = vpack.c.b16 %v484, %v484
      %v501 = vpack.c.b16 %v485, %v485
      %v502 = vpack.c.b16 %v486, %v486
      %v503 = vpack.c.b16 %v487, %v487
      %v504 = vpack.c.b16 %v488, %v488
      %v505 = vpack.c.b16 %v489, %v489
      %vm522 = vcmask 257024
      %523 = vst.msk [vmem:[%s199] sm:$0xf] %vm522, %v490
      %524 = vst.msk [vmem:[%s199 + $0x4] sm:$0xf] %vm522, %v491
      %525 = vst.msk [vmem:[%s199 + $0x8] sm:$0xf] %vm522, %v492
      %526 = vst.msk [vmem:[%s199 + $0xc] sm:$0xf] %vm522, %v493
      %527 = vst.msk [vmem:[%s199 + $0x10] sm:$0xf] %vm522, %v494
      %528 = vst.msk [vmem:[%s199 + $0x14] sm:$0xf] %vm522, %v495
      %529 = vst.msk [vmem:[%s199 + $0x18] sm:$0xf] %vm522, %v496
      %530 = vst.msk [vmem:[%s199 + $0x1c] sm:$0xf] %vm522, %v497
      %531 = vst.msk [vmem:[%s199 + $0x20] sm:$0xf] %vm522, %v498
      %532 = vst.msk [vmem:[%s199 + $0x24] sm:$0xf] %vm522, %v499
      %533 = vst.msk [vmem:[%s199 + $0x28] sm:$0xf] %vm522, %v500
      %534 = vst.msk [vmem:[%s199 + $0x2c] sm:$0xf] %vm522, %v501
      %535 = vst.msk [vmem:[%s199 + $0x30] sm:$0xf] %vm522, %v502
      %536 = vst.msk [vmem:[%s199 + $0x34] sm:$0xf] %vm522, %v503
      %537 = vst.msk [vmem:[%s199 + $0x38] sm:$0xf] %vm522, %v504
      %538 = vst.msk [vmem:[%s199 + $0x3c] sm:$0xf] %vm522, %v505
      %s539 = smul.u32 16, %s15
      %p540 = scmp.lt.s32.totalorder %s539, 63
      %s541 = scalar_select %p540, %s539, 63
      %s542 = smul.addr %s541, 4
      %s543 = scalar_lea.vmem %s4, %s542
      // Predicated region
      $region37: #{_lambda_.31} parent=35 // pred_check
        %p544 = pneg %p122
      $region38: #{_lambda_.31} parent=35 // pred_check_branch
        %546 = sbr.rel (%p544) target = $region40
      $region39: #{_lambda_.31} parent=35 // pred_region
        %s547 = smul.u32 16, %s15
      $region40: #{_lambda_.31} parent=35 // pred_fallthru
        _
    $region36: #{_lambda_.31} parent=5 // pred_fallthru
      _
    %p548 = scmp.le.s32.totalorder 2, %s10
    // Predicated region
    $region41: #{_lambda_.31} parent=5 // pred_check
      %p549 = pneg %p548
    $region42: #{_lambda_.31} parent=5 // pred_check_branch
      %551 = sbr.rel (%p549) target = $region44
    $region43: #{_lambda_.31} parent=5 // pred_region
      %s552 = ssub.s32 %s10, 2
      // Predicated region
      $region45: #{_lambda_.31} parent=43 // pred_check
        %p553 = pneg %p128
      $region46: #{_lambda_.31} parent=43 // pred_check_branch
        %555 = sbr.rel (%p553) target = $region48
      $region47: #{_lambda_.31} parent=43 // pred_region
        %s556 = smul.u32 16, %s16
        %p557 = scmp.lt.s32.totalorder %s556, 63
        %s558 = scalar_select %p557, %s556, 63
        %s559 = smul.addr %s558, 4
        %s560 = scalar_lea.vmem %s4, %s559
      $region48: #{_lambda_.31} parent=43 // pred_fallthru
        _
    $region44: #{_lambda_.31} parent=5 // pred_fallthru
      _
  $region6: #{_lambda_.31} parent=0 // loop_footer
    %s14 = sadd.s32 1, %s10
  $region7: #{_lambda_.31} parent=0 // loop_footer_branch
    %9 = sbr.rel target = $region3
  $region8: #{_lambda_.31} parent=0 // loop_exit
    _

// kernel: _lambda_.34
$region0: #{_lambda_.34}
  #allocation0 [shape = 'u32[]', space=smem, size = 0x4, offset = 0x4, fixed_abs, tag = 'smem constant byte address 0x4 - core index']
  #allocation1 [shape = 'u32[144,128]{1,0:T(1,128)}', space=vmem, size = 0x12000, scoped, tag = 'internal scratch']
  %s0 = inlined_call_operand.vmem [shape: bf16[512,8], index: 0, kind: input, shape index: {}]
  %s1 = inlined_call_operand.vmem [shape: bf16[8,32], index: 1, kind: input, shape index: {}]
  %s2 = inlined_call_operand.vmem [shape: f32[1,32], index: 2, kind: input, shape index: {}]
  %s3 = inlined_call_operand.vmem [shape: f32[1,32], index: 3, kind: input, shape index: {}]
  %s4 = inlined_call_operand.vmem [shape: bf16[512,32], index: 4, kind: input, shape index: {}]
  %s5 = inlined_call_operand.vmem [shape: bf16[512,32], index: 5, kind: output, shape index: {}]
  %s6 = sld [smem:[#allocation0]]
  $region53: #{_lambda_.34} parent=0
    _
  %s8 = ssub.s32 1, %s6
  %s9 = scalar_select 0, %s8, %s6
  loop: start=0, step=1, limit=6
  $region2: #{_lambda_.34} parent=0 // loop_pre_header
    _
  $region3: #{_lambda_.34} parent=0 // loop_header
    %s11 = sphi 0, %s15
    %p12 = scmp.ge.s32.totalorder %s11, 6
    %s21 = sphi 0, %s23
    %s24 = sphi 0, %s21
    %s25 = sphi 0, %s24
    %s41 = sphi 0, %s25
    %s45 = sphi 0, %s45
    %s47 = sphi 0, %s45
    %s48 = sphi 0, %s47
    %s62 = sphi 0, %s48
    %s66 = sphi 0, %s66
    %s68 = sphi 0, %s66
    %s69 = sphi 0, %s68
    %s83 = sphi 0, %s69
    %s87 = sphi 0, %s87
    %s89 = sphi 0, %s87
    %s90 = sphi 0, %s89
    %s104 = sphi 0, %s90
    %s110 = sphi 0, %s112
    %s113 = sphi 0, %s110
    %s114 = sphi 0, %s113
    %s130 = sphi 0, %s114
    %s136 = sphi 0, %s138
    %s139 = sphi 0, %s136
    %s140 = sphi 0, %s139
    %s156 = sphi 0, %s140
  $region4: #{_lambda_.34} parent=0 // loop_header_branch
    %14 = sbr.rel (%p12) target = $region8
  $region5: #{_lambda_.34} parent=0 // loop_body
    %s16 = ssub.s32 %s11, 1
    %s17 = ssub.s32 %s11, 2
    %s18 = sadd.s32 %s11, 1
    %s19 = ssub.s32 %s11, %s18
    %p20 = scmp.eq.s32.totalorder %s19, 0
    %s22 = sadd.s32 %s21, 1
    %s23 = scalar_select %p20, %s21, %s22
    %p26 = pneg %p20
    %p27 = scmp.eq.s32.totalorder %s11, 3
    %p28 = por %p26, %p27
    %p29 = scmp.ne.s32.totalorder %s21, %s24
    %p30 = scmp.eq.s32.totalorder %s11, 0
    %p31 = por %p29, %p30
    %p32 = scmp.ne.s32.totalorder %s21, %s24
    %p33 = scmp.eq.s32.totalorder %s16, 3
    %p34 = por %p32, %p33
    %p35 = scmp.ne.s32.totalorder %s24, %s25
    %p36 = scmp.eq.s32.totalorder %s16, 0
    %p37 = por %p35, %p36
    %p38 = scmp.ne.s32.totalorder %s24, %s25
    %p39 = scmp.eq.s32.totalorder %s17, 3
    %p40 = por %p38, %p39
    %p42 = scmp.ne.s32.totalorder %s25, %s41
    %p43 = scmp.eq.s32.totalorder %s17, 0
    %p44 = por %p42, %p43
    %s46 = sadd.s32 %s45, 1
    %p49 = scmp.eq.s32.totalorder %s11, 3
    %p50 = scmp.ne.s32.totalorder %s45, %s47
    %p51 = scmp.eq.s32.totalorder %s11, 0
    %p52 = por %p50, %p51
    %p53 = scmp.ne.s32.totalorder %s45, %s47
    %p54 = scmp.eq.s32.totalorder %s16, 3
    %p55 = por %p53, %p54
    %p56 = scmp.ne.s32.totalorder %s47, %s48
    %p57 = scmp.eq.s32.totalorder %s16, 0
    %p58 = por %p56, %p57
    %p59 = scmp.ne.s32.totalorder %s47, %s48
    %p60 = scmp.eq.s32.totalorder %s17, 3
    %p61 = por %p59, %p60
    %p63 = scmp.ne.s32.totalorder %s48, %s62
    %p64 = scmp.eq.s32.totalorder %s17, 0
    %p65 = por %p63, %p64
    %s67 = sadd.s32 %s66, 1
    %p70 = scmp.eq.s32.totalorder %s11, 3
    %p71 = scmp.ne.s32.totalorder %s66, %s68
    %p72 = scmp.eq.s32.totalorder %s11, 0
    %p73 = por %p71, %p72
    %p74 = scmp.ne.s32.totalorder %s66, %s68
    %p75 = scmp.eq.s32.totalorder %s16, 3
    %p76 = por %p74, %p75
    %p77 = scmp.ne.s32.totalorder %s68, %s69
    %p78 = scmp.eq.s32.totalorder %s16, 0
    %p79 = por %p77, %p78
    %p80 = scmp.ne.s32.totalorder %s68, %s69
    %p81 = scmp.eq.s32.totalorder %s17, 3
    %p82 = por %p80, %p81
    %p84 = scmp.ne.s32.totalorder %s69, %s83
    %p85 = scmp.eq.s32.totalorder %s17, 0
    %p86 = por %p84, %p85
    %s88 = sadd.s32 %s87, 1
    %p91 = scmp.eq.s32.totalorder %s11, 3
    %p92 = scmp.ne.s32.totalorder %s87, %s89
    %p93 = scmp.eq.s32.totalorder %s11, 0
    %p94 = por %p92, %p93
    %p95 = scmp.ne.s32.totalorder %s87, %s89
    %p96 = scmp.eq.s32.totalorder %s16, 3
    %p97 = por %p95, %p96
    %p98 = scmp.ne.s32.totalorder %s89, %s90
    %p99 = scmp.eq.s32.totalorder %s16, 0
    %p100 = por %p98, %p99
    %p101 = scmp.ne.s32.totalorder %s89, %s90
    %p102 = scmp.eq.s32.totalorder %s17, 3
    %p103 = por %p101, %p102
    %p105 = scmp.ne.s32.totalorder %s90, %s104
    %p106 = scmp.eq.s32.totalorder %s17, 0
    %p107 = por %p105, %p106
    %s108 = ssub.s32 %s11, %s18
    %p109 = scmp.eq.s32.totalorder %s108, 0
    %s111 = sadd.s32 %s110, 1
    %s112 = scalar_select %p109, %s110, %s111
    %p115 = pneg %p109
    %p116 = scmp.eq.s32.totalorder %s11, 3
    %p117 = por %p115, %p116
    %p118 = scmp.ne.s32.totalorder %s110, %s113
    %p119 = scmp.eq.s32.totalorder %s11, 0
    %p120 = por %p118, %p119
    %p121 = scmp.ne.s32.totalorder %s110, %s113
    %p122 = scmp.eq.s32.totalorder %s16, 3
    %p123 = por %p121, %p122
    %p124 = scmp.ne.s32.totalorder %s113, %s114
    %p125 = scmp.eq.s32.totalorder %s16, 0
    %p126 = por %p124, %p125
    %p127 = scmp.ne.s32.totalorder %s113, %s114
    %p128 = scmp.eq.s32.totalorder %s17, 3
    %p129 = por %p127, %p128
    %p131 = scmp.ne.s32.totalorder %s114, %s130
    %p132 = scmp.eq.s32.totalorder %s17, 0
    %p133 = por %p131, %p132
    %s134 = ssub.s32 %s11, %s18
    %p135 = scmp.eq.s32.totalorder %s134, 0
    %s137 = sadd.s32 %s136, 1
    %s138 = scalar_select %p135, %s136, %s137
    %p141 = pneg %p135
    %p142 = scmp.eq.s32.totalorder %s11, 3
    %p143 = por %p141, %p142
    %p144 = scmp.ne.s32.totalorder %s136, %s139
    %p145 = scmp.eq.s32.totalorder %s11, 0
    %p146 = por %p144, %p145
    %p147 = scmp.ne.s32.totalorder %s136, %s139
    %p148 = scmp.eq.s32.totalorder %s16, 3
    %p149 = por %p147, %p148
    %p150 = scmp.ne.s32.totalorder %s139, %s140
    %p151 = scmp.eq.s32.totalorder %s16, 0
    %p152 = por %p150, %p151
    %p153 = scmp.ne.s32.totalorder %s139, %s140
    %p154 = scmp.eq.s32.totalorder %s17, 3
    %p155 = por %p153, %p154
    %p157 = scmp.ne.s32.totalorder %s140, %s156
    %p158 = scmp.eq.s32.totalorder %s17, 0
    %p159 = por %p157, %p158
    %p160 = scmp.le.s32.totalorder 1, %s11
    %p161 = scmp.lt.s32.totalorder %s11, 5
    %p162 = pnand %p160, %p161
    %p163 = pneg %p162
    // Predicated region
    $region9: #{_lambda_.34} parent=5 // pred_check
      _
    $region10: #{_lambda_.34} parent=5 // pred_check_branch
      %165 = sbr.rel (%p162) target = $region12
    $region11: #{_lambda_.34} parent=5 // pred_region
      %s166 = ssub.s32 %s11, 1
      // Predicated region
      $region13: #{_lambda_.34} parent=11 // pred_check
        %p167 = pneg %p58
      $region14: #{_lambda_.34} parent=11 // pred_check_branch
        %169 = sbr.rel (%p167) target = $region16
      $region15: #{_lambda_.34} parent=11 // pred_region
        _
      $region16: #{_lambda_.34} parent=11 // pred_fallthru
        _
      // Predicated region
      $region17: #{_lambda_.34} parent=11 // pred_check
        %p170 = pneg %p79
      $region18: #{_lambda_.34} parent=11 // pred_check_branch
        %172 = sbr.rel (%p170) target = $region20
      $region19: #{_lambda_.34} parent=11 // pred_region
        _
      $region20: #{_lambda_.34} parent=11 // pred_fallthru
        _
      // Predicated region
      $region21: #{_lambda_.34} parent=11 // pred_check
        %p173 = pneg %p100
      $region22: #{_lambda_.34} parent=11 // pred_check_branch
        %175 = sbr.rel (%p173) target = $region24
      $region23: #{_lambda_.34} parent=11 // pred_region
        _
      $region24: #{_lambda_.34} parent=11 // pred_fallthru
        _
    $region12: #{_lambda_.34} parent=5 // pred_fallthru
      _
    %p176 = scmp.lt.s32.totalorder %s11, 4
    // Predicated region
    $region25: #{_lambda_.34} parent=5 // pred_check
      %p177 = pneg %p176
    $region26: #{_lambda_.34} parent=5 // pred_check_branch
      %179 = sbr.rel (%p177) target = $region28
    $region27: #{_lambda_.34} parent=5 // pred_region
      // Predicated region
      $region29: #{_lambda_.34} parent=27 // pred_check
        %p180 = pneg %p31
      $region30: #{_lambda_.34} parent=27 // pred_check_branch
        %182 = sbr.rel (%p180) target = $region32
      $region31: #{_lambda_.34} parent=27 // pred_region
        %s183 = smul.u32 16, %s11
        %p184 = scmp.lt.s32.totalorder %s183, 63
        %s185 = scalar_select %p184, %s183, 63
        %s186 = smul.addr %s185, 4
        %s187 = scalar_lea.vmem %s0, %s186
        %s188 = smul.u32 16, %s11
      $region32: #{_lambda_.34} parent=27 // pred_fallthru
        _
      // Predicated region
      $region33: #{_lambda_.34} parent=27 // pred_check
        %p189 = pneg %p120
      $region34: #{_lambda_.34} parent=27 // pred_check_branch
        %191 = sbr.rel (%p189) target = $region36
      $region35: #{_lambda_.34} parent=27 // pred_region
        %s192 = smul.u32 16, %s11
        %p193 = scmp.lt.s32.totalorder %s192, 63
        %s194 = scalar_select %p193, %s192, 63
        %s195 = smul.addr %s194, 4
        %s196 = scalar_lea.vmem %s4, %s195
        %s197 = smul.u32 16, %s11
      $region36: #{_lambda_.34} parent=27 // pred_fallthru
        _
    $region28: #{_lambda_.34} parent=5 // pred_fallthru
      _
    %p198 = scmp.le.s32.totalorder 1, %s11
    %p199 = scmp.lt.s32.totalorder %s11, 5
    %p200 = pnand %p198, %p199
    %p201 = pneg %p200
    // Predicated region
    $region37: #{_lambda_.34} parent=5 // pred_check
      _
    $region38: #{_lambda_.34} parent=5 // pred_check_branch
      %203 = sbr.rel (%p200) target = $region40
    $region39: #{_lambda_.34} parent=5 // pred_region
      %s204 = ssub.s32 %s11, 1
      %s205 = smul.u32 16, %s16
      %p206 = scmp.lt.s32.totalorder %s205, 63
      %s207 = scalar_select %p206, %s205, 63
      %s208 = smul.addr %s207, 4
      %s209 = scalar_lea.vmem %s0, %s208
      %p210 = pneg %p37
      %p211 = pneg %p34
      %p212 = pneg %p58
      %p213 = pneg %p55
      %p214 = pneg %p79
      %p215 = pneg %p76
      %p216 = pneg %p100
      %p217 = pneg %p97
      %s218 = smul.u32 16, %s16
      %p219 = scmp.lt.s32.totalorder %s218, 63
      %s220 = scalar_select %p219, %s218, 63
      %s221 = smul.addr %s220, 4
      %s222 = scalar_lea.vmem %s4, %s221
      %p223 = pneg %p126
      %p224 = pneg %p123
      %p225 = pneg %p152
      %p226 = pneg %p149
      %s227 = smul.u32 16, %s16
      %p228 = scmp.lt.s32.totalorder %s227, 63
      %s229 = scalar_select %p228, %s227, 63
      %s230 = smul.addr %s229, 4
      %s231 = scalar_lea.vmem %s5, %s230
      %s232 = smul.u32 16, %s16
      %p233 = scmp.lt.s32.totalorder %s232, 63
      %s234 = scalar_select %p233, %s232, 63
      %s235 = smul.addr %s234, 4
      %s236 = scalar_lea.vmem %s0, %s235
      %s237 = smul.u32 16, %s16
      %s238 = smul.u32 16, %s16
      %p239 = scmp.lt.s32.totalorder %s238, 63
      %s240 = scalar_select %p239, %s238, 63
      %s241 = smul.addr %s240, 4
      %s242 = scalar_lea.vmem %s4, %s241
      %s243 = smul.u32 16, %s16
      %s244 = smul.u32 16, %s16
      %p245 = scmp.lt.s32.totalorder %s244, 63
      %s246 = scalar_select %p245, %s244, 63
      %s247 = smul.addr %s246, 4
      %s248 = scalar_lea.vmem %s5, %s247
      %s249 = smul.u32 16, %s16
      %v251 = vld [vmem:[%s236] sm:$0xf]
      %v252 = vld [vmem:[%s236 + $0x4] sm:$0xf]
      %v253 = vld [vmem:[%s236 + $0x8] sm:$0xf]
      %v254 = vld [vmem:[%s236 + $0xc] sm:$0xf]
      %v255 = vld [vmem:[%s236 + $0x10] sm:$0xf]
      %v256 = vld [vmem:[%s236 + $0x14] sm:$0xf]
      %v257 = vld [vmem:[%s236 + $0x18] sm:$0xf]
      %v258 = vld [vmem:[%s236 + $0x1c] sm:$0xf]
      %v259 = vld [vmem:[%s236 + $0x20] sm:$0xf]
      %v260 = vld [vmem:[%s236 + $0x24] sm:$0xf]
      %v261 = vld [vmem:[%s236 + $0x28] sm:$0xf]
      %v262 = vld [vmem:[%s236 + $0x2c] sm:$0xf]
      %v263 = vld [vmem:[%s236 + $0x30] sm:$0xf]
      %v264 = vld [vmem:[%s236 + $0x34] sm:$0xf]
      %v265 = vld [vmem:[%s236 + $0x38] sm:$0xf]
      %v266 = vld [vmem:[%s236 + $0x3c] sm:$0xf]
      %v267 = vld [vmem:[%s1] sm:$0xf]
      %v284 = vunpack.c.l.b16 %v251
      %v285 = vunpack.c.l.b16 %v252
      %v286 = vunpack.c.l.b16 %v253
      %v287 = vunpack.c.l.b16 %v254
      %v288 = vunpack.c.l.b16 %v255
      %v289 = vunpack.c.l.b16 %v256
      %v290 = vunpack.c.l.b16 %v257
      %v291 = vunpack.c.l.b16 %v258
      %v292 = vunpack.c.l.b16 %v259
      %v293 = vunpack.c.l.b16 %v260
      %v294 = vunpack.c.l.b16 %v261
      %v295 = vunpack.c.l.b16 %v262
      %v296 = vunpack.c.l.b16 %v263
      %v297 = vunpack.c.l.b16 %v264
      %v298 = vunpack.c.l.b16 %v265
      %v299 = vunpack.c.l.b16 %v266
      %v300 = vpack.c.b16 %v285, %v284
      %v301 = vpack.c.b16 %v287, %v286
      %v302 = vpack.c.b16 %v289, %v288
      %v303 = vpack.c.b16 %v291, %v290
      %v304 = vpack.c.b16 %v293, %v292
      %v305 = vpack.c.b16 %v295, %v294
      %v306 = vpack.c.b16 %v297, %v296
      %v307 = vpack.c.b16 %v299, %v298
      %vm308 = vcmask 64512
      %v310 = vsel %vm308, %v300, 0
      %v313 = vsel %vm308, %v301, 0
      %v316 = vsel %vm308, %v302, 0
      %v319 = vsel %vm308, %v303, 0
      %v322 = vsel %vm308, %v304, 0
      %v325 = vsel %vm308, %v305, 0
      %v328 = vsel %vm308, %v306, 0
      %v331 = vsel %vm308, %v307, 0
      %vm333 = vcmask 1043456
      %v335 = vsel %vm333, %v267, 0
      %337 = vmatprep.subr.bf16.mxu0 0
      %338 = vmatpush1.bf16.msra.mxu0 %v335
      %339 = vmatprep.subr.bf16.mxu0 0
      %340 = vmatpush1.bf16.msra.mxu0 0
      %341 = vmatprep.subr.bf16.mxu0 0
      %342 = vmatpush1.bf16.msra.mxu0 0
      %343 = vmatprep.subr.bf16.mxu0 0
      %344 = vmatpush1.bf16.msra.mxu0 0
      %345 = vmatprep.subr.bf16.mxu0 0
      %346 = vmatpush1.bf16.msra.mxu0 0
      %347 = vmatprep.subr.bf16.mxu0 0
      %348 = vmatpush1.bf16.msra.mxu0 0
      %349 = vmatprep.subr.bf16.mxu0 0
      %350 = vmatpush1.bf16.msra.mxu0 0
      %351 = vmatprep.subr.bf16.mxu0 0
      %352 = vmatpush1.bf16.msra.mxu0 0
      %353 = vmatprep.subr.bf16.mxu0 0
      %354 = vmatpush1.bf16.msra.mxu0 0
      %355 = vmatprep.subr.bf16.mxu0 0
      %356 = vmatpush1.bf16.msra.mxu0 0
      %357 = vmatprep.subr.bf16.mxu0 0
      %358 = vmatpush1.bf16.msra.mxu0 0
      %359 = vmatprep.subr.bf16.mxu0 0
      %360 = vmatpush1.bf16.msra.mxu0 0
      %361 = vmatprep.subr.bf16.mxu0 0
      %362 = vmatpush1.bf16.msra.mxu0 0
      %363 = vmatprep.subr.bf16.mxu0 0
      %364 = vmatpush1.bf16.msra.mxu0 0
      %365 = vmatprep.subr.bf16.mxu0 0
      %366 = vmatpush1.bf16.msra.mxu0 0
      %367 = vmatprep.subr.bf16.mxu0 0
      %368 = vmatpush1.bf16.msra.mxu0 0
      %369 = vmatprep.mubr.bf16.mxu0 0
      %370 = vmatmul.mubr.bf16.gmra.mrb[0].mxu0 %v310
      %v371 = vpop.f32.mrb[0].mxu0
      %v372 = vadd.f32 0.0, %v371
      %v373 = vpop.f32.mrb[0].mxu0
      %v374 = vpop.f32.mrb[0].mxu0
      %v375 = vadd.f32 0.0, %v374
      %v376 = vpop.f32.mrb[0].mxu0
      %377 = vmatprep.mubr.bf16.mxu0 0
      %378 = vmatmul.mubr.bf16.gmra.mrb[0].mxu0 %v313
      %v379 = vpop.f32.mrb[0].mxu0
      %v380 = vadd.f32 0.0, %v379
      %v381 = vpop.f32.mrb[0].mxu0
      %v382 = vpop.f32.mrb[0].mxu0
      %v383 = vadd.f32 0.0, %v382
      %v384 = vpop.f32.mrb[0].mxu0
      %385 = vmatprep.mubr.bf16.mxu0 0
      %386 = vmatmul.mubr.bf16.gmra.mrb[0].mxu0 %v316
      %v387 = vpop.f32.mrb[0].mxu0
      %v388 = vadd.f32 0.0, %v387
      %v389 = vpop.f32.mrb[0].mxu0
      %v390 = vpop.f32.mrb[0].mxu0
      %v391 = vadd.f32 0.0, %v390
      %v392 = vpop.f32.mrb[0].mxu0
      %393 = vmatprep.mubr.bf16.mxu0 0
      %394 = vmatmul.mubr.bf16.gmra.mrb[0].mxu0 %v319
      %v395 = vpop.f32.mrb[0].mxu0
      %v396 = vadd.f32 0.0, %v395
      %v397 = vpop.f32.mrb[0].mxu0
      %v398 = vpop.f32.mrb[0].mxu0
      %v399 = vadd.f32 0.0, %v398
      %v400 = vpop.f32.mrb[0].mxu0
      %401 = vmatprep.mubr.bf16.mxu0 0
      %402 = vmatmul.mubr.bf16.gmra.mrb[0].mxu0 %v322
      %v403 = vpop.f32.mrb[0].mxu0
      %v404 = vadd.f32 0.0, %v403
      %v405 = vpop.f32.mrb[0].mxu0
      %v406 = vpop.f32.mrb[0].mxu0
      %v407 = vadd.f32 0.0, %v406
      %v408 = vpop.f32.mrb[0].mxu0
      %409 = vmatprep.mubr.bf16.mxu0 0
      %410 = vmatmul.mubr.bf16.gmra.mrb[0].mxu0 %v325
      %v411 = vpop.f32.mrb[0].mxu0
      %v412 = vadd.f32 0.0, %v411
      %v413 = vpop.f32.mrb[0].mxu0
      %v414 = vpop.f32.mrb[0].mxu0
      %v415 = vadd.f32 0.0, %v414
      %v416 = vpop.f32.mrb[0].mxu0
      %417 = vmatprep.mubr.bf16.mxu0 0
      %418 = vmatmul.mubr.bf16.gmra.mrb[0].mxu0 %v328
      %v419 = vpop.f32.mrb[0].mxu0
      %v420 = vadd.f32 0.0, %v419
      %v421 = vpop.f32.mrb[0].mxu0
      %v422 = vpop.f32.mrb[0].mxu0
      %v423 = vadd.f32 0.0, %v422
      %v424 = vpop.f32.mrb[0].mxu0
      %425 = vmatprep.mubr.bf16.mxu0 0
      %426 = vmatmul.mubr.bf16.gmra.mrb[0].mxu0 %v331
      %v427 = vpop.f32.mrb[0].mxu0
      %v428 = vadd.f32 0.0, %v427
      %v429 = vpop.f32.mrb[0].mxu0
      %v430 = vpop.f32.mrb[0].mxu0
      %v431 = vadd.f32 0.0, %v430
      %v432 = vpop.f32.mrb[0].mxu0
      %433 = vdwg.mxu0
      %v434 = vld [vmem:[%s2] sm:$0x1]
      %v436 = vlaneseq
      %v437 = vshrl.u32 %v436, 7
      %v438 = vsub.s32 0, %v437
      %v439 = vrot.slane %v434, %v438
      %v441 = vmul.f32 %v372, %v439
      %v442 = vmul.f32 %v375, %v439
      %v443 = vmul.f32 %v380, %v439
      %v444 = vmul.f32 %v383, %v439
      %v445 = vmul.f32 %v388, %v439
      %v446 = vmul.f32 %v391, %v439
      %v447 = vmul.f32 %v396, %v439
      %v448 = vmul.f32 %v399, %v439
      %v449 = vmul.f32 %v404, %v439
      %v450 = vmul.f32 %v407, %v439
      %v451 = vmul.f32 %v412, %v439
      %v452 = vmul.f32 %v415, %v439
      %v453 = vmul.f32 %v420, %v439
      %v454 = vmul.f32 %v423, %v439
      %v455 = vmul.f32 %v428, %v439
      %v456 = vmul.f32 %v431, %v439
      %v457 = vld [vmem:[%s3] sm:$0x1]
      %v459 = vlaneseq
      %v460 = vshrl.u32 %v459, 7
      %v461 = vsub.s32 0, %v460
      %v462 = vrot.slane %v457, %v461
      %v464 = vadd.f32 %v441, %v462
      %v465 = vadd.f32 %v442, %v462
      %v466 = vadd.f32 %v443, %v462
      %v467 = vadd.f32 %v444, %v462
      %v468 = vadd.f32 %v445, %v462
      %v469 = vadd.f32 %v446, %v462
      %v470 = vadd.f32 %v447, %v462
      %v471 = vadd.f32 %v448, %v462
      %v472 = vadd.f32 %v449, %v462
      %v473 = vadd.f32 %v450, %v462
      %v474 = vadd.f32 %v451, %v462
      %v475 = vadd.f32 %v452, %v462
      %v476 = vadd.f32 %v453, %v462
      %v477 = vadd.f32 %v454, %v462
      %v478 = vadd.f32 %v455, %v462
      %v479 = vadd.f32 %v456, %v462
      %v480 = vld [vmem:[%s242] sm:$0xf]
      %v481 = vld [vmem:[%s242 + $0x4] sm:$0xf]
      %v482 = vld [vmem:[%s242 + $0x8] sm:$0xf]
      %v483 = vld [vmem:[%s242 + $0xc] sm:$0xf]
      %v484 = vld [vmem:[%s242 + $0x10] sm:$0xf]
      %v485 = vld [vmem:[%s242 + $0x14] sm:$0xf]
      %v486 = vld [vmem:[%s242 + $0x18] sm:$0xf]
      %v487 = vld [vmem:[%s242 + $0x1c] sm:$0xf]
      %v488 = vld [vmem:[%s242 + $0x20] sm:$0xf]
      %v489 = vld [vmem:[%s242 + $0x24] sm:$0xf]
      %v490 = vld [vmem:[%s242 + $0x28] sm:$0xf]
      %v491 = vld [vmem:[%s242 + $0x2c] sm:$0xf]
      %v492 = vld [vmem:[%s242 + $0x30] sm:$0xf]
      %v493 = vld [vmem:[%s242 + $0x34] sm:$0xf]
      %v494 = vld [vmem:[%s242 + $0x38] sm:$0xf]
      %v495 = vld [vmem:[%s242 + $0x3c] sm:$0xf]
      %v496 = vunpack.c.l.bf16 %v480
      %v497 = vunpack.c.l.bf16 %v481
      %v498 = vunpack.c.l.bf16 %v482
      %v499 = vunpack.c.l.bf16 %v483
      %v500 = vunpack.c.l.bf16 %v484
      %v501 = vunpack.c.l.bf16 %v485
      %v502 = vunpack.c.l.bf16 %v486
      %v503 = vunpack.c.l.bf16 %v487
      %v504 = vunpack.c.l.bf16 %v488
      %v505 = vunpack.c.l.bf16 %v489
      %v506 = vunpack.c.l.bf16 %v490
      %v507 = vunpack.c.l.bf16 %v491
      %v508 = vunpack.c.l.bf16 %v492
      %v509 = vunpack.c.l.bf16 %v493
      %v510 = vunpack.c.l.bf16 %v494
      %v511 = vunpack.c.l.bf16 %v495
      %v512 = vadd.f32 %v464, %v496
      %v513 = vadd.f32 %v465, %v497
      %v514 = vadd.f32 %v466, %v498
      %v515 = vadd.f32 %v467, %v499
      %v516 = vadd.f32 %v468, %v500
      %v517 = vadd.f32 %v469, %v501
      %v518 = vadd.f32 %v470, %v502
      %v519 = vadd.f32 %v471, %v503
      %v520 = vadd.f32 %v472, %v504
      %v521 = vadd.f32 %v473, %v505
      %v522 = vadd.f32 %v474, %v506
      %v523 = vadd.f32 %v475, %v507
      %v524 = vadd.f32 %v476, %v508
      %v525 = vadd.f32 %v477, %v509
      %v526 = vadd.f32 %v478, %v510
      %v527 = vadd.f32 %v479, %v511
      %v528 = vmax.f32 %v512, 0.0
      %v529 = vmax.f32 %v513, 0.0
      %v530 = vmax.f32 %v514, 0.0
      %v531 = vmax.f32 %v515, 0.0
      %v532 = vmax.f32 %v516, 0.0
      %v533 = vmax.f32 %v517, 0.0
      %v534 = vmax.f32 %v518, 0.0
      %v535 = vmax.f32 %v519, 0.0
      %v536 = vmax.f32 %v520, 0.0
      %v537 = vmax.f32 %v521, 0.0
      %v538 = vmax.f32 %v522, 0.0
      %v539 = vmax.f32 %v523, 0.0
      %v540 = vmax.f32 %v524, 0.0
      %v541 = vmax.f32 %v525, 0.0
      %v542 = vmax.f32 %v526, 0.0
      %v543 = vmax.f32 %v527, 0.0
      %v544 = vpack.c.bf16 %v529, %v528
      %v545 = vpack.c.bf16 %v531, %v530
      %v546 = vpack.c.bf16 %v533, %v532
      %v547 = vpack.c.bf16 %v535, %v534
      %v548 = vpack.c.bf16 %v537, %v536
      %v549 = vpack.c.bf16 %v539, %v538
      %v550 = vpack.c.bf16 %v541, %v540
      %v551 = vpack.c.bf16 %v543, %v542
      %v560 = vunpack.c.l.b16 %v544
      %v561 = vunpack.c.h.b16 %v544
      %v562 = vunpack.c.l.b16 %v545
      %v563 = vunpack.c.h.b16 %v545
      %v564 = vunpack.c.l.b16 %v546
      %v565 = vunpack.c.h.b16 %v546
      %v566 = vunpack.c.l.b16 %v547
      %v567 = vunpack.c.h.b16 %v547
      %v568 = vunpack.c.l.b16 %v548
      %v569 = vunpack.c.h.b16 %v548
      %v570 = vunpack.c.l.b16 %v549
      %v571 = vunpack.c.h.b16 %v549
      %v572 = vunpack.c.l.b16 %v550
      %v573 = vunpack.c.h.b16 %v550
      %v574 = vunpack.c.l.b16 %v551
      %v575 = vunpack.c.h.b16 %v551
      %v576 = vpack.c.b16 %v560, %v560
      %v577 = vpack.c.b16 %v561, %v561
      %v578 = vpack.c.b16 %v562, %v562
      %v579 = vpack.c.b16 %v563, %v563
      %v580 = vpack.c.b16 %v564, %v564
      %v581 = vpack.c.b16 %v565, %v565
      %v582 = vpack.c.b16 %v566, %v566
      %v583 = vpack.c.b16 %v567, %v567
      %v584 = vpack.c.b16 %v568, %v568
      %v585 = vpack.c.b16 %v569, %v569
      %v586 = vpack.c.b16 %v570, %v570
      %v587 = vpack.c.b16 %v571, %v571
      %v588 = vpack.c.b16 %v572, %v572
      %v589 = vpack.c.b16 %v573, %v573
      %v590 = vpack.c.b16 %v574, %v574
      %v591 = vpack.c.b16 %v575, %v575
      %vm608 = vcmask 257024
      %609 = vst.msk [vmem:[%s248] sm:$0xf] %vm608, %v576
      %610 = vst.msk [vmem:[%s248 + $0x4] sm:$0xf] %vm608, %v577
      %611 = vst.msk [vmem:[%s248 + $0x8] sm:$0xf] %vm608, %v578
      %612 = vst.msk [vmem:[%s248 + $0xc] sm:$0xf] %vm608, %v579
      %613 = vst.msk [vmem:[%s248 + $0x10] sm:$0xf] %vm608, %v580
      %614 = vst.msk [vmem:[%s248 + $0x14] sm:$0xf] %vm608, %v581
      %615 = vst.msk [vmem:[%s248 + $0x18] sm:$0xf] %vm608, %v582
      %616 = vst.msk [vmem:[%s248 + $0x1c] sm:$0xf] %vm608, %v583
      %617 = vst.msk [vmem:[%s248 + $0x20] sm:$0xf] %vm608, %v584
      %618 = vst.msk [vmem:[%s248 + $0x24] sm:$0xf] %vm608, %v585
      %619 = vst.msk [vmem:[%s248 + $0x28] sm:$0xf] %vm608, %v586
      %620 = vst.msk [vmem:[%s248 + $0x2c] sm:$0xf] %vm608, %v587
      %621 = vst.msk [vmem:[%s248 + $0x30] sm:$0xf] %vm608, %v588
      %622 = vst.msk [vmem:[%s248 + $0x34] sm:$0xf] %vm608, %v589
      %623 = vst.msk [vmem:[%s248 + $0x38] sm:$0xf] %vm608, %v590
      %624 = vst.msk [vmem:[%s248 + $0x3c] sm:$0xf] %vm608, %v591
      %s625 = smul.u32 16, %s16
      %p626 = scmp.lt.s32.totalorder %s625, 63
      %s627 = scalar_select %p626, %s625, 63
      %s628 = smul.addr %s627, 4
      %s629 = scalar_lea.vmem %s5, %s628
      // Predicated region
      $region41: #{_lambda_.34} parent=39 // pred_check
        %p630 = pneg %p149
      $region42: #{_lambda_.34} parent=39 // pred_check_branch
        %632 = sbr.rel (%p630) target = $region44
      $region43: #{_lambda_.34} parent=39 // pred_region
        %s633 = smul.u32 16, %s16
      $region44: #{_lambda_.34} parent=39 // pred_fallthru
        _
    $region40: #{_lambda_.34} parent=5 // pred_fallthru
      _
    %p634 = scmp.le.s32.totalorder 2, %s11
    // Predicated region
    $region45: #{_lambda_.34} parent=5 // pred_check
      %p635 = pneg %p634
    $region46: #{_lambda_.34} parent=5 // pred_check_branch
      %637 = sbr.rel (%p635) target = $region48
    $region47: #{_lambda_.34} parent=5 // pred_region
      %s638 = ssub.s32 %s11, 2
      // Predicated region
      $region49: #{_lambda_.34} parent=47 // pred_check
        %p639 = pneg %p155
      $region50: #{_lambda_.34} parent=47 // pred_check_branch
        %641 = sbr.rel (%p639) target = $region52
      $region51: #{_lambda_.34} parent=47 // pred_region
        %s642 = smul.u32 16, %s17
        %p643 = scmp.lt.s32.totalorder %s642, 63
        %s644 = scalar_select %p643, %s642, 63
        %s645 = smul.addr %s644, 4
        %s646 = scalar_lea.vmem %s5, %s645
      $region52: #{_lambda_.34} parent=47 // pred_fallthru
        _
    $region48: #{_lambda_.34} parent=5 // pred_fallthru
      _
  $region6: #{_lambda_.34} parent=0 // loop_footer
    %s15 = sadd.s32 1, %s11
  $region7: #{_lambda_.34} parent=0 // loop_footer_branch
    %10 = sbr.rel target = $region3
  $region8: #{_lambda_.34} parent=0 // loop_exit
    _

// kernel: _lambda_.35
$region0: #{_lambda_.35}
  #allocation0 [shape = 'u32[]', space=smem, size = 0x4, offset = 0x4, fixed_abs, tag = 'smem constant byte address 0x4 - core index']
  #allocation1 [shape = 'u32[144,128]{1,0:T(1,128)}', space=vmem, size = 0x12000, scoped, tag = 'internal scratch']
  %s0 = inlined_call_operand.vmem [shape: bf16[512,288], index: 0, kind: input, shape index: {}]
  %s1 = inlined_call_operand.vmem [shape: bf16[288,8], index: 1, kind: input, shape index: {}]
  %s2 = inlined_call_operand.vmem [shape: f32[1,8], index: 2, kind: input, shape index: {}]
  %s3 = inlined_call_operand.vmem [shape: f32[1,8], index: 3, kind: input, shape index: {}]
  %s4 = inlined_call_operand.vmem [shape: bf16[512,8], index: 4, kind: output, shape index: {}]
  %s5 = sld [smem:[#allocation0]]
  $region49: #{_lambda_.35} parent=0
    _
  %s7 = ssub.s32 1, %s5
  %s8 = scalar_select 0, %s7, %s5
  loop: start=0, step=1, limit=6
  $region2: #{_lambda_.35} parent=0 // loop_pre_header
    _
  $region3: #{_lambda_.35} parent=0 // loop_header
    %s10 = sphi 0, %s14
    %p11 = scmp.ge.s32.totalorder %s10, 6
    %s20 = sphi 0, %s22
    %s23 = sphi 0, %s20
    %s24 = sphi 0, %s23
    %s40 = sphi 0, %s24
    %s44 = sphi 0, %s44
    %s46 = sphi 0, %s44
    %s47 = sphi 0, %s46
    %s61 = sphi 0, %s47
    %s65 = sphi 0, %s65
    %s67 = sphi 0, %s65
    %s68 = sphi 0, %s67
    %s82 = sphi 0, %s68
    %s86 = sphi 0, %s86
    %s88 = sphi 0, %s86
    %s89 = sphi 0, %s88
    %s103 = sphi 0, %s89
    %s109 = sphi 0, %s111
    %s112 = sphi 0, %s109
    %s113 = sphi 0, %s112
    %s129 = sphi 0, %s113
  $region4: #{_lambda_.35} parent=0 // loop_header_branch
    %13 = sbr.rel (%p11) target = $region8
  $region5: #{_lambda_.35} parent=0 // loop_body
    %s15 = ssub.s32 %s10, 1
    %s16 = ssub.s32 %s10, 2
    %s17 = sadd.s32 %s10, 1
    %s18 = ssub.s32 %s10, %s17
    %p19 = scmp.eq.s32.totalorder %s18, 0
    %s21 = sadd.s32 %s20, 1
    %s22 = scalar_select %p19, %s20, %s21
    %p25 = pneg %p19
    %p26 = scmp.eq.s32.totalorder %s10, 3
    %p27 = por %p25, %p26
    %p28 = scmp.ne.s32.totalorder %s20, %s23
    %p29 = scmp.eq.s32.totalorder %s10, 0
    %p30 = por %p28, %p29
    %p31 = scmp.ne.s32.totalorder %s20, %s23
    %p32 = scmp.eq.s32.totalorder %s15, 3
    %p33 = por %p31, %p32
    %p34 = scmp.ne.s32.totalorder %s23, %s24
    %p35 = scmp.eq.s32.totalorder %s15, 0
    %p36 = por %p34, %p35
    %p37 = scmp.ne.s32.totalorder %s23, %s24
    %p38 = scmp.eq.s32.totalorder %s16, 3
    %p39 = por %p37, %p38
    %p41 = scmp.ne.s32.totalorder %s24, %s40
    %p42 = scmp.eq.s32.totalorder %s16, 0
    %p43 = por %p41, %p42
    %s45 = sadd.s32 %s44, 1
    %p48 = scmp.eq.s32.totalorder %s10, 3
    %p49 = scmp.ne.s32.totalorder %s44, %s46
    %p50 = scmp.eq.s32.totalorder %s10, 0
    %p51 = por %p49, %p50
    %p52 = scmp.ne.s32.totalorder %s44, %s46
    %p53 = scmp.eq.s32.totalorder %s15, 3
    %p54 = por %p52, %p53
    %p55 = scmp.ne.s32.totalorder %s46, %s47
    %p56 = scmp.eq.s32.totalorder %s15, 0
    %p57 = por %p55, %p56
    %p58 = scmp.ne.s32.totalorder %s46, %s47
    %p59 = scmp.eq.s32.totalorder %s16, 3
    %p60 = por %p58, %p59
    %p62 = scmp.ne.s32.totalorder %s47, %s61
    %p63 = scmp.eq.s32.totalorder %s16, 0
    %p64 = por %p62, %p63
    %s66 = sadd.s32 %s65, 1
    %p69 = scmp.eq.s32.totalorder %s10, 3
    %p70 = scmp.ne.s32.totalorder %s65, %s67
    %p71 = scmp.eq.s32.totalorder %s10, 0
    %p72 = por %p70, %p71
    %p73 = scmp.ne.s32.totalorder %s65, %s67
    %p74 = scmp.eq.s32.totalorder %s15, 3
    %p75 = por %p73, %p74
    %p76 = scmp.ne.s32.totalorder %s67, %s68
    %p77 = scmp.eq.s32.totalorder %s15, 0
    %p78 = por %p76, %p77
    %p79 = scmp.ne.s32.totalorder %s67, %s68
    %p80 = scmp.eq.s32.totalorder %s16, 3
    %p81 = por %p79, %p80
    %p83 = scmp.ne.s32.totalorder %s68, %s82
    %p84 = scmp.eq.s32.totalorder %s16, 0
    %p85 = por %p83, %p84
    %s87 = sadd.s32 %s86, 1
    %p90 = scmp.eq.s32.totalorder %s10, 3
    %p91 = scmp.ne.s32.totalorder %s86, %s88
    %p92 = scmp.eq.s32.totalorder %s10, 0
    %p93 = por %p91, %p92
    %p94 = scmp.ne.s32.totalorder %s86, %s88
    %p95 = scmp.eq.s32.totalorder %s15, 3
    %p96 = por %p94, %p95
    %p97 = scmp.ne.s32.totalorder %s88, %s89
    %p98 = scmp.eq.s32.totalorder %s15, 0
    %p99 = por %p97, %p98
    %p100 = scmp.ne.s32.totalorder %s88, %s89
    %p101 = scmp.eq.s32.totalorder %s16, 3
    %p102 = por %p100, %p101
    %p104 = scmp.ne.s32.totalorder %s89, %s103
    %p105 = scmp.eq.s32.totalorder %s16, 0
    %p106 = por %p104, %p105
    %s107 = ssub.s32 %s10, %s17
    %p108 = scmp.eq.s32.totalorder %s107, 0
    %s110 = sadd.s32 %s109, 1
    %s111 = scalar_select %p108, %s109, %s110
    %p114 = pneg %p108
    %p115 = scmp.eq.s32.totalorder %s10, 3
    %p116 = por %p114, %p115
    %p117 = scmp.ne.s32.totalorder %s109, %s112
    %p118 = scmp.eq.s32.totalorder %s10, 0
    %p119 = por %p117, %p118
    %p120 = scmp.ne.s32.totalorder %s109, %s112
    %p121 = scmp.eq.s32.totalorder %s15, 3
    %p122 = por %p120, %p121
    %p123 = scmp.ne.s32.totalorder %s112, %s113
    %p124 = scmp.eq.s32.totalorder %s15, 0
    %p125 = por %p123, %p124
    %p126 = scmp.ne.s32.totalorder %s112, %s113
    %p127 = scmp.eq.s32.totalorder %s16, 3
    %p128 = por %p126, %p127
    %p130 = scmp.ne.s32.totalorder %s113, %s129
    %p131 = scmp.eq.s32.totalorder %s16, 0
    %p132 = por %p130, %p131
    %p133 = scmp.le.s32.totalorder 1, %s10
    %p134 = scmp.lt.s32.totalorder %s10, 5
    %p135 = pnand %p133, %p134
    %p136 = pneg %p135
    // Predicated region
    $region9: #{_lambda_.35} parent=5 // pred_check
      _
    $region10: #{_lambda_.35} parent=5 // pred_check_branch
      %138 = sbr.rel (%p135) target = $region12
    $region11: #{_lambda_.35} parent=5 // pred_region
      %s139 = ssub.s32 %s10, 1
      // Predicated region
      $region13: #{_lambda_.35} parent=11 // pred_check
        %p140 = pneg %p57
      $region14: #{_lambda_.35} parent=11 // pred_check_branch
        %142 = sbr.rel (%p140) target = $region16
      $region15: #{_lambda_.35} parent=11 // pred_region
        _
      $region16: #{_lambda_.35} parent=11 // pred_fallthru
        _
      // Predicated region
      $region17: #{_lambda_.35} parent=11 // pred_check
        %p143 = pneg %p78
      $region18: #{_lambda_.35} parent=11 // pred_check_branch
        %145 = sbr.rel (%p143) target = $region20
      $region19: #{_lambda_.35} parent=11 // pred_region
        _
      $region20: #{_lambda_.35} parent=11 // pred_fallthru
        _
      // Predicated region
      $region21: #{_lambda_.35} parent=11 // pred_check
        %p146 = pneg %p99
      $region22: #{_lambda_.35} parent=11 // pred_check_branch
        %148 = sbr.rel (%p146) target = $region24
      $region23: #{_lambda_.35} parent=11 // pred_region
        _
      $region24: #{_lambda_.35} parent=11 // pred_fallthru
        _
    $region12: #{_lambda_.35} parent=5 // pred_fallthru
      _
    %p149 = scmp.lt.s32.totalorder %s10, 4
    // Predicated region
    $region25: #{_lambda_.35} parent=5 // pred_check
      %p150 = pneg %p149
    $region26: #{_lambda_.35} parent=5 // pred_check_branch
      %152 = sbr.rel (%p150) target = $region28
    $region27: #{_lambda_.35} parent=5 // pred_region
      // Predicated region
      $region29: #{_lambda_.35} parent=27 // pred_check
        %p153 = pneg %p30
      $region30: #{_lambda_.35} parent=27 // pred_check_branch
        %155 = sbr.rel (%p153) target = $region32
      $region31: #{_lambda_.35} parent=27 // pred_region
        %s156 = smul.u32 16, %s10
        %p157 = scmp.lt.s32.totalorder %s156, 63
        %s158 = scalar_select %p157, %s156, 63
        %s159 = smul.addr %s158, 3
        %s160 = smul.addr %s159, 4
        %s161 = scalar_lea.vmem %s0, %s160
        %s162 = smul.u32 16, %s10
      $region32: #{_lambda_.35} parent=27 // pred_fallthru
        _
    $region28: #{_lambda_.35} parent=5 // pred_fallthru
      _
    %p163 = scmp.le.s32.totalorder 1, %s10
    %p164 = scmp.lt.s32.totalorder %s10, 5
    %p165 = pnand %p163, %p164
    %p166 = pneg %p165
    // Predicated region
    $region33: #{_lambda_.35} parent=5 // pred_check
      _
    $region34: #{_lambda_.35} parent=5 // pred_check_branch
      %168 = sbr.rel (%p165) target = $region36
    $region35: #{_lambda_.35} parent=5 // pred_region
      %s169 = ssub.s32 %s10, 1
      %s170 = smul.u32 16, %s15
      %p171 = scmp.lt.s32.totalorder %s170, 63
      %s172 = scalar_select %p171, %s170, 63
      %s173 = smul.addr %s172, 3
      %s174 = smul.addr %s173, 4
      %s175 = scalar_lea.vmem %s0, %s174
      %p176 = pneg %p36
      %p177 = pneg %p33
      %p178 = pneg %p57
      %p179 = pneg %p54
      %p180 = pneg %p78
      %p181 = pneg %p75
      %p182 = pneg %p99
      %p183 = pneg %p96
      %p184 = pneg %p125
      %p185 = pneg %p122
      %s186 = smul.u32 16, %s15
      %p187 = scmp.lt.s32.totalorder %s186, 63
      %s188 = scalar_select %p187, %s186, 63
      %s189 = smul.addr %s188, 4
      %s190 = scalar_lea.vmem %s4, %s189
      %s191 = smul.u32 16, %s15
      %p192 = scmp.lt.s32.totalorder %s191, 63
      %s193 = scalar_select %p192, %s191, 63
      %s194 = smul.addr %s193, 3
      %s195 = smul.addr %s194, 4
      %s196 = scalar_lea.vmem %s0, %s195
      %s197 = smul.u32 16, %s15
      %s198 = smul.u32 16, %s15
      %p199 = scmp.lt.s32.totalorder %s198, 63
      %s200 = scalar_select %p199, %s198, 63
      %s201 = smul.addr %s200, 4
      %s202 = scalar_lea.vmem %s4, %s201
      %s203 = smul.u32 16, %s15
      %v205 = vld [vmem:[%s196] sm:$0xff]
      %v206 = vld [vmem:[%s196 + $0x8] sm:$0xf]
      %v207 = vld [vmem:[%s196 + $0xc] sm:$0xff]
      %v208 = vld [vmem:[%s196 + $0x14] sm:$0xf]
      %v209 = vld [vmem:[%s196 + $0x18] sm:$0xff]
      %v210 = vld [vmem:[%s196 + $0x20] sm:$0xf]
      %v211 = vld [vmem:[%s196 + $0x24] sm:$0xff]
      %v212 = vld [vmem:[%s196 + $0x2c] sm:$0xf]
      %v213 = vld [vmem:[%s196 + $0x30] sm:$0xff]
      %v214 = vld [vmem:[%s196 + $0x38] sm:$0xf]
      %v215 = vld [vmem:[%s196 + $0x3c] sm:$0xff]
      %v216 = vld [vmem:[%s196 + $0x44] sm:$0xf]
      %v217 = vld [vmem:[%s196 + $0x48] sm:$0xff]
      %v218 = vld [vmem:[%s196 + $0x50] sm:$0xf]
      %v219 = vld [vmem:[%s196 + $0x54] sm:$0xff]
      %v220 = vld [vmem:[%s196 + $0x5c] sm:$0xf]
      %v221 = vld [vmem:[%s196 + $0x60] sm:$0xff]
      %v222 = vld [vmem:[%s196 + $0x68] sm:$0xf]
      %v223 = vld [vmem:[%s196 + $0x6c] sm:$0xff]
      %v224 = vld [vmem:[%s196 + $0x74] sm:$0xf]
      %v225 = vld [vmem:[%s196 + $0x78] sm:$0xff]
      %v226 = vld [vmem:[%s196 + $0x80] sm:$0xf]
      %v227 = vld [vmem:[%s196 + $0x84] sm:$0xff]
      %v228 = vld [vmem:[%s196 + $0x8c] sm:$0xf]
      %v229 = vld [vmem:[%s196 + $0x90] sm:$0xff]
      %v230 = vld [vmem:[%s196 + $0x98] sm:$0xf]
      %v231 = vld [vmem:[%s196 + $0x9c] sm:$0xff]
      %v232 = vld [vmem:[%s196 + $0xa4] sm:$0xf]
      %v233 = vld [vmem:[%s196 + $0xa8] sm:$0xff]
      %v234 = vld [vmem:[%s196 + $0xb0] sm:$0xf]
      %v235 = vld [vmem:[%s196 + $0xb4] sm:$0xff]
      %v236 = vld [vmem:[%s196 + $0xbc] sm:$0xf]
      %v237 = vld [vmem:[%s1] sm:$0xf]
      %v238 = vld [vmem:[%s1 + $0x4] sm:$0xf]
      %v239 = vld [vmem:[%s1 + $0x8] sm:$0xf]
      %v240 = vld [vmem:[%s1 + $0xc] sm:$0xf]
      %v241 = vld [vmem:[%s1 + $0x10] sm:$0xf]
      %v242 = vld [vmem:[%s1 + $0x14] sm:$0xf]
      %v243 = vld [vmem:[%s1 + $0x18] sm:$0xf]
      %v244 = vld [vmem:[%s1 + $0x1c] sm:$0xf]
      %v245 = vld [vmem:[%s1 + $0x20] sm:$0xf]
      %v246 = vld [vmem:[%s1 + $0x24] sm:$0xf]
      %v247 = vld [vmem:[%s1 + $0x28] sm:$0xf]
      %v248 = vld [vmem:[%s1 + $0x2c] sm:$0xf]
      %v249 = vld [vmem:[%s1 + $0x30] sm:$0xf]
      %v250 = vld [vmem:[%s1 + $0x34] sm:$0xf]
      %v251 = vld [vmem:[%s1 + $0x38] sm:$0xf]
      %v252 = vld [vmem:[%s1 + $0x3c] sm:$0xf]
      %v253 = vld [vmem:[%s1 + $0x40] sm:$0xf]
      %v254 = vld [vmem:[%s1 + $0x44] sm:$0xf]
      %v255 = vld [vmem:[%s1 + $0x48] sm:$0xf]
      %v256 = vld [vmem:[%s1 + $0x4c] sm:$0xf]
      %v257 = vld [vmem:[%s1 + $0x50] sm:$0xf]
      %v258 = vld [vmem:[%s1 + $0x54] sm:$0xf]
      %v259 = vld [vmem:[%s1 + $0x58] sm:$0xf]
      %v260 = vld [vmem:[%s1 + $0x5c] sm:$0xf]
      %v261 = vld [vmem:[%s1 + $0x60] sm:$0xf]
      %v262 = vld [vmem:[%s1 + $0x64] sm:$0xf]
      %v263 = vld [vmem:[%s1 + $0x68] sm:$0xf]
      %v264 = vld [vmem:[%s1 + $0x6c] sm:$0xf]
      %v265 = vld [vmem:[%s1 + $0x70] sm:$0xf]
      %v266 = vld [vmem:[%s1 + $0x74] sm:$0xf]
      %v267 = vld [vmem:[%s1 + $0x78] sm:$0xf]
      %v268 = vld [vmem:[%s1 + $0x7c] sm:$0xf]
      %v269 = vld [vmem:[%s1 + $0x80] sm:$0xf]
      %v270 = vld [vmem:[%s1 + $0x84] sm:$0xf]
      %v271 = vld [vmem:[%s1 + $0x88] sm:$0xf]
      %v272 = vld [vmem:[%s1 + $0x8c] sm:$0xf]
      %v305 = vunpack.c.l.b16 %v205
      %v306 = vunpack.c.h.b16 %v205
      %v307 = vunpack.c.l.b16 %v206
      %v308 = vunpack.c.l.b16 %v207
      %v309 = vunpack.c.h.b16 %v207
      %v310 = vunpack.c.l.b16 %v208
      %v311 = vunpack.c.l.b16 %v209
      %v312 = vunpack.c.h.b16 %v209
      %v313 = vunpack.c.l.b16 %v210
      %v314 = vunpack.c.l.b16 %v211
      %v315 = vunpack.c.h.b16 %v211
      %v316 = vunpack.c.l.b16 %v212
      %v317 = vunpack.c.l.b16 %v213
      %v318 = vunpack.c.h.b16 %v213
      %v319 = vunpack.c.l.b16 %v214
      %v320 = vunpack.c.l.b16 %v215
      %v321 = vunpack.c.h.b16 %v215
      %v322 = vunpack.c.l.b16 %v216
      %v323 = vunpack.c.l.b16 %v217
      %v324 = vunpack.c.h.b16 %v217
      %v325 = vunpack.c.l.b16 %v218
      %v326 = vunpack.c.l.b16 %v219
      %v327 = vunpack.c.h.b16 %v219
      %v328 = vunpack.c.l.b16 %v220
      %v329 = vunpack.c.l.b16 %v221
      %v330 = vunpack.c.h.b16 %v221
      %v331 = vunpack.c.l.b16 %v222
      %v332 = vunpack.c.l.b16 %v223
      %v333 = vunpack.c.h.b16 %v223
      %v334 = vunpack.c.l.b16 %v224
      %v335 = vunpack.c.l.b16 %v225
      %v336 = vunpack.c.h.b16 %v225
      %v337 = vunpack.c.l.b16 %v226
      %v338 = vunpack.c.l.b16 %v227
      %v339 = vunpack.c.h.b16 %v227
      %v340 = vunpack.c.l.b16 %v228
      %v341 = vunpack.c.l.b16 %v229
      %v342 = vunpack.c.h.b16 %v229
      %v343 = vunpack.c.l.b16 %v230
      %v344 = vunpack.c.l.b16 %v231
      %v345 = vunpack.c.h.b16 %v231
      %v346 = vunpack.c.l.b16 %v232
      %v347 = vunpack.c.l.b16 %v233
      %v348 = vunpack.c.h.b16 %v233
      %v349 = vunpack.c.l.b16 %v234
      %v350 = vunpack.c.l.b16 %v235
      %v351 = vunpack.c.h.b16 %v235
      %v352 = vunpack.c.l.b16 %v236
      %v353 = vpack.c.b16 %v308, %v305
      %v354 = vpack.c.b16 %v309, %v306
      %v355 = vpack.c.b16 %v310, %v307
      %v356 = vpack.c.b16 %v314, %v311
      %v357 = vpack.c.b16 %v315, %v312
      %v358 = vpack.c.b16 %v316, %v313
      %v359 = vpack.c.b16 %v320, %v317
      %v360 = vpack.c.b16 %v321, %v318
      %v361 = vpack.c.b16 %v322, %v319
      %v362 = vpack.c.b16 %v326, %v323
      %v363 = vpack.c.b16 %v327, %v324
      %v364 = vpack.c.b16 %v328, %v325
      %v365 = vpack.c.b16 %v332, %v329
      %v366 = vpack.c.b16 %v333, %v330
      %v367 = vpack.c.b16 %v334, %v331
      %v368 = vpack.c.b16 %v338, %v335
      %v369 = vpack.c.b16 %v339, %v336
      %v370 = vpack.c.b16 %v340, %v337
      %v371 = vpack.c.b16 %v344, %v341
      %v372 = vpack.c.b16 %v345, %v342
      %v373 = vpack.c.b16 %v346, %v343
      %v374 = vpack.c.b16 %v350, %v347
      %v375 = vpack.c.b16 %v351, %v348
      %v376 = vpack.c.b16 %v352, %v349
      %v429 = vunpack.c.l.b16 %v237
      %v430 = vunpack.c.l.b16 %v238
      %v431 = vunpack.c.l.b16 %v239
      %v432 = vunpack.c.l.b16 %v240
      %v433 = vunpack.c.l.b16 %v241
      %v434 = vunpack.c.l.b16 %v242
      %v435 = vunpack.c.l.b16 %v243
      %v436 = vunpack.c.l.b16 %v244
      %v437 = vunpack.c.l.b16 %v245
      %v438 = vunpack.c.l.b16 %v246
      %v439 = vunpack.c.l.b16 %v247
      %v440 = vunpack.c.l.b16 %v248
      %v441 = vunpack.c.l.b16 %v249
      %v442 = vunpack.c.l.b16 %v250
      %v443 = vunpack.c.l.b16 %v251
      %v444 = vunpack.c.l.b16 %v252
      %v445 = vunpack.c.l.b16 %v253
      %v446 = vunpack.c.l.b16 %v254
      %v447 = vunpack.c.l.b16 %v255
      %v448 = vunpack.c.l.b16 %v256
      %v449 = vunpack.c.l.b16 %v257
      %v450 = vunpack.c.l.b16 %v258
      %v451 = vunpack.c.l.b16 %v259
      %v452 = vunpack.c.l.b16 %v260
      %v453 = vunpack.c.l.b16 %v261
      %v454 = vunpack.c.l.b16 %v262
      %v455 = vunpack.c.l.b16 %v263
      %v456 = vunpack.c.l.b16 %v264
      %v457 = vunpack.c.l.b16 %v265
      %v458 = vunpack.c.l.b16 %v266
      %v459 = vunpack.c.l.b16 %v267
      %v460 = vunpack.c.l.b16 %v268
      %v461 = vunpack.c.l.b16 %v269
      %v462 = vunpack.c.l.b16 %v270
      %v463 = vunpack.c.l.b16 %v271
      %v464 = vunpack.c.l.b16 %v272
      %v465 = vpack.c.b16 %v430, %v429
      %v466 = vpack.c.b16 %v432, %v431
      %v467 = vpack.c.b16 %v434, %v433
      %v468 = vpack.c.b16 %v436, %v435
      %v469 = vpack.c.b16 %v438, %v437
      %v470 = vpack.c.b16 %v440, %v439
      %v471 = vpack.c.b16 %v442, %v441
      %v472 = vpack.c.b16 %v444, %v443
      %v473 = vpack.c.b16 %v446, %v445
      %v474 = vpack.c.b16 %v448, %v447
      %v475 = vpack.c.b16 %v450, %v449
      %v476 = vpack.c.b16 %v452, %v451
      %v477 = vpack.c.b16 %v454, %v453
      %v478 = vpack.c.b16 %v456, %v455
      %v479 = vpack.c.b16 %v458, %v457
      %v480 = vpack.c.b16 %v460, %v459
      %v481 = vpack.c.b16 %v462, %v461
      %v482 = vpack.c.b16 %v464, %v463
      %vm501 = vcmask 261120
      %v503 = vsel %vm501, %v355, 0
      %v506 = vsel %vm501, %v358, 0
      %v509 = vsel %vm501, %v361, 0
      %v512 = vsel %vm501, %v364, 0
      %v515 = vsel %vm501, %v367, 0
      %v518 = vsel %vm501, %v370, 0
      %v521 = vsel %vm501, %v373, 0
      %v524 = vsel %vm501, %v376, 0
      %526 = vmatprep.subr.bf16.mxu0 0
      %527 = vmatpush1.bf16.msra.mxu0 %v465
      %528 = vmatprep.subr.bf16.mxu0 0
      %529 = vmatpush1.bf16.msra.mxu0 %v466
      %530 = vmatprep.subr.bf16.mxu0 0
      %531 = vmatpush1.bf16.msra.mxu0 %v467
      %532 = vmatprep.subr.bf16.mxu0 0
      %533 = vmatpush1.bf16.msra.mxu0 %v468
      %534 = vmatprep.subr.bf16.mxu0 0
      %535 = vmatpush1.bf16.msra.mxu0 %v469
      %536 = vmatprep.subr.bf16.mxu0 0
      %537 = vmatpush1.bf16.msra.mxu0 %v470
      %538 = vmatprep.subr.bf16.mxu0 0
      %539 = vmatpush1.bf16.msra.mxu0 %v471
      %540 = vmatprep.subr.bf16.mxu0 0
      %541 = vmatpush1.bf16.msra.mxu0 %v472
      %542 = vmatprep.subr.bf16.mxu0 0
      %543 = vmatpush1.bf16.msra.mxu0 %v473
      %544 = vmatprep.subr.bf16.mxu0 0
      %545 = vmatpush1.bf16.msra.mxu0 %v474
      %546 = vmatprep.subr.bf16.mxu0 0
      %547 = vmatpush1.bf16.msra.mxu0 %v475
      %548 = vmatprep.subr.bf16.mxu0 0
      %549 = vmatpush1.bf16.msra.mxu0 %v476
      %550 = vmatprep.subr.bf16.mxu0 0
      %551 = vmatpush1.bf16.msra.mxu0 %v477
      %552 = vmatprep.subr.bf16.mxu0 0
      %553 = vmatpush1.bf16.msra.mxu0 %v478
      %554 = vmatprep.subr.bf16.mxu0 0
      %555 = vmatpush1.bf16.msra.mxu0 %v479
      %556 = vmatprep.subr.bf16.mxu0 0
      %557 = vmatpush1.bf16.msra.mxu0 %v480
      %558 = vmatprep.mubr.bf16.mxu0 %v354
      %559 = vmatmul.mubr.bf16.gmra.mrb[0].mxu0 %v353
      %v560 = vpop.f32.mrb[0].mxu0
      %v561 = vadd.f32 0.0, %v560
      %v562 = vpop.f32.mrb[0].mxu0
      %v563 = vpop.f32.mrb[0].mxu0
      %v564 = vadd.f32 0.0, %v563
      %v565 = vpop.f32.mrb[0].mxu0
      %566 = vmatprep.mubr.bf16.mxu0 %v357
      %567 = vmatmul.mubr.bf16.gmra.mrb[0].mxu0 %v356
      %v568 = vpop.f32.mrb[0].mxu0
      %v569 = vadd.f32 0.0, %v568
      %v570 = vpop.f32.mrb[0].mxu0
      %v571 = vpop.f32.mrb[0].mxu0
      %v572 = vadd.f32 0.0, %v571
      %v573 = vpop.f32.mrb[0].mxu0
      %574 = vmatprep.mubr.bf16.mxu0 %v360
      %575 = vmatmul.mubr.bf16.gmra.mrb[0].mxu0 %v359
      %v576 = vpop.f32.mrb[0].mxu0
      %v577 = vadd.f32 0.0, %v576
      %v578 = vpop.f32.mrb[0].mxu0
      %v579 = vpop.f32.mrb[0].mxu0
      %v580 = vadd.f32 0.0, %v579
      %v581 = vpop.f32.mrb[0].mxu0
      %582 = vmatprep.mubr.bf16.mxu0 %v363
      %583 = vmatmul.mubr.bf16.gmra.mrb[0].mxu0 %v362
      %v584 = vpop.f32.mrb[0].mxu0
      %v585 = vadd.f32 0.0, %v584
      %v586 = vpop.f32.mrb[0].mxu0
      %v587 = vpop.f32.mrb[0].mxu0
      %v588 = vadd.f32 0.0, %v587
      %v589 = vpop.f32.mrb[0].mxu0
      %590 = vmatprep.mubr.bf16.mxu0 %v366
      %591 = vmatmul.mubr.bf16.gmra.mrb[0].mxu0 %v365
      %v592 = vpop.f32.mrb[0].mxu0
      %v593 = vadd.f32 0.0, %v592
      %v594 = vpop.f32.mrb[0].mxu0
      %v595 = vpop.f32.mrb[0].mxu0
      %v596 = vadd.f32 0.0, %v595
      %v597 = vpop.f32.mrb[0].mxu0
      %598 = vmatprep.mubr.bf16.mxu0 %v369
      %599 = vmatmul.mubr.bf16.gmra.mrb[0].mxu0 %v368
      %v600 = vpop.f32.mrb[0].mxu0
      %v601 = vadd.f32 0.0, %v600
      %v602 = vpop.f32.mrb[0].mxu0
      %v603 = vpop.f32.mrb[0].mxu0
      %v604 = vadd.f32 0.0, %v603
      %v605 = vpop.f32.mrb[0].mxu0
      %606 = vmatprep.mubr.bf16.mxu0 %v372
      %607 = vmatmul.mubr.bf16.gmra.mrb[0].mxu0 %v371
      %v608 = vpop.f32.mrb[0].mxu0
      %v609 = vadd.f32 0.0, %v608
      %v610 = vpop.f32.mrb[0].mxu0
      %v611 = vpop.f32.mrb[0].mxu0
      %v612 = vadd.f32 0.0, %v611
      %v613 = vpop.f32.mrb[0].mxu0
      %614 = vmatprep.mubr.bf16.mxu0 %v375
      %615 = vmatmul.mubr.bf16.gmra.mrb[0].mxu0 %v374
      %v616 = vpop.f32.mrb[0].mxu0
      %v617 = vadd.f32 0.0, %v616
      %v618 = vpop.f32.mrb[0].mxu0
      %v619 = vpop.f32.mrb[0].mxu0
      %v620 = vadd.f32 0.0, %v619
      %v621 = vpop.f32.mrb[0].mxu0
      %622 = vdwg.mxu0
      %623 = vmatprep.subr.bf16.mxu0 0
      %624 = vmatpush1.bf16.msra.mxu0 %v481
      %625 = vmatprep.subr.bf16.mxu0 0
      %626 = vmatpush1.bf16.msra.mxu0 %v482
      %627 = vmatprep.subr.bf16.mxu0 0
      %628 = vmatpush1.bf16.msra.mxu0 0
      %629 = vmatprep.subr.bf16.mxu0 0
      %630 = vmatpush1.bf16.msra.mxu0 0
      %631 = vmatprep.subr.bf16.mxu0 0
      %632 = vmatpush1.bf16.msra.mxu0 0
      %633 = vmatprep.subr.bf16.mxu0 0
      %634 = vmatpush1.bf16.msra.mxu0 0
      %635 = vmatprep.subr.bf16.mxu0 0
      %636 = vmatpush1.bf16.msra.mxu0 0
      %637 = vmatprep.subr.bf16.mxu0 0
      %638 = vmatpush1.bf16.msra.mxu0 0
      %639 = vmatprep.subr.bf16.mxu0 0
      %640 = vmatpush1.bf16.msra.mxu0 0
      %641 = vmatprep.subr.bf16.mxu0 0
      %642 = vmatpush1.bf16.msra.mxu0 0
      %643 = vmatprep.subr.bf16.mxu0 0
      %644 = vmatpush1.bf16.msra.mxu0 0
      %645 = vmatprep.subr.bf16.mxu0 0
      %646 = vmatpush1.bf16.msra.mxu0 0
      %647 = vmatprep.subr.bf16.mxu0 0
      %648 = vmatpush1.bf16.msra.mxu0 0
      %649 = vmatprep.subr.bf16.mxu0 0
      %650 = vmatpush1.bf16.msra.mxu0 0
      %651 = vmatprep.subr.bf16.mxu0 0
      %652 = vmatpush1.bf16.msra.mxu0 0
      %653 = vmatprep.subr.bf16.mxu0 0
      %654 = vmatpush1.bf16.msra.mxu0 0
      %655 = vmatprep.mubr.bf16.mxu0 0
      %656 = vmatmul.mubr.bf16.gmra.mrb[0].mxu0 %v503
      %v657 = vpop.f32.mrb[0].mxu0
      %v658 = vadd.f32 %v561, %v657
      %v659 = vpop.f32.mrb[0].mxu0
      %v660 = vpop.f32.mrb[0].mxu0
      %v661 = vadd.f32 %v564, %v660
      %v662 = vpop.f32.mrb[0].mxu0
      %663 = vmatprep.mubr.bf16.mxu0 0
      %664 = vmatmul.mubr.bf16.gmra.mrb[0].mxu0 %v506
      %v665 = vpop.f32.mrb[0].mxu0
      %v666 = vadd.f32 %v569, %v665
      %v667 = vpop.f32.mrb[0].mxu0
      %v668 = vpop.f32.mrb[0].mxu0
      %v669 = vadd.f32 %v572, %v668
      %v670 = vpop.f32.mrb[0].mxu0
      %671 = vmatprep.mubr.bf16.mxu0 0
      %672 = vmatmul.mubr.bf16.gmra.mrb[0].mxu0 %v509
      %v673 = vpop.f32.mrb[0].mxu0
      %v674 = vadd.f32 %v577, %v673
      %v675 = vpop.f32.mrb[0].mxu0
      %v676 = vpop.f32.mrb[0].mxu0
      %v677 = vadd.f32 %v580, %v676
      %v678 = vpop.f32.mrb[0].mxu0
      %679 = vmatprep.mubr.bf16.mxu0 0
      %680 = vmatmul.mubr.bf16.gmra.mrb[0].mxu0 %v512
      %v681 = vpop.f32.mrb[0].mxu0
      %v682 = vadd.f32 %v585, %v681
      %v683 = vpop.f32.mrb[0].mxu0
      %v684 = vpop.f32.mrb[0].mxu0
      %v685 = vadd.f32 %v588, %v684
      %v686 = vpop.f32.mrb[0].mxu0
      %687 = vmatprep.mubr.bf16.mxu0 0
      %688 = vmatmul.mubr.bf16.gmra.mrb[0].mxu0 %v515
      %v689 = vpop.f32.mrb[0].mxu0
      %v690 = vadd.f32 %v593, %v689
      %v691 = vpop.f32.mrb[0].mxu0
      %v692 = vpop.f32.mrb[0].mxu0
      %v693 = vadd.f32 %v596, %v692
      %v694 = vpop.f32.mrb[0].mxu0
      %695 = vmatprep.mubr.bf16.mxu0 0
      %696 = vmatmul.mubr.bf16.gmra.mrb[0].mxu0 %v518
      %v697 = vpop.f32.mrb[0].mxu0
      %v698 = vadd.f32 %v601, %v697
      %v699 = vpop.f32.mrb[0].mxu0
      %v700 = vpop.f32.mrb[0].mxu0
      %v701 = vadd.f32 %v604, %v700
      %v702 = vpop.f32.mrb[0].mxu0
      %703 = vmatprep.mubr.bf16.mxu0 0
      %704 = vmatmul.mubr.bf16.gmra.mrb[0].mxu0 %v521
      %v705 = vpop.f32.mrb[0].mxu0
      %v706 = vadd.f32 %v609, %v705
      %v707 = vpop.f32.mrb[0].mxu0
      %v708 = vpop.f32.mrb[0].mxu0
      %v709 = vadd.f32 %v612, %v708
      %v710 = vpop.f32.mrb[0].mxu0
      %711 = vmatprep.mubr.bf16.mxu0 0
      %712 = vmatmul.mubr.bf16.gmra.mrb[0].mxu0 %v524
      %v713 = vpop.f32.mrb[0].mxu0
      %v714 = vadd.f32 %v617, %v713
      %v715 = vpop.f32.mrb[0].mxu0
      %v716 = vpop.f32.mrb[0].mxu0
      %v717 = vadd.f32 %v620, %v716
      %v718 = vpop.f32.mrb[0].mxu0
      %719 = vdwg.mxu0
      %v720 = vld [vmem:[%s2] sm:$0x1]
      %v722 = vlaneseq
      %v723 = vshrl.u32 %v722, 7
      %v724 = vsub.s32 0, %v723
      %v725 = vrot.slane %v720, %v724
      %v727 = vmul.f32 %v658, %v725
      %v728 = vmul.f32 %v661, %v725
      %v729 = vmul.f32 %v666, %v725
      %v730 = vmul.f32 %v669, %v725
      %v731 = vmul.f32 %v674, %v725
      %v732 = vmul.f32 %v677, %v725
      %v733 = vmul.f32 %v682, %v725
      %v734 = vmul.f32 %v685, %v725
      %v735 = vmul.f32 %v690, %v725
      %v736 = vmul.f32 %v693, %v725
      %v737 = vmul.f32 %v698, %v725
      %v738 = vmul.f32 %v701, %v725
      %v739 = vmul.f32 %v706, %v725
      %v740 = vmul.f32 %v709, %v725
      %v741 = vmul.f32 %v714, %v725
      %v742 = vmul.f32 %v717, %v725
      %v743 = vld [vmem:[%s3] sm:$0x1]
      %v745 = vlaneseq
      %v746 = vshrl.u32 %v745, 7
      %v747 = vsub.s32 0, %v746
      %v748 = vrot.slane %v743, %v747
      %v750 = vadd.f32 %v727, %v748
      %v751 = vadd.f32 %v728, %v748
      %v752 = vadd.f32 %v729, %v748
      %v753 = vadd.f32 %v730, %v748
      %v754 = vadd.f32 %v731, %v748
      %v755 = vadd.f32 %v732, %v748
      %v756 = vadd.f32 %v733, %v748
      %v757 = vadd.f32 %v734, %v748
      %v758 = vadd.f32 %v735, %v748
      %v759 = vadd.f32 %v736, %v748
      %v760 = vadd.f32 %v737, %v748
      %v761 = vadd.f32 %v738, %v748
      %v762 = vadd.f32 %v739, %v748
      %v763 = vadd.f32 %v740, %v748
      %v764 = vadd.f32 %v741, %v748
      %v765 = vadd.f32 %v742, %v748
      %v766 = vmax.f32 %v750, 0.0
      %v767 = vmax.f32 %v751, 0.0
      %v768 = vmax.f32 %v752, 0.0
      %v769 = vmax.f32 %v753, 0.0
      %v770 = vmax.f32 %v754, 0.0
      %v771 = vmax.f32 %v755, 0.0
      %v772 = vmax.f32 %v756, 0.0
      %v773 = vmax.f32 %v757, 0.0
      %v774 = vmax.f32 %v758, 0.0
      %v775 = vmax.f32 %v759, 0.0
      %v776 = vmax.f32 %v760, 0.0
      %v777 = vmax.f32 %v761, 0.0
      %v778 = vmax.f32 %v762, 0.0
      %v779 = vmax.f32 %v763, 0.0
      %v780 = vmax.f32 %v764, 0.0
      %v781 = vmax.f32 %v765, 0.0
      %v782 = vpack.c.bf16 %v767, %v766
      %v783 = vpack.c.bf16 %v769, %v768
      %v784 = vpack.c.bf16 %v771, %v770
      %v785 = vpack.c.bf16 %v773, %v772
      %v786 = vpack.c.bf16 %v775, %v774
      %v787 = vpack.c.bf16 %v777, %v776
      %v788 = vpack.c.bf16 %v779, %v778
      %v789 = vpack.c.bf16 %v781, %v780
      %v798 = vunpack.c.l.b16 %v782
      %v799 = vunpack.c.h.b16 %v782
      %v800 = vunpack.c.l.b16 %v783
      %v801 = vunpack.c.h.b16 %v783
      %v802 = vunpack.c.l.b16 %v784
      %v803 = vunpack.c.h.b16 %v784
      %v804 = vunpack.c.l.b16 %v785
      %v805 = vunpack.c.h.b16 %v785
      %v806 = vunpack.c.l.b16 %v786
      %v807 = vunpack.c.h.b16 %v786
      %v808 = vunpack.c.l.b16 %v787
      %v809 = vunpack.c.h.b16 %v787
      %v810 = vunpack.c.l.b16 %v788
      %v811 = vunpack.c.h.b16 %v788
      %v812 = vunpack.c.l.b16 %v789
      %v813 = vunpack.c.h.b16 %v789
      %v814 = vpack.c.b16 %v798, %v798
      %v815 = vpack.c.b16 %v799, %v799
      %v816 = vpack.c.b16 %v800, %v800
      %v817 = vpack.c.b16 %v801, %v801
      %v818 = vpack.c.b16 %v802, %v802
      %v819 = vpack.c.b16 %v803, %v803
      %v820 = vpack.c.b16 %v804, %v804
      %v821 = vpack.c.b16 %v805, %v805
      %v822 = vpack.c.b16 %v806, %v806
      %v823 = vpack.c.b16 %v807, %v807
      %v824 = vpack.c.b16 %v808, %v808
      %v825 = vpack.c.b16 %v809, %v809
      %v826 = vpack.c.b16 %v810, %v810
      %v827 = vpack.c.b16 %v811, %v811
      %v828 = vpack.c.b16 %v812, %v812
      %v829 = vpack.c.b16 %v813, %v813
      %vm846 = vcmask 60416
      %847 = vst.msk [vmem:[%s202] sm:$0xf] %vm846, %v814
      %848 = vst.msk [vmem:[%s202 + $0x4] sm:$0xf] %vm846, %v815
      %849 = vst.msk [vmem:[%s202 + $0x8] sm:$0xf] %vm846, %v816
      %850 = vst.msk [vmem:[%s202 + $0xc] sm:$0xf] %vm846, %v817
      %851 = vst.msk [vmem:[%s202 + $0x10] sm:$0xf] %vm846, %v818
      %852 = vst.msk [vmem:[%s202 + $0x14] sm:$0xf] %vm846, %v819
      %853 = vst.msk [vmem:[%s202 + $0x18] sm:$0xf] %vm846, %v820
      %854 = vst.msk [vmem:[%s202 + $0x1c] sm:$0xf] %vm846, %v821
      %855 = vst.msk [vmem:[%s202 + $0x20] sm:$0xf] %vm846, %v822
      %856 = vst.msk [vmem:[%s202 + $0x24] sm:$0xf] %vm846, %v823
      %857 = vst.msk [vmem:[%s202 + $0x28] sm:$0xf] %vm846, %v824
      %858 = vst.msk [vmem:[%s202 + $0x2c] sm:$0xf] %vm846, %v825
      %859 = vst.msk [vmem:[%s202 + $0x30] sm:$0xf] %vm846, %v826
      %860 = vst.msk [vmem:[%s202 + $0x34] sm:$0xf] %vm846, %v827
      %861 = vst.msk [vmem:[%s202 + $0x38] sm:$0xf] %vm846, %v828
      %862 = vst.msk [vmem:[%s202 + $0x3c] sm:$0xf] %vm846, %v829
      %s863 = smul.u32 16, %s15
      %p864 = scmp.lt.s32.totalorder %s863, 63
      %s865 = scalar_select %p864, %s863, 63
      %s866 = smul.addr %s865, 4
      %s867 = scalar_lea.vmem %s4, %s866
      // Predicated region
      $region37: #{_lambda_.35} parent=35 // pred_check
        %p868 = pneg %p122
      $region38: #{_lambda_.35} parent=35 // pred_check_branch
        %870 = sbr.rel (%p868) target = $region40
      $region39: #{_lambda_.35} parent=35 // pred_region
        %s871 = smul.u32 16, %s15
      $region40: #{_lambda_.35} parent=35 // pred_fallthru
        _
    $region36: #{_lambda_.35} parent=5 // pred_fallthru
      _
    %p872 = scmp.le.s32.totalorder 2, %s10
    // Predicated region
    $region41: #{_lambda_.35} parent=5 // pred_check
      %p873 = pneg %p872
    $region42: #{_lambda_.35} parent=5 // pred_check_branch
      %875 = sbr.rel (%p873) target = $region44
    $region43: #{_lambda_.35} parent=5 // pred_region
      %s876 = ssub.s32 %s10, 2
      // Predicated region
      $region45: #{_lambda_.35} parent=43 // pred_check
        %p877 = pneg %p128
      $region46: #{_lambda_.35} parent=43 // pred_check_branch
        %879 = sbr.rel (%p877) target = $region48
      $region47: #{_lambda_.35} parent=43 // pred_region
        %s880 = smul.u32 16, %s16
        %p881 = scmp.lt.s32.totalorder %s880, 63
        %s882 = scalar_select %p881, %s880, 63
        %s883 = smul.addr %s882, 4
        %s884 = scalar_lea.vmem %s4, %s883
      $region48: #{_lambda_.35} parent=43 // pred_fallthru
        _
    $region44: #{_lambda_.35} parent=5 // pred_fallthru
      _
  $region6: #{_lambda_.35} parent=0 // loop_footer
    %s14 = sadd.s32 1, %s10
  $region7: #{_lambda_.35} parent=0 // loop_footer_branch
    %9 = sbr.rel target = $region3
  $region8: #{_lambda_.35} parent=0 // loop_exit
    _

// kernel: _lambda_.38
$region0: #{_lambda_.38}
  #allocation0 [shape = 'u32[]', space=smem, size = 0x4, offset = 0x4, fixed_abs, tag = 'smem constant byte address 0x4 - core index']
  #allocation1 [shape = 'u32[144,128]{1,0:T(1,128)}', space=vmem, size = 0x12000, scoped, tag = 'internal scratch']
  %s0 = inlined_call_operand.vmem [shape: bf16[512,72], index: 0, kind: input, shape index: {}]
  %s1 = inlined_call_operand.vmem [shape: bf16[72,8], index: 1, kind: input, shape index: {}]
  %s2 = inlined_call_operand.vmem [shape: f32[1,8], index: 2, kind: input, shape index: {}]
  %s3 = inlined_call_operand.vmem [shape: f32[1,8], index: 3, kind: input, shape index: {}]
  %s4 = inlined_call_operand.vmem [shape: bf16[512,8], index: 4, kind: input, shape index: {}]
  %s5 = inlined_call_operand.vmem [shape: bf16[512,8], index: 5, kind: output, shape index: {}]
  %s6 = sld [smem:[#allocation0]]
  $region53: #{_lambda_.38} parent=0
    _
  %s8 = ssub.s32 1, %s6
  %s9 = scalar_select 0, %s8, %s6
  loop: start=0, step=1, limit=6
  $region2: #{_lambda_.38} parent=0 // loop_pre_header
    _
  $region3: #{_lambda_.38} parent=0 // loop_header
    %s11 = sphi 0, %s15
    %p12 = scmp.ge.s32.totalorder %s11, 6
    %s21 = sphi 0, %s23
    %s24 = sphi 0, %s21
    %s25 = sphi 0, %s24
    %s41 = sphi 0, %s25
    %s45 = sphi 0, %s45
    %s47 = sphi 0, %s45
    %s48 = sphi 0, %s47
    %s62 = sphi 0, %s48
    %s66 = sphi 0, %s66
    %s68 = sphi 0, %s66
    %s69 = sphi 0, %s68
    %s83 = sphi 0, %s69
    %s87 = sphi 0, %s87
    %s89 = sphi 0, %s87
    %s90 = sphi 0, %s89
    %s104 = sphi 0, %s90
    %s110 = sphi 0, %s112
    %s113 = sphi 0, %s110
    %s114 = sphi 0, %s113
    %s130 = sphi 0, %s114
    %s136 = sphi 0, %s138
    %s139 = sphi 0, %s136
    %s140 = sphi 0, %s139
    %s156 = sphi 0, %s140
  $region4: #{_lambda_.38} parent=0 // loop_header_branch
    %14 = sbr.rel (%p12) target = $region8
  $region5: #{_lambda_.38} parent=0 // loop_body
    %s16 = ssub.s32 %s11, 1
    %s17 = ssub.s32 %s11, 2
    %s18 = sadd.s32 %s11, 1
    %s19 = ssub.s32 %s11, %s18
    %p20 = scmp.eq.s32.totalorder %s19, 0
    %s22 = sadd.s32 %s21, 1
    %s23 = scalar_select %p20, %s21, %s22
    %p26 = pneg %p20
    %p27 = scmp.eq.s32.totalorder %s11, 3
    %p28 = por %p26, %p27
    %p29 = scmp.ne.s32.totalorder %s21, %s24
    %p30 = scmp.eq.s32.totalorder %s11, 0
    %p31 = por %p29, %p30
    %p32 = scmp.ne.s32.totalorder %s21, %s24
    %p33 = scmp.eq.s32.totalorder %s16, 3
    %p34 = por %p32, %p33
    %p35 = scmp.ne.s32.totalorder %s24, %s25
    %p36 = scmp.eq.s32.totalorder %s16, 0
    %p37 = por %p35, %p36
    %p38 = scmp.ne.s32.totalorder %s24, %s25
    %p39 = scmp.eq.s32.totalorder %s17, 3
    %p40 = por %p38, %p39
    %p42 = scmp.ne.s32.totalorder %s25, %s41
    %p43 = scmp.eq.s32.totalorder %s17, 0
    %p44 = por %p42, %p43
    %s46 = sadd.s32 %s45, 1
    %p49 = scmp.eq.s32.totalorder %s11, 3
    %p50 = scmp.ne.s32.totalorder %s45, %s47
    %p51 = scmp.eq.s32.totalorder %s11, 0
    %p52 = por %p50, %p51
    %p53 = scmp.ne.s32.totalorder %s45, %s47
    %p54 = scmp.eq.s32.totalorder %s16, 3
    %p55 = por %p53, %p54
    %p56 = scmp.ne.s32.totalorder %s47, %s48
    %p57 = scmp.eq.s32.totalorder %s16, 0
    %p58 = por %p56, %p57
    %p59 = scmp.ne.s32.totalorder %s47, %s48
    %p60 = scmp.eq.s32.totalorder %s17, 3
    %p61 = por %p59, %p60
    %p63 = scmp.ne.s32.totalorder %s48, %s62
    %p64 = scmp.eq.s32.totalorder %s17, 0
    %p65 = por %p63, %p64
    %s67 = sadd.s32 %s66, 1
    %p70 = scmp.eq.s32.totalorder %s11, 3
    %p71 = scmp.ne.s32.totalorder %s66, %s68
    %p72 = scmp.eq.s32.totalorder %s11, 0
    %p73 = por %p71, %p72
    %p74 = scmp.ne.s32.totalorder %s66, %s68
    %p75 = scmp.eq.s32.totalorder %s16, 3
    %p76 = por %p74, %p75
    %p77 = scmp.ne.s32.totalorder %s68, %s69
    %p78 = scmp.eq.s32.totalorder %s16, 0
    %p79 = por %p77, %p78
    %p80 = scmp.ne.s32.totalorder %s68, %s69
    %p81 = scmp.eq.s32.totalorder %s17, 3
    %p82 = por %p80, %p81
    %p84 = scmp.ne.s32.totalorder %s69, %s83
    %p85 = scmp.eq.s32.totalorder %s17, 0
    %p86 = por %p84, %p85
    %s88 = sadd.s32 %s87, 1
    %p91 = scmp.eq.s32.totalorder %s11, 3
    %p92 = scmp.ne.s32.totalorder %s87, %s89
    %p93 = scmp.eq.s32.totalorder %s11, 0
    %p94 = por %p92, %p93
    %p95 = scmp.ne.s32.totalorder %s87, %s89
    %p96 = scmp.eq.s32.totalorder %s16, 3
    %p97 = por %p95, %p96
    %p98 = scmp.ne.s32.totalorder %s89, %s90
    %p99 = scmp.eq.s32.totalorder %s16, 0
    %p100 = por %p98, %p99
    %p101 = scmp.ne.s32.totalorder %s89, %s90
    %p102 = scmp.eq.s32.totalorder %s17, 3
    %p103 = por %p101, %p102
    %p105 = scmp.ne.s32.totalorder %s90, %s104
    %p106 = scmp.eq.s32.totalorder %s17, 0
    %p107 = por %p105, %p106
    %s108 = ssub.s32 %s11, %s18
    %p109 = scmp.eq.s32.totalorder %s108, 0
    %s111 = sadd.s32 %s110, 1
    %s112 = scalar_select %p109, %s110, %s111
    %p115 = pneg %p109
    %p116 = scmp.eq.s32.totalorder %s11, 3
    %p117 = por %p115, %p116
    %p118 = scmp.ne.s32.totalorder %s110, %s113
    %p119 = scmp.eq.s32.totalorder %s11, 0
    %p120 = por %p118, %p119
    %p121 = scmp.ne.s32.totalorder %s110, %s113
    %p122 = scmp.eq.s32.totalorder %s16, 3
    %p123 = por %p121, %p122
    %p124 = scmp.ne.s32.totalorder %s113, %s114
    %p125 = scmp.eq.s32.totalorder %s16, 0
    %p126 = por %p124, %p125
    %p127 = scmp.ne.s32.totalorder %s113, %s114
    %p128 = scmp.eq.s32.totalorder %s17, 3
    %p129 = por %p127, %p128
    %p131 = scmp.ne.s32.totalorder %s114, %s130
    %p132 = scmp.eq.s32.totalorder %s17, 0
    %p133 = por %p131, %p132
    %s134 = ssub.s32 %s11, %s18
    %p135 = scmp.eq.s32.totalorder %s134, 0
    %s137 = sadd.s32 %s136, 1
    %s138 = scalar_select %p135, %s136, %s137
    %p141 = pneg %p135
    %p142 = scmp.eq.s32.totalorder %s11, 3
    %p143 = por %p141, %p142
    %p144 = scmp.ne.s32.totalorder %s136, %s139
    %p145 = scmp.eq.s32.totalorder %s11, 0
    %p146 = por %p144, %p145
    %p147 = scmp.ne.s32.totalorder %s136, %s139
    %p148 = scmp.eq.s32.totalorder %s16, 3
    %p149 = por %p147, %p148
    %p150 = scmp.ne.s32.totalorder %s139, %s140
    %p151 = scmp.eq.s32.totalorder %s16, 0
    %p152 = por %p150, %p151
    %p153 = scmp.ne.s32.totalorder %s139, %s140
    %p154 = scmp.eq.s32.totalorder %s17, 3
    %p155 = por %p153, %p154
    %p157 = scmp.ne.s32.totalorder %s140, %s156
    %p158 = scmp.eq.s32.totalorder %s17, 0
    %p159 = por %p157, %p158
    %p160 = scmp.le.s32.totalorder 1, %s11
    %p161 = scmp.lt.s32.totalorder %s11, 5
    %p162 = pnand %p160, %p161
    %p163 = pneg %p162
    // Predicated region
    $region9: #{_lambda_.38} parent=5 // pred_check
      _
    $region10: #{_lambda_.38} parent=5 // pred_check_branch
      %165 = sbr.rel (%p162) target = $region12
    $region11: #{_lambda_.38} parent=5 // pred_region
      %s166 = ssub.s32 %s11, 1
      // Predicated region
      $region13: #{_lambda_.38} parent=11 // pred_check
        %p167 = pneg %p58
      $region14: #{_lambda_.38} parent=11 // pred_check_branch
        %169 = sbr.rel (%p167) target = $region16
      $region15: #{_lambda_.38} parent=11 // pred_region
        _
      $region16: #{_lambda_.38} parent=11 // pred_fallthru
        _
      // Predicated region
      $region17: #{_lambda_.38} parent=11 // pred_check
        %p170 = pneg %p79
      $region18: #{_lambda_.38} parent=11 // pred_check_branch
        %172 = sbr.rel (%p170) target = $region20
      $region19: #{_lambda_.38} parent=11 // pred_region
        _
      $region20: #{_lambda_.38} parent=11 // pred_fallthru
        _
      // Predicated region
      $region21: #{_lambda_.38} parent=11 // pred_check
        %p173 = pneg %p100
      $region22: #{_lambda_.38} parent=11 // pred_check_branch
        %175 = sbr.rel (%p173) target = $region24
      $region23: #{_lambda_.38} parent=11 // pred_region
        _
      $region24: #{_lambda_.38} parent=11 // pred_fallthru
        _
    $region12: #{_lambda_.38} parent=5 // pred_fallthru
      _
    %p176 = scmp.lt.s32.totalorder %s11, 4
    // Predicated region
    $region25: #{_lambda_.38} parent=5 // pred_check
      %p177 = pneg %p176
    $region26: #{_lambda_.38} parent=5 // pred_check_branch
      %179 = sbr.rel (%p177) target = $region28
    $region27: #{_lambda_.38} parent=5 // pred_region
      // Predicated region
      $region29: #{_lambda_.38} parent=27 // pred_check
        %p180 = pneg %p31
      $region30: #{_lambda_.38} parent=27 // pred_check_branch
        %182 = sbr.rel (%p180) target = $region32
      $region31: #{_lambda_.38} parent=27 // pred_region
        %s183 = smul.u32 16, %s11
        %p184 = scmp.lt.s32.totalorder %s183, 63
        %s185 = scalar_select %p184, %s183, 63
        %s186 = smul.addr %s185, 4
        %s187 = scalar_lea.vmem %s0, %s186
        %s188 = smul.u32 16, %s11
      $region32: #{_lambda_.38} parent=27 // pred_fallthru
        _
      // Predicated region
      $region33: #{_lambda_.38} parent=27 // pred_check
        %p189 = pneg %p120
      $region34: #{_lambda_.38} parent=27 // pred_check_branch
        %191 = sbr.rel (%p189) target = $region36
      $region35: #{_lambda_.38} parent=27 // pred_region
        %s192 = smul.u32 16, %s11
        %p193 = scmp.lt.s32.totalorder %s192, 63
        %s194 = scalar_select %p193, %s192, 63
        %s195 = smul.addr %s194, 4
        %s196 = scalar_lea.vmem %s4, %s195
        %s197 = smul.u32 16, %s11
      $region36: #{_lambda_.38} parent=27 // pred_fallthru
        _
    $region28: #{_lambda_.38} parent=5 // pred_fallthru
      _
    %p198 = scmp.le.s32.totalorder 1, %s11
    %p199 = scmp.lt.s32.totalorder %s11, 5
    %p200 = pnand %p198, %p199
    %p201 = pneg %p200
    // Predicated region
    $region37: #{_lambda_.38} parent=5 // pred_check
      _
    $region38: #{_lambda_.38} parent=5 // pred_check_branch
      %203 = sbr.rel (%p200) target = $region40
    $region39: #{_lambda_.38} parent=5 // pred_region
      %s204 = ssub.s32 %s11, 1
      %s205 = smul.u32 16, %s16
      %p206 = scmp.lt.s32.totalorder %s205, 63
      %s207 = scalar_select %p206, %s205, 63
      %s208 = smul.addr %s207, 4
      %s209 = scalar_lea.vmem %s0, %s208
      %p210 = pneg %p37
      %p211 = pneg %p34
      %p212 = pneg %p58
      %p213 = pneg %p55
      %p214 = pneg %p79
      %p215 = pneg %p76
      %p216 = pneg %p100
      %p217 = pneg %p97
      %s218 = smul.u32 16, %s16
      %p219 = scmp.lt.s32.totalorder %s218, 63
      %s220 = scalar_select %p219, %s218, 63
      %s221 = smul.addr %s220, 4
      %s222 = scalar_lea.vmem %s4, %s221
      %p223 = pneg %p126
      %p224 = pneg %p123
      %p225 = pneg %p152
      %p226 = pneg %p149
      %s227 = smul.u32 16, %s16
      %p228 = scmp.lt.s32.totalorder %s227, 63
      %s229 = scalar_select %p228, %s227, 63
      %s230 = smul.addr %s229, 4
      %s231 = scalar_lea.vmem %s5, %s230
      %s232 = smul.u32 16, %s16
      %p233 = scmp.lt.s32.totalorder %s232, 63
      %s234 = scalar_select %p233, %s232, 63
      %s235 = smul.addr %s234, 4
      %s236 = scalar_lea.vmem %s0, %s235
      %s237 = smul.u32 16, %s16
      %s238 = smul.u32 16, %s16
      %p239 = scmp.lt.s32.totalorder %s238, 63
      %s240 = scalar_select %p239, %s238, 63
      %s241 = smul.addr %s240, 4
      %s242 = scalar_lea.vmem %s4, %s241
      %s243 = smul.u32 16, %s16
      %s244 = smul.u32 16, %s16
      %p245 = scmp.lt.s32.totalorder %s244, 63
      %s246 = scalar_select %p245, %s244, 63
      %s247 = smul.addr %s246, 4
      %s248 = scalar_lea.vmem %s5, %s247
      %s249 = smul.u32 16, %s16
      %v251 = vld [vmem:[%s236] sm:$0xf]
      %v252 = vld [vmem:[%s236 + $0x4] sm:$0xf]
      %v253 = vld [vmem:[%s236 + $0x8] sm:$0xf]
      %v254 = vld [vmem:[%s236 + $0xc] sm:$0xf]
      %v255 = vld [vmem:[%s236 + $0x10] sm:$0xf]
      %v256 = vld [vmem:[%s236 + $0x14] sm:$0xf]
      %v257 = vld [vmem:[%s236 + $0x18] sm:$0xf]
      %v258 = vld [vmem:[%s236 + $0x1c] sm:$0xf]
      %v259 = vld [vmem:[%s236 + $0x20] sm:$0xf]
      %v260 = vld [vmem:[%s236 + $0x24] sm:$0xf]
      %v261 = vld [vmem:[%s236 + $0x28] sm:$0xf]
      %v262 = vld [vmem:[%s236 + $0x2c] sm:$0xf]
      %v263 = vld [vmem:[%s236 + $0x30] sm:$0xf]
      %v264 = vld [vmem:[%s236 + $0x34] sm:$0xf]
      %v265 = vld [vmem:[%s236 + $0x38] sm:$0xf]
      %v266 = vld [vmem:[%s236 + $0x3c] sm:$0xf]
      %v267 = vld [vmem:[%s1] sm:$0xf]
      %v268 = vld [vmem:[%s1 + $0x4] sm:$0xf]
      %v269 = vld [vmem:[%s1 + $0x8] sm:$0xf]
      %v270 = vld [vmem:[%s1 + $0xc] sm:$0xf]
      %v271 = vld [vmem:[%s1 + $0x10] sm:$0xf]
      %v272 = vld [vmem:[%s1 + $0x14] sm:$0xf]
      %v273 = vld [vmem:[%s1 + $0x18] sm:$0xf]
      %v274 = vld [vmem:[%s1 + $0x1c] sm:$0xf]
      %v275 = vld [vmem:[%s1 + $0x20] sm:$0xf]
      %v292 = vunpack.c.l.b16 %v251
      %v293 = vunpack.c.l.b16 %v252
      %v294 = vunpack.c.l.b16 %v253
      %v295 = vunpack.c.l.b16 %v254
      %v296 = vunpack.c.l.b16 %v255
      %v297 = vunpack.c.l.b16 %v256
      %v298 = vunpack.c.l.b16 %v257
      %v299 = vunpack.c.l.b16 %v258
      %v300 = vunpack.c.l.b16 %v259
      %v301 = vunpack.c.l.b16 %v260
      %v302 = vunpack.c.l.b16 %v261
      %v303 = vunpack.c.l.b16 %v262
      %v304 = vunpack.c.l.b16 %v263
      %v305 = vunpack.c.l.b16 %v264
      %v306 = vunpack.c.l.b16 %v265
      %v307 = vunpack.c.l.b16 %v266
      %v308 = vpack.c.b16 %v293, %v292
      %v309 = vpack.c.b16 %v295, %v294
      %v310 = vpack.c.b16 %v297, %v296
      %v311 = vpack.c.b16 %v299, %v298
      %v312 = vpack.c.b16 %v301, %v300
      %v313 = vpack.c.b16 %v303, %v302
      %v314 = vpack.c.b16 %v305, %v304
      %v315 = vpack.c.b16 %v307, %v306
      %v325 = vunpack.c.l.b16 %v267
      %v326 = vunpack.c.l.b16 %v268
      %v327 = vunpack.c.l.b16 %v269
      %v328 = vunpack.c.l.b16 %v270
      %v329 = vunpack.c.l.b16 %v271
      %v330 = vunpack.c.l.b16 %v272
      %v331 = vunpack.c.l.b16 %v273
      %v332 = vunpack.c.l.b16 %v274
      %v333 = vunpack.c.l.b16 %v275
      %v334 = vpack.c.b16 %v326, %v325
      %v335 = vpack.c.b16 %v328, %v327
      %v336 = vpack.c.b16 %v330, %v329
      %v337 = vpack.c.b16 %v332, %v331
      %v338 = vpack.c.b16 %v333, %v333
      %vm343 = vcmask 588800
      %v345 = vsel %vm343, %v308, 0
      %v348 = vsel %vm343, %v309, 0
      %v351 = vsel %vm343, %v310, 0
      %v354 = vsel %vm343, %v311, 0
      %v357 = vsel %vm343, %v312, 0
      %v360 = vsel %vm343, %v313, 0
      %v363 = vsel %vm343, %v314, 0
      %v366 = vsel %vm343, %v315, 0
      %vm368 = vcmask 1043456
      %v370 = vsel %vm368, %v338, 0
      %372 = vmatprep.subr.bf16.mxu0 0
      %373 = vmatpush1.bf16.msra.mxu0 %v334
      %374 = vmatprep.subr.bf16.mxu0 0
      %375 = vmatpush1.bf16.msra.mxu0 %v335
      %376 = vmatprep.subr.bf16.mxu0 0
      %377 = vmatpush1.bf16.msra.mxu0 %v336
      %378 = vmatprep.subr.bf16.mxu0 0
      %379 = vmatpush1.bf16.msra.mxu0 %v337
      %380 = vmatprep.subr.bf16.mxu0 0
      %381 = vmatpush1.bf16.msra.mxu0 %v370
      %382 = vmatprep.subr.bf16.mxu0 0
      %383 = vmatpush1.bf16.msra.mxu0 0
      %384 = vmatprep.subr.bf16.mxu0 0
      %385 = vmatpush1.bf16.msra.mxu0 0
      %386 = vmatprep.subr.bf16.mxu0 0
      %387 = vmatpush1.bf16.msra.mxu0 0
      %388 = vmatprep.subr.bf16.mxu0 0
      %389 = vmatpush1.bf16.msra.mxu0 0
      %390 = vmatprep.subr.bf16.mxu0 0
      %391 = vmatpush1.bf16.msra.mxu0 0
      %392 = vmatprep.subr.bf16.mxu0 0
      %393 = vmatpush1.bf16.msra.mxu0 0
      %394 = vmatprep.subr.bf16.mxu0 0
      %395 = vmatpush1.bf16.msra.mxu0 0
      %396 = vmatprep.subr.bf16.mxu0 0
      %397 = vmatpush1.bf16.msra.mxu0 0
      %398 = vmatprep.subr.bf16.mxu0 0
      %399 = vmatpush1.bf16.msra.mxu0 0
      %400 = vmatprep.subr.bf16.mxu0 0
      %401 = vmatpush1.bf16.msra.mxu0 0
      %402 = vmatprep.subr.bf16.mxu0 0
      %403 = vmatpush1.bf16.msra.mxu0 0
      %404 = vmatprep.mubr.bf16.mxu0 0
      %405 = vmatmul.mubr.bf16.gmra.mrb[0].mxu0 %v345
      %v406 = vpop.f32.mrb[0].mxu0
      %v407 = vadd.f32 0.0, %v406
      %v408 = vpop.f32.mrb[0].mxu0
      %v409 = vpop.f32.mrb[0].mxu0
      %v410 = vadd.f32 0.0, %v409
      %v411 = vpop.f32.mrb[0].mxu0
      %412 = vmatprep.mubr.bf16.mxu0 0
      %413 = vmatmul.mubr.bf16.gmra.mrb[0].mxu0 %v348
      %v414 = vpop.f32.mrb[0].mxu0
      %v415 = vadd.f32 0.0, %v414
      %v416 = vpop.f32.mrb[0].mxu0
      %v417 = vpop.f32.mrb[0].mxu0
      %v418 = vadd.f32 0.0, %v417
      %v419 = vpop.f32.mrb[0].mxu0
      %420 = vmatprep.mubr.bf16.mxu0 0
      %421 = vmatmul.mubr.bf16.gmra.mrb[0].mxu0 %v351
      %v422 = vpop.f32.mrb[0].mxu0
      %v423 = vadd.f32 0.0, %v422
      %v424 = vpop.f32.mrb[0].mxu0
      %v425 = vpop.f32.mrb[0].mxu0
      %v426 = vadd.f32 0.0, %v425
      %v427 = vpop.f32.mrb[0].mxu0
      %428 = vmatprep.mubr.bf16.mxu0 0
      %429 = vmatmul.mubr.bf16.gmra.mrb[0].mxu0 %v354
      %v430 = vpop.f32.mrb[0].mxu0
      %v431 = vadd.f32 0.0, %v430
      %v432 = vpop.f32.mrb[0].mxu0
      %v433 = vpop.f32.mrb[0].mxu0
      %v434 = vadd.f32 0.0, %v433
      %v435 = vpop.f32.mrb[0].mxu0
      %436 = vmatprep.mubr.bf16.mxu0 0
      %437 = vmatmul.mubr.bf16.gmra.mrb[0].mxu0 %v357
      %v438 = vpop.f32.mrb[0].mxu0
      %v439 = vadd.f32 0.0, %v438
      %v440 = vpop.f32.mrb[0].mxu0
      %v441 = vpop.f32.mrb[0].mxu0
      %v442 = vadd.f32 0.0, %v441
      %v443 = vpop.f32.mrb[0].mxu0
      %444 = vmatprep.mubr.bf16.mxu0 0
      %445 = vmatmul.mubr.bf16.gmra.mrb[0].mxu0 %v360
      %v446 = vpop.f32.mrb[0].mxu0
      %v447 = vadd.f32 0.0, %v446
      %v448 = vpop.f32.mrb[0].mxu0
      %v449 = vpop.f32.mrb[0].mxu0
      %v450 = vadd.f32 0.0, %v449
      %v451 = vpop.f32.mrb[0].mxu0
      %452 = vmatprep.mubr.bf16.mxu0 0
      %453 = vmatmul.mubr.bf16.gmra.mrb[0].mxu0 %v363
      %v454 = vpop.f32.mrb[0].mxu0
      %v455 = vadd.f32 0.0, %v454
      %v456 = vpop.f32.mrb[0].mxu0
      %v457 = vpop.f32.mrb[0].mxu0
      %v458 = vadd.f32 0.0, %v457
      %v459 = vpop.f32.mrb[0].mxu0
      %460 = vmatprep.mubr.bf16.mxu0 0
      %461 = vmatmul.mubr.bf16.gmra.mrb[0].mxu0 %v366
      %v462 = vpop.f32.mrb[0].mxu0
      %v463 = vadd.f32 0.0, %v462
      %v464 = vpop.f32.mrb[0].mxu0
      %v465 = vpop.f32.mrb[0].mxu0
      %v466 = vadd.f32 0.0, %v465
      %v467 = vpop.f32.mrb[0].mxu0
      %468 = vdwg.mxu0
      %v469 = vld [vmem:[%s2] sm:$0x1]
      %v471 = vlaneseq
      %v472 = vshrl.u32 %v471, 7
      %v473 = vsub.s32 0, %v472
      %v474 = vrot.slane %v469, %v473
      %v476 = vmul.f32 %v407, %v474
      %v477 = vmul.f32 %v410, %v474
      %v478 = vmul.f32 %v415, %v474
      %v479 = vmul.f32 %v418, %v474
      %v480 = vmul.f32 %v423, %v474
      %v481 = vmul.f32 %v426, %v474
      %v482 = vmul.f32 %v431, %v474
      %v483 = vmul.f32 %v434, %v474
      %v484 = vmul.f32 %v439, %v474
      %v485 = vmul.f32 %v442, %v474
      %v486 = vmul.f32 %v447, %v474
      %v487 = vmul.f32 %v450, %v474
      %v488 = vmul.f32 %v455, %v474
      %v489 = vmul.f32 %v458, %v474
      %v490 = vmul.f32 %v463, %v474
      %v491 = vmul.f32 %v466, %v474
      %v492 = vld [vmem:[%s3] sm:$0x1]
      %v494 = vlaneseq
      %v495 = vshrl.u32 %v494, 7
      %v496 = vsub.s32 0, %v495
      %v497 = vrot.slane %v492, %v496
      %v499 = vadd.f32 %v476, %v497
      %v500 = vadd.f32 %v477, %v497
      %v501 = vadd.f32 %v478, %v497
      %v502 = vadd.f32 %v479, %v497
      %v503 = vadd.f32 %v480, %v497
      %v504 = vadd.f32 %v481, %v497
      %v505 = vadd.f32 %v482, %v497
      %v506 = vadd.f32 %v483, %v497
      %v507 = vadd.f32 %v484, %v497
      %v508 = vadd.f32 %v485, %v497
      %v509 = vadd.f32 %v486, %v497
      %v510 = vadd.f32 %v487, %v497
      %v511 = vadd.f32 %v488, %v497
      %v512 = vadd.f32 %v489, %v497
      %v513 = vadd.f32 %v490, %v497
      %v514 = vadd.f32 %v491, %v497
      %v515 = vld [vmem:[%s242] sm:$0xf]
      %v516 = vld [vmem:[%s242 + $0x4] sm:$0xf]
      %v517 = vld [vmem:[%s242 + $0x8] sm:$0xf]
      %v518 = vld [vmem:[%s242 + $0xc] sm:$0xf]
      %v519 = vld [vmem:[%s242 + $0x10] sm:$0xf]
      %v520 = vld [vmem:[%s242 + $0x14] sm:$0xf]
      %v521 = vld [vmem:[%s242 + $0x18] sm:$0xf]
      %v522 = vld [vmem:[%s242 + $0x1c] sm:$0xf]
      %v523 = vld [vmem:[%s242 + $0x20] sm:$0xf]
      %v524 = vld [vmem:[%s242 + $0x24] sm:$0xf]
      %v525 = vld [vmem:[%s242 + $0x28] sm:$0xf]
      %v526 = vld [vmem:[%s242 + $0x2c] sm:$0xf]
      %v527 = vld [vmem:[%s242 + $0x30] sm:$0xf]
      %v528 = vld [vmem:[%s242 + $0x34] sm:$0xf]
      %v529 = vld [vmem:[%s242 + $0x38] sm:$0xf]
      %v530 = vld [vmem:[%s242 + $0x3c] sm:$0xf]
      %v531 = vunpack.c.l.bf16 %v515
      %v532 = vunpack.c.l.bf16 %v516
      %v533 = vunpack.c.l.bf16 %v517
      %v534 = vunpack.c.l.bf16 %v518
      %v535 = vunpack.c.l.bf16 %v519
      %v536 = vunpack.c.l.bf16 %v520
      %v537 = vunpack.c.l.bf16 %v521
      %v538 = vunpack.c.l.bf16 %v522
      %v539 = vunpack.c.l.bf16 %v523
      %v540 = vunpack.c.l.bf16 %v524
      %v541 = vunpack.c.l.bf16 %v525
      %v542 = vunpack.c.l.bf16 %v526
      %v543 = vunpack.c.l.bf16 %v527
      %v544 = vunpack.c.l.bf16 %v528
      %v545 = vunpack.c.l.bf16 %v529
      %v546 = vunpack.c.l.bf16 %v530
      %v547 = vadd.f32 %v499, %v531
      %v548 = vadd.f32 %v500, %v532
      %v549 = vadd.f32 %v501, %v533
      %v550 = vadd.f32 %v502, %v534
      %v551 = vadd.f32 %v503, %v535
      %v552 = vadd.f32 %v504, %v536
      %v553 = vadd.f32 %v505, %v537
      %v554 = vadd.f32 %v506, %v538
      %v555 = vadd.f32 %v507, %v539
      %v556 = vadd.f32 %v508, %v540
      %v557 = vadd.f32 %v509, %v541
      %v558 = vadd.f32 %v510, %v542
      %v559 = vadd.f32 %v511, %v543
      %v560 = vadd.f32 %v512, %v544
      %v561 = vadd.f32 %v513, %v545
      %v562 = vadd.f32 %v514, %v546
      %v563 = vmax.f32 %v547, 0.0
      %v564 = vmax.f32 %v548, 0.0
      %v565 = vmax.f32 %v549, 0.0
      %v566 = vmax.f32 %v550, 0.0
      %v567 = vmax.f32 %v551, 0.0
      %v568 = vmax.f32 %v552, 0.0
      %v569 = vmax.f32 %v553, 0.0
      %v570 = vmax.f32 %v554, 0.0
      %v571 = vmax.f32 %v555, 0.0
      %v572 = vmax.f32 %v556, 0.0
      %v573 = vmax.f32 %v557, 0.0
      %v574 = vmax.f32 %v558, 0.0
      %v575 = vmax.f32 %v559, 0.0
      %v576 = vmax.f32 %v560, 0.0
      %v577 = vmax.f32 %v561, 0.0
      %v578 = vmax.f32 %v562, 0.0
      %v579 = vpack.c.bf16 %v564, %v563
      %v580 = vpack.c.bf16 %v566, %v565
      %v581 = vpack.c.bf16 %v568, %v567
      %v582 = vpack.c.bf16 %v570, %v569
      %v583 = vpack.c.bf16 %v572, %v571
      %v584 = vpack.c.bf16 %v574, %v573
      %v585 = vpack.c.bf16 %v576, %v575
      %v586 = vpack.c.bf16 %v578, %v577
      %v595 = vunpack.c.l.b16 %v579
      %v596 = vunpack.c.h.b16 %v579
      %v597 = vunpack.c.l.b16 %v580
      %v598 = vunpack.c.h.b16 %v580
      %v599 = vunpack.c.l.b16 %v581
      %v600 = vunpack.c.h.b16 %v581
      %v601 = vunpack.c.l.b16 %v582
      %v602 = vunpack.c.h.b16 %v582
      %v603 = vunpack.c.l.b16 %v583
      %v604 = vunpack.c.h.b16 %v583
      %v605 = vunpack.c.l.b16 %v584
      %v606 = vunpack.c.h.b16 %v584
      %v607 = vunpack.c.l.b16 %v585
      %v608 = vunpack.c.h.b16 %v585
      %v609 = vunpack.c.l.b16 %v586
      %v610 = vunpack.c.h.b16 %v586
      %v611 = vpack.c.b16 %v595, %v595
      %v612 = vpack.c.b16 %v596, %v596
      %v613 = vpack.c.b16 %v597, %v597
      %v614 = vpack.c.b16 %v598, %v598
      %v615 = vpack.c.b16 %v599, %v599
      %v616 = vpack.c.b16 %v600, %v600
      %v617 = vpack.c.b16 %v601, %v601
      %v618 = vpack.c.b16 %v602, %v602
      %v619 = vpack.c.b16 %v603, %v603
      %v620 = vpack.c.b16 %v604, %v604
      %v621 = vpack.c.b16 %v605, %v605
      %v622 = vpack.c.b16 %v606, %v606
      %v623 = vpack.c.b16 %v607, %v607
      %v624 = vpack.c.b16 %v608, %v608
      %v625 = vpack.c.b16 %v609, %v609
      %v626 = vpack.c.b16 %v610, %v610
      %vm643 = vcmask 60416
      %644 = vst.msk [vmem:[%s248] sm:$0xf] %vm643, %v611
      %645 = vst.msk [vmem:[%s248 + $0x4] sm:$0xf] %vm643, %v612
      %646 = vst.msk [vmem:[%s248 + $0x8] sm:$0xf] %vm643, %v613
      %647 = vst.msk [vmem:[%s248 + $0xc] sm:$0xf] %vm643, %v614
      %648 = vst.msk [vmem:[%s248 + $0x10] sm:$0xf] %vm643, %v615
      %649 = vst.msk [vmem:[%s248 + $0x14] sm:$0xf] %vm643, %v616
      %650 = vst.msk [vmem:[%s248 + $0x18] sm:$0xf] %vm643, %v617
      %651 = vst.msk [vmem:[%s248 + $0x1c] sm:$0xf] %vm643, %v618
      %652 = vst.msk [vmem:[%s248 + $0x20] sm:$0xf] %vm643, %v619
      %653 = vst.msk [vmem:[%s248 + $0x24] sm:$0xf] %vm643, %v620
      %654 = vst.msk [vmem:[%s248 + $0x28] sm:$0xf] %vm643, %v621
      %655 = vst.msk [vmem:[%s248 + $0x2c] sm:$0xf] %vm643, %v622
      %656 = vst.msk [vmem:[%s248 + $0x30] sm:$0xf] %vm643, %v623
      %657 = vst.msk [vmem:[%s248 + $0x34] sm:$0xf] %vm643, %v624
      %658 = vst.msk [vmem:[%s248 + $0x38] sm:$0xf] %vm643, %v625
      %659 = vst.msk [vmem:[%s248 + $0x3c] sm:$0xf] %vm643, %v626
      %s660 = smul.u32 16, %s16
      %p661 = scmp.lt.s32.totalorder %s660, 63
      %s662 = scalar_select %p661, %s660, 63
      %s663 = smul.addr %s662, 4
      %s664 = scalar_lea.vmem %s5, %s663
      // Predicated region
      $region41: #{_lambda_.38} parent=39 // pred_check
        %p665 = pneg %p149
      $region42: #{_lambda_.38} parent=39 // pred_check_branch
        %667 = sbr.rel (%p665) target = $region44
      $region43: #{_lambda_.38} parent=39 // pred_region
        %s668 = smul.u32 16, %s16
      $region44: #{_lambda_.38} parent=39 // pred_fallthru
        _
    $region40: #{_lambda_.38} parent=5 // pred_fallthru
      _
    %p669 = scmp.le.s32.totalorder 2, %s11
    // Predicated region
    $region45: #{_lambda_.38} parent=5 // pred_check
      %p670 = pneg %p669
    $region46: #{_lambda_.38} parent=5 // pred_check_branch
      %672 = sbr.rel (%p670) target = $region48
    $region47: #{_lambda_.38} parent=5 // pred_region
      %s673 = ssub.s32 %s11, 2
      // Predicated region
      $region49: #{_lambda_.38} parent=47 // pred_check
        %p674 = pneg %p155
      $region50: #{_lambda_.38} parent=47 // pred_check_branch
        %676 = sbr.rel (%p674) target = $region52
      $region51: #{_lambda_.38} parent=47 // pred_region
        %s677 = smul.u32 16, %s17
        %p678 = scmp.lt.s32.totalorder %s677, 63
        %s679 = scalar_select %p678, %s677, 63
        %s680 = smul.addr %s679, 4
        %s681 = scalar_lea.vmem %s5, %s680
      $region52: #{_lambda_.38} parent=47 // pred_fallthru
        _
    $region48: #{_lambda_.38} parent=5 // pred_fallthru
      _
  $region6: #{_lambda_.38} parent=0 // loop_footer
    %s15 = sadd.s32 1, %s11
  $region7: #{_lambda_.38} parent=0 // loop_footer_branch
    %10 = sbr.rel target = $region3
  $region8: #{_lambda_.38} parent=0 // loop_exit
    _

// kernel: _lambda_.36
$region0: #{_lambda_.36}
  #allocation0 [shape = 'u32[]', space=smem, size = 0x4, offset = 0x4, fixed_abs, tag = 'smem constant byte address 0x4 - core index']
  #allocation1 [shape = 'u32[144,128]{1,0:T(1,128)}', space=vmem, size = 0x12000, scoped, tag = 'internal scratch']
  %s0 = inlined_call_operand.vmem [shape: bf16[128,288], index: 0, kind: input, shape index: {}]
  %s1 = inlined_call_operand.vmem [shape: bf16[288,16], index: 1, kind: input, shape index: {}]
  %s2 = inlined_call_operand.vmem [shape: f32[1,16], index: 2, kind: input, shape index: {}]
  %s3 = inlined_call_operand.vmem [shape: f32[1,16], index: 3, kind: input, shape index: {}]
  %s4 = inlined_call_operand.vmem [shape: bf16[128,16], index: 4, kind: output, shape index: {}]
  %s5 = sld [smem:[#allocation0]]
  $region26: #{_lambda_.36} parent=0
    _
  %s7 = ssub.s32 1, %s5
  %s8 = scalar_select 0, %s7, %s5
  // Predicated region
  $region2: #{_lambda_.36} parent=0 // pred_check
    _
  $region3: #{_lambda_.36} parent=0 // pred_check_branch
    %10 = sbr.rel (0) target = $region5
  $region4: #{_lambda_.36} parent=0 // pred_region
    _
  $region5: #{_lambda_.36} parent=0 // pred_fallthru
    _
  // Predicated region
  $region6: #{_lambda_.36} parent=0 // pred_check
    _
  $region7: #{_lambda_.36} parent=0 // pred_check_branch
    %12 = sbr.rel (0) target = $region9
  $region8: #{_lambda_.36} parent=0 // pred_region
    _
  $region9: #{_lambda_.36} parent=0 // pred_fallthru
    _
  // Predicated region
  $region10: #{_lambda_.36} parent=0 // pred_check
    _
  $region11: #{_lambda_.36} parent=0 // pred_check_branch
    %14 = sbr.rel (0) target = $region13
  $region12: #{_lambda_.36} parent=0 // pred_region
    _
  $region13: #{_lambda_.36} parent=0 // pred_fallthru
    _
  // Predicated region
  $region14: #{_lambda_.36} parent=0 // pred_check
    _
  $region15: #{_lambda_.36} parent=0 // pred_check_branch
    %16 = sbr.rel (0) target = $region17
  $region16: #{_lambda_.36} parent=0 // pred_region
    _
  $region17: #{_lambda_.36} parent=0 // pred_fallthru
    _
  %v18 = vld [vmem:[%s0] sm:$0xff]
  %v19 = vld [vmem:[%s0 + $0x8] sm:$0xf]
  %v20 = vld [vmem:[%s0 + $0xc] sm:$0xff]
  %v21 = vld [vmem:[%s0 + $0x14] sm:$0xf]
  %v22 = vld [vmem:[%s0 + $0x18] sm:$0xff]
  %v23 = vld [vmem:[%s0 + $0x20] sm:$0xf]
  %v24 = vld [vmem:[%s0 + $0x24] sm:$0xff]
  %v25 = vld [vmem:[%s0 + $0x2c] sm:$0xf]
  %v26 = vld [vmem:[%s0 + $0x30] sm:$0xff]
  %v27 = vld [vmem:[%s0 + $0x38] sm:$0xf]
  %v28 = vld [vmem:[%s0 + $0x3c] sm:$0xff]
  %v29 = vld [vmem:[%s0 + $0x44] sm:$0xf]
  %v30 = vld [vmem:[%s0 + $0x48] sm:$0xff]
  %v31 = vld [vmem:[%s0 + $0x50] sm:$0xf]
  %v32 = vld [vmem:[%s0 + $0x54] sm:$0xff]
  %v33 = vld [vmem:[%s0 + $0x5c] sm:$0xf]
  %v34 = vld [vmem:[%s0 + $0x60] sm:$0xff]
  %v35 = vld [vmem:[%s0 + $0x68] sm:$0xf]
  %v36 = vld [vmem:[%s0 + $0x6c] sm:$0xff]
  %v37 = vld [vmem:[%s0 + $0x74] sm:$0xf]
  %v38 = vld [vmem:[%s0 + $0x78] sm:$0xff]
  %v39 = vld [vmem:[%s0 + $0x80] sm:$0xf]
  %v40 = vld [vmem:[%s0 + $0x84] sm:$0xff]
  %v41 = vld [vmem:[%s0 + $0x8c] sm:$0xf]
  %v42 = vld [vmem:[%s0 + $0x90] sm:$0xff]
  %v43 = vld [vmem:[%s0 + $0x98] sm:$0xf]
  %v44 = vld [vmem:[%s0 + $0x9c] sm:$0xff]
  %v45 = vld [vmem:[%s0 + $0xa4] sm:$0xf]
  %v46 = vld [vmem:[%s0 + $0xa8] sm:$0xff]
  %v47 = vld [vmem:[%s0 + $0xb0] sm:$0xf]
  %v48 = vld [vmem:[%s0 + $0xb4] sm:$0xff]
  %v49 = vld [vmem:[%s0 + $0xbc] sm:$0xf]
  %v50 = vld [vmem:[%s1] sm:$0xf]
  %v51 = vld [vmem:[%s1 + $0x4] sm:$0xf]
  %v52 = vld [vmem:[%s1 + $0x8] sm:$0xf]
  %v53 = vld [vmem:[%s1 + $0xc] sm:$0xf]
  %v54 = vld [vmem:[%s1 + $0x10] sm:$0xf]
  %v55 = vld [vmem:[%s1 + $0x14] sm:$0xf]
  %v56 = vld [vmem:[%s1 + $0x18] sm:$0xf]
  %v57 = vld [vmem:[%s1 + $0x1c] sm:$0xf]
  %v58 = vld [vmem:[%s1 + $0x20] sm:$0xf]
  %v59 = vld [vmem:[%s1 + $0x24] sm:$0xf]
  %v60 = vld [vmem:[%s1 + $0x28] sm:$0xf]
  %v61 = vld [vmem:[%s1 + $0x2c] sm:$0xf]
  %v62 = vld [vmem:[%s1 + $0x30] sm:$0xf]
  %v63 = vld [vmem:[%s1 + $0x34] sm:$0xf]
  %v64 = vld [vmem:[%s1 + $0x38] sm:$0xf]
  %v65 = vld [vmem:[%s1 + $0x3c] sm:$0xf]
  %v66 = vld [vmem:[%s1 + $0x40] sm:$0xf]
  %v67 = vld [vmem:[%s1 + $0x44] sm:$0xf]
  %v68 = vld [vmem:[%s1 + $0x48] sm:$0xf]
  %v69 = vld [vmem:[%s1 + $0x4c] sm:$0xf]
  %v70 = vld [vmem:[%s1 + $0x50] sm:$0xf]
  %v71 = vld [vmem:[%s1 + $0x54] sm:$0xf]
  %v72 = vld [vmem:[%s1 + $0x58] sm:$0xf]
  %v73 = vld [vmem:[%s1 + $0x5c] sm:$0xf]
  %v74 = vld [vmem:[%s1 + $0x60] sm:$0xf]
  %v75 = vld [vmem:[%s1 + $0x64] sm:$0xf]
  %v76 = vld [vmem:[%s1 + $0x68] sm:$0xf]
  %v77 = vld [vmem:[%s1 + $0x6c] sm:$0xf]
  %v78 = vld [vmem:[%s1 + $0x70] sm:$0xf]
  %v79 = vld [vmem:[%s1 + $0x74] sm:$0xf]
  %v80 = vld [vmem:[%s1 + $0x78] sm:$0xf]
  %v81 = vld [vmem:[%s1 + $0x7c] sm:$0xf]
  %v82 = vld [vmem:[%s1 + $0x80] sm:$0xf]
  %v83 = vld [vmem:[%s1 + $0x84] sm:$0xf]
  %v84 = vld [vmem:[%s1 + $0x88] sm:$0xf]
  %v85 = vld [vmem:[%s1 + $0x8c] sm:$0xf]
  %v118 = vunpack.c.l.b16 %v18
  %v119 = vunpack.c.h.b16 %v18
  %v120 = vunpack.c.l.b16 %v19
  %v121 = vunpack.c.l.b16 %v20
  %v122 = vunpack.c.h.b16 %v20
  %v123 = vunpack.c.l.b16 %v21
  %v124 = vunpack.c.l.b16 %v22
  %v125 = vunpack.c.h.b16 %v22
  %v126 = vunpack.c.l.b16 %v23
  %v127 = vunpack.c.l.b16 %v24
  %v128 = vunpack.c.h.b16 %v24
  %v129 = vunpack.c.l.b16 %v25
  %v130 = vunpack.c.l.b16 %v26
  %v131 = vunpack.c.h.b16 %v26
  %v132 = vunpack.c.l.b16 %v27
  %v133 = vunpack.c.l.b16 %v28
  %v134 = vunpack.c.h.b16 %v28
  %v135 = vunpack.c.l.b16 %v29
  %v136 = vunpack.c.l.b16 %v30
  %v137 = vunpack.c.h.b16 %v30
  %v138 = vunpack.c.l.b16 %v31
  %v139 = vunpack.c.l.b16 %v32
  %v140 = vunpack.c.h.b16 %v32
  %v141 = vunpack.c.l.b16 %v33
  %v142 = vunpack.c.l.b16 %v34
  %v143 = vunpack.c.h.b16 %v34
  %v144 = vunpack.c.l.b16 %v35
  %v145 = vunpack.c.l.b16 %v36
  %v146 = vunpack.c.h.b16 %v36
  %v147 = vunpack.c.l.b16 %v37
  %v148 = vunpack.c.l.b16 %v38
  %v149 = vunpack.c.h.b16 %v38
  %v150 = vunpack.c.l.b16 %v39
  %v151 = vunpack.c.l.b16 %v40
  %v152 = vunpack.c.h.b16 %v40
  %v153 = vunpack.c.l.b16 %v41
  %v154 = vunpack.c.l.b16 %v42
  %v155 = vunpack.c.h.b16 %v42
  %v156 = vunpack.c.l.b16 %v43
  %v157 = vunpack.c.l.b16 %v44
  %v158 = vunpack.c.h.b16 %v44
  %v159 = vunpack.c.l.b16 %v45
  %v160 = vunpack.c.l.b16 %v46
  %v161 = vunpack.c.h.b16 %v46
  %v162 = vunpack.c.l.b16 %v47
  %v163 = vunpack.c.l.b16 %v48
  %v164 = vunpack.c.h.b16 %v48
  %v165 = vunpack.c.l.b16 %v49
  %v166 = vpack.c.b16 %v121, %v118
  %v167 = vpack.c.b16 %v122, %v119
  %v168 = vpack.c.b16 %v123, %v120
  %v169 = vpack.c.b16 %v127, %v124
  %v170 = vpack.c.b16 %v128, %v125
  %v171 = vpack.c.b16 %v129, %v126
  %v172 = vpack.c.b16 %v133, %v130
  %v173 = vpack.c.b16 %v134, %v131
  %v174 = vpack.c.b16 %v135, %v132
  %v175 = vpack.c.b16 %v139, %v136
  %v176 = vpack.c.b16 %v140, %v137
  %v177 = vpack.c.b16 %v141, %v138
  %v178 = vpack.c.b16 %v145, %v142
  %v179 = vpack.c.b16 %v146, %v143
  %v180 = vpack.c.b16 %v147, %v144
  %v181 = vpack.c.b16 %v151, %v148
  %v182 = vpack.c.b16 %v152, %v149
  %v183 = vpack.c.b16 %v153, %v150
  %v184 = vpack.c.b16 %v157, %v154
  %v185 = vpack.c.b16 %v158, %v155
  %v186 = vpack.c.b16 %v159, %v156
  %v187 = vpack.c.b16 %v163, %v160
  %v188 = vpack.c.b16 %v164, %v161
  %v189 = vpack.c.b16 %v165, %v162
  %v242 = vunpack.c.l.b16 %v50
  %v243 = vunpack.c.l.b16 %v51
  %v244 = vunpack.c.l.b16 %v52
  %v245 = vunpack.c.l.b16 %v53
  %v246 = vunpack.c.l.b16 %v54
  %v247 = vunpack.c.l.b16 %v55
  %v248 = vunpack.c.l.b16 %v56
  %v249 = vunpack.c.l.b16 %v57
  %v250 = vunpack.c.l.b16 %v58
  %v251 = vunpack.c.l.b16 %v59
  %v252 = vunpack.c.l.b16 %v60
  %v253 = vunpack.c.l.b16 %v61
  %v254 = vunpack.c.l.b16 %v62
  %v255 = vunpack.c.l.b16 %v63
  %v256 = vunpack.c.l.b16 %v64
  %v257 = vunpack.c.l.b16 %v65
  %v258 = vunpack.c.l.b16 %v66
  %v259 = vunpack.c.l.b16 %v67
  %v260 = vunpack.c.l.b16 %v68
  %v261 = vunpack.c.l.b16 %v69
  %v262 = vunpack.c.l.b16 %v70
  %v263 = vunpack.c.l.b16 %v71
  %v264 = vunpack.c.l.b16 %v72
  %v265 = vunpack.c.l.b16 %v73
  %v266 = vunpack.c.l.b16 %v74
  %v267 = vunpack.c.l.b16 %v75
  %v268 = vunpack.c.l.b16 %v76
  %v269 = vunpack.c.l.b16 %v77
  %v270 = vunpack.c.l.b16 %v78
  %v271 = vunpack.c.l.b16 %v79
  %v272 = vunpack.c.l.b16 %v80
  %v273 = vunpack.c.l.b16 %v81
  %v274 = vunpack.c.l.b16 %v82
  %v275 = vunpack.c.l.b16 %v83
  %v276 = vunpack.c.l.b16 %v84
  %v277 = vunpack.c.l.b16 %v85
  %v278 = vpack.c.b16 %v243, %v242
  %v279 = vpack.c.b16 %v245, %v244
  %v280 = vpack.c.b16 %v247, %v246
  %v281 = vpack.c.b16 %v249, %v248
  %v282 = vpack.c.b16 %v251, %v250
  %v283 = vpack.c.b16 %v253, %v252
  %v284 = vpack.c.b16 %v255, %v254
  %v285 = vpack.c.b16 %v257, %v256
  %v286 = vpack.c.b16 %v259, %v258
  %v287 = vpack.c.b16 %v261, %v260
  %v288 = vpack.c.b16 %v263, %v262
  %v289 = vpack.c.b16 %v265, %v264
  %v290 = vpack.c.b16 %v267, %v266
  %v291 = vpack.c.b16 %v269, %v268
  %v292 = vpack.c.b16 %v271, %v270
  %v293 = vpack.c.b16 %v273, %v272
  %v294 = vpack.c.b16 %v275, %v274
  %v295 = vpack.c.b16 %v277, %v276
  %vm314 = vcmask 261120
  %v316 = vsel %vm314, %v168, 0
  %v319 = vsel %vm314, %v171, 0
  %v322 = vsel %vm314, %v174, 0
  %v325 = vsel %vm314, %v177, 0
  %v328 = vsel %vm314, %v180, 0
  %v331 = vsel %vm314, %v183, 0
  %v334 = vsel %vm314, %v186, 0
  %v337 = vsel %vm314, %v189, 0
  %339 = vmatprep.subr.bf16.mxu0 0
  %340 = vmatpush1.bf16.msra.mxu0 %v278
  %341 = vmatprep.subr.bf16.mxu0 0
  %342 = vmatpush1.bf16.msra.mxu0 %v279
  %343 = vmatprep.subr.bf16.mxu0 0
  %344 = vmatpush1.bf16.msra.mxu0 %v280
  %345 = vmatprep.subr.bf16.mxu0 0
  %346 = vmatpush1.bf16.msra.mxu0 %v281
  %347 = vmatprep.subr.bf16.mxu0 0
  %348 = vmatpush1.bf16.msra.mxu0 %v282
  %349 = vmatprep.subr.bf16.mxu0 0
  %350 = vmatpush1.bf16.msra.mxu0 %v283
  %351 = vmatprep.subr.bf16.mxu0 0
  %352 = vmatpush1.bf16.msra.mxu0 %v284
  %353 = vmatprep.subr.bf16.mxu0 0
  %354 = vmatpush1.bf16.msra.mxu0 %v285
  %355 = vmatprep.subr.bf16.mxu0 0
  %356 = vmatpush1.bf16.msra.mxu0 %v286
  %357 = vmatprep.subr.bf16.mxu0 0
  %358 = vmatpush1.bf16.msra.mxu0 %v287
  %359 = vmatprep.subr.bf16.mxu0 0
  %360 = vmatpush1.bf16.msra.mxu0 %v288
  %361 = vmatprep.subr.bf16.mxu0 0
  %362 = vmatpush1.bf16.msra.mxu0 %v289
  %363 = vmatprep.subr.bf16.mxu0 0
  %364 = vmatpush1.bf16.msra.mxu0 %v290
  %365 = vmatprep.subr.bf16.mxu0 0
  %366 = vmatpush1.bf16.msra.mxu0 %v291
  %367 = vmatprep.subr.bf16.mxu0 0
  %368 = vmatpush1.bf16.msra.mxu0 %v292
  %369 = vmatprep.subr.bf16.mxu0 0
  %370 = vmatpush1.bf16.msra.mxu0 %v293
  %371 = vmatprep.mubr.bf16.mxu0 %v167
  %372 = vmatmul.mubr.bf16.gmra.mrb[0].mxu0 %v166
  %v373 = vpop.f32.mrb[0].mxu0
  %v374 = vadd.f32 0.0, %v373
  %v375 = vpop.f32.mrb[0].mxu0
  %v376 = vpop.f32.mrb[0].mxu0
  %v377 = vadd.f32 0.0, %v376
  %v378 = vpop.f32.mrb[0].mxu0
  %379 = vmatprep.mubr.bf16.mxu0 %v170
  %380 = vmatmul.mubr.bf16.gmra.mrb[0].mxu0 %v169
  %v381 = vpop.f32.mrb[0].mxu0
  %v382 = vadd.f32 0.0, %v381
  %v383 = vpop.f32.mrb[0].mxu0
  %v384 = vpop.f32.mrb[0].mxu0
  %v385 = vadd.f32 0.0, %v384
  %v386 = vpop.f32.mrb[0].mxu0
  %387 = vmatprep.mubr.bf16.mxu0 %v173
  %388 = vmatmul.mubr.bf16.gmra.mrb[0].mxu0 %v172
  %v389 = vpop.f32.mrb[0].mxu0
  %v390 = vadd.f32 0.0, %v389
  %v391 = vpop.f32.mrb[0].mxu0
  %v392 = vpop.f32.mrb[0].mxu0
  %v393 = vadd.f32 0.0, %v392
  %v394 = vpop.f32.mrb[0].mxu0
  %395 = vmatprep.mubr.bf16.mxu0 %v176
  %396 = vmatmul.mubr.bf16.gmra.mrb[0].mxu0 %v175
  %v397 = vpop.f32.mrb[0].mxu0
  %v398 = vadd.f32 0.0, %v397
  %v399 = vpop.f32.mrb[0].mxu0
  %v400 = vpop.f32.mrb[0].mxu0
  %v401 = vadd.f32 0.0, %v400
  %v402 = vpop.f32.mrb[0].mxu0
  %403 = vmatprep.mubr.bf16.mxu0 %v179
  %404 = vmatmul.mubr.bf16.gmra.mrb[0].mxu0 %v178
  %v405 = vpop.f32.mrb[0].mxu0
  %v406 = vadd.f32 0.0, %v405
  %v407 = vpop.f32.mrb[0].mxu0
  %v408 = vpop.f32.mrb[0].mxu0
  %v409 = vadd.f32 0.0, %v408
  %v410 = vpop.f32.mrb[0].mxu0
  %411 = vmatprep.mubr.bf16.mxu0 %v182
  %412 = vmatmul.mubr.bf16.gmra.mrb[0].mxu0 %v181
  %v413 = vpop.f32.mrb[0].mxu0
  %v414 = vadd.f32 0.0, %v413
  %v415 = vpop.f32.mrb[0].mxu0
  %v416 = vpop.f32.mrb[0].mxu0
  %v417 = vadd.f32 0.0, %v416
  %v418 = vpop.f32.mrb[0].mxu0
  %419 = vmatprep.mubr.bf16.mxu0 %v185
  %420 = vmatmul.mubr.bf16.gmra.mrb[0].mxu0 %v184
  %v421 = vpop.f32.mrb[0].mxu0
  %v422 = vadd.f32 0.0, %v421
  %v423 = vpop.f32.mrb[0].mxu0
  %v424 = vpop.f32.mrb[0].mxu0
  %v425 = vadd.f32 0.0, %v424
  %v426 = vpop.f32.mrb[0].mxu0
  %427 = vmatprep.mubr.bf16.mxu0 %v188
  %428 = vmatmul.mubr.bf16.gmra.mrb[0].mxu0 %v187
  %v429 = vpop.f32.mrb[0].mxu0
  %v430 = vadd.f32 0.0, %v429
  %v431 = vpop.f32.mrb[0].mxu0
  %v432 = vpop.f32.mrb[0].mxu0
  %v433 = vadd.f32 0.0, %v432
  %v434 = vpop.f32.mrb[0].mxu0
  %435 = vdwg.mxu0
  %436 = vmatprep.subr.bf16.mxu0 0
  %437 = vmatpush1.bf16.msra.mxu0 %v294
  %438 = vmatprep.subr.bf16.mxu0 0
  %439 = vmatpush1.bf16.msra.mxu0 %v295
  %440 = vmatprep.subr.bf16.mxu0 0
  %441 = vmatpush1.bf16.msra.mxu0 0
  %442 = vmatprep.subr.bf16.mxu0 0
  %443 = vmatpush1.bf16.msra.mxu0 0
  %444 = vmatprep.subr.bf16.mxu0 0
  %445 = vmatpush1.bf16.msra.mxu0 0
  %446 = vmatprep.subr.bf16.mxu0 0
  %447 = vmatpush1.bf16.msra.mxu0 0
  %448 = vmatprep.subr.bf16.mxu0 0
  %449 = vmatpush1.bf16.msra.mxu0 0
  %450 = vmatprep.subr.bf16.mxu0 0
  %451 = vmatpush1.bf16.msra.mxu0 0
  %452 = vmatprep.subr.bf16.mxu0 0
  %453 = vmatpush1.bf16.msra.mxu0 0
  %454 = vmatprep.subr.bf16.mxu0 0
  %455 = vmatpush1.bf16.msra.mxu0 0
  %456 = vmatprep.subr.bf16.mxu0 0
  %457 = vmatpush1.bf16.msra.mxu0 0
  %458 = vmatprep.subr.bf16.mxu0 0
  %459 = vmatpush1.bf16.msra.mxu0 0
  %460 = vmatprep.subr.bf16.mxu0 0
  %461 = vmatpush1.bf16.msra.mxu0 0
  %462 = vmatprep.subr.bf16.mxu0 0
  %463 = vmatpush1.bf16.msra.mxu0 0
  %464 = vmatprep.subr.bf16.mxu0 0
  %465 = vmatpush1.bf16.msra.mxu0 0
  %466 = vmatprep.subr.bf16.mxu0 0
  %467 = vmatpush1.bf16.msra.mxu0 0
  %468 = vmatprep.mubr.bf16.mxu0 0
  %469 = vmatmul.mubr.bf16.gmra.mrb[0].mxu0 %v316
  %v470 = vpop.f32.mrb[0].mxu0
  %v471 = vadd.f32 %v374, %v470
  %v472 = vpop.f32.mrb[0].mxu0
  %v473 = vpop.f32.mrb[0].mxu0
  %v474 = vadd.f32 %v377, %v473
  %v475 = vpop.f32.mrb[0].mxu0
  %476 = vmatprep.mubr.bf16.mxu0 0
  %477 = vmatmul.mubr.bf16.gmra.mrb[0].mxu0 %v319
  %v478 = vpop.f32.mrb[0].mxu0
  %v479 = vadd.f32 %v382, %v478
  %v480 = vpop.f32.mrb[0].mxu0
  %v481 = vpop.f32.mrb[0].mxu0
  %v482 = vadd.f32 %v385, %v481
  %v483 = vpop.f32.mrb[0].mxu0
  %484 = vmatprep.mubr.bf16.mxu0 0
  %485 = vmatmul.mubr.bf16.gmra.mrb[0].mxu0 %v322
  %v486 = vpop.f32.mrb[0].mxu0
  %v487 = vadd.f32 %v390, %v486
  %v488 = vpop.f32.mrb[0].mxu0
  %v489 = vpop.f32.mrb[0].mxu0
  %v490 = vadd.f32 %v393, %v489
  %v491 = vpop.f32.mrb[0].mxu0
  %492 = vmatprep.mubr.bf16.mxu0 0
  %493 = vmatmul.mubr.bf16.gmra.mrb[0].mxu0 %v325
  %v494 = vpop.f32.mrb[0].mxu0
  %v495 = vadd.f32 %v398, %v494
  %v496 = vpop.f32.mrb[0].mxu0
  %v497 = vpop.f32.mrb[0].mxu0
  %v498 = vadd.f32 %v401, %v497
  %v499 = vpop.f32.mrb[0].mxu0
  %500 = vmatprep.mubr.bf16.mxu0 0
  %501 = vmatmul.mubr.bf16.gmra.mrb[0].mxu0 %v328
  %v502 = vpop.f32.mrb[0].mxu0
  %v503 = vadd.f32 %v406, %v502
  %v504 = vpop.f32.mrb[0].mxu0
  %v505 = vpop.f32.mrb[0].mxu0
  %v506 = vadd.f32 %v409, %v505
  %v507 = vpop.f32.mrb[0].mxu0
  %508 = vmatprep.mubr.bf16.mxu0 0
  %509 = vmatmul.mubr.bf16.gmra.mrb[0].mxu0 %v331
  %v510 = vpop.f32.mrb[0].mxu0
  %v511 = vadd.f32 %v414, %v510
  %v512 = vpop.f32.mrb[0].mxu0
  %v513 = vpop.f32.mrb[0].mxu0
  %v514 = vadd.f32 %v417, %v513
  %v515 = vpop.f32.mrb[0].mxu0
  %516 = vmatprep.mubr.bf16.mxu0 0
  %517 = vmatmul.mubr.bf16.gmra.mrb[0].mxu0 %v334
  %v518 = vpop.f32.mrb[0].mxu0
  %v519 = vadd.f32 %v422, %v518
  %v520 = vpop.f32.mrb[0].mxu0
  %v521 = vpop.f32.mrb[0].mxu0
  %v522 = vadd.f32 %v425, %v521
  %v523 = vpop.f32.mrb[0].mxu0
  %524 = vmatprep.mubr.bf16.mxu0 0
  %525 = vmatmul.mubr.bf16.gmra.mrb[0].mxu0 %v337
  %v526 = vpop.f32.mrb[0].mxu0
  %v527 = vadd.f32 %v430, %v526
  %v528 = vpop.f32.mrb[0].mxu0
  %v529 = vpop.f32.mrb[0].mxu0
  %v530 = vadd.f32 %v433, %v529
  %v531 = vpop.f32.mrb[0].mxu0
  %532 = vdwg.mxu0
  %v533 = vld [vmem:[%s2] sm:$0x1]
  %v535 = vlaneseq
  %v536 = vshrl.u32 %v535, 7
  %v537 = vsub.s32 0, %v536
  %v538 = vrot.slane %v533, %v537
  %v540 = vmul.f32 %v471, %v538
  %v541 = vmul.f32 %v474, %v538
  %v542 = vmul.f32 %v479, %v538
  %v543 = vmul.f32 %v482, %v538
  %v544 = vmul.f32 %v487, %v538
  %v545 = vmul.f32 %v490, %v538
  %v546 = vmul.f32 %v495, %v538
  %v547 = vmul.f32 %v498, %v538
  %v548 = vmul.f32 %v503, %v538
  %v549 = vmul.f32 %v506, %v538
  %v550 = vmul.f32 %v511, %v538
  %v551 = vmul.f32 %v514, %v538
  %v552 = vmul.f32 %v519, %v538
  %v553 = vmul.f32 %v522, %v538
  %v554 = vmul.f32 %v527, %v538
  %v555 = vmul.f32 %v530, %v538
  %v556 = vld [vmem:[%s3] sm:$0x1]
  %v558 = vlaneseq
  %v559 = vshrl.u32 %v558, 7
  %v560 = vsub.s32 0, %v559
  %v561 = vrot.slane %v556, %v560
  %v563 = vadd.f32 %v540, %v561
  %v564 = vadd.f32 %v541, %v561
  %v565 = vadd.f32 %v542, %v561
  %v566 = vadd.f32 %v543, %v561
  %v567 = vadd.f32 %v544, %v561
  %v568 = vadd.f32 %v545, %v561
  %v569 = vadd.f32 %v546, %v561
  %v570 = vadd.f32 %v547, %v561
  %v571 = vadd.f32 %v548, %v561
  %v572 = vadd.f32 %v549, %v561
  %v573 = vadd.f32 %v550, %v561
  %v574 = vadd.f32 %v551, %v561
  %v575 = vadd.f32 %v552, %v561
  %v576 = vadd.f32 %v553, %v561
  %v577 = vadd.f32 %v554, %v561
  %v578 = vadd.f32 %v555, %v561
  %v579 = vmax.f32 %v563, 0.0
  %v580 = vmax.f32 %v564, 0.0
  %v581 = vmax.f32 %v565, 0.0
  %v582 = vmax.f32 %v566, 0.0
  %v583 = vmax.f32 %v567, 0.0
  %v584 = vmax.f32 %v568, 0.0
  %v585 = vmax.f32 %v569, 0.0
  %v586 = vmax.f32 %v570, 0.0
  %v587 = vmax.f32 %v571, 0.0
  %v588 = vmax.f32 %v572, 0.0
  %v589 = vmax.f32 %v573, 0.0
  %v590 = vmax.f32 %v574, 0.0
  %v591 = vmax.f32 %v575, 0.0
  %v592 = vmax.f32 %v576, 0.0
  %v593 = vmax.f32 %v577, 0.0
  %v594 = vmax.f32 %v578, 0.0
  %v595 = vpack.c.bf16 %v580, %v579
  %v596 = vpack.c.bf16 %v582, %v581
  %v597 = vpack.c.bf16 %v584, %v583
  %v598 = vpack.c.bf16 %v586, %v585
  %v599 = vpack.c.bf16 %v588, %v587
  %v600 = vpack.c.bf16 %v590, %v589
  %v601 = vpack.c.bf16 %v592, %v591
  %v602 = vpack.c.bf16 %v594, %v593
  %v611 = vunpack.c.l.b16 %v595
  %v612 = vunpack.c.h.b16 %v595
  %v613 = vunpack.c.l.b16 %v596
  %v614 = vunpack.c.h.b16 %v596
  %v615 = vunpack.c.l.b16 %v597
  %v616 = vunpack.c.h.b16 %v597
  %v617 = vunpack.c.l.b16 %v598
  %v618 = vunpack.c.h.b16 %v598
  %v619 = vunpack.c.l.b16 %v599
  %v620 = vunpack.c.h.b16 %v599
  %v621 = vunpack.c.l.b16 %v600
  %v622 = vunpack.c.h.b16 %v600
  %v623 = vunpack.c.l.b16 %v601
  %v624 = vunpack.c.h.b16 %v601
  %v625 = vunpack.c.l.b16 %v602
  %v626 = vunpack.c.h.b16 %v602
  %v627 = vpack.c.b16 %v611, %v611
  %v628 = vpack.c.b16 %v612, %v612
  %v629 = vpack.c.b16 %v613, %v613
  %v630 = vpack.c.b16 %v614, %v614
  %v631 = vpack.c.b16 %v615, %v615
  %v632 = vpack.c.b16 %v616, %v616
  %v633 = vpack.c.b16 %v617, %v617
  %v634 = vpack.c.b16 %v618, %v618
  %v635 = vpack.c.b16 %v619, %v619
  %v636 = vpack.c.b16 %v620, %v620
  %v637 = vpack.c.b16 %v621, %v621
  %v638 = vpack.c.b16 %v622, %v622
  %v639 = vpack.c.b16 %v623, %v623
  %v640 = vpack.c.b16 %v624, %v624
  %v641 = vpack.c.b16 %v625, %v625
  %v642 = vpack.c.b16 %v626, %v626
  %vm659 = vcmask 125952
  %660 = vst.msk [vmem:[%s4] sm:$0xf] %vm659, %v627
  %661 = vst.msk [vmem:[%s4 + $0x4] sm:$0xf] %vm659, %v628
  %662 = vst.msk [vmem:[%s4 + $0x8] sm:$0xf] %vm659, %v629
  %663 = vst.msk [vmem:[%s4 + $0xc] sm:$0xf] %vm659, %v630
  %664 = vst.msk [vmem:[%s4 + $0x10] sm:$0xf] %vm659, %v631
  %665 = vst.msk [vmem:[%s4 + $0x14] sm:$0xf] %vm659, %v632
  %666 = vst.msk [vmem:[%s4 + $0x18] sm:$0xf] %vm659, %v633
  %667 = vst.msk [vmem:[%s4 + $0x1c] sm:$0xf] %vm659, %v634
  %668 = vst.msk [vmem:[%s4 + $0x20] sm:$0xf] %vm659, %v635
  %669 = vst.msk [vmem:[%s4 + $0x24] sm:$0xf] %vm659, %v636
  %670 = vst.msk [vmem:[%s4 + $0x28] sm:$0xf] %vm659, %v637
  %671 = vst.msk [vmem:[%s4 + $0x2c] sm:$0xf] %vm659, %v638
  %672 = vst.msk [vmem:[%s4 + $0x30] sm:$0xf] %vm659, %v639
  %673 = vst.msk [vmem:[%s4 + $0x34] sm:$0xf] %vm659, %v640
  %674 = vst.msk [vmem:[%s4 + $0x38] sm:$0xf] %vm659, %v641
  %675 = vst.msk [vmem:[%s4 + $0x3c] sm:$0xf] %vm659, %v642
  // Predicated region
  $region18: #{_lambda_.36} parent=0 // pred_check
    _
  $region19: #{_lambda_.36} parent=0 // pred_check_branch
    %677 = sbr.rel (0) target = $region21
  $region20: #{_lambda_.36} parent=0 // pred_region
    _
  $region21: #{_lambda_.36} parent=0 // pred_fallthru
    _
  // Predicated region
  $region22: #{_lambda_.36} parent=0 // pred_check
    _
  $region23: #{_lambda_.36} parent=0 // pred_check_branch
    %679 = sbr.rel (0) target = $region25
  $region24: #{_lambda_.36} parent=0 // pred_region
    _
  $region25: #{_lambda_.36} parent=0 // pred_fallthru
    _

// kernel: _lambda_.39
$region0: #{_lambda_.39}
  #allocation0 [shape = 'u32[]', space=smem, size = 0x4, offset = 0x4, fixed_abs, tag = 'smem constant byte address 0x4 - core index']
  #allocation1 [shape = 'u32[144,128]{1,0:T(1,128)}', space=vmem, size = 0x12000, scoped, tag = 'internal scratch']
  %s0 = inlined_call_operand.vmem [shape: bf16[128,144], index: 0, kind: input, shape index: {}]
  %s1 = inlined_call_operand.vmem [shape: bf16[144,16], index: 1, kind: input, shape index: {}]
  %s2 = inlined_call_operand.vmem [shape: f32[1,16], index: 2, kind: input, shape index: {}]
  %s3 = inlined_call_operand.vmem [shape: f32[1,16], index: 3, kind: input, shape index: {}]
  %s4 = inlined_call_operand.vmem [shape: bf16[128,16], index: 4, kind: output, shape index: {}]
  %s5 = sld [smem:[#allocation0]]
  $region26: #{_lambda_.39} parent=0
    _
  %s7 = ssub.s32 1, %s5
  %s8 = scalar_select 0, %s7, %s5
  // Predicated region
  $region2: #{_lambda_.39} parent=0 // pred_check
    _
  $region3: #{_lambda_.39} parent=0 // pred_check_branch
    %10 = sbr.rel (0) target = $region5
  $region4: #{_lambda_.39} parent=0 // pred_region
    _
  $region5: #{_lambda_.39} parent=0 // pred_fallthru
    _
  // Predicated region
  $region6: #{_lambda_.39} parent=0 // pred_check
    _
  $region7: #{_lambda_.39} parent=0 // pred_check_branch
    %12 = sbr.rel (0) target = $region9
  $region8: #{_lambda_.39} parent=0 // pred_region
    _
  $region9: #{_lambda_.39} parent=0 // pred_fallthru
    _
  // Predicated region
  $region10: #{_lambda_.39} parent=0 // pred_check
    _
  $region11: #{_lambda_.39} parent=0 // pred_check_branch
    %14 = sbr.rel (0) target = $region13
  $region12: #{_lambda_.39} parent=0 // pred_region
    _
  $region13: #{_lambda_.39} parent=0 // pred_fallthru
    _
  // Predicated region
  $region14: #{_lambda_.39} parent=0 // pred_check
    _
  $region15: #{_lambda_.39} parent=0 // pred_check_branch
    %16 = sbr.rel (0) target = $region17
  $region16: #{_lambda_.39} parent=0 // pred_region
    _
  $region17: #{_lambda_.39} parent=0 // pred_fallthru
    _
  %v18 = vld [vmem:[%s0] sm:$0xff]
  %v19 = vld [vmem:[%s0 + $0x8] sm:$0xff]
  %v20 = vld [vmem:[%s0 + $0x10] sm:$0xff]
  %v21 = vld [vmem:[%s0 + $0x18] sm:$0xff]
  %v22 = vld [vmem:[%s0 + $0x20] sm:$0xff]
  %v23 = vld [vmem:[%s0 + $0x28] sm:$0xff]
  %v24 = vld [vmem:[%s0 + $0x30] sm:$0xff]
  %v25 = vld [vmem:[%s0 + $0x38] sm:$0xff]
  %v26 = vld [vmem:[%s0 + $0x40] sm:$0xff]
  %v27 = vld [vmem:[%s0 + $0x48] sm:$0xff]
  %v28 = vld [vmem:[%s0 + $0x50] sm:$0xff]
  %v29 = vld [vmem:[%s0 + $0x58] sm:$0xff]
  %v30 = vld [vmem:[%s0 + $0x60] sm:$0xff]
  %v31 = vld [vmem:[%s0 + $0x68] sm:$0xff]
  %v32 = vld [vmem:[%s0 + $0x70] sm:$0xff]
  %v33 = vld [vmem:[%s0 + $0x78] sm:$0xff]
  %v34 = vld [vmem:[%s1] sm:$0xf]
  %v35 = vld [vmem:[%s1 + $0x4] sm:$0xf]
  %v36 = vld [vmem:[%s1 + $0x8] sm:$0xf]
  %v37 = vld [vmem:[%s1 + $0xc] sm:$0xf]
  %v38 = vld [vmem:[%s1 + $0x10] sm:$0xf]
  %v39 = vld [vmem:[%s1 + $0x14] sm:$0xf]
  %v40 = vld [vmem:[%s1 + $0x18] sm:$0xf]
  %v41 = vld [vmem:[%s1 + $0x1c] sm:$0xf]
  %v42 = vld [vmem:[%s1 + $0x20] sm:$0xf]
  %v43 = vld [vmem:[%s1 + $0x24] sm:$0xf]
  %v44 = vld [vmem:[%s1 + $0x28] sm:$0xf]
  %v45 = vld [vmem:[%s1 + $0x2c] sm:$0xf]
  %v46 = vld [vmem:[%s1 + $0x30] sm:$0xf]
  %v47 = vld [vmem:[%s1 + $0x34] sm:$0xf]
  %v48 = vld [vmem:[%s1 + $0x38] sm:$0xf]
  %v49 = vld [vmem:[%s1 + $0x3c] sm:$0xf]
  %v50 = vld [vmem:[%s1 + $0x40] sm:$0xf]
  %v51 = vld [vmem:[%s1 + $0x44] sm:$0xf]
  %v68 = vunpack.c.l.b16 %v18
  %v69 = vunpack.c.h.b16 %v18
  %v70 = vunpack.c.l.b16 %v19
  %v71 = vunpack.c.h.b16 %v19
  %v72 = vunpack.c.l.b16 %v20
  %v73 = vunpack.c.h.b16 %v20
  %v74 = vunpack.c.l.b16 %v21
  %v75 = vunpack.c.h.b16 %v21
  %v76 = vunpack.c.l.b16 %v22
  %v77 = vunpack.c.h.b16 %v22
  %v78 = vunpack.c.l.b16 %v23
  %v79 = vunpack.c.h.b16 %v23
  %v80 = vunpack.c.l.b16 %v24
  %v81 = vunpack.c.h.b16 %v24
  %v82 = vunpack.c.l.b16 %v25
  %v83 = vunpack.c.h.b16 %v25
  %v84 = vunpack.c.l.b16 %v26
  %v85 = vunpack.c.h.b16 %v26
  %v86 = vunpack.c.l.b16 %v27
  %v87 = vunpack.c.h.b16 %v27
  %v88 = vunpack.c.l.b16 %v28
  %v89 = vunpack.c.h.b16 %v28
  %v90 = vunpack.c.l.b16 %v29
  %v91 = vunpack.c.h.b16 %v29
  %v92 = vunpack.c.l.b16 %v30
  %v93 = vunpack.c.h.b16 %v30
  %v94 = vunpack.c.l.b16 %v31
  %v95 = vunpack.c.h.b16 %v31
  %v96 = vunpack.c.l.b16 %v32
  %v97 = vunpack.c.h.b16 %v32
  %v98 = vunpack.c.l.b16 %v33
  %v99 = vunpack.c.h.b16 %v33
  %v100 = vpack.c.b16 %v70, %v68
  %v101 = vpack.c.b16 %v71, %v69
  %v102 = vpack.c.b16 %v74, %v72
  %v103 = vpack.c.b16 %v75, %v73
  %v104 = vpack.c.b16 %v78, %v76
  %v105 = vpack.c.b16 %v79, %v77
  %v106 = vpack.c.b16 %v82, %v80
  %v107 = vpack.c.b16 %v83, %v81
  %v108 = vpack.c.b16 %v86, %v84
  %v109 = vpack.c.b16 %v87, %v85
  %v110 = vpack.c.b16 %v90, %v88
  %v111 = vpack.c.b16 %v91, %v89
  %v112 = vpack.c.b16 %v94, %v92
  %v113 = vpack.c.b16 %v95, %v93
  %v114 = vpack.c.b16 %v98, %v96
  %v115 = vpack.c.b16 %v99, %v97
  %v142 = vunpack.c.l.b16 %v34
  %v143 = vunpack.c.l.b16 %v35
  %v144 = vunpack.c.l.b16 %v36
  %v145 = vunpack.c.l.b16 %v37
  %v146 = vunpack.c.l.b16 %v38
  %v147 = vunpack.c.l.b16 %v39
  %v148 = vunpack.c.l.b16 %v40
  %v149 = vunpack.c.l.b16 %v41
  %v150 = vunpack.c.l.b16 %v42
  %v151 = vunpack.c.l.b16 %v43
  %v152 = vunpack.c.l.b16 %v44
  %v153 = vunpack.c.l.b16 %v45
  %v154 = vunpack.c.l.b16 %v46
  %v155 = vunpack.c.l.b16 %v47
  %v156 = vunpack.c.l.b16 %v48
  %v157 = vunpack.c.l.b16 %v49
  %v158 = vunpack.c.l.b16 %v50
  %v159 = vunpack.c.l.b16 %v51
  %v160 = vpack.c.b16 %v143, %v142
  %v161 = vpack.c.b16 %v145, %v144
  %v162 = vpack.c.b16 %v147, %v146
  %v163 = vpack.c.b16 %v149, %v148
  %v164 = vpack.c.b16 %v151, %v150
  %v165 = vpack.c.b16 %v153, %v152
  %v166 = vpack.c.b16 %v155, %v154
  %v167 = vpack.c.b16 %v157, %v156
  %v168 = vpack.c.b16 %v159, %v158
  %vm178 = vcmask 130048
  %v180 = vsel %vm178, %v101, 0
  %v183 = vsel %vm178, %v103, 0
  %v186 = vsel %vm178, %v105, 0
  %v189 = vsel %vm178, %v107, 0
  %v192 = vsel %vm178, %v109, 0
  %v195 = vsel %vm178, %v111, 0
  %v198 = vsel %vm178, %v113, 0
  %v201 = vsel %vm178, %v115, 0
  %203 = vmatprep.subr.bf16.mxu0 0
  %204 = vmatpush1.bf16.msra.mxu0 %v160
  %205 = vmatprep.subr.bf16.mxu0 0
  %206 = vmatpush1.bf16.msra.mxu0 %v161
  %207 = vmatprep.subr.bf16.mxu0 0
  %208 = vmatpush1.bf16.msra.mxu0 %v162
  %209 = vmatprep.subr.bf16.mxu0 0
  %210 = vmatpush1.bf16.msra.mxu0 %v163
  %211 = vmatprep.subr.bf16.mxu0 0
  %212 = vmatpush1.bf16.msra.mxu0 %v164
  %213 = vmatprep.subr.bf16.mxu0 0
  %214 = vmatpush1.bf16.msra.mxu0 %v165
  %215 = vmatprep.subr.bf16.mxu0 0
  %216 = vmatpush1.bf16.msra.mxu0 %v166
  %217 = vmatprep.subr.bf16.mxu0 0
  %218 = vmatpush1.bf16.msra.mxu0 %v167
  %219 = vmatprep.subr.bf16.mxu0 0
  %220 = vmatpush1.bf16.msra.mxu0 %v168
  %221 = vmatprep.subr.bf16.mxu0 0
  %222 = vmatpush1.bf16.msra.mxu0 0
  %223 = vmatprep.subr.bf16.mxu0 0
  %224 = vmatpush1.bf16.msra.mxu0 0
  %225 = vmatprep.subr.bf16.mxu0 0
  %226 = vmatpush1.bf16.msra.mxu0 0
  %227 = vmatprep.subr.bf16.mxu0 0
  %228 = vmatpush1.bf16.msra.mxu0 0
  %229 = vmatprep.subr.bf16.mxu0 0
  %230 = vmatpush1.bf16.msra.mxu0 0
  %231 = vmatprep.subr.bf16.mxu0 0
  %232 = vmatpush1.bf16.msra.mxu0 0
  %233 = vmatprep.subr.bf16.mxu0 0
  %234 = vmatpush1.bf16.msra.mxu0 0
  %235 = vmatprep.mubr.bf16.mxu0 %v180
  %236 = vmatmul.mubr.bf16.gmra.mrb[0].mxu0 %v100
  %v237 = vpop.f32.mrb[0].mxu0
  %v238 = vadd.f32 0.0, %v237
  %v239 = vpop.f32.mrb[0].mxu0
  %v240 = vpop.f32.mrb[0].mxu0
  %v241 = vadd.f32 0.0, %v240
  %v242 = vpop.f32.mrb[0].mxu0
  %243 = vmatprep.mubr.bf16.mxu0 %v183
  %244 = vmatmul.mubr.bf16.gmra.mrb[0].mxu0 %v102
  %v245 = vpop.f32.mrb[0].mxu0
  %v246 = vadd.f32 0.0, %v245
  %v247 = vpop.f32.mrb[0].mxu0
  %v248 = vpop.f32.mrb[0].mxu0
  %v249 = vadd.f32 0.0, %v248
  %v250 = vpop.f32.mrb[0].mxu0
  %251 = vmatprep.mubr.bf16.mxu0 %v186
  %252 = vmatmul.mubr.bf16.gmra.mrb[0].mxu0 %v104
  %v253 = vpop.f32.mrb[0].mxu0
  %v254 = vadd.f32 0.0, %v253
  %v255 = vpop.f32.mrb[0].mxu0
  %v256 = vpop.f32.mrb[0].mxu0
  %v257 = vadd.f32 0.0, %v256
  %v258 = vpop.f32.mrb[0].mxu0
  %259 = vmatprep.mubr.bf16.mxu0 %v189
  %260 = vmatmul.mubr.bf16.gmra.mrb[0].mxu0 %v106
  %v261 = vpop.f32.mrb[0].mxu0
  %v262 = vadd.f32 0.0, %v261
  %v263 = vpop.f32.mrb[0].mxu0
  %v264 = vpop.f32.mrb[0].mxu0
  %v265 = vadd.f32 0.0, %v264
  %v266 = vpop.f32.mrb[0].mxu0
  %267 = vmatprep.mubr.bf16.mxu0 %v192
  %268 = vmatmul.mubr.bf16.gmra.mrb[0].mxu0 %v108
  %v269 = vpop.f32.mrb[0].mxu0
  %v270 = vadd.f32 0.0, %v269
  %v271 = vpop.f32.mrb[0].mxu0
  %v272 = vpop.f32.mrb[0].mxu0
  %v273 = vadd.f32 0.0, %v272
  %v274 = vpop.f32.mrb[0].mxu0
  %275 = vmatprep.mubr.bf16.mxu0 %v195
  %276 = vmatmul.mubr.bf16.gmra.mrb[0].mxu0 %v110
  %v277 = vpop.f32.mrb[0].mxu0
  %v278 = vadd.f32 0.0, %v277
  %v279 = vpop.f32.mrb[0].mxu0
  %v280 = vpop.f32.mrb[0].mxu0
  %v281 = vadd.f32 0.0, %v280
  %v282 = vpop.f32.mrb[0].mxu0
  %283 = vmatprep.mubr.bf16.mxu0 %v198
  %284 = vmatmul.mubr.bf16.gmra.mrb[0].mxu0 %v112
  %v285 = vpop.f32.mrb[0].mxu0
  %v286 = vadd.f32 0.0, %v285
  %v287 = vpop.f32.mrb[0].mxu0
  %v288 = vpop.f32.mrb[0].mxu0
  %v289 = vadd.f32 0.0, %v288
  %v290 = vpop.f32.mrb[0].mxu0
  %291 = vmatprep.mubr.bf16.mxu0 %v201
  %292 = vmatmul.mubr.bf16.gmra.mrb[0].mxu0 %v114
  %v293 = vpop.f32.mrb[0].mxu0
  %v294 = vadd.f32 0.0, %v293
  %v295 = vpop.f32.mrb[0].mxu0
  %v296 = vpop.f32.mrb[0].mxu0
  %v297 = vadd.f32 0.0, %v296
  %v298 = vpop.f32.mrb[0].mxu0
  %299 = vdwg.mxu0
  %v300 = vld [vmem:[%s2] sm:$0x1]
  %v302 = vlaneseq
  %v303 = vshrl.u32 %v302, 7
  %v304 = vsub.s32 0, %v303
  %v305 = vrot.slane %v300, %v304
  %v307 = vmul.f32 %v238, %v305
  %v308 = vmul.f32 %v241, %v305
  %v309 = vmul.f32 %v246, %v305
  %v310 = vmul.f32 %v249, %v305
  %v311 = vmul.f32 %v254, %v305
  %v312 = vmul.f32 %v257, %v305
  %v313 = vmul.f32 %v262, %v305
  %v314 = vmul.f32 %v265, %v305
  %v315 = vmul.f32 %v270, %v305
  %v316 = vmul.f32 %v273, %v305
  %v317 = vmul.f32 %v278, %v305
  %v318 = vmul.f32 %v281, %v305
  %v319 = vmul.f32 %v286, %v305
  %v320 = vmul.f32 %v289, %v305
  %v321 = vmul.f32 %v294, %v305
  %v322 = vmul.f32 %v297, %v305
  %v323 = vld [vmem:[%s3] sm:$0x1]
  %v325 = vlaneseq
  %v326 = vshrl.u32 %v325, 7
  %v327 = vsub.s32 0, %v326
  %v328 = vrot.slane %v323, %v327
  %v330 = vadd.f32 %v307, %v328
  %v331 = vadd.f32 %v308, %v328
  %v332 = vadd.f32 %v309, %v328
  %v333 = vadd.f32 %v310, %v328
  %v334 = vadd.f32 %v311, %v328
  %v335 = vadd.f32 %v312, %v328
  %v336 = vadd.f32 %v313, %v328
  %v337 = vadd.f32 %v314, %v328
  %v338 = vadd.f32 %v315, %v328
  %v339 = vadd.f32 %v316, %v328
  %v340 = vadd.f32 %v317, %v328
  %v341 = vadd.f32 %v318, %v328
  %v342 = vadd.f32 %v319, %v328
  %v343 = vadd.f32 %v320, %v328
  %v344 = vadd.f32 %v321, %v328
  %v345 = vadd.f32 %v322, %v328
  %v346 = vmax.f32 %v330, 0.0
  %v347 = vmax.f32 %v331, 0.0
  %v348 = vmax.f32 %v332, 0.0
  %v349 = vmax.f32 %v333, 0.0
  %v350 = vmax.f32 %v334, 0.0
  %v351 = vmax.f32 %v335, 0.0
  %v352 = vmax.f32 %v336, 0.0
  %v353 = vmax.f32 %v337, 0.0
  %v354 = vmax.f32 %v338, 0.0
  %v355 = vmax.f32 %v339, 0.0
  %v356 = vmax.f32 %v340, 0.0
  %v357 = vmax.f32 %v341, 0.0
  %v358 = vmax.f32 %v342, 0.0
  %v359 = vmax.f32 %v343, 0.0
  %v360 = vmax.f32 %v344, 0.0
  %v361 = vmax.f32 %v345, 0.0
  %v362 = vpack.c.bf16 %v347, %v346
  %v363 = vpack.c.bf16 %v349, %v348
  %v364 = vpack.c.bf16 %v351, %v350
  %v365 = vpack.c.bf16 %v353, %v352
  %v366 = vpack.c.bf16 %v355, %v354
  %v367 = vpack.c.bf16 %v357, %v356
  %v368 = vpack.c.bf16 %v359, %v358
  %v369 = vpack.c.bf16 %v361, %v360
  %v378 = vunpack.c.l.b16 %v362
  %v379 = vunpack.c.h.b16 %v362
  %v380 = vunpack.c.l.b16 %v363
  %v381 = vunpack.c.h.b16 %v363
  %v382 = vunpack.c.l.b16 %v364
  %v383 = vunpack.c.h.b16 %v364
  %v384 = vunpack.c.l.b16 %v365
  %v385 = vunpack.c.h.b16 %v365
  %v386 = vunpack.c.l.b16 %v366
  %v387 = vunpack.c.h.b16 %v366
  %v388 = vunpack.c.l.b16 %v367
  %v389 = vunpack.c.h.b16 %v367
  %v390 = vunpack.c.l.b16 %v368
  %v391 = vunpack.c.h.b16 %v368
  %v392 = vunpack.c.l.b16 %v369
  %v393 = vunpack.c.h.b16 %v369
  %v394 = vpack.c.b16 %v378, %v378
  %v395 = vpack.c.b16 %v379, %v379
  %v396 = vpack.c.b16 %v380, %v380
  %v397 = vpack.c.b16 %v381, %v381
  %v398 = vpack.c.b16 %v382, %v382
  %v399 = vpack.c.b16 %v383, %v383
  %v400 = vpack.c.b16 %v384, %v384
  %v401 = vpack.c.b16 %v385, %v385
  %v402 = vpack.c.b16 %v386, %v386
  %v403 = vpack.c.b16 %v387, %v387
  %v404 = vpack.c.b16 %v388, %v388
  %v405 = vpack.c.b16 %v389, %v389
  %v406 = vpack.c.b16 %v390, %v390
  %v407 = vpack.c.b16 %v391, %v391
  %v408 = vpack.c.b16 %v392, %v392
  %v409 = vpack.c.b16 %v393, %v393
  %vm426 = vcmask 125952
  %427 = vst.msk [vmem:[%s4] sm:$0xf] %vm426, %v394
  %428 = vst.msk [vmem:[%s4 + $0x4] sm:$0xf] %vm426, %v395
  %429 = vst.msk [vmem:[%s4 + $0x8] sm:$0xf] %vm426, %v396
  %430 = vst.msk [vmem:[%s4 + $0xc] sm:$0xf] %vm426, %v397
  %431 = vst.msk [vmem:[%s4 + $0x10] sm:$0xf] %vm426, %v398
  %432 = vst.msk [vmem:[%s4 + $0x14] sm:$0xf] %vm426, %v399
  %433 = vst.msk [vmem:[%s4 + $0x18] sm:$0xf] %vm426, %v400
  %434 = vst.msk [vmem:[%s4 + $0x1c] sm:$0xf] %vm426, %v401
  %435 = vst.msk [vmem:[%s4 + $0x20] sm:$0xf] %vm426, %v402
  %436 = vst.msk [vmem:[%s4 + $0x24] sm:$0xf] %vm426, %v403
  %437 = vst.msk [vmem:[%s4 + $0x28] sm:$0xf] %vm426, %v404
  %438 = vst.msk [vmem:[%s4 + $0x2c] sm:$0xf] %vm426, %v405
  %439 = vst.msk [vmem:[%s4 + $0x30] sm:$0xf] %vm426, %v406
  %440 = vst.msk [vmem:[%s4 + $0x34] sm:$0xf] %vm426, %v407
  %441 = vst.msk [vmem:[%s4 + $0x38] sm:$0xf] %vm426, %v408
  %442 = vst.msk [vmem:[%s4 + $0x3c] sm:$0xf] %vm426, %v409
  // Predicated region
  $region18: #{_lambda_.39} parent=0 // pred_check
    _
  $region19: #{_lambda_.39} parent=0 // pred_check_branch
    %444 = sbr.rel (0) target = $region21
  $region20: #{_lambda_.39} parent=0 // pred_region
    _
  $region21: #{_lambda_.39} parent=0 // pred_fallthru
    _
  // Predicated region
  $region22: #{_lambda_.39} parent=0 // pred_check
    _
  $region23: #{_lambda_.39} parent=0 // pred_check_branch
    %446 = sbr.rel (0) target = $region25
  $region24: #{_lambda_.39} parent=0 // pred_region
    _
  $region25: #{_lambda_.39} parent=0 // pred_fallthru
    _

// kernel: _lambda_.41
$region0: #{_lambda_.41}
  #allocation0 [shape = 'u32[]', space=smem, size = 0x4, offset = 0x4, fixed_abs, tag = 'smem constant byte address 0x4 - core index']
  #allocation1 [shape = 'u32[144,128]{1,0:T(1,128)}', space=vmem, size = 0x12000, scoped, tag = 'internal scratch']
  %s0 = inlined_call_operand.vmem [shape: bf16[128,16], index: 0, kind: input, shape index: {}]
  %s1 = inlined_call_operand.vmem [shape: bf16[16,8], index: 1, kind: input, shape index: {}]
  %s2 = inlined_call_operand.vmem [shape: f32[1,8], index: 2, kind: input, shape index: {}]
  %s3 = inlined_call_operand.vmem [shape: f32[1,8], index: 3, kind: input, shape index: {}]
  %s4 = inlined_call_operand.vmem [shape: bf16[128,8], index: 4, kind: output, shape index: {}]
  %s5 = sld [smem:[#allocation0]]
  $region26: #{_lambda_.41} parent=0
    _
  %s7 = ssub.s32 1, %s5
  %s8 = scalar_select 0, %s7, %s5
  // Predicated region
  $region2: #{_lambda_.41} parent=0 // pred_check
    _
  $region3: #{_lambda_.41} parent=0 // pred_check_branch
    %10 = sbr.rel (0) target = $region5
  $region4: #{_lambda_.41} parent=0 // pred_region
    _
  $region5: #{_lambda_.41} parent=0 // pred_fallthru
    _
  // Predicated region
  $region6: #{_lambda_.41} parent=0 // pred_check
    _
  $region7: #{_lambda_.41} parent=0 // pred_check_branch
    %12 = sbr.rel (0) target = $region9
  $region8: #{_lambda_.41} parent=0 // pred_region
    _
  $region9: #{_lambda_.41} parent=0 // pred_fallthru
    _
  // Predicated region
  $region10: #{_lambda_.41} parent=0 // pred_check
    _
  $region11: #{_lambda_.41} parent=0 // pred_check_branch
    %14 = sbr.rel (0) target = $region13
  $region12: #{_lambda_.41} parent=0 // pred_region
    _
  $region13: #{_lambda_.41} parent=0 // pred_fallthru
    _
  // Predicated region
  $region14: #{_lambda_.41} parent=0 // pred_check
    _
  $region15: #{_lambda_.41} parent=0 // pred_check_branch
    %16 = sbr.rel (0) target = $region17
  $region16: #{_lambda_.41} parent=0 // pred_region
    _
  $region17: #{_lambda_.41} parent=0 // pred_fallthru
    _
  %v18 = vld [vmem:[%s0] sm:$0xf]
  %v19 = vld [vmem:[%s0 + $0x4] sm:$0xf]
  %v20 = vld [vmem:[%s0 + $0x8] sm:$0xf]
  %v21 = vld [vmem:[%s0 + $0xc] sm:$0xf]
  %v22 = vld [vmem:[%s0 + $0x10] sm:$0xf]
  %v23 = vld [vmem:[%s0 + $0x14] sm:$0xf]
  %v24 = vld [vmem:[%s0 + $0x18] sm:$0xf]
  %v25 = vld [vmem:[%s0 + $0x1c] sm:$0xf]
  %v26 = vld [vmem:[%s0 + $0x20] sm:$0xf]
  %v27 = vld [vmem:[%s0 + $0x24] sm:$0xf]
  %v28 = vld [vmem:[%s0 + $0x28] sm:$0xf]
  %v29 = vld [vmem:[%s0 + $0x2c] sm:$0xf]
  %v30 = vld [vmem:[%s0 + $0x30] sm:$0xf]
  %v31 = vld [vmem:[%s0 + $0x34] sm:$0xf]
  %v32 = vld [vmem:[%s0 + $0x38] sm:$0xf]
  %v33 = vld [vmem:[%s0 + $0x3c] sm:$0xf]
  %v34 = vld [vmem:[%s1] sm:$0xf]
  %v35 = vld [vmem:[%s1 + $0x4] sm:$0xf]
  %v52 = vunpack.c.l.b16 %v18
  %v53 = vunpack.c.l.b16 %v19
  %v54 = vunpack.c.l.b16 %v20
  %v55 = vunpack.c.l.b16 %v21
  %v56 = vunpack.c.l.b16 %v22
  %v57 = vunpack.c.l.b16 %v23
  %v58 = vunpack.c.l.b16 %v24
  %v59 = vunpack.c.l.b16 %v25
  %v60 = vunpack.c.l.b16 %v26
  %v61 = vunpack.c.l.b16 %v27
  %v62 = vunpack.c.l.b16 %v28
  %v63 = vunpack.c.l.b16 %v29
  %v64 = vunpack.c.l.b16 %v30
  %v65 = vunpack.c.l.b16 %v31
  %v66 = vunpack.c.l.b16 %v32
  %v67 = vunpack.c.l.b16 %v33
  %v68 = vpack.c.b16 %v53, %v52
  %v69 = vpack.c.b16 %v55, %v54
  %v70 = vpack.c.b16 %v57, %v56
  %v71 = vpack.c.b16 %v59, %v58
  %v72 = vpack.c.b16 %v61, %v60
  %v73 = vpack.c.b16 %v63, %v62
  %v74 = vpack.c.b16 %v65, %v64
  %v75 = vpack.c.b16 %v67, %v66
  %v78 = vunpack.c.l.b16 %v34
  %v79 = vunpack.c.l.b16 %v35
  %v80 = vpack.c.b16 %v79, %v78
  %vm82 = vcmask 130048
  %v84 = vsel %vm82, %v68, 0
  %v87 = vsel %vm82, %v69, 0
  %v90 = vsel %vm82, %v70, 0
  %v93 = vsel %vm82, %v71, 0
  %v96 = vsel %vm82, %v72, 0
  %v99 = vsel %vm82, %v73, 0
  %v102 = vsel %vm82, %v74, 0
  %v105 = vsel %vm82, %v75, 0
  %107 = vmatprep.subr.bf16.mxu0 0
  %108 = vmatpush1.bf16.msra.mxu0 %v80
  %109 = vmatprep.subr.bf16.mxu0 0
  %110 = vmatpush1.bf16.msra.mxu0 0
  %111 = vmatprep.subr.bf16.mxu0 0
  %112 = vmatpush1.bf16.msra.mxu0 0
  %113 = vmatprep.subr.bf16.mxu0 0
  %114 = vmatpush1.bf16.msra.mxu0 0
  %115 = vmatprep.subr.bf16.mxu0 0
  %116 = vmatpush1.bf16.msra.mxu0 0
  %117 = vmatprep.subr.bf16.mxu0 0
  %118 = vmatpush1.bf16.msra.mxu0 0
  %119 = vmatprep.subr.bf16.mxu0 0
  %120 = vmatpush1.bf16.msra.mxu0 0
  %121 = vmatprep.subr.bf16.mxu0 0
  %122 = vmatpush1.bf16.msra.mxu0 0
  %123 = vmatprep.subr.bf16.mxu0 0
  %124 = vmatpush1.bf16.msra.mxu0 0
  %125 = vmatprep.subr.bf16.mxu0 0
  %126 = vmatpush1.bf16.msra.mxu0 0
  %127 = vmatprep.subr.bf16.mxu0 0
  %128 = vmatpush1.bf16.msra.mxu0 0
  %129 = vmatprep.subr.bf16.mxu0 0
  %130 = vmatpush1.bf16.msra.mxu0 0
  %131 = vmatprep.subr.bf16.mxu0 0
  %132 = vmatpush1.bf16.msra.mxu0 0
  %133 = vmatprep.subr.bf16.mxu0 0
  %134 = vmatpush1.bf16.msra.mxu0 0
  %135 = vmatprep.subr.bf16.mxu0 0
  %136 = vmatpush1.bf16.msra.mxu0 0
  %137 = vmatprep.subr.bf16.mxu0 0
  %138 = vmatpush1.bf16.msra.mxu0 0
  %139 = vmatprep.mubr.bf16.mxu0 0
  %140 = vmatmul.mubr.bf16.gmra.mrb[0].mxu0 %v84
  %v141 = vpop.f32.mrb[0].mxu0
  %v142 = vadd.f32 0.0, %v141
  %v143 = vpop.f32.mrb[0].mxu0
  %v144 = vpop.f32.mrb[0].mxu0
  %v145 = vadd.f32 0.0, %v144
  %v146 = vpop.f32.mrb[0].mxu0
  %147 = vmatprep.mubr.bf16.mxu0 0
  %148 = vmatmul.mubr.bf16.gmra.mrb[0].mxu0 %v87
  %v149 = vpop.f32.mrb[0].mxu0
  %v150 = vadd.f32 0.0, %v149
  %v151 = vpop.f32.mrb[0].mxu0
  %v152 = vpop.f32.mrb[0].mxu0
  %v153 = vadd.f32 0.0, %v152
  %v154 = vpop.f32.mrb[0].mxu0
  %155 = vmatprep.mubr.bf16.mxu0 0
  %156 = vmatmul.mubr.bf16.gmra.mrb[0].mxu0 %v90
  %v157 = vpop.f32.mrb[0].mxu0
  %v158 = vadd.f32 0.0, %v157
  %v159 = vpop.f32.mrb[0].mxu0
  %v160 = vpop.f32.mrb[0].mxu0
  %v161 = vadd.f32 0.0, %v160
  %v162 = vpop.f32.mrb[0].mxu0
  %163 = vmatprep.mubr.bf16.mxu0 0
  %164 = vmatmul.mubr.bf16.gmra.mrb[0].mxu0 %v93
  %v165 = vpop.f32.mrb[0].mxu0
  %v166 = vadd.f32 0.0, %v165
  %v167 = vpop.f32.mrb[0].mxu0
  %v168 = vpop.f32.mrb[0].mxu0
  %v169 = vadd.f32 0.0, %v168
  %v170 = vpop.f32.mrb[0].mxu0
  %171 = vmatprep.mubr.bf16.mxu0 0
  %172 = vmatmul.mubr.bf16.gmra.mrb[0].mxu0 %v96
  %v173 = vpop.f32.mrb[0].mxu0
  %v174 = vadd.f32 0.0, %v173
  %v175 = vpop.f32.mrb[0].mxu0
  %v176 = vpop.f32.mrb[0].mxu0
  %v177 = vadd.f32 0.0, %v176
  %v178 = vpop.f32.mrb[0].mxu0
  %179 = vmatprep.mubr.bf16.mxu0 0
  %180 = vmatmul.mubr.bf16.gmra.mrb[0].mxu0 %v99
  %v181 = vpop.f32.mrb[0].mxu0
  %v182 = vadd.f32 0.0, %v181
  %v183 = vpop.f32.mrb[0].mxu0
  %v184 = vpop.f32.mrb[0].mxu0
  %v185 = vadd.f32 0.0, %v184
  %v186 = vpop.f32.mrb[0].mxu0
  %187 = vmatprep.mubr.bf16.mxu0 0
  %188 = vmatmul.mubr.bf16.gmra.mrb[0].mxu0 %v102
  %v189 = vpop.f32.mrb[0].mxu0
  %v190 = vadd.f32 0.0, %v189
  %v191 = vpop.f32.mrb[0].mxu0
  %v192 = vpop.f32.mrb[0].mxu0
  %v193 = vadd.f32 0.0, %v192
  %v194 = vpop.f32.mrb[0].mxu0
  %195 = vmatprep.mubr.bf16.mxu0 0
  %196 = vmatmul.mubr.bf16.gmra.mrb[0].mxu0 %v105
  %v197 = vpop.f32.mrb[0].mxu0
  %v198 = vadd.f32 0.0, %v197
  %v199 = vpop.f32.mrb[0].mxu0
  %v200 = vpop.f32.mrb[0].mxu0
  %v201 = vadd.f32 0.0, %v200
  %v202 = vpop.f32.mrb[0].mxu0
  %203 = vdwg.mxu0
  %v204 = vld [vmem:[%s2] sm:$0x1]
  %v206 = vlaneseq
  %v207 = vshrl.u32 %v206, 7
  %v208 = vsub.s32 0, %v207
  %v209 = vrot.slane %v204, %v208
  %v211 = vmul.f32 %v142, %v209
  %v212 = vmul.f32 %v145, %v209
  %v213 = vmul.f32 %v150, %v209
  %v214 = vmul.f32 %v153, %v209
  %v215 = vmul.f32 %v158, %v209
  %v216 = vmul.f32 %v161, %v209
  %v217 = vmul.f32 %v166, %v209
  %v218 = vmul.f32 %v169, %v209
  %v219 = vmul.f32 %v174, %v209
  %v220 = vmul.f32 %v177, %v209
  %v221 = vmul.f32 %v182, %v209
  %v222 = vmul.f32 %v185, %v209
  %v223 = vmul.f32 %v190, %v209
  %v224 = vmul.f32 %v193, %v209
  %v225 = vmul.f32 %v198, %v209
  %v226 = vmul.f32 %v201, %v209
  %v227 = vld [vmem:[%s3] sm:$0x1]
  %v229 = vlaneseq
  %v230 = vshrl.u32 %v229, 7
  %v231 = vsub.s32 0, %v230
  %v232 = vrot.slane %v227, %v231
  %v234 = vadd.f32 %v211, %v232
  %v235 = vadd.f32 %v212, %v232
  %v236 = vadd.f32 %v213, %v232
  %v237 = vadd.f32 %v214, %v232
  %v238 = vadd.f32 %v215, %v232
  %v239 = vadd.f32 %v216, %v232
  %v240 = vadd.f32 %v217, %v232
  %v241 = vadd.f32 %v218, %v232
  %v242 = vadd.f32 %v219, %v232
  %v243 = vadd.f32 %v220, %v232
  %v244 = vadd.f32 %v221, %v232
  %v245 = vadd.f32 %v222, %v232
  %v246 = vadd.f32 %v223, %v232
  %v247 = vadd.f32 %v224, %v232
  %v248 = vadd.f32 %v225, %v232
  %v249 = vadd.f32 %v226, %v232
  %v250 = vpack.c.bf16 %v235, %v234
  %v251 = vpack.c.bf16 %v237, %v236
  %v252 = vpack.c.bf16 %v239, %v238
  %v253 = vpack.c.bf16 %v241, %v240
  %v254 = vpack.c.bf16 %v243, %v242
  %v255 = vpack.c.bf16 %v245, %v244
  %v256 = vpack.c.bf16 %v247, %v246
  %v257 = vpack.c.bf16 %v249, %v248
  %v266 = vunpack.c.l.b16 %v250
  %v267 = vunpack.c.h.b16 %v250
  %v268 = vunpack.c.l.b16 %v251
  %v269 = vunpack.c.h.b16 %v251
  %v270 = vunpack.c.l.b16 %v252
  %v271 = vunpack.c.h.b16 %v252
  %v272 = vunpack.c.l.b16 %v253
  %v273 = vunpack.c.h.b16 %v253
  %v274 = vunpack.c.l.b16 %v254
  %v275 = vunpack.c.h.b16 %v254
  %v276 = vunpack.c.l.b16 %v255
  %v277 = vunpack.c.h.b16 %v255
  %v278 = vunpack.c.l.b16 %v256
  %v279 = vunpack.c.h.b16 %v256
  %v280 = vunpack.c.l.b16 %v257
  %v281 = vunpack.c.h.b16 %v257
  %v282 = vpack.c.b16 %v266, %v266
  %v283 = vpack.c.b16 %v267, %v267
  %v284 = vpack.c.b16 %v268, %v268
  %v285 = vpack.c.b16 %v269, %v269
  %v286 = vpack.c.b16 %v270, %v270
  %v287 = vpack.c.b16 %v271, %v271
  %v288 = vpack.c.b16 %v272, %v272
  %v289 = vpack.c.b16 %v273, %v273
  %v290 = vpack.c.b16 %v274, %v274
  %v291 = vpack.c.b16 %v275, %v275
  %v292 = vpack.c.b16 %v276, %v276
  %v293 = vpack.c.b16 %v277, %v277
  %v294 = vpack.c.b16 %v278, %v278
  %v295 = vpack.c.b16 %v279, %v279
  %v296 = vpack.c.b16 %v280, %v280
  %v297 = vpack.c.b16 %v281, %v281
  %vm314 = vcmask 60416
  %315 = vst.msk [vmem:[%s4] sm:$0xf] %vm314, %v282
  %316 = vst.msk [vmem:[%s4 + $0x4] sm:$0xf] %vm314, %v283
  %317 = vst.msk [vmem:[%s4 + $0x8] sm:$0xf] %vm314, %v284
  %318 = vst.msk [vmem:[%s4 + $0xc] sm:$0xf] %vm314, %v285
  %319 = vst.msk [vmem:[%s4 + $0x10] sm:$0xf] %vm314, %v286
  %320 = vst.msk [vmem:[%s4 + $0x14] sm:$0xf] %vm314, %v287
  %321 = vst.msk [vmem:[%s4 + $0x18] sm:$0xf] %vm314, %v288
  %322 = vst.msk [vmem:[%s4 + $0x1c] sm:$0xf] %vm314, %v289
  %323 = vst.msk [vmem:[%s4 + $0x20] sm:$0xf] %vm314, %v290
  %324 = vst.msk [vmem:[%s4 + $0x24] sm:$0xf] %vm314, %v291
  %325 = vst.msk [vmem:[%s4 + $0x28] sm:$0xf] %vm314, %v292
  %326 = vst.msk [vmem:[%s4 + $0x2c] sm:$0xf] %vm314, %v293
  %327 = vst.msk [vmem:[%s4 + $0x30] sm:$0xf] %vm314, %v294
  %328 = vst.msk [vmem:[%s4 + $0x34] sm:$0xf] %vm314, %v295
  %329 = vst.msk [vmem:[%s4 + $0x38] sm:$0xf] %vm314, %v296
  %330 = vst.msk [vmem:[%s4 + $0x3c] sm:$0xf] %vm314, %v297
  // Predicated region
  $region18: #{_lambda_.41} parent=0 // pred_check
    _
  $region19: #{_lambda_.41} parent=0 // pred_check_branch
    %332 = sbr.rel (0) target = $region21
  $region20: #{_lambda_.41} parent=0 // pred_region
    _
  $region21: #{_lambda_.41} parent=0 // pred_fallthru
    _
  // Predicated region
  $region22: #{_lambda_.41} parent=0 // pred_check
    _
  $region23: #{_lambda_.41} parent=0 // pred_check_branch
    %334 = sbr.rel (0) target = $region25
  $region24: #{_lambda_.41} parent=0 // pred_region
    _
  $region25: #{_lambda_.41} parent=0 // pred_fallthru
    _

// kernel: _lambda_.40
$region0: #{_lambda_.40}
  #allocation0 [shape = 'u32[]', space=smem, size = 0x4, offset = 0x4, fixed_abs, tag = 'smem constant byte address 0x4 - core index']
  #allocation1 [shape = 'u32[144,128]{1,0:T(1,128)}', space=vmem, size = 0x12000, scoped, tag = 'internal scratch']
  %s0 = inlined_call_operand.vmem [shape: bf16[128,144], index: 0, kind: input, shape index: {}]
  %s1 = inlined_call_operand.vmem [shape: bf16[144,16], index: 1, kind: input, shape index: {}]
  %s2 = inlined_call_operand.vmem [shape: f32[1,16], index: 2, kind: input, shape index: {}]
  %s3 = inlined_call_operand.vmem [shape: f32[1,16], index: 3, kind: input, shape index: {}]
  %s4 = inlined_call_operand.vmem [shape: bf16[128,16], index: 4, kind: input, shape index: {}]
  %s5 = inlined_call_operand.vmem [shape: bf16[128,16], index: 5, kind: output, shape index: {}]
  %s6 = sld [smem:[#allocation0]]
  $region30: #{_lambda_.40} parent=0
    _
  %s8 = ssub.s32 1, %s6
  %s9 = scalar_select 0, %s8, %s6
  // Predicated region
  $region2: #{_lambda_.40} parent=0 // pred_check
    _
  $region3: #{_lambda_.40} parent=0 // pred_check_branch
    %11 = sbr.rel (0) target = $region5
  $region4: #{_lambda_.40} parent=0 // pred_region
    _
  $region5: #{_lambda_.40} parent=0 // pred_fallthru
    _
  // Predicated region
  $region6: #{_lambda_.40} parent=0 // pred_check
    _
  $region7: #{_lambda_.40} parent=0 // pred_check_branch
    %13 = sbr.rel (0) target = $region9
  $region8: #{_lambda_.40} parent=0 // pred_region
    _
  $region9: #{_lambda_.40} parent=0 // pred_fallthru
    _
  // Predicated region
  $region10: #{_lambda_.40} parent=0 // pred_check
    _
  $region11: #{_lambda_.40} parent=0 // pred_check_branch
    %15 = sbr.rel (0) target = $region13
  $region12: #{_lambda_.40} parent=0 // pred_region
    _
  $region13: #{_lambda_.40} parent=0 // pred_fallthru
    _
  // Predicated region
  $region14: #{_lambda_.40} parent=0 // pred_check
    _
  $region15: #{_lambda_.40} parent=0 // pred_check_branch
    %17 = sbr.rel (0) target = $region17
  $region16: #{_lambda_.40} parent=0 // pred_region
    _
  $region17: #{_lambda_.40} parent=0 // pred_fallthru
    _
  // Predicated region
  $region18: #{_lambda_.40} parent=0 // pred_check
    _
  $region19: #{_lambda_.40} parent=0 // pred_check_branch
    %19 = sbr.rel (0) target = $region21
  $region20: #{_lambda_.40} parent=0 // pred_region
    _
  $region21: #{_lambda_.40} parent=0 // pred_fallthru
    _
  %v21 = vld [vmem:[%s0] sm:$0xff]
  %v22 = vld [vmem:[%s0 + $0x8] sm:$0xff]
  %v23 = vld [vmem:[%s0 + $0x10] sm:$0xff]
  %v24 = vld [vmem:[%s0 + $0x18] sm:$0xff]
  %v25 = vld [vmem:[%s0 + $0x20] sm:$0xff]
  %v26 = vld [vmem:[%s0 + $0x28] sm:$0xff]
  %v27 = vld [vmem:[%s0 + $0x30] sm:$0xff]
  %v28 = vld [vmem:[%s0 + $0x38] sm:$0xff]
  %v29 = vld [vmem:[%s0 + $0x40] sm:$0xff]
  %v30 = vld [vmem:[%s0 + $0x48] sm:$0xff]
  %v31 = vld [vmem:[%s0 + $0x50] sm:$0xff]
  %v32 = vld [vmem:[%s0 + $0x58] sm:$0xff]
  %v33 = vld [vmem:[%s0 + $0x60] sm:$0xff]
  %v34 = vld [vmem:[%s0 + $0x68] sm:$0xff]
  %v35 = vld [vmem:[%s0 + $0x70] sm:$0xff]
  %v36 = vld [vmem:[%s0 + $0x78] sm:$0xff]
  %v37 = vld [vmem:[%s1] sm:$0xf]
  %v38 = vld [vmem:[%s1 + $0x4] sm:$0xf]
  %v39 = vld [vmem:[%s1 + $0x8] sm:$0xf]
  %v40 = vld [vmem:[%s1 + $0xc] sm:$0xf]
  %v41 = vld [vmem:[%s1 + $0x10] sm:$0xf]
  %v42 = vld [vmem:[%s1 + $0x14] sm:$0xf]
  %v43 = vld [vmem:[%s1 + $0x18] sm:$0xf]
  %v44 = vld [vmem:[%s1 + $0x1c] sm:$0xf]
  %v45 = vld [vmem:[%s1 + $0x20] sm:$0xf]
  %v46 = vld [vmem:[%s1 + $0x24] sm:$0xf]
  %v47 = vld [vmem:[%s1 + $0x28] sm:$0xf]
  %v48 = vld [vmem:[%s1 + $0x2c] sm:$0xf]
  %v49 = vld [vmem:[%s1 + $0x30] sm:$0xf]
  %v50 = vld [vmem:[%s1 + $0x34] sm:$0xf]
  %v51 = vld [vmem:[%s1 + $0x38] sm:$0xf]
  %v52 = vld [vmem:[%s1 + $0x3c] sm:$0xf]
  %v53 = vld [vmem:[%s1 + $0x40] sm:$0xf]
  %v54 = vld [vmem:[%s1 + $0x44] sm:$0xf]
  %v71 = vunpack.c.l.b16 %v21
  %v72 = vunpack.c.h.b16 %v21
  %v73 = vunpack.c.l.b16 %v22
  %v74 = vunpack.c.h.b16 %v22
  %v75 = vunpack.c.l.b16 %v23
  %v76 = vunpack.c.h.b16 %v23
  %v77 = vunpack.c.l.b16 %v24
  %v78 = vunpack.c.h.b16 %v24
  %v79 = vunpack.c.l.b16 %v25
  %v80 = vunpack.c.h.b16 %v25
  %v81 = vunpack.c.l.b16 %v26
  %v82 = vunpack.c.h.b16 %v26
  %v83 = vunpack.c.l.b16 %v27
  %v84 = vunpack.c.h.b16 %v27
  %v85 = vunpack.c.l.b16 %v28
  %v86 = vunpack.c.h.b16 %v28
  %v87 = vunpack.c.l.b16 %v29
  %v88 = vunpack.c.h.b16 %v29
  %v89 = vunpack.c.l.b16 %v30
  %v90 = vunpack.c.h.b16 %v30
  %v91 = vunpack.c.l.b16 %v31
  %v92 = vunpack.c.h.b16 %v31
  %v93 = vunpack.c.l.b16 %v32
  %v94 = vunpack.c.h.b16 %v32
  %v95 = vunpack.c.l.b16 %v33
  %v96 = vunpack.c.h.b16 %v33
  %v97 = vunpack.c.l.b16 %v34
  %v98 = vunpack.c.h.b16 %v34
  %v99 = vunpack.c.l.b16 %v35
  %v100 = vunpack.c.h.b16 %v35
  %v101 = vunpack.c.l.b16 %v36
  %v102 = vunpack.c.h.b16 %v36
  %v103 = vpack.c.b16 %v73, %v71
  %v104 = vpack.c.b16 %v74, %v72
  %v105 = vpack.c.b16 %v77, %v75
  %v106 = vpack.c.b16 %v78, %v76
  %v107 = vpack.c.b16 %v81, %v79
  %v108 = vpack.c.b16 %v82, %v80
  %v109 = vpack.c.b16 %v85, %v83
  %v110 = vpack.c.b16 %v86, %v84
  %v111 = vpack.c.b16 %v89, %v87
  %v112 = vpack.c.b16 %v90, %v88
  %v113 = vpack.c.b16 %v93, %v91
  %v114 = vpack.c.b16 %v94, %v92
  %v115 = vpack.c.b16 %v97, %v95
  %v116 = vpack.c.b16 %v98, %v96
  %v117 = vpack.c.b16 %v101, %v99
  %v118 = vpack.c.b16 %v102, %v100
  %v145 = vunpack.c.l.b16 %v37
  %v146 = vunpack.c.l.b16 %v38
  %v147 = vunpack.c.l.b16 %v39
  %v148 = vunpack.c.l.b16 %v40
  %v149 = vunpack.c.l.b16 %v41
  %v150 = vunpack.c.l.b16 %v42
  %v151 = vunpack.c.l.b16 %v43
  %v152 = vunpack.c.l.b16 %v44
  %v153 = vunpack.c.l.b16 %v45
  %v154 = vunpack.c.l.b16 %v46
  %v155 = vunpack.c.l.b16 %v47
  %v156 = vunpack.c.l.b16 %v48
  %v157 = vunpack.c.l.b16 %v49
  %v158 = vunpack.c.l.b16 %v50
  %v159 = vunpack.c.l.b16 %v51
  %v160 = vunpack.c.l.b16 %v52
  %v161 = vunpack.c.l.b16 %v53
  %v162 = vunpack.c.l.b16 %v54
  %v163 = vpack.c.b16 %v146, %v145
  %v164 = vpack.c.b16 %v148, %v147
  %v165 = vpack.c.b16 %v150, %v149
  %v166 = vpack.c.b16 %v152, %v151
  %v167 = vpack.c.b16 %v154, %v153
  %v168 = vpack.c.b16 %v156, %v155
  %v169 = vpack.c.b16 %v158, %v157
  %v170 = vpack.c.b16 %v160, %v159
  %v171 = vpack.c.b16 %v162, %v161
  %vm181 = vcmask 130048
  %v183 = vsel %vm181, %v104, 0
  %v186 = vsel %vm181, %v106, 0
  %v189 = vsel %vm181, %v108, 0
  %v192 = vsel %vm181, %v110, 0
  %v195 = vsel %vm181, %v112, 0
  %v198 = vsel %vm181, %v114, 0
  %v201 = vsel %vm181, %v116, 0
  %v204 = vsel %vm181, %v118, 0
  %206 = vmatprep.subr.bf16.mxu0 0
  %207 = vmatpush1.bf16.msra.mxu0 %v163
  %208 = vmatprep.subr.bf16.mxu0 0
  %209 = vmatpush1.bf16.msra.mxu0 %v164
  %210 = vmatprep.subr.bf16.mxu0 0
  %211 = vmatpush1.bf16.msra.mxu0 %v165
  %212 = vmatprep.subr.bf16.mxu0 0
  %213 = vmatpush1.bf16.msra.mxu0 %v166
  %214 = vmatprep.subr.bf16.mxu0 0
  %215 = vmatpush1.bf16.msra.mxu0 %v167
  %216 = vmatprep.subr.bf16.mxu0 0
  %217 = vmatpush1.bf16.msra.mxu0 %v168
  %218 = vmatprep.subr.bf16.mxu0 0
  %219 = vmatpush1.bf16.msra.mxu0 %v169
  %220 = vmatprep.subr.bf16.mxu0 0
  %221 = vmatpush1.bf16.msra.mxu0 %v170
  %222 = vmatprep.subr.bf16.mxu0 0
  %223 = vmatpush1.bf16.msra.mxu0 %v171
  %224 = vmatprep.subr.bf16.mxu0 0
  %225 = vmatpush1.bf16.msra.mxu0 0
  %226 = vmatprep.subr.bf16.mxu0 0
  %227 = vmatpush1.bf16.msra.mxu0 0
  %228 = vmatprep.subr.bf16.mxu0 0
  %229 = vmatpush1.bf16.msra.mxu0 0
  %230 = vmatprep.subr.bf16.mxu0 0
  %231 = vmatpush1.bf16.msra.mxu0 0
  %232 = vmatprep.subr.bf16.mxu0 0
  %233 = vmatpush1.bf16.msra.mxu0 0
  %234 = vmatprep.subr.bf16.mxu0 0
  %235 = vmatpush1.bf16.msra.mxu0 0
  %236 = vmatprep.subr.bf16.mxu0 0
  %237 = vmatpush1.bf16.msra.mxu0 0
  %238 = vmatprep.mubr.bf16.mxu0 %v183
  %239 = vmatmul.mubr.bf16.gmra.mrb[0].mxu0 %v103
  %v240 = vpop.f32.mrb[0].mxu0
  %v241 = vadd.f32 0.0, %v240
  %v242 = vpop.f32.mrb[0].mxu0
  %v243 = vpop.f32.mrb[0].mxu0
  %v244 = vadd.f32 0.0, %v243
  %v245 = vpop.f32.mrb[0].mxu0
  %246 = vmatprep.mubr.bf16.mxu0 %v186
  %247 = vmatmul.mubr.bf16.gmra.mrb[0].mxu0 %v105
  %v248 = vpop.f32.mrb[0].mxu0
  %v249 = vadd.f32 0.0, %v248
  %v250 = vpop.f32.mrb[0].mxu0
  %v251 = vpop.f32.mrb[0].mxu0
  %v252 = vadd.f32 0.0, %v251
  %v253 = vpop.f32.mrb[0].mxu0
  %254 = vmatprep.mubr.bf16.mxu0 %v189
  %255 = vmatmul.mubr.bf16.gmra.mrb[0].mxu0 %v107
  %v256 = vpop.f32.mrb[0].mxu0
  %v257 = vadd.f32 0.0, %v256
  %v258 = vpop.f32.mrb[0].mxu0
  %v259 = vpop.f32.mrb[0].mxu0
  %v260 = vadd.f32 0.0, %v259
  %v261 = vpop.f32.mrb[0].mxu0
  %262 = vmatprep.mubr.bf16.mxu0 %v192
  %263 = vmatmul.mubr.bf16.gmra.mrb[0].mxu0 %v109
  %v264 = vpop.f32.mrb[0].mxu0
  %v265 = vadd.f32 0.0, %v264
  %v266 = vpop.f32.mrb[0].mxu0
  %v267 = vpop.f32.mrb[0].mxu0
  %v268 = vadd.f32 0.0, %v267
  %v269 = vpop.f32.mrb[0].mxu0
  %270 = vmatprep.mubr.bf16.mxu0 %v195
  %271 = vmatmul.mubr.bf16.gmra.mrb[0].mxu0 %v111
  %v272 = vpop.f32.mrb[0].mxu0
  %v273 = vadd.f32 0.0, %v272
  %v274 = vpop.f32.mrb[0].mxu0
  %v275 = vpop.f32.mrb[0].mxu0
  %v276 = vadd.f32 0.0, %v275
  %v277 = vpop.f32.mrb[0].mxu0
  %278 = vmatprep.mubr.bf16.mxu0 %v198
  %279 = vmatmul.mubr.bf16.gmra.mrb[0].mxu0 %v113
  %v280 = vpop.f32.mrb[0].mxu0
  %v281 = vadd.f32 0.0, %v280
  %v282 = vpop.f32.mrb[0].mxu0
  %v283 = vpop.f32.mrb[0].mxu0
  %v284 = vadd.f32 0.0, %v283
  %v285 = vpop.f32.mrb[0].mxu0
  %286 = vmatprep.mubr.bf16.mxu0 %v201
  %287 = vmatmul.mubr.bf16.gmra.mrb[0].mxu0 %v115
  %v288 = vpop.f32.mrb[0].mxu0
  %v289 = vadd.f32 0.0, %v288
  %v290 = vpop.f32.mrb[0].mxu0
  %v291 = vpop.f32.mrb[0].mxu0
  %v292 = vadd.f32 0.0, %v291
  %v293 = vpop.f32.mrb[0].mxu0
  %294 = vmatprep.mubr.bf16.mxu0 %v204
  %295 = vmatmul.mubr.bf16.gmra.mrb[0].mxu0 %v117
  %v296 = vpop.f32.mrb[0].mxu0
  %v297 = vadd.f32 0.0, %v296
  %v298 = vpop.f32.mrb[0].mxu0
  %v299 = vpop.f32.mrb[0].mxu0
  %v300 = vadd.f32 0.0, %v299
  %v301 = vpop.f32.mrb[0].mxu0
  %302 = vdwg.mxu0
  %v303 = vld [vmem:[%s2] sm:$0x1]
  %v305 = vlaneseq
  %v306 = vshrl.u32 %v305, 7
  %v307 = vsub.s32 0, %v306
  %v308 = vrot.slane %v303, %v307
  %v310 = vmul.f32 %v241, %v308
  %v311 = vmul.f32 %v244, %v308
  %v312 = vmul.f32 %v249, %v308
  %v313 = vmul.f32 %v252, %v308
  %v314 = vmul.f32 %v257, %v308
  %v315 = vmul.f32 %v260, %v308
  %v316 = vmul.f32 %v265, %v308
  %v317 = vmul.f32 %v268, %v308
  %v318 = vmul.f32 %v273, %v308
  %v319 = vmul.f32 %v276, %v308
  %v320 = vmul.f32 %v281, %v308
  %v321 = vmul.f32 %v284, %v308
  %v322 = vmul.f32 %v289, %v308
  %v323 = vmul.f32 %v292, %v308
  %v324 = vmul.f32 %v297, %v308
  %v325 = vmul.f32 %v300, %v308
  %v326 = vld [vmem:[%s3] sm:$0x1]
  %v328 = vlaneseq
  %v329 = vshrl.u32 %v328, 7
  %v330 = vsub.s32 0, %v329
  %v331 = vrot.slane %v326, %v330
  %v333 = vadd.f32 %v310, %v331
  %v334 = vadd.f32 %v311, %v331
  %v335 = vadd.f32 %v312, %v331
  %v336 = vadd.f32 %v313, %v331
  %v337 = vadd.f32 %v314, %v331
  %v338 = vadd.f32 %v315, %v331
  %v339 = vadd.f32 %v316, %v331
  %v340 = vadd.f32 %v317, %v331
  %v341 = vadd.f32 %v318, %v331
  %v342 = vadd.f32 %v319, %v331
  %v343 = vadd.f32 %v320, %v331
  %v344 = vadd.f32 %v321, %v331
  %v345 = vadd.f32 %v322, %v331
  %v346 = vadd.f32 %v323, %v331
  %v347 = vadd.f32 %v324, %v331
  %v348 = vadd.f32 %v325, %v331
  %v349 = vld [vmem:[%s4] sm:$0xf]
  %v350 = vld [vmem:[%s4 + $0x4] sm:$0xf]
  %v351 = vld [vmem:[%s4 + $0x8] sm:$0xf]
  %v352 = vld [vmem:[%s4 + $0xc] sm:$0xf]
  %v353 = vld [vmem:[%s4 + $0x10] sm:$0xf]
  %v354 = vld [vmem:[%s4 + $0x14] sm:$0xf]
  %v355 = vld [vmem:[%s4 + $0x18] sm:$0xf]
  %v356 = vld [vmem:[%s4 + $0x1c] sm:$0xf]
  %v357 = vld [vmem:[%s4 + $0x20] sm:$0xf]
  %v358 = vld [vmem:[%s4 + $0x24] sm:$0xf]
  %v359 = vld [vmem:[%s4 + $0x28] sm:$0xf]
  %v360 = vld [vmem:[%s4 + $0x2c] sm:$0xf]
  %v361 = vld [vmem:[%s4 + $0x30] sm:$0xf]
  %v362 = vld [vmem:[%s4 + $0x34] sm:$0xf]
  %v363 = vld [vmem:[%s4 + $0x38] sm:$0xf]
  %v364 = vld [vmem:[%s4 + $0x3c] sm:$0xf]
  %v365 = vunpack.c.l.bf16 %v349
  %v366 = vunpack.c.l.bf16 %v350
  %v367 = vunpack.c.l.bf16 %v351
  %v368 = vunpack.c.l.bf16 %v352
  %v369 = vunpack.c.l.bf16 %v353
  %v370 = vunpack.c.l.bf16 %v354
  %v371 = vunpack.c.l.bf16 %v355
  %v372 = vunpack.c.l.bf16 %v356
  %v373 = vunpack.c.l.bf16 %v357
  %v374 = vunpack.c.l.bf16 %v358
  %v375 = vunpack.c.l.bf16 %v359
  %v376 = vunpack.c.l.bf16 %v360
  %v377 = vunpack.c.l.bf16 %v361
  %v378 = vunpack.c.l.bf16 %v362
  %v379 = vunpack.c.l.bf16 %v363
  %v380 = vunpack.c.l.bf16 %v364
  %v381 = vadd.f32 %v333, %v365
  %v382 = vadd.f32 %v334, %v366
  %v383 = vadd.f32 %v335, %v367
  %v384 = vadd.f32 %v336, %v368
  %v385 = vadd.f32 %v337, %v369
  %v386 = vadd.f32 %v338, %v370
  %v387 = vadd.f32 %v339, %v371
  %v388 = vadd.f32 %v340, %v372
  %v389 = vadd.f32 %v341, %v373
  %v390 = vadd.f32 %v342, %v374
  %v391 = vadd.f32 %v343, %v375
  %v392 = vadd.f32 %v344, %v376
  %v393 = vadd.f32 %v345, %v377
  %v394 = vadd.f32 %v346, %v378
  %v395 = vadd.f32 %v347, %v379
  %v396 = vadd.f32 %v348, %v380
  %v397 = vmax.f32 %v381, 0.0
  %v398 = vmax.f32 %v382, 0.0
  %v399 = vmax.f32 %v383, 0.0
  %v400 = vmax.f32 %v384, 0.0
  %v401 = vmax.f32 %v385, 0.0
  %v402 = vmax.f32 %v386, 0.0
  %v403 = vmax.f32 %v387, 0.0
  %v404 = vmax.f32 %v388, 0.0
  %v405 = vmax.f32 %v389, 0.0
  %v406 = vmax.f32 %v390, 0.0
  %v407 = vmax.f32 %v391, 0.0
  %v408 = vmax.f32 %v392, 0.0
  %v409 = vmax.f32 %v393, 0.0
  %v410 = vmax.f32 %v394, 0.0
  %v411 = vmax.f32 %v395, 0.0
  %v412 = vmax.f32 %v396, 0.0
  %v413 = vpack.c.bf16 %v398, %v397
  %v414 = vpack.c.bf16 %v400, %v399
  %v415 = vpack.c.bf16 %v402, %v401
  %v416 = vpack.c.bf16 %v404, %v403
  %v417 = vpack.c.bf16 %v406, %v405
  %v418 = vpack.c.bf16 %v408, %v407
  %v419 = vpack.c.bf16 %v410, %v409
  %v420 = vpack.c.bf16 %v412, %v411
  %v429 = vunpack.c.l.b16 %v413
  %v430 = vunpack.c.h.b16 %v413
  %v431 = vunpack.c.l.b16 %v414
  %v432 = vunpack.c.h.b16 %v414
  %v433 = vunpack.c.l.b16 %v415
  %v434 = vunpack.c.h.b16 %v415
  %v435 = vunpack.c.l.b16 %v416
  %v436 = vunpack.c.h.b16 %v416
  %v437 = vunpack.c.l.b16 %v417
  %v438 = vunpack.c.h.b16 %v417
  %v439 = vunpack.c.l.b16 %v418
  %v440 = vunpack.c.h.b16 %v418
  %v441 = vunpack.c.l.b16 %v419
  %v442 = vunpack.c.h.b16 %v419
  %v443 = vunpack.c.l.b16 %v420
  %v444 = vunpack.c.h.b16 %v420
  %v445 = vpack.c.b16 %v429, %v429
  %v446 = vpack.c.b16 %v430, %v430
  %v447 = vpack.c.b16 %v431, %v431
  %v448 = vpack.c.b16 %v432, %v432
  %v449 = vpack.c.b16 %v433, %v433
  %v450 = vpack.c.b16 %v434, %v434
  %v451 = vpack.c.b16 %v435, %v435
  %v452 = vpack.c.b16 %v436, %v436
  %v453 = vpack.c.b16 %v437, %v437
  %v454 = vpack.c.b16 %v438, %v438
  %v455 = vpack.c.b16 %v439, %v439
  %v456 = vpack.c.b16 %v440, %v440
  %v457 = vpack.c.b16 %v441, %v441
  %v458 = vpack.c.b16 %v442, %v442
  %v459 = vpack.c.b16 %v443, %v443
  %v460 = vpack.c.b16 %v444, %v444
  %vm477 = vcmask 125952
  %478 = vst.msk [vmem:[%s5] sm:$0xf] %vm477, %v445
  %479 = vst.msk [vmem:[%s5 + $0x4] sm:$0xf] %vm477, %v446
  %480 = vst.msk [vmem:[%s5 + $0x8] sm:$0xf] %vm477, %v447
  %481 = vst.msk [vmem:[%s5 + $0xc] sm:$0xf] %vm477, %v448
  %482 = vst.msk [vmem:[%s5 + $0x10] sm:$0xf] %vm477, %v449
  %483 = vst.msk [vmem:[%s5 + $0x14] sm:$0xf] %vm477, %v450
  %484 = vst.msk [vmem:[%s5 + $0x18] sm:$0xf] %vm477, %v451
  %485 = vst.msk [vmem:[%s5 + $0x1c] sm:$0xf] %vm477, %v452
  %486 = vst.msk [vmem:[%s5 + $0x20] sm:$0xf] %vm477, %v453
  %487 = vst.msk [vmem:[%s5 + $0x24] sm:$0xf] %vm477, %v454
  %488 = vst.msk [vmem:[%s5 + $0x28] sm:$0xf] %vm477, %v455
  %489 = vst.msk [vmem:[%s5 + $0x2c] sm:$0xf] %vm477, %v456
  %490 = vst.msk [vmem:[%s5 + $0x30] sm:$0xf] %vm477, %v457
  %491 = vst.msk [vmem:[%s5 + $0x34] sm:$0xf] %vm477, %v458
  %492 = vst.msk [vmem:[%s5 + $0x38] sm:$0xf] %vm477, %v459
  %493 = vst.msk [vmem:[%s5 + $0x3c] sm:$0xf] %vm477, %v460
  // Predicated region
  $region22: #{_lambda_.40} parent=0 // pred_check
    _
  $region23: #{_lambda_.40} parent=0 // pred_check_branch
    %495 = sbr.rel (0) target = $region25
  $region24: #{_lambda_.40} parent=0 // pred_region
    _
  $region25: #{_lambda_.40} parent=0 // pred_fallthru
    _
  // Predicated region
  $region26: #{_lambda_.40} parent=0 // pred_check
    _
  $region27: #{_lambda_.40} parent=0 // pred_check_branch
    %497 = sbr.rel (0) target = $region29
  $region28: #{_lambda_.40} parent=0 // pred_region
    _
  $region29: #{_lambda_.40} parent=0 // pred_fallthru
    _

// kernel: _lambda_.42
$region0: #{_lambda_.42}
  #allocation0 [shape = 'u32[]', space=smem, size = 0x4, offset = 0x4, fixed_abs, tag = 'smem constant byte address 0x4 - core index']
  #allocation1 [shape = 'u32[144,128]{1,0:T(1,128)}', space=vmem, size = 0x12000, scoped, tag = 'internal scratch']
  %s0 = inlined_call_operand.vmem [shape: bf16[128,72], index: 0, kind: input, shape index: {}]
  %s1 = inlined_call_operand.vmem [shape: bf16[72,16], index: 1, kind: input, shape index: {}]
  %s2 = inlined_call_operand.vmem [shape: f32[1,16], index: 2, kind: input, shape index: {}]
  %s3 = inlined_call_operand.vmem [shape: f32[1,16], index: 3, kind: input, shape index: {}]
  %s4 = inlined_call_operand.vmem [shape: bf16[128,16], index: 4, kind: output, shape index: {}]
  %s5 = sld [smem:[#allocation0]]
  $region26: #{_lambda_.42} parent=0
    _
  %s7 = ssub.s32 1, %s5
  %s8 = scalar_select 0, %s7, %s5
  // Predicated region
  $region2: #{_lambda_.42} parent=0 // pred_check
    _
  $region3: #{_lambda_.42} parent=0 // pred_check_branch
    %10 = sbr.rel (0) target = $region5
  $region4: #{_lambda_.42} parent=0 // pred_region
    _
  $region5: #{_lambda_.42} parent=0 // pred_fallthru
    _
  // Predicated region
  $region6: #{_lambda_.42} parent=0 // pred_check
    _
  $region7: #{_lambda_.42} parent=0 // pred_check_branch
    %12 = sbr.rel (0) target = $region9
  $region8: #{_lambda_.42} parent=0 // pred_region
    _
  $region9: #{_lambda_.42} parent=0 // pred_fallthru
    _
  // Predicated region
  $region10: #{_lambda_.42} parent=0 // pred_check
    _
  $region11: #{_lambda_.42} parent=0 // pred_check_branch
    %14 = sbr.rel (0) target = $region13
  $region12: #{_lambda_.42} parent=0 // pred_region
    _
  $region13: #{_lambda_.42} parent=0 // pred_fallthru
    _
  // Predicated region
  $region14: #{_lambda_.42} parent=0 // pred_check
    _
  $region15: #{_lambda_.42} parent=0 // pred_check_branch
    %16 = sbr.rel (0) target = $region17
  $region16: #{_lambda_.42} parent=0 // pred_region
    _
  $region17: #{_lambda_.42} parent=0 // pred_fallthru
    _
  %v18 = vld [vmem:[%s0] sm:$0xf]
  %v19 = vld [vmem:[%s0 + $0x4] sm:$0xf]
  %v20 = vld [vmem:[%s0 + $0x8] sm:$0xf]
  %v21 = vld [vmem:[%s0 + $0xc] sm:$0xf]
  %v22 = vld [vmem:[%s0 + $0x10] sm:$0xf]
  %v23 = vld [vmem:[%s0 + $0x14] sm:$0xf]
  %v24 = vld [vmem:[%s0 + $0x18] sm:$0xf]
  %v25 = vld [vmem:[%s0 + $0x1c] sm:$0xf]
  %v26 = vld [vmem:[%s0 + $0x20] sm:$0xf]
  %v27 = vld [vmem:[%s0 + $0x24] sm:$0xf]
  %v28 = vld [vmem:[%s0 + $0x28] sm:$0xf]
  %v29 = vld [vmem:[%s0 + $0x2c] sm:$0xf]
  %v30 = vld [vmem:[%s0 + $0x30] sm:$0xf]
  %v31 = vld [vmem:[%s0 + $0x34] sm:$0xf]
  %v32 = vld [vmem:[%s0 + $0x38] sm:$0xf]
  %v33 = vld [vmem:[%s0 + $0x3c] sm:$0xf]
  %v34 = vld [vmem:[%s1] sm:$0xf]
  %v35 = vld [vmem:[%s1 + $0x4] sm:$0xf]
  %v36 = vld [vmem:[%s1 + $0x8] sm:$0xf]
  %v37 = vld [vmem:[%s1 + $0xc] sm:$0xf]
  %v38 = vld [vmem:[%s1 + $0x10] sm:$0xf]
  %v39 = vld [vmem:[%s1 + $0x14] sm:$0xf]
  %v40 = vld [vmem:[%s1 + $0x18] sm:$0xf]
  %v41 = vld [vmem:[%s1 + $0x1c] sm:$0xf]
  %v42 = vld [vmem:[%s1 + $0x20] sm:$0xf]
  %v59 = vunpack.c.l.b16 %v18
  %v60 = vunpack.c.l.b16 %v19
  %v61 = vunpack.c.l.b16 %v20
  %v62 = vunpack.c.l.b16 %v21
  %v63 = vunpack.c.l.b16 %v22
  %v64 = vunpack.c.l.b16 %v23
  %v65 = vunpack.c.l.b16 %v24
  %v66 = vunpack.c.l.b16 %v25
  %v67 = vunpack.c.l.b16 %v26
  %v68 = vunpack.c.l.b16 %v27
  %v69 = vunpack.c.l.b16 %v28
  %v70 = vunpack.c.l.b16 %v29
  %v71 = vunpack.c.l.b16 %v30
  %v72 = vunpack.c.l.b16 %v31
  %v73 = vunpack.c.l.b16 %v32
  %v74 = vunpack.c.l.b16 %v33
  %v75 = vpack.c.b16 %v60, %v59
  %v76 = vpack.c.b16 %v62, %v61
  %v77 = vpack.c.b16 %v64, %v63
  %v78 = vpack.c.b16 %v66, %v65
  %v79 = vpack.c.b16 %v68, %v67
  %v80 = vpack.c.b16 %v70, %v69
  %v81 = vpack.c.b16 %v72, %v71
  %v82 = vpack.c.b16 %v74, %v73
  %v92 = vunpack.c.l.b16 %v34
  %v93 = vunpack.c.l.b16 %v35
  %v94 = vunpack.c.l.b16 %v36
  %v95 = vunpack.c.l.b16 %v37
  %v96 = vunpack.c.l.b16 %v38
  %v97 = vunpack.c.l.b16 %v39
  %v98 = vunpack.c.l.b16 %v40
  %v99 = vunpack.c.l.b16 %v41
  %v100 = vunpack.c.l.b16 %v42
  %v101 = vpack.c.b16 %v93, %v92
  %v102 = vpack.c.b16 %v95, %v94
  %v103 = vpack.c.b16 %v97, %v96
  %v104 = vpack.c.b16 %v99, %v98
  %v105 = vpack.c.b16 %v100, %v100
  %vm110 = vcmask 588800
  %v112 = vsel %vm110, %v75, 0
  %v115 = vsel %vm110, %v76, 0
  %v118 = vsel %vm110, %v77, 0
  %v121 = vsel %vm110, %v78, 0
  %v124 = vsel %vm110, %v79, 0
  %v127 = vsel %vm110, %v80, 0
  %v130 = vsel %vm110, %v81, 0
  %v133 = vsel %vm110, %v82, 0
  %vm135 = vcmask 1043456
  %v137 = vsel %vm135, %v105, 0
  %139 = vmatprep.subr.bf16.mxu0 0
  %140 = vmatpush1.bf16.msra.mxu0 %v101
  %141 = vmatprep.subr.bf16.mxu0 0
  %142 = vmatpush1.bf16.msra.mxu0 %v102
  %143 = vmatprep.subr.bf16.mxu0 0
  %144 = vmatpush1.bf16.msra.mxu0 %v103
  %145 = vmatprep.subr.bf16.mxu0 0
  %146 = vmatpush1.bf16.msra.mxu0 %v104
  %147 = vmatprep.subr.bf16.mxu0 0
  %148 = vmatpush1.bf16.msra.mxu0 %v137
  %149 = vmatprep.subr.bf16.mxu0 0
  %150 = vmatpush1.bf16.msra.mxu0 0
  %151 = vmatprep.subr.bf16.mxu0 0
  %152 = vmatpush1.bf16.msra.mxu0 0
  %153 = vmatprep.subr.bf16.mxu0 0
  %154 = vmatpush1.bf16.msra.mxu0 0
  %155 = vmatprep.subr.bf16.mxu0 0
  %156 = vmatpush1.bf16.msra.mxu0 0
  %157 = vmatprep.subr.bf16.mxu0 0
  %158 = vmatpush1.bf16.msra.mxu0 0
  %159 = vmatprep.subr.bf16.mxu0 0
  %160 = vmatpush1.bf16.msra.mxu0 0
  %161 = vmatprep.subr.bf16.mxu0 0
  %162 = vmatpush1.bf16.msra.mxu0 0
  %163 = vmatprep.subr.bf16.mxu0 0
  %164 = vmatpush1.bf16.msra.mxu0 0
  %165 = vmatprep.subr.bf16.mxu0 0
  %166 = vmatpush1.bf16.msra.mxu0 0
  %167 = vmatprep.subr.bf16.mxu0 0
  %168 = vmatpush1.bf16.msra.mxu0 0
  %169 = vmatprep.subr.bf16.mxu0 0
  %170 = vmatpush1.bf16.msra.mxu0 0
  %171 = vmatprep.mubr.bf16.mxu0 0
  %172 = vmatmul.mubr.bf16.gmra.mrb[0].mxu0 %v112
  %v173 = vpop.f32.mrb[0].mxu0
  %v174 = vadd.f32 0.0, %v173
  %v175 = vpop.f32.mrb[0].mxu0
  %v176 = vpop.f32.mrb[0].mxu0
  %v177 = vadd.f32 0.0, %v176
  %v178 = vpop.f32.mrb[0].mxu0
  %179 = vmatprep.mubr.bf16.mxu0 0
  %180 = vmatmul.mubr.bf16.gmra.mrb[0].mxu0 %v115
  %v181 = vpop.f32.mrb[0].mxu0
  %v182 = vadd.f32 0.0, %v181
  %v183 = vpop.f32.mrb[0].mxu0
  %v184 = vpop.f32.mrb[0].mxu0
  %v185 = vadd.f32 0.0, %v184
  %v186 = vpop.f32.mrb[0].mxu0
  %187 = vmatprep.mubr.bf16.mxu0 0
  %188 = vmatmul.mubr.bf16.gmra.mrb[0].mxu0 %v118
  %v189 = vpop.f32.mrb[0].mxu0
  %v190 = vadd.f32 0.0, %v189
  %v191 = vpop.f32.mrb[0].mxu0
  %v192 = vpop.f32.mrb[0].mxu0
  %v193 = vadd.f32 0.0, %v192
  %v194 = vpop.f32.mrb[0].mxu0
  %195 = vmatprep.mubr.bf16.mxu0 0
  %196 = vmatmul.mubr.bf16.gmra.mrb[0].mxu0 %v121
  %v197 = vpop.f32.mrb[0].mxu0
  %v198 = vadd.f32 0.0, %v197
  %v199 = vpop.f32.mrb[0].mxu0
  %v200 = vpop.f32.mrb[0].mxu0
  %v201 = vadd.f32 0.0, %v200
  %v202 = vpop.f32.mrb[0].mxu0
  %203 = vmatprep.mubr.bf16.mxu0 0
  %204 = vmatmul.mubr.bf16.gmra.mrb[0].mxu0 %v124
  %v205 = vpop.f32.mrb[0].mxu0
  %v206 = vadd.f32 0.0, %v205
  %v207 = vpop.f32.mrb[0].mxu0
  %v208 = vpop.f32.mrb[0].mxu0
  %v209 = vadd.f32 0.0, %v208
  %v210 = vpop.f32.mrb[0].mxu0
  %211 = vmatprep.mubr.bf16.mxu0 0
  %212 = vmatmul.mubr.bf16.gmra.mrb[0].mxu0 %v127
  %v213 = vpop.f32.mrb[0].mxu0
  %v214 = vadd.f32 0.0, %v213
  %v215 = vpop.f32.mrb[0].mxu0
  %v216 = vpop.f32.mrb[0].mxu0
  %v217 = vadd.f32 0.0, %v216
  %v218 = vpop.f32.mrb[0].mxu0
  %219 = vmatprep.mubr.bf16.mxu0 0
  %220 = vmatmul.mubr.bf16.gmra.mrb[0].mxu0 %v130
  %v221 = vpop.f32.mrb[0].mxu0
  %v222 = vadd.f32 0.0, %v221
  %v223 = vpop.f32.mrb[0].mxu0
  %v224 = vpop.f32.mrb[0].mxu0
  %v225 = vadd.f32 0.0, %v224
  %v226 = vpop.f32.mrb[0].mxu0
  %227 = vmatprep.mubr.bf16.mxu0 0
  %228 = vmatmul.mubr.bf16.gmra.mrb[0].mxu0 %v133
  %v229 = vpop.f32.mrb[0].mxu0
  %v230 = vadd.f32 0.0, %v229
  %v231 = vpop.f32.mrb[0].mxu0
  %v232 = vpop.f32.mrb[0].mxu0
  %v233 = vadd.f32 0.0, %v232
  %v234 = vpop.f32.mrb[0].mxu0
  %235 = vdwg.mxu0
  %v236 = vld [vmem:[%s2] sm:$0x1]
  %v238 = vlaneseq
  %v239 = vshrl.u32 %v238, 7
  %v240 = vsub.s32 0, %v239
  %v241 = vrot.slane %v236, %v240
  %v243 = vmul.f32 %v174, %v241
  %v244 = vmul.f32 %v177, %v241
  %v245 = vmul.f32 %v182, %v241
  %v246 = vmul.f32 %v185, %v241
  %v247 = vmul.f32 %v190, %v241
  %v248 = vmul.f32 %v193, %v241
  %v249 = vmul.f32 %v198, %v241
  %v250 = vmul.f32 %v201, %v241
  %v251 = vmul.f32 %v206, %v241
  %v252 = vmul.f32 %v209, %v241
  %v253 = vmul.f32 %v214, %v241
  %v254 = vmul.f32 %v217, %v241
  %v255 = vmul.f32 %v222, %v241
  %v256 = vmul.f32 %v225, %v241
  %v257 = vmul.f32 %v230, %v241
  %v258 = vmul.f32 %v233, %v241
  %v259 = vld [vmem:[%s3] sm:$0x1]
  %v261 = vlaneseq
  %v262 = vshrl.u32 %v261, 7
  %v263 = vsub.s32 0, %v262
  %v264 = vrot.slane %v259, %v263
  %v266 = vadd.f32 %v243, %v264
  %v267 = vadd.f32 %v244, %v264
  %v268 = vadd.f32 %v245, %v264
  %v269 = vadd.f32 %v246, %v264
  %v270 = vadd.f32 %v247, %v264
  %v271 = vadd.f32 %v248, %v264
  %v272 = vadd.f32 %v249, %v264
  %v273 = vadd.f32 %v250, %v264
  %v274 = vadd.f32 %v251, %v264
  %v275 = vadd.f32 %v252, %v264
  %v276 = vadd.f32 %v253, %v264
  %v277 = vadd.f32 %v254, %v264
  %v278 = vadd.f32 %v255, %v264
  %v279 = vadd.f32 %v256, %v264
  %v280 = vadd.f32 %v257, %v264
  %v281 = vadd.f32 %v258, %v264
  %v282 = vpack.c.bf16 %v267, %v266
  %v283 = vpack.c.bf16 %v269, %v268
  %v284 = vpack.c.bf16 %v271, %v270
  %v285 = vpack.c.bf16 %v273, %v272
  %v286 = vpack.c.bf16 %v275, %v274
  %v287 = vpack.c.bf16 %v277, %v276
  %v288 = vpack.c.bf16 %v279, %v278
  %v289 = vpack.c.bf16 %v281, %v280
  %v298 = vunpack.c.l.b16 %v282
  %v299 = vunpack.c.h.b16 %v282
  %v300 = vunpack.c.l.b16 %v283
  %v301 = vunpack.c.h.b16 %v283
  %v302 = vunpack.c.l.b16 %v284
  %v303 = vunpack.c.h.b16 %v284
  %v304 = vunpack.c.l.b16 %v285
  %v305 = vunpack.c.h.b16 %v285
  %v306 = vunpack.c.l.b16 %v286
  %v307 = vunpack.c.h.b16 %v286
  %v308 = vunpack.c.l.b16 %v287
  %v309 = vunpack.c.h.b16 %v287
  %v310 = vunpack.c.l.b16 %v288
  %v311 = vunpack.c.h.b16 %v288
  %v312 = vunpack.c.l.b16 %v289
  %v313 = vunpack.c.h.b16 %v289
  %v314 = vpack.c.b16 %v298, %v298
  %v315 = vpack.c.b16 %v299, %v299
  %v316 = vpack.c.b16 %v300, %v300
  %v317 = vpack.c.b16 %v301, %v301
  %v318 = vpack.c.b16 %v302, %v302
  %v319 = vpack.c.b16 %v303, %v303
  %v320 = vpack.c.b16 %v304, %v304
  %v321 = vpack.c.b16 %v305, %v305
  %v322 = vpack.c.b16 %v306, %v306
  %v323 = vpack.c.b16 %v307, %v307
  %v324 = vpack.c.b16 %v308, %v308
  %v325 = vpack.c.b16 %v309, %v309
  %v326 = vpack.c.b16 %v310, %v310
  %v327 = vpack.c.b16 %v311, %v311
  %v328 = vpack.c.b16 %v312, %v312
  %v329 = vpack.c.b16 %v313, %v313
  %vm346 = vcmask 125952
  %347 = vst.msk [vmem:[%s4] sm:$0xf] %vm346, %v314
  %348 = vst.msk [vmem:[%s4 + $0x4] sm:$0xf] %vm346, %v315
  %349 = vst.msk [vmem:[%s4 + $0x8] sm:$0xf] %vm346, %v316
  %350 = vst.msk [vmem:[%s4 + $0xc] sm:$0xf] %vm346, %v317
  %351 = vst.msk [vmem:[%s4 + $0x10] sm:$0xf] %vm346, %v318
  %352 = vst.msk [vmem:[%s4 + $0x14] sm:$0xf] %vm346, %v319
  %353 = vst.msk [vmem:[%s4 + $0x18] sm:$0xf] %vm346, %v320
  %354 = vst.msk [vmem:[%s4 + $0x1c] sm:$0xf] %vm346, %v321
  %355 = vst.msk [vmem:[%s4 + $0x20] sm:$0xf] %vm346, %v322
  %356 = vst.msk [vmem:[%s4 + $0x24] sm:$0xf] %vm346, %v323
  %357 = vst.msk [vmem:[%s4 + $0x28] sm:$0xf] %vm346, %v324
  %358 = vst.msk [vmem:[%s4 + $0x2c] sm:$0xf] %vm346, %v325
  %359 = vst.msk [vmem:[%s4 + $0x30] sm:$0xf] %vm346, %v326
  %360 = vst.msk [vmem:[%s4 + $0x34] sm:$0xf] %vm346, %v327
  %361 = vst.msk [vmem:[%s4 + $0x38] sm:$0xf] %vm346, %v328
  %362 = vst.msk [vmem:[%s4 + $0x3c] sm:$0xf] %vm346, %v329
  // Predicated region
  $region18: #{_lambda_.42} parent=0 // pred_check
    _
  $region19: #{_lambda_.42} parent=0 // pred_check_branch
    %364 = sbr.rel (0) target = $region21
  $region20: #{_lambda_.42} parent=0 // pred_region
    _
  $region21: #{_lambda_.42} parent=0 // pred_fallthru
    _
  // Predicated region
  $region22: #{_lambda_.42} parent=0 // pred_check
    _
  $region23: #{_lambda_.42} parent=0 // pred_check_branch
    %366 = sbr.rel (0) target = $region25
  $region24: #{_lambda_.42} parent=0 // pred_region
    _
  $region25: #{_lambda_.42} parent=0 // pred_fallthru
    _

// kernel: _lambda_.57
$region0: #{_lambda_.57}
  #allocation0 [shape = 'u32[]', space=smem, size = 0x4, offset = 0x4, fixed_abs, tag = 'smem constant byte address 0x4 - core index']
  #allocation1 [shape = 'u32[144,128]{1,0:T(1,128)}', space=vmem, size = 0x12000, scoped, tag = 'internal scratch']
  %s0 = inlined_call_operand.vmem [shape: bf16[128,72], index: 0, kind: input, shape index: {}]
  %s1 = inlined_call_operand.vmem [shape: bf16[72,8], index: 1, kind: input, shape index: {}]
  %s2 = inlined_call_operand.vmem [shape: f32[1,8], index: 2, kind: input, shape index: {}]
  %s3 = inlined_call_operand.vmem [shape: f32[1,8], index: 3, kind: input, shape index: {}]
  %s4 = inlined_call_operand.vmem [shape: bf16[128,8], index: 4, kind: output, shape index: {}]
  %s5 = sld [smem:[#allocation0]]
  $region26: #{_lambda_.57} parent=0
    _
  %s7 = ssub.s32 1, %s5
  %s8 = scalar_select 0, %s7, %s5
  // Predicated region
  $region2: #{_lambda_.57} parent=0 // pred_check
    _
  $region3: #{_lambda_.57} parent=0 // pred_check_branch
    %10 = sbr.rel (0) target = $region5
  $region4: #{_lambda_.57} parent=0 // pred_region
    _
  $region5: #{_lambda_.57} parent=0 // pred_fallthru
    _
  // Predicated region
  $region6: #{_lambda_.57} parent=0 // pred_check
    _
  $region7: #{_lambda_.57} parent=0 // pred_check_branch
    %12 = sbr.rel (0) target = $region9
  $region8: #{_lambda_.57} parent=0 // pred_region
    _
  $region9: #{_lambda_.57} parent=0 // pred_fallthru
    _
  // Predicated region
  $region10: #{_lambda_.57} parent=0 // pred_check
    _
  $region11: #{_lambda_.57} parent=0 // pred_check_branch
    %14 = sbr.rel (0) target = $region13
  $region12: #{_lambda_.57} parent=0 // pred_region
    _
  $region13: #{_lambda_.57} parent=0 // pred_fallthru
    _
  // Predicated region
  $region14: #{_lambda_.57} parent=0 // pred_check
    _
  $region15: #{_lambda_.57} parent=0 // pred_check_branch
    %16 = sbr.rel (0) target = $region17
  $region16: #{_lambda_.57} parent=0 // pred_region
    _
  $region17: #{_lambda_.57} parent=0 // pred_fallthru
    _
  %v18 = vld [vmem:[%s0] sm:$0xf]
  %v19 = vld [vmem:[%s0 + $0x4] sm:$0xf]
  %v20 = vld [vmem:[%s0 + $0x8] sm:$0xf]
  %v21 = vld [vmem:[%s0 + $0xc] sm:$0xf]
  %v22 = vld [vmem:[%s0 + $0x10] sm:$0xf]
  %v23 = vld [vmem:[%s0 + $0x14] sm:$0xf]
  %v24 = vld [vmem:[%s0 + $0x18] sm:$0xf]
  %v25 = vld [vmem:[%s0 + $0x1c] sm:$0xf]
  %v26 = vld [vmem:[%s0 + $0x20] sm:$0xf]
  %v27 = vld [vmem:[%s0 + $0x24] sm:$0xf]
  %v28 = vld [vmem:[%s0 + $0x28] sm:$0xf]
  %v29 = vld [vmem:[%s0 + $0x2c] sm:$0xf]
  %v30 = vld [vmem:[%s0 + $0x30] sm:$0xf]
  %v31 = vld [vmem:[%s0 + $0x34] sm:$0xf]
  %v32 = vld [vmem:[%s0 + $0x38] sm:$0xf]
  %v33 = vld [vmem:[%s0 + $0x3c] sm:$0xf]
  %v34 = vld [vmem:[%s1] sm:$0xf]
  %v35 = vld [vmem:[%s1 + $0x4] sm:$0xf]
  %v36 = vld [vmem:[%s1 + $0x8] sm:$0xf]
  %v37 = vld [vmem:[%s1 + $0xc] sm:$0xf]
  %v38 = vld [vmem:[%s1 + $0x10] sm:$0xf]
  %v39 = vld [vmem:[%s1 + $0x14] sm:$0xf]
  %v40 = vld [vmem:[%s1 + $0x18] sm:$0xf]
  %v41 = vld [vmem:[%s1 + $0x1c] sm:$0xf]
  %v42 = vld [vmem:[%s1 + $0x20] sm:$0xf]
  %v59 = vunpack.c.l.b16 %v18
  %v60 = vunpack.c.l.b16 %v19
  %v61 = vunpack.c.l.b16 %v20
  %v62 = vunpack.c.l.b16 %v21
  %v63 = vunpack.c.l.b16 %v22
  %v64 = vunpack.c.l.b16 %v23
  %v65 = vunpack.c.l.b16 %v24
  %v66 = vunpack.c.l.b16 %v25
  %v67 = vunpack.c.l.b16 %v26
  %v68 = vunpack.c.l.b16 %v27
  %v69 = vunpack.c.l.b16 %v28
  %v70 = vunpack.c.l.b16 %v29
  %v71 = vunpack.c.l.b16 %v30
  %v72 = vunpack.c.l.b16 %v31
  %v73 = vunpack.c.l.b16 %v32
  %v74 = vunpack.c.l.b16 %v33
  %v75 = vpack.c.b16 %v60, %v59
  %v76 = vpack.c.b16 %v62, %v61
  %v77 = vpack.c.b16 %v64, %v63
  %v78 = vpack.c.b16 %v66, %v65
  %v79 = vpack.c.b16 %v68, %v67
  %v80 = vpack.c.b16 %v70, %v69
  %v81 = vpack.c.b16 %v72, %v71
  %v82 = vpack.c.b16 %v74, %v73
  %v92 = vunpack.c.l.b16 %v34
  %v93 = vunpack.c.l.b16 %v35
  %v94 = vunpack.c.l.b16 %v36
  %v95 = vunpack.c.l.b16 %v37
  %v96 = vunpack.c.l.b16 %v38
  %v97 = vunpack.c.l.b16 %v39
  %v98 = vunpack.c.l.b16 %v40
  %v99 = vunpack.c.l.b16 %v41
  %v100 = vunpack.c.l.b16 %v42
  %v101 = vpack.c.b16 %v93, %v92
  %v102 = vpack.c.b16 %v95, %v94
  %v103 = vpack.c.b16 %v97, %v96
  %v104 = vpack.c.b16 %v99, %v98
  %v105 = vpack.c.b16 %v100, %v100
  %vm110 = vcmask 588800
  %v112 = vsel %vm110, %v75, 0
  %v115 = vsel %vm110, %v76, 0
  %v118 = vsel %vm110, %v77, 0
  %v121 = vsel %vm110, %v78, 0
  %v124 = vsel %vm110, %v79, 0
  %v127 = vsel %vm110, %v80, 0
  %v130 = vsel %vm110, %v81, 0
  %v133 = vsel %vm110, %v82, 0
  %vm135 = vcmask 1043456
  %v137 = vsel %vm135, %v105, 0
  %139 = vmatprep.subr.bf16.mxu0 0
  %140 = vmatpush1.bf16.msra.mxu0 %v101
  %141 = vmatprep.subr.bf16.mxu0 0
  %142 = vmatpush1.bf16.msra.mxu0 %v102
  %143 = vmatprep.subr.bf16.mxu0 0
  %144 = vmatpush1.bf16.msra.mxu0 %v103
  %145 = vmatprep.subr.bf16.mxu0 0
  %146 = vmatpush1.bf16.msra.mxu0 %v104
  %147 = vmatprep.subr.bf16.mxu0 0
  %148 = vmatpush1.bf16.msra.mxu0 %v137
  %149 = vmatprep.subr.bf16.mxu0 0
  %150 = vmatpush1.bf16.msra.mxu0 0
  %151 = vmatprep.subr.bf16.mxu0 0
  %152 = vmatpush1.bf16.msra.mxu0 0
  %153 = vmatprep.subr.bf16.mxu0 0
  %154 = vmatpush1.bf16.msra.mxu0 0
  %155 = vmatprep.subr.bf16.mxu0 0
  %156 = vmatpush1.bf16.msra.mxu0 0
  %157 = vmatprep.subr.bf16.mxu0 0
  %158 = vmatpush1.bf16.msra.mxu0 0
  %159 = vmatprep.subr.bf16.mxu0 0
  %160 = vmatpush1.bf16.msra.mxu0 0
  %161 = vmatprep.subr.bf16.mxu0 0
  %162 = vmatpush1.bf16.msra.mxu0 0
  %163 = vmatprep.subr.bf16.mxu0 0
  %164 = vmatpush1.bf16.msra.mxu0 0
  %165 = vmatprep.subr.bf16.mxu0 0
  %166 = vmatpush1.bf16.msra.mxu0 0
  %167 = vmatprep.subr.bf16.mxu0 0
  %168 = vmatpush1.bf16.msra.mxu0 0
  %169 = vmatprep.subr.bf16.mxu0 0
  %170 = vmatpush1.bf16.msra.mxu0 0
  %171 = vmatprep.mubr.bf16.mxu0 0
  %172 = vmatmul.mubr.bf16.gmra.mrb[0].mxu0 %v112
  %v173 = vpop.f32.mrb[0].mxu0
  %v174 = vadd.f32 0.0, %v173
  %v175 = vpop.f32.mrb[0].mxu0
  %v176 = vpop.f32.mrb[0].mxu0
  %v177 = vadd.f32 0.0, %v176
  %v178 = vpop.f32.mrb[0].mxu0
  %179 = vmatprep.mubr.bf16.mxu0 0
  %180 = vmatmul.mubr.bf16.gmra.mrb[0].mxu0 %v115
  %v181 = vpop.f32.mrb[0].mxu0
  %v182 = vadd.f32 0.0, %v181
  %v183 = vpop.f32.mrb[0].mxu0
  %v184 = vpop.f32.mrb[0].mxu0
  %v185 = vadd.f32 0.0, %v184
  %v186 = vpop.f32.mrb[0].mxu0
  %187 = vmatprep.mubr.bf16.mxu0 0
  %188 = vmatmul.mubr.bf16.gmra.mrb[0].mxu0 %v118
  %v189 = vpop.f32.mrb[0].mxu0
  %v190 = vadd.f32 0.0, %v189
  %v191 = vpop.f32.mrb[0].mxu0
  %v192 = vpop.f32.mrb[0].mxu0
  %v193 = vadd.f32 0.0, %v192
  %v194 = vpop.f32.mrb[0].mxu0
  %195 = vmatprep.mubr.bf16.mxu0 0
  %196 = vmatmul.mubr.bf16.gmra.mrb[0].mxu0 %v121
  %v197 = vpop.f32.mrb[0].mxu0
  %v198 = vadd.f32 0.0, %v197
  %v199 = vpop.f32.mrb[0].mxu0
  %v200 = vpop.f32.mrb[0].mxu0
  %v201 = vadd.f32 0.0, %v200
  %v202 = vpop.f32.mrb[0].mxu0
  %203 = vmatprep.mubr.bf16.mxu0 0
  %204 = vmatmul.mubr.bf16.gmra.mrb[0].mxu0 %v124
  %v205 = vpop.f32.mrb[0].mxu0
  %v206 = vadd.f32 0.0, %v205
  %v207 = vpop.f32.mrb[0].mxu0
  %v208 = vpop.f32.mrb[0].mxu0
  %v209 = vadd.f32 0.0, %v208
  %v210 = vpop.f32.mrb[0].mxu0
  %211 = vmatprep.mubr.bf16.mxu0 0
  %212 = vmatmul.mubr.bf16.gmra.mrb[0].mxu0 %v127
  %v213 = vpop.f32.mrb[0].mxu0
  %v214 = vadd.f32 0.0, %v213
  %v215 = vpop.f32.mrb[0].mxu0
  %v216 = vpop.f32.mrb[0].mxu0
  %v217 = vadd.f32 0.0, %v216
  %v218 = vpop.f32.mrb[0].mxu0
  %219 = vmatprep.mubr.bf16.mxu0 0
  %220 = vmatmul.mubr.bf16.gmra.mrb[0].mxu0 %v130
  %v221 = vpop.f32.mrb[0].mxu0
  %v222 = vadd.f32 0.0, %v221
  %v223 = vpop.f32.mrb[0].mxu0
  %v224 = vpop.f32.mrb[0].mxu0
  %v225 = vadd.f32 0.0, %v224
  %v226 = vpop.f32.mrb[0].mxu0
  %227 = vmatprep.mubr.bf16.mxu0 0
  %228 = vmatmul.mubr.bf16.gmra.mrb[0].mxu0 %v133
  %v229 = vpop.f32.mrb[0].mxu0
  %v230 = vadd.f32 0.0, %v229
  %v231 = vpop.f32.mrb[0].mxu0
  %v232 = vpop.f32.mrb[0].mxu0
  %v233 = vadd.f32 0.0, %v232
  %v234 = vpop.f32.mrb[0].mxu0
  %235 = vdwg.mxu0
  %v236 = vld [vmem:[%s2] sm:$0x1]
  %v238 = vlaneseq
  %v239 = vshrl.u32 %v238, 7
  %v240 = vsub.s32 0, %v239
  %v241 = vrot.slane %v236, %v240
  %v243 = vmul.f32 %v174, %v241
  %v244 = vmul.f32 %v177, %v241
  %v245 = vmul.f32 %v182, %v241
  %v246 = vmul.f32 %v185, %v241
  %v247 = vmul.f32 %v190, %v241
  %v248 = vmul.f32 %v193, %v241
  %v249 = vmul.f32 %v198, %v241
  %v250 = vmul.f32 %v201, %v241
  %v251 = vmul.f32 %v206, %v241
  %v252 = vmul.f32 %v209, %v241
  %v253 = vmul.f32 %v214, %v241
  %v254 = vmul.f32 %v217, %v241
  %v255 = vmul.f32 %v222, %v241
  %v256 = vmul.f32 %v225, %v241
  %v257 = vmul.f32 %v230, %v241
  %v258 = vmul.f32 %v233, %v241
  %v259 = vld [vmem:[%s3] sm:$0x1]
  %v261 = vlaneseq
  %v262 = vshrl.u32 %v261, 7
  %v263 = vsub.s32 0, %v262
  %v264 = vrot.slane %v259, %v263
  %v266 = vadd.f32 %v243, %v264
  %v267 = vadd.f32 %v244, %v264
  %v268 = vadd.f32 %v245, %v264
  %v269 = vadd.f32 %v246, %v264
  %v270 = vadd.f32 %v247, %v264
  %v271 = vadd.f32 %v248, %v264
  %v272 = vadd.f32 %v249, %v264
  %v273 = vadd.f32 %v250, %v264
  %v274 = vadd.f32 %v251, %v264
  %v275 = vadd.f32 %v252, %v264
  %v276 = vadd.f32 %v253, %v264
  %v277 = vadd.f32 %v254, %v264
  %v278 = vadd.f32 %v255, %v264
  %v279 = vadd.f32 %v256, %v264
  %v280 = vadd.f32 %v257, %v264
  %v281 = vadd.f32 %v258, %v264
  %v282 = vmax.f32 %v266, 0.0
  %v283 = vmax.f32 %v267, 0.0
  %v284 = vmax.f32 %v268, 0.0
  %v285 = vmax.f32 %v269, 0.0
  %v286 = vmax.f32 %v270, 0.0
  %v287 = vmax.f32 %v271, 0.0
  %v288 = vmax.f32 %v272, 0.0
  %v289 = vmax.f32 %v273, 0.0
  %v290 = vmax.f32 %v274, 0.0
  %v291 = vmax.f32 %v275, 0.0
  %v292 = vmax.f32 %v276, 0.0
  %v293 = vmax.f32 %v277, 0.0
  %v294 = vmax.f32 %v278, 0.0
  %v295 = vmax.f32 %v279, 0.0
  %v296 = vmax.f32 %v280, 0.0
  %v297 = vmax.f32 %v281, 0.0
  %v298 = vpack.c.bf16 %v283, %v282
  %v299 = vpack.c.bf16 %v285, %v284
  %v300 = vpack.c.bf16 %v287, %v286
  %v301 = vpack.c.bf16 %v289, %v288
  %v302 = vpack.c.bf16 %v291, %v290
  %v303 = vpack.c.bf16 %v293, %v292
  %v304 = vpack.c.bf16 %v295, %v294
  %v305 = vpack.c.bf16 %v297, %v296
  %v314 = vunpack.c.l.b16 %v298
  %v315 = vunpack.c.h.b16 %v298
  %v316 = vunpack.c.l.b16 %v299
  %v317 = vunpack.c.h.b16 %v299
  %v318 = vunpack.c.l.b16 %v300
  %v319 = vunpack.c.h.b16 %v300
  %v320 = vunpack.c.l.b16 %v301
  %v321 = vunpack.c.h.b16 %v301
  %v322 = vunpack.c.l.b16 %v302
  %v323 = vunpack.c.h.b16 %v302
  %v324 = vunpack.c.l.b16 %v303
  %v325 = vunpack.c.h.b16 %v303
  %v326 = vunpack.c.l.b16 %v304
  %v327 = vunpack.c.h.b16 %v304
  %v328 = vunpack.c.l.b16 %v305
  %v329 = vunpack.c.h.b16 %v305
  %v330 = vpack.c.b16 %v314, %v314
  %v331 = vpack.c.b16 %v315, %v315
  %v332 = vpack.c.b16 %v316, %v316
  %v333 = vpack.c.b16 %v317, %v317
  %v334 = vpack.c.b16 %v318, %v318
  %v335 = vpack.c.b16 %v319, %v319
  %v336 = vpack.c.b16 %v320, %v320
  %v337 = vpack.c.b16 %v321, %v321
  %v338 = vpack.c.b16 %v322, %v322
  %v339 = vpack.c.b16 %v323, %v323
  %v340 = vpack.c.b16 %v324, %v324
  %v341 = vpack.c.b16 %v325, %v325
  %v342 = vpack.c.b16 %v326, %v326
  %v343 = vpack.c.b16 %v327, %v327
  %v344 = vpack.c.b16 %v328, %v328
  %v345 = vpack.c.b16 %v329, %v329
  %vm362 = vcmask 60416
  %363 = vst.msk [vmem:[%s4] sm:$0xf] %vm362, %v330
  %364 = vst.msk [vmem:[%s4 + $0x4] sm:$0xf] %vm362, %v331
  %365 = vst.msk [vmem:[%s4 + $0x8] sm:$0xf] %vm362, %v332
  %366 = vst.msk [vmem:[%s4 + $0xc] sm:$0xf] %vm362, %v333
  %367 = vst.msk [vmem:[%s4 + $0x10] sm:$0xf] %vm362, %v334
  %368 = vst.msk [vmem:[%s4 + $0x14] sm:$0xf] %vm362, %v335
  %369 = vst.msk [vmem:[%s4 + $0x18] sm:$0xf] %vm362, %v336
  %370 = vst.msk [vmem:[%s4 + $0x1c] sm:$0xf] %vm362, %v337
  %371 = vst.msk [vmem:[%s4 + $0x20] sm:$0xf] %vm362, %v338
  %372 = vst.msk [vmem:[%s4 + $0x24] sm:$0xf] %vm362, %v339
  %373 = vst.msk [vmem:[%s4 + $0x28] sm:$0xf] %vm362, %v340
  %374 = vst.msk [vmem:[%s4 + $0x2c] sm:$0xf] %vm362, %v341
  %375 = vst.msk [vmem:[%s4 + $0x30] sm:$0xf] %vm362, %v342
  %376 = vst.msk [vmem:[%s4 + $0x34] sm:$0xf] %vm362, %v343
  %377 = vst.msk [vmem:[%s4 + $0x38] sm:$0xf] %vm362, %v344
  %378 = vst.msk [vmem:[%s4 + $0x3c] sm:$0xf] %vm362, %v345
  // Predicated region
  $region18: #{_lambda_.57} parent=0 // pred_check
    _
  $region19: #{_lambda_.57} parent=0 // pred_check_branch
    %380 = sbr.rel (0) target = $region21
  $region20: #{_lambda_.57} parent=0 // pred_region
    _
  $region21: #{_lambda_.57} parent=0 // pred_fallthru
    _
  // Predicated region
  $region22: #{_lambda_.57} parent=0 // pred_check
    _
  $region23: #{_lambda_.57} parent=0 // pred_check_branch
    %382 = sbr.rel (0) target = $region25
  $region24: #{_lambda_.57} parent=0 // pred_region
    _
  $region25: #{_lambda_.57} parent=0 // pred_fallthru
    _

</llo_original>
